<compile_context>
chip_gen: v7x
topology: tpu7x:2x2x1
jax: 0.10.0
libtpu: 0.0.40
codegen_flags: <defaults>
</compile_context>

<pallas_src>
import functools

import numpy as np
import jax
import jax.numpy as jnp
from jax.experimental import pallas as pl
from jax.experimental.pallas import tpu as pltpu

EPS = 1e-3  # BatchNorm eps


def _mish(y):
    # numerically stable softplus, then y * tanh(softplus(y))
    sp = jnp.maximum(y, 0.0) + jnp.log1p(jnp.exp(-jnp.abs(y)))
    return y * jnp.tanh(sp)


# ----------------------------------------------------------------------------
# The single fused kernel: conv21 -> conv222/223/224 -> BN22 -> PAM -> pool
# ----------------------------------------------------------------------------
def _fused_branch_kernel(
    x_ref, shift_ref, abias_ref, pool_ref,
    w21_ref, c21_ref, w222_ref, c222_ref, w223_ref, c223_ref,
    w224_ref, c224_ref, s22_ref, h22_ref, wqkv_ref, bqkv_ref,
    gamma_ref, ssp_ref, hsp_ref, o_ref):
    f32 = jnp.float32
    x = x_ref[0]                                   # (M, 2), M = B*N (batch folded into rows)

    # conv21 (1x1x{1,2} conv) + folded BN21 + mish.  Cin <= 2 -> VPU outer
    # product (two vmul + vadd) instead of a nearly-empty MXU push.
    w21 = w21_ref[0]                               # (2, 24); unused rows are zero
    x21 = _mish(x[:, 0:1] * w21[0:1, :] + x[:, 1:2] * w21[1:2, :] + c21_ref[0])   # (M, 24)

    def conv3x3(inp, w_r, c_r):
        # In-VMEM im2col: 9 spatial taps gathered by block-diagonal (per-sample)
        # 0/1 shift matrices, then one (M, 9*Cin)@(9*Cin, Cout) conv matmul.
        cols = jnp.concatenate(
            [jnp.dot(shift_ref[t], inp, preferred_element_type=f32) for t in range(9)],
            axis=-1)
        return jnp.dot(cols, w_r[0], preferred_element_type=f32) + c_r[0]

    x221 = x21[:, 0:6]
    x222 = _mish(conv3x3(x21[:, 6:12], w222_ref, c222_ref))
    x223 = _mish(conv3x3(jnp.concatenate([x222, x21[:, 12:18]], axis=-1),
                         w223_ref, c223_ref))
    x224 = conv3x3(jnp.concatenate([x223, x21[:, 18:24]], axis=-1),
                   w224_ref, c224_ref)             # conv224 has no BN / mish
    x22 = _mish(jnp.concatenate([x221, x222, x223, x224], axis=-1)
                * s22_ref[0] + h22_ref[0])         # batch_norm22 + mish  -> (M, 24)

    # PAM attention with a fused q/k/v projection (one (M,24)@(24,30) matmul).
    qkv = jnp.dot(x22, wqkv_ref[0], preferred_element_type=f32) + bqkv_ref[0]
    q, k, v = qkv[:, 0:3], qkv[:, 3:6], qkv[:, 6:30]
    energy = jax.lax.dot_general(q, k, (((1,), (1,)), ((), ())),
                                 preferred_element_type=f32)    # (M, M): q_n . k_m
    energy = energy + abias_ref[...]               # -1e30 off the per-sample diagonal block
    energy = energy - jnp.max(energy, axis=-1, keepdims=True)
    e = jnp.exp(energy)
    att = e / jnp.sum(e, axis=-1, keepdims=True)   # softmax over keys (per sample)
    out = jnp.dot(att, v, preferred_element_type=f32)   # == bmm(value, att^T) channels-first
    pam = gamma_ref[0] * out + x22                 # gamma * out + X22
    x2 = pam * x22                                 # torch.mul(X2, X22)
    x2 = _mish(x2 * ssp_ref[0] + hsp_ref[0])       # batch_norm_spatial + mish
    # TODO(synk): BatchNorm is folded with fixed eval-mode running stats and
    # Dropout(p=0.5) is identity (inference only); training-mode parity is not implemented.
    o_ref[0] = jnp.dot(pool_ref[...], x2, preferred_element_type=f32)   # per-sample avg pool -> (B, 24)


def fused_forward(x_all, prm):
    """x_all: (2, M, 2) branch-stacked inputs; prm: stacked params + constants."""
    nbr, M, _ = x_all.shape
    B = prm["pool"].shape[0]

    def br(a):   # per-branch stacked parameter: leading dim 2, selected by grid index
        s = a.shape[1:]
        return pl.BlockSpec((1,) + s, lambda g, _n=len(s): (g,) + (0,) * _n)

    def sh(a):   # shared constant: same block every grid step
        s = a.shape
        return pl.BlockSpec(s, lambda g, _n=len(s): (0,) * _n)

    branch_keys = ("w21", "c21", "w222", "c222", "w223", "c223", "w224", "c224",
                   "s22", "h22", "wqkv", "bqkv", "gamma", "ssp", "hsp")
    branch_args = [prm[k] for k in branch_keys]

    return pl.pallas_call(
        _fused_branch_kernel,
        out_shape=jax.ShapeDtypeStruct((nbr, B, 24), jnp.float32),
        grid=(nbr,),
        in_specs=([br(x_all), sh(prm["shift"]), sh(prm["abias"]), sh(prm["pool"])]
                  + [br(a) for a in branch_args]),
        out_specs=pl.BlockSpec((1, B, 24), lambda g: (g, 0, 0)),
        compiler_params=pltpu.CompilerParams(dimension_semantics=("parallel",)),
    )(x_all, prm["shift"], prm["abias"], prm["pool"], *branch_args)


# ----------------------------------------------------------------------------
# Constants: shift / attention-bias / pooling matrices (precomputed, host side)
# ----------------------------------------------------------------------------
def make_consts(P, B):
    N = P * P
    M = B * N
    # 9 spatial-tap gather matrices for a 3x3 conv with pad=1 (tap-major kh,kw).
    S = np.zeros((9, N, N), np.float32)
    t = 0
    for dh in (-1, 0, 1):
        for dw in (-1, 0, 1):
            for h in range(P):
                hh = h + dh
                if 0 <= hh < P:
                    for w in range(P):
                        ww = w + dw
                        if 0 <= ww < P:
                            S[t, h * P + w, hh * P + ww] = 1.0
            t += 1
    Sm = np.zeros((9, M, M), np.float32)          # block-diagonal over batch
    pool = np.zeros((B, M), np.float32)           # per-sample global average pool
    abias = np.full((M, M), -1e30, np.float32)    # block-diagonal softmax mask
    for b in range(B):
        sl = slice(b * N, (b + 1) * N)
        Sm[:, sl, sl] = S
        pool[b, sl] = 1.0 / N
        abias[sl, sl] = 0.0
    return {"shift": jnp.asarray(Sm), "abias": jnp.asarray(abias),
            "pool": jnp.asarray(pool)}


# ----------------------------------------------------------------------------
# Parameters (deterministic random init; BN folded into weights/biases)
# ----------------------------------------------------------------------------
def _bn_fold(key, c):
    k1, k2, k3, k4 = jax.random.split(key, 4)
    gamma = 1.0 + 0.1 * jax.random.normal(k1, (c,), jnp.float32)
    beta = 0.1 * jax.random.normal(k2, (c,), jnp.float32)
    mean = 0.1 * jax.random.normal(k3, (c,), jnp.float32)
    var = 1.0 + 0.1 * jax.random.uniform(k4, (c,), jnp.float32)
    scale = gamma / jnp.sqrt(var + EPS)
    shift = beta - mean * scale
    return scale.reshape(1, c), shift.reshape(1, c)


def make_branch_params(key, cin0):
    ks = jax.random.split(key, 20)
    prm = {}
    # conv21 (1x1 conv in matmul form) with BN21 folded in; Cin padded to 2.
    w21 = 0.1 * jax.random.normal(ks[0], (cin0, 24), jnp.float32)
    b21 = 0.1 * jax.random.normal(ks[1], (1, 24), jnp.float32)
    s21, h21 = _bn_fold(ks[2], 24)
    w21 = w21 * s21
    if cin0 < 2:
        w21 = jnp.concatenate([w21, jnp.zeros((2 - cin0, 24), jnp.float32)], axis=0)
    prm["w21"] = w21
    prm["c21"] = b21 * s21 + h21

    def conv_bn(kw, kb, kbn, cin_k, cout):
        w = 0.1 * jax.random.normal(kw, (cin_k, cout), jnp.float32)
        b = 0.1 * jax.random.normal(kb, (1, cout), jnp.float32)
        s, h = _bn_fold(kbn, cout)
        return w * s, b * s + h

    prm["w222"], prm["c222"] = conv_bn(ks[3], ks[4], ks[5], 9 * 6, 6)    # conv222: 3x3, 6->6
    prm["w223"], prm["c223"] = conv_bn(ks[6], ks[7], ks[8], 9 * 12, 6)   # conv223: 3x3, 12->6
    prm["w224"] = 0.1 * jax.random.normal(ks[9], (9 * 12, 6), jnp.float32)  # conv224: no BN/mish
    prm["c224"] = 0.1 * jax.random.normal(ks[10], (1, 6), jnp.float32)
    prm["s22"], prm["h22"] = _bn_fold(ks[11], 24)                        # batch_norm22
    wq = 0.1 * jax.random.normal(ks[12], (24, 3), jnp.float32)           # query_conv 1x1, 24 -> 24//8
    bq = 0.1 * jax.random.normal(ks[13], (1, 3), jnp.float32)
    wk = 0.1 * jax.random.normal(ks[14], (24, 3), jnp.float32)
    bk = 0.1 * jax.random.normal(ks[15], (1, 3), jnp.float32)
    wv = 0.1 * jax.random.normal(ks[16], (24, 24), jnp.float32)
    bv = 0.1 * jax.random.normal(ks[17], (1, 24), jnp.float32)
    prm["wqkv"] = jnp.concatenate([wq, wk, wv], axis=1)                  # fused q/k/v projection
    prm["bqkv"] = jnp.concatenate([bq, bk, bv], axis=1)
    prm["gamma"] = jnp.zeros((1, 1), jnp.float32)   # PyTorch PAM gamma is zero-initialized
    prm["ssp"], prm["hsp"] = _bn_fold(ks[18], 24)                        # batch_norm_spatial
    return prm


def stack_branch_params(p_main, p_pos):
    return jax.tree_util.tree_map(lambda a, b: jnp.stack([a, b], axis=0), p_main, p_pos)


# ----------------------------------------------------------------------------
# Model composition (layout: (B*N, C) with N = H*W row-major, channels last)
# ----------------------------------------------------------------------------
def lidar_model_forward(X, xp, params, *, p):
    B, P, _, D = X.shape                          # D == 1 (lidar depth)
    N = P * P
    x_main = X.reshape(B * N, D)
    x_main = jnp.pad(x_main, ((0, 0), (0, 2 - D)))     # pad Cin to 2 (weights zero-padded)
    Xp = xp[:, :, :, :-2]                         # (B, P, P, 2) -> PositionModel input
    Xl = xp[:, p, p, -2:]                         # (B, 2)
    x_pos = Xp.reshape(B * N, 2)                  # PositionModel conv21 (1,1,2) == matmul over 2
    x_all = jnp.stack([x_main, x_pos], axis=0)    # (2 branches, B*N, 2)

    feats = fused_forward(x_all, params)          # (2, B, 24) -- single pallas_call
    feature_X, feature_Xp = feats[0], feats[1]
    feature = jnp.concatenate([feature_X, feature_Xp], axis=1)
    return feature_X, Xl, feature


if __name__ == "__main__":
    p = 2
    P = 2 * p + 1          # patch size 5 (so xp[:, p, p] is the center pixel)
    B = 2

    key = jax.random.PRNGKey(0)
    kx, kxp, kmain, kpos = jax.random.split(key, 4)
    X = jax.random.normal(kx, (B, P, P, 1), jnp.float32)     # lidar patch, depth 1
    xp = jax.random.normal(kxp, (B, P, P, 4), jnp.float32)   # last 2 = Xl, first 2 -> PositionModel

    params = {**stack_branch_params(make_branch_params(kmain, 1),
                                    make_branch_params(kpos, 2)),
              **make_consts(P, B)}

    fwd = jax.jit(functools.partial(lidar_model_forward, p=p))
    feature_X, Xl, feature = fwd(X, xp, params)
    jax.block_until_ready(feature)

    assert feature_X.shape == (B, 24)
    assert Xl.shape == (B, 2)
    assert feature.shape == (B, 48)
    assert bool(jnp.all(jnp.isfinite(feature)))
    print("KERNEL_OK")
</pallas_src>

<mosaic_0001>
module attributes {stable_mosaic.version = 11 : i64} {
  func.func @_fused_branch_kernel(%arg0: i32, %arg1: memref<1x50x2xf32, #tpu.memory_space<vmem>>, %arg2: memref<9x50x50xf32, #tpu.memory_space<vmem>>, %arg3: memref<50x50xf32, #tpu.memory_space<vmem>>, %arg4: memref<2x50xf32, #tpu.memory_space<vmem>>, %arg5: memref<1x2x24xf32, #tpu.memory_space<vmem>>, %arg6: memref<1x1x24xf32, #tpu.memory_space<vmem>>, %arg7: memref<1x54x6xf32, #tpu.memory_space<vmem>>, %arg8: memref<1x1x6xf32, #tpu.memory_space<vmem>>, %arg9: memref<1x108x6xf32, #tpu.memory_space<vmem>>, %arg10: memref<1x1x6xf32, #tpu.memory_space<vmem>>, %arg11: memref<1x108x6xf32, #tpu.memory_space<vmem>>, %arg12: memref<1x1x6xf32, #tpu.memory_space<vmem>>, %arg13: memref<1x1x24xf32, #tpu.memory_space<vmem>>, %arg14: memref<1x1x24xf32, #tpu.memory_space<vmem>>, %arg15: memref<1x24x30xf32, #tpu.memory_space<vmem>>, %arg16: memref<1x1x30xf32, #tpu.memory_space<vmem>>, %arg17: memref<1x1x1xf32, #tpu.memory_space<vmem>>, %arg18: memref<1x1x24xf32, #tpu.memory_space<vmem>>, %arg19: memref<1x1x24xf32, #tpu.memory_space<vmem>>, %arg20: memref<1x2x24xf32, #tpu.memory_space<vmem>>) attributes {dimension_semantics = [#tpu.dimension_semantics<parallel>], iteration_bounds = array<i64: 2>, scalar_prefetch = 0 : i64, scratch_operands = 0 : i64, tpu.core_type = #tpu.core_type<tc>, window_params = [{transform_indices = @transform_0, window_bounds = array<i64: 1, 50, 2>}, {pipeline_mode = #tpu.pipeline_mode<synchronous>, transform_indices = @transform_1, window_bounds = array<i64: 9, 50, 50>}, {pipeline_mode = #tpu.pipeline_mode<synchronous>, transform_indices = @transform_2, window_bounds = array<i64: 50, 50>}, {pipeline_mode = #tpu.pipeline_mode<synchronous>, transform_indices = @transform_3, window_bounds = array<i64: 2, 50>}, {transform_indices = @transform_4, window_bounds = array<i64: 1, 2, 24>}, {transform_indices = @transform_5, window_bounds = array<i64: 1, 1, 24>}, {transform_indices = @transform_6, window_bounds = array<i64: 1, 54, 6>}, {transform_indices = @transform_7, window_bounds = array<i64: 1, 1, 6>}, {transform_indices = @transform_8, window_bounds = array<i64: 1, 108, 6>}, {transform_indices = @transform_9, window_bounds = array<i64: 1, 1, 6>}, {transform_indices = @transform_10, window_bounds = array<i64: 1, 108, 6>}, {transform_indices = @transform_11, window_bounds = array<i64: 1, 1, 6>}, {transform_indices = @transform_12, window_bounds = array<i64: 1, 1, 24>}, {transform_indices = @transform_13, window_bounds = array<i64: 1, 1, 24>}, {transform_indices = @transform_14, window_bounds = array<i64: 1, 24, 30>}, {transform_indices = @transform_15, window_bounds = array<i64: 1, 1, 30>}, {transform_indices = @transform_16, window_bounds = array<i64: 1, 1, 1>}, {transform_indices = @transform_17, window_bounds = array<i64: 1, 1, 24>}, {transform_indices = @transform_18, window_bounds = array<i64: 1, 1, 24>}, {transform_indices = @transform_19, window_bounds = array<i64: 1, 2, 24>}]} {
    %c0 = arith.constant 0 : index
    %c0_0 = arith.constant 0 : index
    %c0_1 = arith.constant 0 : index
    %0 = vector.load %arg1[%c0, %c0_0, %c0_1] : memref<1x50x2xf32, #tpu.memory_space<vmem>>, vector<1x50x2xf32>
    %1 = vector.shape_cast %0 : vector<1x50x2xf32> to vector<50x2xf32>
    %c0_2 = arith.constant 0 : index
    %c0_3 = arith.constant 0 : index
    %c0_4 = arith.constant 0 : index
    %2 = vector.load %arg5[%c0_2, %c0_3, %c0_4] : memref<1x2x24xf32, #tpu.memory_space<vmem>>, vector<1x2x24xf32>
    %3 = vector.shape_cast %2 : vector<1x2x24xf32> to vector<2x24xf32>
    %4 = vector.extract_strided_slice %1 {offsets = [0, 0], sizes = [50, 1], strides = [1, 1]} : vector<50x2xf32> to vector<50x1xf32>
    %5 = vector.extract_strided_slice %3 {offsets = [0, 0], sizes = [1, 24], strides = [1, 1]} : vector<2x24xf32> to vector<1x24xf32>
    %6 = vector.broadcast %4 : vector<50x1xf32> to vector<50x24xf32>
    %7 = vector.broadcast %5 : vector<1x24xf32> to vector<50x24xf32>
    %8 = arith.mulf %6, %7 : vector<50x24xf32>
    %9 = vector.extract_strided_slice %1 {offsets = [0, 1], sizes = [50, 1], strides = [1, 1]} : vector<50x2xf32> to vector<50x1xf32>
    %10 = vector.extract_strided_slice %3 {offsets = [1, 0], sizes = [1, 24], strides = [1, 1]} : vector<2x24xf32> to vector<1x24xf32>
    %11 = vector.broadcast %9 : vector<50x1xf32> to vector<50x24xf32>
    %12 = vector.broadcast %10 : vector<1x24xf32> to vector<50x24xf32>
    %13 = arith.mulf %11, %12 : vector<50x24xf32>
    %14 = arith.addf %8, %13 : vector<50x24xf32>
    %c0_5 = arith.constant 0 : index
    %c0_6 = arith.constant 0 : index
    %c0_7 = arith.constant 0 : index
    %15 = vector.load %arg6[%c0_5, %c0_6, %c0_7] : memref<1x1x24xf32, #tpu.memory_space<vmem>>, vector<1x1x24xf32>
    %16 = vector.shape_cast %15 : vector<1x1x24xf32> to vector<1x24xf32>
    %17 = vector.broadcast %16 : vector<1x24xf32> to vector<50x24xf32>
    %18 = arith.addf %14, %17 : vector<50x24xf32>
    %cst = arith.constant 0.000000e+00 : f32
    %19 = vector.broadcast %cst : f32 to vector<50x24xf32>
    %20 = arith.maximumf %18, %19 : vector<50x24xf32>
    %21 = math.absf %18 : vector<50x24xf32>
    %cst_8 = arith.constant 0.000000e+00 : f32
    %22 = vector.broadcast %cst_8 : f32 to vector<50x24xf32>
    %23 = arith.subf %22, %21 : vector<50x24xf32>
    %24 = math.exp %23 : vector<50x24xf32>
    %25 = math.log1p %24 : vector<50x24xf32>
    %26 = arith.addf %20, %25 : vector<50x24xf32>
    %27 = math.tanh %26 : vector<50x24xf32>
    %28 = arith.mulf %18, %27 : vector<50x24xf32>
    %29 = vector.extract_strided_slice %28 {offsets = [0, 0], sizes = [50, 6], strides = [1, 1]} : vector<50x24xf32> to vector<50x6xf32>
    %30 = vector.extract_strided_slice %28 {offsets = [0, 6], sizes = [50, 6], strides = [1, 1]} : vector<50x24xf32> to vector<50x6xf32>
    %c0_9 = arith.constant 0 : index
    %c0_10 = arith.constant 0 : index
    %c0_11 = arith.constant 0 : index
    %31 = vector.load %arg2[%c0_9, %c0_10, %c0_11] : memref<9x50x50xf32, #tpu.memory_space<vmem>>, vector<1x50x50xf32>
    %32 = vector.shape_cast %31 : vector<1x50x50xf32> to vector<50x50xf32>
    %cst_12 = arith.constant dense<0.000000e+00> : vector<50x6xf32>
    %33 = tpu.matmul %32, %30, %cst_12 {dimension_numbers = #tpu.dot_dimension_numbers<[1], [0], [0], [1], [0, 0, 1, 1], [], []>} : vector<50x50xf32>, vector<50x6xf32>, vector<50x6xf32> -> vector<50x6xf32>
    %c1 = arith.constant 1 : index
    %c0_13 = arith.constant 0 : index
    %c0_14 = arith.constant 0 : index
    %34 = vector.load %arg2[%c1, %c0_13, %c0_14] : memref<9x50x50xf32, #tpu.memory_space<vmem>>, vector<1x50x50xf32>
    %35 = vector.shape_cast %34 : vector<1x50x50xf32> to vector<50x50xf32>
    %cst_15 = arith.constant dense<0.000000e+00> : vector<50x6xf32>
    %36 = tpu.matmul %35, %30, %cst_15 {dimension_numbers = #tpu.dot_dimension_numbers<[1], [0], [0], [1], [0, 0, 1, 1], [], []>} : vector<50x50xf32>, vector<50x6xf32>, vector<50x6xf32> -> vector<50x6xf32>
    %c2 = arith.constant 2 : index
    %c0_16 = arith.constant 0 : index
    %c0_17 = arith.constant 0 : index
    %37 = vector.load %arg2[%c2, %c0_16, %c0_17] : memref<9x50x50xf32, #tpu.memory_space<vmem>>, vector<1x50x50xf32>
    %38 = vector.shape_cast %37 : vector<1x50x50xf32> to vector<50x50xf32>
    %cst_18 = arith.constant dense<0.000000e+00> : vector<50x6xf32>
    %39 = tpu.matmul %38, %30, %cst_18 {dimension_numbers = #tpu.dot_dimension_numbers<[1], [0], [0], [1], [0, 0, 1, 1], [], []>} : vector<50x50xf32>, vector<50x6xf32>, vector<50x6xf32> -> vector<50x6xf32>
    %c3 = arith.constant 3 : index
    %c0_19 = arith.constant 0 : index
    %c0_20 = arith.constant 0 : index
    %40 = vector.load %arg2[%c3, %c0_19, %c0_20] : memref<9x50x50xf32, #tpu.memory_space<vmem>>, vector<1x50x50xf32>
    %41 = vector.shape_cast %40 : vector<1x50x50xf32> to vector<50x50xf32>
    %cst_21 = arith.constant dense<0.000000e+00> : vector<50x6xf32>
    %42 = tpu.matmul %41, %30, %cst_21 {dimension_numbers = #tpu.dot_dimension_numbers<[1], [0], [0], [1], [0, 0, 1, 1], [], []>} : vector<50x50xf32>, vector<50x6xf32>, vector<50x6xf32> -> vector<50x6xf32>
    %c4 = arith.constant 4 : index
    %c0_22 = arith.constant 0 : index
    %c0_23 = arith.constant 0 : index
    %43 = vector.load %arg2[%c4, %c0_22, %c0_23] : memref<9x50x50xf32, #tpu.memory_space<vmem>>, vector<1x50x50xf32>
    %44 = vector.shape_cast %43 : vector<1x50x50xf32> to vector<50x50xf32>
    %cst_24 = arith.constant dense<0.000000e+00> : vector<50x6xf32>
    %45 = tpu.matmul %44, %30, %cst_24 {dimension_numbers = #tpu.dot_dimension_numbers<[1], [0], [0], [1], [0, 0, 1, 1], [], []>} : vector<50x50xf32>, vector<50x6xf32>, vector<50x6xf32> -> vector<50x6xf32>
    %c5 = arith.constant 5 : index
    %c0_25 = arith.constant 0 : index
    %c0_26 = arith.constant 0 : index
    %46 = vector.load %arg2[%c5, %c0_25, %c0_26] : memref<9x50x50xf32, #tpu.memory_space<vmem>>, vector<1x50x50xf32>
    %47 = vector.shape_cast %46 : vector<1x50x50xf32> to vector<50x50xf32>
    %cst_27 = arith.constant dense<0.000000e+00> : vector<50x6xf32>
    %48 = tpu.matmul %47, %30, %cst_27 {dimension_numbers = #tpu.dot_dimension_numbers<[1], [0], [0], [1], [0, 0, 1, 1], [], []>} : vector<50x50xf32>, vector<50x6xf32>, vector<50x6xf32> -> vector<50x6xf32>
    %c6 = arith.constant 6 : index
    %c0_28 = arith.constant 0 : index
    %c0_29 = arith.constant 0 : index
    %49 = vector.load %arg2[%c6, %c0_28, %c0_29] : memref<9x50x50xf32, #tpu.memory_space<vmem>>, vector<1x50x50xf32>
    %50 = vector.shape_cast %49 : vector<1x50x50xf32> to vector<50x50xf32>
    %cst_30 = arith.constant dense<0.000000e+00> : vector<50x6xf32>
    %51 = tpu.matmul %50, %30, %cst_30 {dimension_numbers = #tpu.dot_dimension_numbers<[1], [0], [0], [1], [0, 0, 1, 1], [], []>} : vector<50x50xf32>, vector<50x6xf32>, vector<50x6xf32> -> vector<50x6xf32>
    %c7 = arith.constant 7 : index
    %c0_31 = arith.constant 0 : index
    %c0_32 = arith.constant 0 : index
    %52 = vector.load %arg2[%c7, %c0_31, %c0_32] : memref<9x50x50xf32, #tpu.memory_space<vmem>>, vector<1x50x50xf32>
    %53 = vector.shape_cast %52 : vector<1x50x50xf32> to vector<50x50xf32>
    %cst_33 = arith.constant dense<0.000000e+00> : vector<50x6xf32>
    %54 = tpu.matmul %53, %30, %cst_33 {dimension_numbers = #tpu.dot_dimension_numbers<[1], [0], [0], [1], [0, 0, 1, 1], [], []>} : vector<50x50xf32>, vector<50x6xf32>, vector<50x6xf32> -> vector<50x6xf32>
    %c8 = arith.constant 8 : index
    %c0_34 = arith.constant 0 : index
    %c0_35 = arith.constant 0 : index
    %55 = vector.load %arg2[%c8, %c0_34, %c0_35] : memref<9x50x50xf32, #tpu.memory_space<vmem>>, vector<1x50x50xf32>
    %56 = vector.shape_cast %55 : vector<1x50x50xf32> to vector<50x50xf32>
    %cst_36 = arith.constant dense<0.000000e+00> : vector<50x6xf32>
    %57 = tpu.matmul %56, %30, %cst_36 {dimension_numbers = #tpu.dot_dimension_numbers<[1], [0], [0], [1], [0, 0, 1, 1], [], []>} : vector<50x50xf32>, vector<50x6xf32>, vector<50x6xf32> -> vector<50x6xf32>
    %58 = tpu.concatenate %33, %36, %39, %42, %45, %48, %51, %54, %57 in 1 : vector<50x6xf32>, vector<50x6xf32>, vector<50x6xf32>, vector<50x6xf32>, vector<50x6xf32>, vector<50x6xf32>, vector<50x6xf32>, vector<50x6xf32>, vector<50x6xf32> -> vector<50x54xf32>
    %c0_37 = arith.constant 0 : index
    %c0_38 = arith.constant 0 : index
    %c0_39 = arith.constant 0 : index
    %59 = vector.load %arg7[%c0_37, %c0_38, %c0_39] : memref<1x54x6xf32, #tpu.memory_space<vmem>>, vector<1x54x6xf32>
    %60 = vector.shape_cast %59 : vector<1x54x6xf32> to vector<54x6xf32>
    %cst_40 = arith.constant dense<0.000000e+00> : vector<50x6xf32>
    %61 = tpu.matmul %58, %60, %cst_40 {dimension_numbers = #tpu.dot_dimension_numbers<[1], [0], [0], [1], [0, 0, 1, 1], [], []>} : vector<50x54xf32>, vector<54x6xf32>, vector<50x6xf32> -> vector<50x6xf32>
    %c0_41 = arith.constant 0 : index
    %c0_42 = arith.constant 0 : index
    %c0_43 = arith.constant 0 : index
    %62 = vector.load %arg8[%c0_41, %c0_42, %c0_43] : memref<1x1x6xf32, #tpu.memory_space<vmem>>, vector<1x1x6xf32>
    %63 = vector.shape_cast %62 : vector<1x1x6xf32> to vector<1x6xf32>
    %64 = vector.broadcast %63 : vector<1x6xf32> to vector<50x6xf32>
    %65 = arith.addf %61, %64 : vector<50x6xf32>
    %cst_44 = arith.constant 0.000000e+00 : f32
    %66 = vector.broadcast %cst_44 : f32 to vector<50x6xf32>
    %67 = arith.maximumf %65, %66 : vector<50x6xf32>
    %68 = math.absf %65 : vector<50x6xf32>
    %cst_45 = arith.constant 0.000000e+00 : f32
    %69 = vector.broadcast %cst_45 : f32 to vector<50x6xf32>
    %70 = arith.subf %69, %68 : vector<50x6xf32>
    %71 = math.exp %70 : vector<50x6xf32>
    %72 = math.log1p %71 : vector<50x6xf32>
    %73 = arith.addf %67, %72 : vector<50x6xf32>
    %74 = math.tanh %73 : vector<50x6xf32>
    %75 = arith.mulf %65, %74 : vector<50x6xf32>
    %76 = vector.extract_strided_slice %28 {offsets = [0, 12], sizes = [50, 6], strides = [1, 1]} : vector<50x24xf32> to vector<50x6xf32>
    %77 = tpu.concatenate %75, %76 in 1 : vector<50x6xf32>, vector<50x6xf32> -> vector<50x12xf32>
    %c0_46 = arith.constant 0 : index
    %c0_47 = arith.constant 0 : index
    %c0_48 = arith.constant 0 : index
    %78 = vector.load %arg2[%c0_46, %c0_47, %c0_48] : memref<9x50x50xf32, #tpu.memory_space<vmem>>, vector<1x50x50xf32>
    %79 = vector.shape_cast %78 : vector<1x50x50xf32> to vector<50x50xf32>
    %cst_49 = arith.constant dense<0.000000e+00> : vector<50x12xf32>
    %80 = tpu.matmul %79, %77, %cst_49 {dimension_numbers = #tpu.dot_dimension_numbers<[1], [0], [0], [1], [0, 0, 1, 1], [], []>} : vector<50x50xf32>, vector<50x12xf32>, vector<50x12xf32> -> vector<50x12xf32>
    %c1_50 = arith.constant 1 : index
    %c0_51 = arith.constant 0 : index
    %c0_52 = arith.constant 0 : index
    %81 = vector.load %arg2[%c1_50, %c0_51, %c0_52] : memref<9x50x50xf32, #tpu.memory_space<vmem>>, vector<1x50x50xf32>
    %82 = vector.shape_cast %81 : vector<1x50x50xf32> to vector<50x50xf32>
    %cst_53 = arith.constant dense<0.000000e+00> : vector<50x12xf32>
    %83 = tpu.matmul %82, %77, %cst_53 {dimension_numbers = #tpu.dot_dimension_numbers<[1], [0], [0], [1], [0, 0, 1, 1], [], []>} : vector<50x50xf32>, vector<50x12xf32>, vector<50x12xf32> -> vector<50x12xf32>
    %c2_54 = arith.constant 2 : index
    %c0_55 = arith.constant 0 : index
    %c0_56 = arith.constant 0 : index
    %84 = vector.load %arg2[%c2_54, %c0_55, %c0_56] : memref<9x50x50xf32, #tpu.memory_space<vmem>>, vector<1x50x50xf32>
    %85 = vector.shape_cast %84 : vector<1x50x50xf32> to vector<50x50xf32>
    %cst_57 = arith.constant dense<0.000000e+00> : vector<50x12xf32>
    %86 = tpu.matmul %85, %77, %cst_57 {dimension_numbers = #tpu.dot_dimension_numbers<[1], [0], [0], [1], [0, 0, 1, 1], [], []>} : vector<50x50xf32>, vector<50x12xf32>, vector<50x12xf32> -> vector<50x12xf32>
    %c3_58 = arith.constant 3 : index
    %c0_59 = arith.constant 0 : index
    %c0_60 = arith.constant 0 : index
    %87 = vector.load %arg2[%c3_58, %c0_59, %c0_60] : memref<9x50x50xf32, #tpu.memory_space<vmem>>, vector<1x50x50xf32>
    %88 = vector.shape_cast %87 : vector<1x50x50xf32> to vector<50x50xf32>
    %cst_61 = arith.constant dense<0.000000e+00> : vector<50x12xf32>
    %89 = tpu.matmul %88, %77, %cst_61 {dimension_numbers = #tpu.dot_dimension_numbers<[1], [0], [0], [1], [0, 0, 1, 1], [], []>} : vector<50x50xf32>, vector<50x12xf32>, vector<50x12xf32> -> vector<50x12xf32>
    %c4_62 = arith.constant 4 : index
    %c0_63 = arith.constant 0 : index
    %c0_64 = arith.constant 0 : index
    %90 = vector.load %arg2[%c4_62, %c0_63, %c0_64] : memref<9x50x50xf32, #tpu.memory_space<vmem>>, vector<1x50x50xf32>
    %91 = vector.shape_cast %90 : vector<1x50x50xf32> to vector<50x50xf32>
    %cst_65 = arith.constant dense<0.000000e+00> : vector<50x12xf32>
    %92 = tpu.matmul %91, %77, %cst_65 {dimension_numbers = #tpu.dot_dimension_numbers<[1], [0], [0], [1], [0, 0, 1, 1], [], []>} : vector<50x50xf32>, vector<50x12xf32>, vector<50x12xf32> -> vector<50x12xf32>
    %c5_66 = arith.constant 5 : index
    %c0_67 = arith.constant 0 : index
    %c0_68 = arith.constant 0 : index
    %93 = vector.load %arg2[%c5_66, %c0_67, %c0_68] : memref<9x50x50xf32, #tpu.memory_space<vmem>>, vector<1x50x50xf32>
    %94 = vector.shape_cast %93 : vector<1x50x50xf32> to vector<50x50xf32>
    %cst_69 = arith.constant dense<0.000000e+00> : vector<50x12xf32>
    %95 = tpu.matmul %94, %77, %cst_69 {dimension_numbers = #tpu.dot_dimension_numbers<[1], [0], [0], [1], [0, 0, 1, 1], [], []>} : vector<50x50xf32>, vector<50x12xf32>, vector<50x12xf32> -> vector<50x12xf32>
    %c6_70 = arith.constant 6 : index
    %c0_71 = arith.constant 0 : index
    %c0_72 = arith.constant 0 : index
    %96 = vector.load %arg2[%c6_70, %c0_71, %c0_72] : memref<9x50x50xf32, #tpu.memory_space<vmem>>, vector<1x50x50xf32>
    %97 = vector.shape_cast %96 : vector<1x50x50xf32> to vector<50x50xf32>
    %cst_73 = arith.constant dense<0.000000e+00> : vector<50x12xf32>
    %98 = tpu.matmul %97, %77, %cst_73 {dimension_numbers = #tpu.dot_dimension_numbers<[1], [0], [0], [1], [0, 0, 1, 1], [], []>} : vector<50x50xf32>, vector<50x12xf32>, vector<50x12xf32> -> vector<50x12xf32>
    %c7_74 = arith.constant 7 : index
    %c0_75 = arith.constant 0 : index
    %c0_76 = arith.constant 0 : index
    %99 = vector.load %arg2[%c7_74, %c0_75, %c0_76] : memref<9x50x50xf32, #tpu.memory_space<vmem>>, vector<1x50x50xf32>
    %100 = vector.shape_cast %99 : vector<1x50x50xf32> to vector<50x50xf32>
    %cst_77 = arith.constant dense<0.000000e+00> : vector<50x12xf32>
    %101 = tpu.matmul %100, %77, %cst_77 {dimension_numbers = #tpu.dot_dimension_numbers<[1], [0], [0], [1], [0, 0, 1, 1], [], []>} : vector<50x50xf32>, vector<50x12xf32>, vector<50x12xf32> -> vector<50x12xf32>
    %c8_78 = arith.constant 8 : index
    %c0_79 = arith.constant 0 : index
    %c0_80 = arith.constant 0 : index
    %102 = vector.load %arg2[%c8_78, %c0_79, %c0_80] : memref<9x50x50xf32, #tpu.memory_space<vmem>>, vector<1x50x50xf32>
    %103 = vector.shape_cast %102 : vector<1x50x50xf32> to vector<50x50xf32>
    %cst_81 = arith.constant dense<0.000000e+00> : vector<50x12xf32>
    %104 = tpu.matmul %103, %77, %cst_81 {dimension_numbers = #tpu.dot_dimension_numbers<[1], [0], [0], [1], [0, 0, 1, 1], [], []>} : vector<50x50xf32>, vector<50x12xf32>, vector<50x12xf32> -> vector<50x12xf32>
    %105 = tpu.concatenate %80, %83, %86, %89, %92, %95, %98, %101, %104 in 1 : vector<50x12xf32>, vector<50x12xf32>, vector<50x12xf32>, vector<50x12xf32>, vector<50x12xf32>, vector<50x12xf32>, vector<50x12xf32>, vector<50x12xf32>, vector<50x12xf32> -> vector<50x108xf32>
    %c0_82 = arith.constant 0 : index
    %c0_83 = arith.constant 0 : index
    %c0_84 = arith.constant 0 : index
    %106 = vector.load %arg9[%c0_82, %c0_83, %c0_84] : memref<1x108x6xf32, #tpu.memory_space<vmem>>, vector<1x108x6xf32>
    %107 = vector.shape_cast %106 : vector<1x108x6xf32> to vector<108x6xf32>
    %cst_85 = arith.constant dense<0.000000e+00> : vector<50x6xf32>
    %108 = tpu.matmul %105, %107, %cst_85 {dimension_numbers = #tpu.dot_dimension_numbers<[1], [0], [0], [1], [0, 0, 1, 1], [], []>} : vector<50x108xf32>, vector<108x6xf32>, vector<50x6xf32> -> vector<50x6xf32>
    %c0_86 = arith.constant 0 : index
    %c0_87 = arith.constant 0 : index
    %c0_88 = arith.constant 0 : index
    %109 = vector.load %arg10[%c0_86, %c0_87, %c0_88] : memref<1x1x6xf32, #tpu.memory_space<vmem>>, vector<1x1x6xf32>
    %110 = vector.shape_cast %109 : vector<1x1x6xf32> to vector<1x6xf32>
    %111 = vector.broadcast %110 : vector<1x6xf32> to vector<50x6xf32>
    %112 = arith.addf %108, %111 : vector<50x6xf32>
    %cst_89 = arith.constant 0.000000e+00 : f32
    %113 = vector.broadcast %cst_89 : f32 to vector<50x6xf32>
    %114 = arith.maximumf %112, %113 : vector<50x6xf32>
    %115 = math.absf %112 : vector<50x6xf32>
    %cst_90 = arith.constant 0.000000e+00 : f32
    %116 = vector.broadcast %cst_90 : f32 to vector<50x6xf32>
    %117 = arith.subf %116, %115 : vector<50x6xf32>
    %118 = math.exp %117 : vector<50x6xf32>
    %119 = math.log1p %118 : vector<50x6xf32>
    %120 = arith.addf %114, %119 : vector<50x6xf32>
    %121 = math.tanh %120 : vector<50x6xf32>
    %122 = arith.mulf %112, %121 : vector<50x6xf32>
    %123 = vector.extract_strided_slice %28 {offsets = [0, 18], sizes = [50, 6], strides = [1, 1]} : vector<50x24xf32> to vector<50x6xf32>
    %124 = tpu.concatenate %122, %123 in 1 : vector<50x6xf32>, vector<50x6xf32> -> vector<50x12xf32>
    %c0_91 = arith.constant 0 : index
    %c0_92 = arith.constant 0 : index
    %c0_93 = arith.constant 0 : index
    %125 = vector.load %arg2[%c0_91, %c0_92, %c0_93] : memref<9x50x50xf32, #tpu.memory_space<vmem>>, vector<1x50x50xf32>
    %126 = vector.shape_cast %125 : vector<1x50x50xf32> to vector<50x50xf32>
    %cst_94 = arith.constant dense<0.000000e+00> : vector<50x12xf32>
    %127 = tpu.matmul %126, %124, %cst_94 {dimension_numbers = #tpu.dot_dimension_numbers<[1], [0], [0], [1], [0, 0, 1, 1], [], []>} : vector<50x50xf32>, vector<50x12xf32>, vector<50x12xf32> -> vector<50x12xf32>
    %c1_95 = arith.constant 1 : index
    %c0_96 = arith.constant 0 : index
    %c0_97 = arith.constant 0 : index
    %128 = vector.load %arg2[%c1_95, %c0_96, %c0_97] : memref<9x50x50xf32, #tpu.memory_space<vmem>>, vector<1x50x50xf32>
    %129 = vector.shape_cast %128 : vector<1x50x50xf32> to vector<50x50xf32>
    %cst_98 = arith.constant dense<0.000000e+00> : vector<50x12xf32>
    %130 = tpu.matmul %129, %124, %cst_98 {dimension_numbers = #tpu.dot_dimension_numbers<[1], [0], [0], [1], [0, 0, 1, 1], [], []>} : vector<50x50xf32>, vector<50x12xf32>, vector<50x12xf32> -> vector<50x12xf32>
    %c2_99 = arith.constant 2 : index
    %c0_100 = arith.constant 0 : index
    %c0_101 = arith.constant 0 : index
    %131 = vector.load %arg2[%c2_99, %c0_100, %c0_101] : memref<9x50x50xf32, #tpu.memory_space<vmem>>, vector<1x50x50xf32>
    %132 = vector.shape_cast %131 : vector<1x50x50xf32> to vector<50x50xf32>
    %cst_102 = arith.constant dense<0.000000e+00> : vector<50x12xf32>
    %133 = tpu.matmul %132, %124, %cst_102 {dimension_numbers = #tpu.dot_dimension_numbers<[1], [0], [0], [1], [0, 0, 1, 1], [], []>} : vector<50x50xf32>, vector<50x12xf32>, vector<50x12xf32> -> vector<50x12xf32>
    %c3_103 = arith.constant 3 : index
    %c0_104 = arith.constant 0 : index
    %c0_105 = arith.constant 0 : index
    %134 = vector.load %arg2[%c3_103, %c0_104, %c0_105] : memref<9x50x50xf32, #tpu.memory_space<vmem>>, vector<1x50x50xf32>
    %135 = vector.shape_cast %134 : vector<1x50x50xf32> to vector<50x50xf32>
    %cst_106 = arith.constant dense<0.000000e+00> : vector<50x12xf32>
    %136 = tpu.matmul %135, %124, %cst_106 {dimension_numbers = #tpu.dot_dimension_numbers<[1], [0], [0], [1], [0, 0, 1, 1], [], []>} : vector<50x50xf32>, vector<50x12xf32>, vector<50x12xf32> -> vector<50x12xf32>
    %c4_107 = arith.constant 4 : index
    %c0_108 = arith.constant 0 : index
    %c0_109 = arith.constant 0 : index
    %137 = vector.load %arg2[%c4_107, %c0_108, %c0_109] : memref<9x50x50xf32, #tpu.memory_space<vmem>>, vector<1x50x50xf32>
    %138 = vector.shape_cast %137 : vector<1x50x50xf32> to vector<50x50xf32>
    %cst_110 = arith.constant dense<0.000000e+00> : vector<50x12xf32>
    %139 = tpu.matmul %138, %124, %cst_110 {dimension_numbers = #tpu.dot_dimension_numbers<[1], [0], [0], [1], [0, 0, 1, 1], [], []>} : vector<50x50xf32>, vector<50x12xf32>, vector<50x12xf32> -> vector<50x12xf32>
    %c5_111 = arith.constant 5 : index
    %c0_112 = arith.constant 0 : index
    %c0_113 = arith.constant 0 : index
    %140 = vector.load %arg2[%c5_111, %c0_112, %c0_113] : memref<9x50x50xf32, #tpu.memory_space<vmem>>, vector<1x50x50xf32>
    %141 = vector.shape_cast %140 : vector<1x50x50xf32> to vector<50x50xf32>
    %cst_114 = arith.constant dense<0.000000e+00> : vector<50x12xf32>
    %142 = tpu.matmul %141, %124, %cst_114 {dimension_numbers = #tpu.dot_dimension_numbers<[1], [0], [0], [1], [0, 0, 1, 1], [], []>} : vector<50x50xf32>, vector<50x12xf32>, vector<50x12xf32> -> vector<50x12xf32>
    %c6_115 = arith.constant 6 : index
    %c0_116 = arith.constant 0 : index
    %c0_117 = arith.constant 0 : index
    %143 = vector.load %arg2[%c6_115, %c0_116, %c0_117] : memref<9x50x50xf32, #tpu.memory_space<vmem>>, vector<1x50x50xf32>
    %144 = vector.shape_cast %143 : vector<1x50x50xf32> to vector<50x50xf32>
    %cst_118 = arith.constant dense<0.000000e+00> : vector<50x12xf32>
    %145 = tpu.matmul %144, %124, %cst_118 {dimension_numbers = #tpu.dot_dimension_numbers<[1], [0], [0], [1], [0, 0, 1, 1], [], []>} : vector<50x50xf32>, vector<50x12xf32>, vector<50x12xf32> -> vector<50x12xf32>
    %c7_119 = arith.constant 7 : index
    %c0_120 = arith.constant 0 : index
    %c0_121 = arith.constant 0 : index
    %146 = vector.load %arg2[%c7_119, %c0_120, %c0_121] : memref<9x50x50xf32, #tpu.memory_space<vmem>>, vector<1x50x50xf32>
    %147 = vector.shape_cast %146 : vector<1x50x50xf32> to vector<50x50xf32>
    %cst_122 = arith.constant dense<0.000000e+00> : vector<50x12xf32>
    %148 = tpu.matmul %147, %124, %cst_122 {dimension_numbers = #tpu.dot_dimension_numbers<[1], [0], [0], [1], [0, 0, 1, 1], [], []>} : vector<50x50xf32>, vector<50x12xf32>, vector<50x12xf32> -> vector<50x12xf32>
    %c8_123 = arith.constant 8 : index
    %c0_124 = arith.constant 0 : index
    %c0_125 = arith.constant 0 : index
    %149 = vector.load %arg2[%c8_123, %c0_124, %c0_125] : memref<9x50x50xf32, #tpu.memory_space<vmem>>, vector<1x50x50xf32>
    %150 = vector.shape_cast %149 : vector<1x50x50xf32> to vector<50x50xf32>
    %cst_126 = arith.constant dense<0.000000e+00> : vector<50x12xf32>
    %151 = tpu.matmul %150, %124, %cst_126 {dimension_numbers = #tpu.dot_dimension_numbers<[1], [0], [0], [1], [0, 0, 1, 1], [], []>} : vector<50x50xf32>, vector<50x12xf32>, vector<50x12xf32> -> vector<50x12xf32>
    %152 = tpu.concatenate %127, %130, %133, %136, %139, %142, %145, %148, %151 in 1 : vector<50x12xf32>, vector<50x12xf32>, vector<50x12xf32>, vector<50x12xf32>, vector<50x12xf32>, vector<50x12xf32>, vector<50x12xf32>, vector<50x12xf32>, vector<50x12xf32> -> vector<50x108xf32>
    %c0_127 = arith.constant 0 : index
    %c0_128 = arith.constant 0 : index
    %c0_129 = arith.constant 0 : index
    %153 = vector.load %arg11[%c0_127, %c0_128, %c0_129] : memref<1x108x6xf32, #tpu.memory_space<vmem>>, vector<1x108x6xf32>
    %154 = vector.shape_cast %153 : vector<1x108x6xf32> to vector<108x6xf32>
    %cst_130 = arith.constant dense<0.000000e+00> : vector<50x6xf32>
    %155 = tpu.matmul %152, %154, %cst_130 {dimension_numbers = #tpu.dot_dimension_numbers<[1], [0], [0], [1], [0, 0, 1, 1], [], []>} : vector<50x108xf32>, vector<108x6xf32>, vector<50x6xf32> -> vector<50x6xf32>
    %c0_131 = arith.constant 0 : index
    %c0_132 = arith.constant 0 : index
    %c0_133 = arith.constant 0 : index
    %156 = vector.load %arg12[%c0_131, %c0_132, %c0_133] : memref<1x1x6xf32, #tpu.memory_space<vmem>>, vector<1x1x6xf32>
    %157 = vector.shape_cast %156 : vector<1x1x6xf32> to vector<1x6xf32>
    %158 = vector.broadcast %157 : vector<1x6xf32> to vector<50x6xf32>
    %159 = arith.addf %155, %158 : vector<50x6xf32>
    %160 = tpu.concatenate %29, %75, %122, %159 in 1 : vector<50x6xf32>, vector<50x6xf32>, vector<50x6xf32>, vector<50x6xf32> -> vector<50x24xf32>
    %c0_134 = arith.constant 0 : index
    %c0_135 = arith.constant 0 : index
    %c0_136 = arith.constant 0 : index
    %161 = vector.load %arg13[%c0_134, %c0_135, %c0_136] : memref<1x1x24xf32, #tpu.memory_space<vmem>>, vector<1x1x24xf32>
    %162 = vector.shape_cast %161 : vector<1x1x24xf32> to vector<1x24xf32>
    %163 = vector.broadcast %162 : vector<1x24xf32> to vector<50x24xf32>
    %164 = arith.mulf %160, %163 : vector<50x24xf32>
    %c0_137 = arith.constant 0 : index
    %c0_138 = arith.constant 0 : index
    %c0_139 = arith.constant 0 : index
    %165 = vector.load %arg14[%c0_137, %c0_138, %c0_139] : memref<1x1x24xf32, #tpu.memory_space<vmem>>, vector<1x1x24xf32>
    %166 = vector.shape_cast %165 : vector<1x1x24xf32> to vector<1x24xf32>
    %167 = vector.broadcast %166 : vector<1x24xf32> to vector<50x24xf32>
    %168 = arith.addf %164, %167 : vector<50x24xf32>
    %cst_140 = arith.constant 0.000000e+00 : f32
    %169 = vector.broadcast %cst_140 : f32 to vector<50x24xf32>
    %170 = arith.maximumf %168, %169 : vector<50x24xf32>
    %171 = math.absf %168 : vector<50x24xf32>
    %cst_141 = arith.constant 0.000000e+00 : f32
    %172 = vector.broadcast %cst_141 : f32 to vector<50x24xf32>
    %173 = arith.subf %172, %171 : vector<50x24xf32>
    %174 = math.exp %173 : vector<50x24xf32>
    %175 = math.log1p %174 : vector<50x24xf32>
    %176 = arith.addf %170, %175 : vector<50x24xf32>
    %177 = math.tanh %176 : vector<50x24xf32>
    %178 = arith.mulf %168, %177 : vector<50x24xf32>
    %c0_142 = arith.constant 0 : index
    %c0_143 = arith.constant 0 : index
    %c0_144 = arith.constant 0 : index
    %179 = vector.load %arg15[%c0_142, %c0_143, %c0_144] : memref<1x24x30xf32, #tpu.memory_space<vmem>>, vector<1x24x30xf32>
    %180 = vector.shape_cast %179 : vector<1x24x30xf32> to vector<24x30xf32>
    %cst_145 = arith.constant dense<0.000000e+00> : vector<50x30xf32>
    %181 = tpu.matmul %178, %180, %cst_145 {dimension_numbers = #tpu.dot_dimension_numbers<[1], [0], [0], [1], [0, 0, 1, 1], [], []>} : vector<50x24xf32>, vector<24x30xf32>, vector<50x30xf32> -> vector<50x30xf32>
    %c0_146 = arith.constant 0 : index
    %c0_147 = arith.constant 0 : index
    %c0_148 = arith.constant 0 : index
    %182 = vector.load %arg16[%c0_146, %c0_147, %c0_148] : memref<1x1x30xf32, #tpu.memory_space<vmem>>, vector<1x1x30xf32>
    %183 = vector.shape_cast %182 : vector<1x1x30xf32> to vector<1x30xf32>
    %184 = vector.broadcast %183 : vector<1x30xf32> to vector<50x30xf32>
    %185 = arith.addf %181, %184 : vector<50x30xf32>
    %186 = vector.extract_strided_slice %185 {offsets = [0, 0], sizes = [50, 3], strides = [1, 1]} : vector<50x30xf32> to vector<50x3xf32>
    %187 = vector.extract_strided_slice %185 {offsets = [0, 3], sizes = [50, 3], strides = [1, 1]} : vector<50x30xf32> to vector<50x3xf32>
    %188 = vector.extract_strided_slice %185 {offsets = [0, 6], sizes = [50, 24], strides = [1, 1]} : vector<50x30xf32> to vector<50x24xf32>
    %cst_149 = arith.constant dense<0.000000e+00> : vector<50x50xf32>
    %189 = tpu.matmul %186, %187, %cst_149 {dimension_numbers = #tpu.dot_dimension_numbers<[1], [1], [0], [0], [0, 0, 1, 0], [], []>} : vector<50x3xf32>, vector<50x3xf32>, vector<50x50xf32> -> vector<50x50xf32>
    %c0_150 = arith.constant 0 : index
    %c0_151 = arith.constant 0 : index
    %190 = vector.load %arg3[%c0_150, %c0_151] : memref<50x50xf32, #tpu.memory_space<vmem>>, vector<50x50xf32>
    %191 = arith.addf %189, %190 : vector<50x50xf32>
    %cst_152 = arith.constant dense<0xFF800000> : vector<50xf32>
    %192 = vector.multi_reduction <maximumf>, %191, %cst_152 [1] : vector<50x50xf32> to vector<50xf32>
    %193 = vector.shape_cast %192 : vector<50xf32> to vector<50x1xf32>
    %194 = vector.broadcast %193 : vector<50x1xf32> to vector<50x50xf32>
    %195 = arith.subf %191, %194 : vector<50x50xf32>
    %196 = math.exp %195 : vector<50x50xf32>
    %cst_153 = arith.constant dense<0.000000e+00> : vector<50xf32>
    %197 = vector.multi_reduction <add>, %196, %cst_153 [1] : vector<50x50xf32> to vector<50xf32>
    %198 = vector.shape_cast %197 : vector<50xf32> to vector<50x1xf32>
    %199 = vector.broadcast %198 : vector<50x1xf32> to vector<50x50xf32>
    %200 = arith.divf %196, %199 : vector<50x50xf32>
    %cst_154 = arith.constant dense<0.000000e+00> : vector<50x24xf32>
    %201 = tpu.matmul %200, %188, %cst_154 {dimension_numbers = #tpu.dot_dimension_numbers<[1], [0], [0], [1], [0, 0, 1, 1], [], []>} : vector<50x50xf32>, vector<50x24xf32>, vector<50x24xf32> -> vector<50x24xf32>
    %c0_155 = arith.constant 0 : index
    %c0_156 = arith.constant 0 : index
    %c0_157 = arith.constant 0 : index
    %202 = vector.load %arg17[%c0_155, %c0_156, %c0_157] : memref<1x1x1xf32, #tpu.memory_space<vmem>>, vector<1x1x1xf32>
    %203 = vector.shape_cast %202 : vector<1x1x1xf32> to vector<1x1xf32>
    %204 = vector.broadcast %203 : vector<1x1xf32> to vector<50x24xf32>
    %205 = arith.mulf %204, %201 : vector<50x24xf32>
    %206 = arith.addf %205, %178 : vector<50x24xf32>
    %207 = arith.mulf %206, %178 : vector<50x24xf32>
    %c0_158 = arith.constant 0 : index
    %c0_159 = arith.constant 0 : index
    %c0_160 = arith.constant 0 : index
    %208 = vector.load %arg18[%c0_158, %c0_159, %c0_160] : memref<1x1x24xf32, #tpu.memory_space<vmem>>, vector<1x1x24xf32>
    %209 = vector.shape_cast %208 : vector<1x1x24xf32> to vector<1x24xf32>
    %210 = vector.broadcast %209 : vector<1x24xf32> to vector<50x24xf32>
    %211 = arith.mulf %207, %210 : vector<50x24xf32>
    %c0_161 = arith.constant 0 : index
    %c0_162 = arith.constant 0 : index
    %c0_163 = arith.constant 0 : index
    %212 = vector.load %arg19[%c0_161, %c0_162, %c0_163] : memref<1x1x24xf32, #tpu.memory_space<vmem>>, vector<1x1x24xf32>
    %213 = vector.shape_cast %212 : vector<1x1x24xf32> to vector<1x24xf32>
    %214 = vector.broadcast %213 : vector<1x24xf32> to vector<50x24xf32>
    %215 = arith.addf %211, %214 : vector<50x24xf32>
    %cst_164 = arith.constant 0.000000e+00 : f32
    %216 = vector.broadcast %cst_164 : f32 to vector<50x24xf32>
    %217 = arith.maximumf %215, %216 : vector<50x24xf32>
    %218 = math.absf %215 : vector<50x24xf32>
    %cst_165 = arith.constant 0.000000e+00 : f32
    %219 = vector.broadcast %cst_165 : f32 to vector<50x24xf32>
    %220 = arith.subf %219, %218 : vector<50x24xf32>
    %221 = math.exp %220 : vector<50x24xf32>
    %222 = math.log1p %221 : vector<50x24xf32>
    %223 = arith.addf %217, %222 : vector<50x24xf32>
    %224 = math.tanh %223 : vector<50x24xf32>
    %225 = arith.mulf %215, %224 : vector<50x24xf32>
    %c0_166 = arith.constant 0 : index
    %c0_167 = arith.constant 0 : index
    %226 = vector.load %arg4[%c0_166, %c0_167] : memref<2x50xf32, #tpu.memory_space<vmem>>, vector<2x50xf32>
    %cst_168 = arith.constant dense<0.000000e+00> : vector<2x24xf32>
    %227 = tpu.matmul %226, %225, %cst_168 {dimension_numbers = #tpu.dot_dimension_numbers<[1], [0], [0], [1], [0, 0, 1, 1], [], []>} : vector<2x50xf32>, vector<50x24xf32>, vector<2x24xf32> -> vector<2x24xf32>
    %c0_169 = arith.constant 0 : index
    %c0_170 = arith.constant 0 : index
    %c0_171 = arith.constant 0 : index
    %228 = vector.load %arg20[%c0_169, %c0_170, %c0_171] : memref<1x2x24xf32, #tpu.memory_space<vmem>>, vector<1x2x24xf32>
    %229 = vector.shape_cast %228 : vector<1x2x24xf32> to vector<2x24xf32>
    %230 = vector.shape_cast %227 : vector<2x24xf32> to vector<1x2x24xf32>
    tpu.vector_store %arg20[%c0_169, %c0_170, %c0_171], %230 {strides = array<i32>} : memref<1x2x24xf32, #tpu.memory_space<vmem>>, vector<1x2x24xf32>,
    return
  }
  func.func @transform_0(%arg0: i32) -> (i32, i32, i32) {
    %c0_i32 = arith.constant 0 : i32
    %c0_i32_0 = arith.constant 0 : i32
    %c0_i32_1 = arith.constant 0 : i32
    return %arg0, %c0_i32, %c0_i32_0 : i32, i32, i32
  }
  func.func @transform_1(%arg0: i32) -> (i32, i32, i32) {
    %c0_i32 = arith.constant 0 : i32
    %c0_i32_0 = arith.constant 0 : i32
    %c0_i32_1 = arith.constant 0 : i32
    %c0_i32_2 = arith.constant 0 : i32
    return %c0_i32, %c0_i32_0, %c0_i32_1 : i32, i32, i32
  }
  func.func @transform_2(%arg0: i32) -> (i32, i32) {
    %c0_i32 = arith.constant 0 : i32
    %c0_i32_0 = arith.constant 0 : i32
    %c0_i32_1 = arith.constant 0 : i32
    return %c0_i32, %c0_i32_0 : i32, i32
  }
  func.func @transform_3(%arg0: i32) -> (i32, i32) {
    %c0_i32 = arith.constant 0 : i32
    %c0_i32_0 = arith.constant 0 : i32
    %c0_i32_1 = arith.constant 0 : i32
    return %c0_i32, %c0_i32_0 : i32, i32
  }
  func.func @transform_4(%arg0: i32) -> (i32, i32, i32) {
    %c0_i32 = arith.constant 0 : i32
    %c0_i32_0 = arith.constant 0 : i32
    %c0_i32_1 = arith.constant 0 : i32
    return %arg0, %c0_i32, %c0_i32_0 : i32, i32, i32
  }
  func.func @transform_5(%arg0: i32) -> (i32, i32, i32) {
    %c0_i32 = arith.constant 0 : i32
    %c0_i32_0 = arith.constant 0 : i32
    %c0_i32_1 = arith.constant 0 : i32
    return %arg0, %c0_i32, %c0_i32_0 : i32, i32, i32
  }
  func.func @transform_6(%arg0: i32) -> (i32, i32, i32) {
    %c0_i32 = arith.constant 0 : i32
    %c0_i32_0 = arith.constant 0 : i32
    %c0_i32_1 = arith.constant 0 : i32
    return %arg0, %c0_i32, %c0_i32_0 : i32, i32, i32
  }
  func.func @transform_7(%arg0: i32) -> (i32, i32, i32) {
    %c0_i32 = arith.constant 0 : i32
    %c0_i32_0 = arith.constant 0 : i32
    %c0_i32_1 = arith.constant 0 : i32
    return %arg0, %c0_i32, %c0_i32_0 : i32, i32, i32
  }
  func.func @transform_8(%arg0: i32) -> (i32, i32, i32) {
    %c0_i32 = arith.constant 0 : i32
    %c0_i32_0 = arith.constant 0 : i32
    %c0_i32_1 = arith.constant 0 : i32
    return %arg0, %c0_i32, %c0_i32_0 : i32, i32, i32
  }
  func.func @transform_9(%arg0: i32) -> (i32, i32, i32) {
    %c0_i32 = arith.constant 0 : i32
    %c0_i32_0 = arith.constant 0 : i32
    %c0_i32_1 = arith.constant 0 : i32
    return %arg0, %c0_i32, %c0_i32_0 : i32, i32, i32
  }
  func.func @transform_10(%arg0: i32) -> (i32, i32, i32) {
    %c0_i32 = arith.constant 0 : i32
    %c0_i32_0 = arith.constant 0 : i32
    %c0_i32_1 = arith.constant 0 : i32
    return %arg0, %c0_i32, %c0_i32_0 : i32, i32, i32
  }
  func.func @transform_11(%arg0: i32) -> (i32, i32, i32) {
    %c0_i32 = arith.constant 0 : i32
    %c0_i32_0 = arith.constant 0 : i32
    %c0_i32_1 = arith.constant 0 : i32
    return %arg0, %c0_i32, %c0_i32_0 : i32, i32, i32
  }
  func.func @transform_12(%arg0: i32) -> (i32, i32, i32) {
    %c0_i32 = arith.constant 0 : i32
    %c0_i32_0 = arith.constant 0 : i32
    %c0_i32_1 = arith.constant 0 : i32
    return %arg0, %c0_i32, %c0_i32_0 : i32, i32, i32
  }
  func.func @transform_13(%arg0: i32) -> (i32, i32, i32) {
    %c0_i32 = arith.constant 0 : i32
    %c0_i32_0 = arith.constant 0 : i32
    %c0_i32_1 = arith.constant 0 : i32
    return %arg0, %c0_i32, %c0_i32_0 : i32, i32, i32
  }
  func.func @transform_14(%arg0: i32) -> (i32, i32, i32) {
    %c0_i32 = arith.constant 0 : i32
    %c0_i32_0 = arith.constant 0 : i32
    %c0_i32_1 = arith.constant 0 : i32
    return %arg0, %c0_i32, %c0_i32_0 : i32, i32, i32
  }
  func.func @transform_15(%arg0: i32) -> (i32, i32, i32) {
    %c0_i32 = arith.constant 0 : i32
    %c0_i32_0 = arith.constant 0 : i32
    %c0_i32_1 = arith.constant 0 : i32
    return %arg0, %c0_i32, %c0_i32_0 : i32, i32, i32
  }
  func.func @transform_16(%arg0: i32) -> (i32, i32, i32) {
    %c0_i32 = arith.constant 0 : i32
    %c0_i32_0 = arith.constant 0 : i32
    %c0_i32_1 = arith.constant 0 : i32
    return %arg0, %c0_i32, %c0_i32_0 : i32, i32, i32
  }
  func.func @transform_17(%arg0: i32) -> (i32, i32, i32) {
    %c0_i32 = arith.constant 0 : i32
    %c0_i32_0 = arith.constant 0 : i32
    %c0_i32_1 = arith.constant 0 : i32
    return %arg0, %c0_i32, %c0_i32_0 : i32, i32, i32
  }
  func.func @transform_18(%arg0: i32) -> (i32, i32, i32) {
    %c0_i32 = arith.constant 0 : i32
    %c0_i32_0 = arith.constant 0 : i32
    %c0_i32_1 = arith.constant 0 : i32
    return %arg0, %c0_i32, %c0_i32_0 : i32, i32, i32
  }
  func.func @transform_19(%arg0: i32) -> (i32, i32, i32) {
    %c0_i32 = arith.constant 0 : i32
    %c0_i32_0 = arith.constant 0 : i32
    %c0_i32_1 = arith.constant 0 : i32
    return %arg0, %c0_i32, %c0_i32_0 : i32, i32, i32
  }
}

</mosaic_0001>

<llo_original>
// kernel: lidar_model_forward.1
$region0: #{lidar_model_forward.1}
  #allocation0 [shape = 'u32[]', space=smem, size = 0x4, offset = 0x4, fixed_abs, tag = 'smem constant byte address 0x4 - core index']
  #allocation1 [shape = 'u32[144,128]{1,0:T(1,128)}', space=vmem, size = 0x12000, scoped, tag = 'internal scratch']
  %s0 = inlined_call_operand.vmem [shape: f32[2,50,2], index: 0, kind: input, shape index: {}]
  %s1 = inlined_call_operand.vmem [shape: f32[9,50,50], index: 1, kind: input, shape index: {}]
  %s2 = inlined_call_operand.vmem [shape: f32[50,50], index: 2, kind: input, shape index: {}]
  %s3 = inlined_call_operand.vmem [shape: f32[2,50], index: 3, kind: input, shape index: {}]
  %s4 = inlined_call_operand.vmem [shape: f32[2,2,24], index: 4, kind: input, shape index: {}]
  %s5 = inlined_call_operand.vmem [shape: f32[2,1,24], index: 5, kind: input, shape index: {}]
  %s6 = inlined_call_operand.vmem [shape: f32[2,54,6], index: 6, kind: input, shape index: {}]
  %s7 = inlined_call_operand.vmem [shape: f32[2,1,6], index: 7, kind: input, shape index: {}]
  %s8 = inlined_call_operand.vmem [shape: f32[2,108,6], index: 8, kind: input, shape index: {}]
  %s9 = inlined_call_operand.vmem [shape: f32[2,1,6], index: 9, kind: input, shape index: {}]
  %s10 = inlined_call_operand.vmem [shape: f32[2,108,6], index: 10, kind: input, shape index: {}]
  %s11 = inlined_call_operand.vmem [shape: f32[2,1,6], index: 11, kind: input, shape index: {}]
  %s12 = inlined_call_operand.vmem [shape: f32[2,1,24], index: 12, kind: input, shape index: {}]
  %s13 = inlined_call_operand.vmem [shape: f32[2,1,24], index: 13, kind: input, shape index: {}]
  %s14 = inlined_call_operand.vmem [shape: f32[2,24,30], index: 14, kind: input, shape index: {}]
  %s15 = inlined_call_operand.vmem [shape: f32[2,1,30], index: 15, kind: input, shape index: {}]
  %s16 = inlined_call_operand.vmem [shape: f32[2,1,1], index: 16, kind: input, shape index: {}]
  %s17 = inlined_call_operand.vmem [shape: f32[2,1,24], index: 17, kind: input, shape index: {}]
  %s18 = inlined_call_operand.vmem [shape: f32[2,1,24], index: 18, kind: input, shape index: {}]
  %s19 = inlined_call_operand.vmem [shape: f32[2,2,24], index: 19, kind: output, shape index: {}]
  %s20 = sld [smem:[#allocation0]]
  $region109: #{lidar_model_forward.1} parent=0
    _
  %s22 = ssub.s32 1, %s20
  %s23 = scalar_select 0, %s22, %s20
  loop: start=0, step=1, limit=4
  $region2: #{lidar_model_forward.1} parent=0 // loop_pre_header
    _
  $region3: #{lidar_model_forward.1} parent=0 // loop_header
    %s25 = sphi 0, %s29
    %p26 = scmp.ge.s32.totalorder %s25, 4
    %s35 = sphi 0, %s37
    %s38 = sphi 0, %s35
    %s39 = sphi 0, %s38
    %s55 = sphi 0, %s39
    %s59 = sphi 0, %s59
    %s61 = sphi 0, %s59
    %s62 = sphi 0, %s61
    %s76 = sphi 0, %s62
    %s80 = sphi 0, %s80
    %s82 = sphi 0, %s80
    %s83 = sphi 0, %s82
    %s97 = sphi 0, %s83
    %s101 = sphi 0, %s101
    %s103 = sphi 0, %s101
    %s104 = sphi 0, %s103
    %s118 = sphi 0, %s104
    %s124 = sphi 0, %s126
    %s127 = sphi 0, %s124
    %s128 = sphi 0, %s127
    %s144 = sphi 0, %s128
    %s150 = sphi 0, %s152
    %s153 = sphi 0, %s150
    %s154 = sphi 0, %s153
    %s170 = sphi 0, %s154
    %s176 = sphi 0, %s178
    %s179 = sphi 0, %s176
    %s180 = sphi 0, %s179
    %s196 = sphi 0, %s180
    %s202 = sphi 0, %s204
    %s205 = sphi 0, %s202
    %s206 = sphi 0, %s205
    %s222 = sphi 0, %s206
    %s228 = sphi 0, %s230
    %s231 = sphi 0, %s228
    %s232 = sphi 0, %s231
    %s248 = sphi 0, %s232
    %s254 = sphi 0, %s256
    %s257 = sphi 0, %s254
    %s258 = sphi 0, %s257
    %s274 = sphi 0, %s258
    %s280 = sphi 0, %s282
    %s283 = sphi 0, %s280
    %s284 = sphi 0, %s283
    %s300 = sphi 0, %s284
    %s306 = sphi 0, %s308
    %s309 = sphi 0, %s306
    %s310 = sphi 0, %s309
    %s326 = sphi 0, %s310
    %s332 = sphi 0, %s334
    %s335 = sphi 0, %s332
    %s336 = sphi 0, %s335
    %s352 = sphi 0, %s336
    %s358 = sphi 0, %s360
    %s361 = sphi 0, %s358
    %s362 = sphi 0, %s361
    %s378 = sphi 0, %s362
    %s384 = sphi 0, %s386
    %s387 = sphi 0, %s384
    %s388 = sphi 0, %s387
    %s404 = sphi 0, %s388
    %s410 = sphi 0, %s412
    %s413 = sphi 0, %s410
    %s414 = sphi 0, %s413
    %s430 = sphi 0, %s414
    %s436 = sphi 0, %s438
    %s439 = sphi 0, %s436
    %s440 = sphi 0, %s439
    %s456 = sphi 0, %s440
    %s462 = sphi 0, %s464
    %s465 = sphi 0, %s462
    %s466 = sphi 0, %s465
    %s482 = sphi 0, %s466
    %s488 = sphi 0, %s490
    %s491 = sphi 0, %s488
    %s492 = sphi 0, %s491
    %s508 = sphi 0, %s492
    %s514 = sphi 0, %s516
    %s517 = sphi 0, %s514
    %s518 = sphi 0, %s517
    %s534 = sphi 0, %s518
  $region4: #{lidar_model_forward.1} parent=0 // loop_header_branch
    %28 = sbr.rel (%p26) target = $region8
  $region5: #{lidar_model_forward.1} parent=0 // loop_body
    %s30 = ssub.s32 %s25, 1
    %s31 = ssub.s32 %s25, 2
    %s32 = sadd.s32 %s25, 1
    %s33 = ssub.s32 %s25, %s32
    %p34 = scmp.eq.s32.totalorder %s33, 0
    %s36 = sadd.s32 %s35, 1
    %s37 = scalar_select %p34, %s35, %s36
    %p40 = pneg %p34
    %p41 = scmp.eq.s32.totalorder %s25, 1
    %p42 = por %p40, %p41
    %p43 = scmp.ne.s32.totalorder %s35, %s38
    %p44 = scmp.eq.s32.totalorder %s25, 0
    %p45 = por %p43, %p44
    %p46 = scmp.ne.s32.totalorder %s35, %s38
    %p47 = scmp.eq.s32.totalorder %s30, 1
    %p48 = por %p46, %p47
    %p49 = scmp.ne.s32.totalorder %s38, %s39
    %p50 = scmp.eq.s32.totalorder %s30, 0
    %p51 = por %p49, %p50
    %p52 = scmp.ne.s32.totalorder %s38, %s39
    %p53 = scmp.eq.s32.totalorder %s31, 1
    %p54 = por %p52, %p53
    %p56 = scmp.ne.s32.totalorder %s39, %s55
    %p57 = scmp.eq.s32.totalorder %s31, 0
    %p58 = por %p56, %p57
    %s60 = sadd.s32 %s59, 1
    %p63 = scmp.eq.s32.totalorder %s25, 1
    %p64 = scmp.ne.s32.totalorder %s59, %s61
    %p65 = scmp.eq.s32.totalorder %s25, 0
    %p66 = por %p64, %p65
    %p67 = scmp.ne.s32.totalorder %s59, %s61
    %p68 = scmp.eq.s32.totalorder %s30, 1
    %p69 = por %p67, %p68
    %p70 = scmp.ne.s32.totalorder %s61, %s62
    %p71 = scmp.eq.s32.totalorder %s30, 0
    %p72 = por %p70, %p71
    %p73 = scmp.ne.s32.totalorder %s61, %s62
    %p74 = scmp.eq.s32.totalorder %s31, 1
    %p75 = por %p73, %p74
    %p77 = scmp.ne.s32.totalorder %s62, %s76
    %p78 = scmp.eq.s32.totalorder %s31, 0
    %p79 = por %p77, %p78
    %s81 = sadd.s32 %s80, 1
    %p84 = scmp.eq.s32.totalorder %s25, 1
    %p85 = scmp.ne.s32.totalorder %s80, %s82
    %p86 = scmp.eq.s32.totalorder %s25, 0
    %p87 = por %p85, %p86
    %p88 = scmp.ne.s32.totalorder %s80, %s82
    %p89 = scmp.eq.s32.totalorder %s30, 1
    %p90 = por %p88, %p89
    %p91 = scmp.ne.s32.totalorder %s82, %s83
    %p92 = scmp.eq.s32.totalorder %s30, 0
    %p93 = por %p91, %p92
    %p94 = scmp.ne.s32.totalorder %s82, %s83
    %p95 = scmp.eq.s32.totalorder %s31, 1
    %p96 = por %p94, %p95
    %p98 = scmp.ne.s32.totalorder %s83, %s97
    %p99 = scmp.eq.s32.totalorder %s31, 0
    %p100 = por %p98, %p99
    %s102 = sadd.s32 %s101, 1
    %p105 = scmp.eq.s32.totalorder %s25, 1
    %p106 = scmp.ne.s32.totalorder %s101, %s103
    %p107 = scmp.eq.s32.totalorder %s25, 0
    %p108 = por %p106, %p107
    %p109 = scmp.ne.s32.totalorder %s101, %s103
    %p110 = scmp.eq.s32.totalorder %s30, 1
    %p111 = por %p109, %p110
    %p112 = scmp.ne.s32.totalorder %s103, %s104
    %p113 = scmp.eq.s32.totalorder %s30, 0
    %p114 = por %p112, %p113
    %p115 = scmp.ne.s32.totalorder %s103, %s104
    %p116 = scmp.eq.s32.totalorder %s31, 1
    %p117 = por %p115, %p116
    %p119 = scmp.ne.s32.totalorder %s104, %s118
    %p120 = scmp.eq.s32.totalorder %s31, 0
    %p121 = por %p119, %p120
    %s122 = ssub.s32 %s25, %s32
    %p123 = scmp.eq.s32.totalorder %s122, 0
    %s125 = sadd.s32 %s124, 1
    %s126 = scalar_select %p123, %s124, %s125
    %p129 = pneg %p123
    %p130 = scmp.eq.s32.totalorder %s25, 1
    %p131 = por %p129, %p130
    %p132 = scmp.ne.s32.totalorder %s124, %s127
    %p133 = scmp.eq.s32.totalorder %s25, 0
    %p134 = por %p132, %p133
    %p135 = scmp.ne.s32.totalorder %s124, %s127
    %p136 = scmp.eq.s32.totalorder %s30, 1
    %p137 = por %p135, %p136
    %p138 = scmp.ne.s32.totalorder %s127, %s128
    %p139 = scmp.eq.s32.totalorder %s30, 0
    %p140 = por %p138, %p139
    %p141 = scmp.ne.s32.totalorder %s127, %s128
    %p142 = scmp.eq.s32.totalorder %s31, 1
    %p143 = por %p141, %p142
    %p145 = scmp.ne.s32.totalorder %s128, %s144
    %p146 = scmp.eq.s32.totalorder %s31, 0
    %p147 = por %p145, %p146
    %s148 = ssub.s32 %s25, %s32
    %p149 = scmp.eq.s32.totalorder %s148, 0
    %s151 = sadd.s32 %s150, 1
    %s152 = scalar_select %p149, %s150, %s151
    %p155 = pneg %p149
    %p156 = scmp.eq.s32.totalorder %s25, 1
    %p157 = por %p155, %p156
    %p158 = scmp.ne.s32.totalorder %s150, %s153
    %p159 = scmp.eq.s32.totalorder %s25, 0
    %p160 = por %p158, %p159
    %p161 = scmp.ne.s32.totalorder %s150, %s153
    %p162 = scmp.eq.s32.totalorder %s30, 1
    %p163 = por %p161, %p162
    %p164 = scmp.ne.s32.totalorder %s153, %s154
    %p165 = scmp.eq.s32.totalorder %s30, 0
    %p166 = por %p164, %p165
    %p167 = scmp.ne.s32.totalorder %s153, %s154
    %p168 = scmp.eq.s32.totalorder %s31, 1
    %p169 = por %p167, %p168
    %p171 = scmp.ne.s32.totalorder %s154, %s170
    %p172 = scmp.eq.s32.totalorder %s31, 0
    %p173 = por %p171, %p172
    %s174 = ssub.s32 %s25, %s32
    %p175 = scmp.eq.s32.totalorder %s174, 0
    %s177 = sadd.s32 %s176, 1
    %s178 = scalar_select %p175, %s176, %s177
    %p181 = pneg %p175
    %p182 = scmp.eq.s32.totalorder %s25, 1
    %p183 = por %p181, %p182
    %p184 = scmp.ne.s32.totalorder %s176, %s179
    %p185 = scmp.eq.s32.totalorder %s25, 0
    %p186 = por %p184, %p185
    %p187 = scmp.ne.s32.totalorder %s176, %s179
    %p188 = scmp.eq.s32.totalorder %s30, 1
    %p189 = por %p187, %p188
    %p190 = scmp.ne.s32.totalorder %s179, %s180
    %p191 = scmp.eq.s32.totalorder %s30, 0
    %p192 = por %p190, %p191
    %p193 = scmp.ne.s32.totalorder %s179, %s180
    %p194 = scmp.eq.s32.totalorder %s31, 1
    %p195 = por %p193, %p194
    %p197 = scmp.ne.s32.totalorder %s180, %s196
    %p198 = scmp.eq.s32.totalorder %s31, 0
    %p199 = por %p197, %p198
    %s200 = ssub.s32 %s25, %s32
    %p201 = scmp.eq.s32.totalorder %s200, 0
    %s203 = sadd.s32 %s202, 1
    %s204 = scalar_select %p201, %s202, %s203
    %p207 = pneg %p201
    %p208 = scmp.eq.s32.totalorder %s25, 1
    %p209 = por %p207, %p208
    %p210 = scmp.ne.s32.totalorder %s202, %s205
    %p211 = scmp.eq.s32.totalorder %s25, 0
    %p212 = por %p210, %p211
    %p213 = scmp.ne.s32.totalorder %s202, %s205
    %p214 = scmp.eq.s32.totalorder %s30, 1
    %p215 = por %p213, %p214
    %p216 = scmp.ne.s32.totalorder %s205, %s206
    %p217 = scmp.eq.s32.totalorder %s30, 0
    %p218 = por %p216, %p217
    %p219 = scmp.ne.s32.totalorder %s205, %s206
    %p220 = scmp.eq.s32.totalorder %s31, 1
    %p221 = por %p219, %p220
    %p223 = scmp.ne.s32.totalorder %s206, %s222
    %p224 = scmp.eq.s32.totalorder %s31, 0
    %p225 = por %p223, %p224
    %s226 = ssub.s32 %s25, %s32
    %p227 = scmp.eq.s32.totalorder %s226, 0
    %s229 = sadd.s32 %s228, 1
    %s230 = scalar_select %p227, %s228, %s229
    %p233 = pneg %p227
    %p234 = scmp.eq.s32.totalorder %s25, 1
    %p235 = por %p233, %p234
    %p236 = scmp.ne.s32.totalorder %s228, %s231
    %p237 = scmp.eq.s32.totalorder %s25, 0
    %p238 = por %p236, %p237
    %p239 = scmp.ne.s32.totalorder %s228, %s231
    %p240 = scmp.eq.s32.totalorder %s30, 1
    %p241 = por %p239, %p240
    %p242 = scmp.ne.s32.totalorder %s231, %s232
    %p243 = scmp.eq.s32.totalorder %s30, 0
    %p244 = por %p242, %p243
    %p245 = scmp.ne.s32.totalorder %s231, %s232
    %p246 = scmp.eq.s32.totalorder %s31, 1
    %p247 = por %p245, %p246
    %p249 = scmp.ne.s32.totalorder %s232, %s248
    %p250 = scmp.eq.s32.totalorder %s31, 0
    %p251 = por %p249, %p250
    %s252 = ssub.s32 %s25, %s32
    %p253 = scmp.eq.s32.totalorder %s252, 0
    %s255 = sadd.s32 %s254, 1
    %s256 = scalar_select %p253, %s254, %s255
    %p259 = pneg %p253
    %p260 = scmp.eq.s32.totalorder %s25, 1
    %p261 = por %p259, %p260
    %p262 = scmp.ne.s32.totalorder %s254, %s257
    %p263 = scmp.eq.s32.totalorder %s25, 0
    %p264 = por %p262, %p263
    %p265 = scmp.ne.s32.totalorder %s254, %s257
    %p266 = scmp.eq.s32.totalorder %s30, 1
    %p267 = por %p265, %p266
    %p268 = scmp.ne.s32.totalorder %s257, %s258
    %p269 = scmp.eq.s32.totalorder %s30, 0
    %p270 = por %p268, %p269
    %p271 = scmp.ne.s32.totalorder %s257, %s258
    %p272 = scmp.eq.s32.totalorder %s31, 1
    %p273 = por %p271, %p272
    %p275 = scmp.ne.s32.totalorder %s258, %s274
    %p276 = scmp.eq.s32.totalorder %s31, 0
    %p277 = por %p275, %p276
    %s278 = ssub.s32 %s25, %s32
    %p279 = scmp.eq.s32.totalorder %s278, 0
    %s281 = sadd.s32 %s280, 1
    %s282 = scalar_select %p279, %s280, %s281
    %p285 = pneg %p279
    %p286 = scmp.eq.s32.totalorder %s25, 1
    %p287 = por %p285, %p286
    %p288 = scmp.ne.s32.totalorder %s280, %s283
    %p289 = scmp.eq.s32.totalorder %s25, 0
    %p290 = por %p288, %p289
    %p291 = scmp.ne.s32.totalorder %s280, %s283
    %p292 = scmp.eq.s32.totalorder %s30, 1
    %p293 = por %p291, %p292
    %p294 = scmp.ne.s32.totalorder %s283, %s284
    %p295 = scmp.eq.s32.totalorder %s30, 0
    %p296 = por %p294, %p295
    %p297 = scmp.ne.s32.totalorder %s283, %s284
    %p298 = scmp.eq.s32.totalorder %s31, 1
    %p299 = por %p297, %p298
    %p301 = scmp.ne.s32.totalorder %s284, %s300
    %p302 = scmp.eq.s32.totalorder %s31, 0
    %p303 = por %p301, %p302
    %s304 = ssub.s32 %s25, %s32
    %p305 = scmp.eq.s32.totalorder %s304, 0
    %s307 = sadd.s32 %s306, 1
    %s308 = scalar_select %p305, %s306, %s307
    %p311 = pneg %p305
    %p312 = scmp.eq.s32.totalorder %s25, 1
    %p313 = por %p311, %p312
    %p314 = scmp.ne.s32.totalorder %s306, %s309
    %p315 = scmp.eq.s32.totalorder %s25, 0
    %p316 = por %p314, %p315
    %p317 = scmp.ne.s32.totalorder %s306, %s309
    %p318 = scmp.eq.s32.totalorder %s30, 1
    %p319 = por %p317, %p318
    %p320 = scmp.ne.s32.totalorder %s309, %s310
    %p321 = scmp.eq.s32.totalorder %s30, 0
    %p322 = por %p320, %p321
    %p323 = scmp.ne.s32.totalorder %s309, %s310
    %p324 = scmp.eq.s32.totalorder %s31, 1
    %p325 = por %p323, %p324
    %p327 = scmp.ne.s32.totalorder %s310, %s326
    %p328 = scmp.eq.s32.totalorder %s31, 0
    %p329 = por %p327, %p328
    %s330 = ssub.s32 %s25, %s32
    %p331 = scmp.eq.s32.totalorder %s330, 0
    %s333 = sadd.s32 %s332, 1
    %s334 = scalar_select %p331, %s332, %s333
    %p337 = pneg %p331
    %p338 = scmp.eq.s32.totalorder %s25, 1
    %p339 = por %p337, %p338
    %p340 = scmp.ne.s32.totalorder %s332, %s335
    %p341 = scmp.eq.s32.totalorder %s25, 0
    %p342 = por %p340, %p341
    %p343 = scmp.ne.s32.totalorder %s332, %s335
    %p344 = scmp.eq.s32.totalorder %s30, 1
    %p345 = por %p343, %p344
    %p346 = scmp.ne.s32.totalorder %s335, %s336
    %p347 = scmp.eq.s32.totalorder %s30, 0
    %p348 = por %p346, %p347
    %p349 = scmp.ne.s32.totalorder %s335, %s336
    %p350 = scmp.eq.s32.totalorder %s31, 1
    %p351 = por %p349, %p350
    %p353 = scmp.ne.s32.totalorder %s336, %s352
    %p354 = scmp.eq.s32.totalorder %s31, 0
    %p355 = por %p353, %p354
    %s356 = ssub.s32 %s25, %s32
    %p357 = scmp.eq.s32.totalorder %s356, 0
    %s359 = sadd.s32 %s358, 1
    %s360 = scalar_select %p357, %s358, %s359
    %p363 = pneg %p357
    %p364 = scmp.eq.s32.totalorder %s25, 1
    %p365 = por %p363, %p364
    %p366 = scmp.ne.s32.totalorder %s358, %s361
    %p367 = scmp.eq.s32.totalorder %s25, 0
    %p368 = por %p366, %p367
    %p369 = scmp.ne.s32.totalorder %s358, %s361
    %p370 = scmp.eq.s32.totalorder %s30, 1
    %p371 = por %p369, %p370
    %p372 = scmp.ne.s32.totalorder %s361, %s362
    %p373 = scmp.eq.s32.totalorder %s30, 0
    %p374 = por %p372, %p373
    %p375 = scmp.ne.s32.totalorder %s361, %s362
    %p376 = scmp.eq.s32.totalorder %s31, 1
    %p377 = por %p375, %p376
    %p379 = scmp.ne.s32.totalorder %s362, %s378
    %p380 = scmp.eq.s32.totalorder %s31, 0
    %p381 = por %p379, %p380
    %s382 = ssub.s32 %s25, %s32
    %p383 = scmp.eq.s32.totalorder %s382, 0
    %s385 = sadd.s32 %s384, 1
    %s386 = scalar_select %p383, %s384, %s385
    %p389 = pneg %p383
    %p390 = scmp.eq.s32.totalorder %s25, 1
    %p391 = por %p389, %p390
    %p392 = scmp.ne.s32.totalorder %s384, %s387
    %p393 = scmp.eq.s32.totalorder %s25, 0
    %p394 = por %p392, %p393
    %p395 = scmp.ne.s32.totalorder %s384, %s387
    %p396 = scmp.eq.s32.totalorder %s30, 1
    %p397 = por %p395, %p396
    %p398 = scmp.ne.s32.totalorder %s387, %s388
    %p399 = scmp.eq.s32.totalorder %s30, 0
    %p400 = por %p398, %p399
    %p401 = scmp.ne.s32.totalorder %s387, %s388
    %p402 = scmp.eq.s32.totalorder %s31, 1
    %p403 = por %p401, %p402
    %p405 = scmp.ne.s32.totalorder %s388, %s404
    %p406 = scmp.eq.s32.totalorder %s31, 0
    %p407 = por %p405, %p406
    %s408 = ssub.s32 %s25, %s32
    %p409 = scmp.eq.s32.totalorder %s408, 0
    %s411 = sadd.s32 %s410, 1
    %s412 = scalar_select %p409, %s410, %s411
    %p415 = pneg %p409
    %p416 = scmp.eq.s32.totalorder %s25, 1
    %p417 = por %p415, %p416
    %p418 = scmp.ne.s32.totalorder %s410, %s413
    %p419 = scmp.eq.s32.totalorder %s25, 0
    %p420 = por %p418, %p419
    %p421 = scmp.ne.s32.totalorder %s410, %s413
    %p422 = scmp.eq.s32.totalorder %s30, 1
    %p423 = por %p421, %p422
    %p424 = scmp.ne.s32.totalorder %s413, %s414
    %p425 = scmp.eq.s32.totalorder %s30, 0
    %p426 = por %p424, %p425
    %p427 = scmp.ne.s32.totalorder %s413, %s414
    %p428 = scmp.eq.s32.totalorder %s31, 1
    %p429 = por %p427, %p428
    %p431 = scmp.ne.s32.totalorder %s414, %s430
    %p432 = scmp.eq.s32.totalorder %s31, 0
    %p433 = por %p431, %p432
    %s434 = ssub.s32 %s25, %s32
    %p435 = scmp.eq.s32.totalorder %s434, 0
    %s437 = sadd.s32 %s436, 1
    %s438 = scalar_select %p435, %s436, %s437
    %p441 = pneg %p435
    %p442 = scmp.eq.s32.totalorder %s25, 1
    %p443 = por %p441, %p442
    %p444 = scmp.ne.s32.totalorder %s436, %s439
    %p445 = scmp.eq.s32.totalorder %s25, 0
    %p446 = por %p444, %p445
    %p447 = scmp.ne.s32.totalorder %s436, %s439
    %p448 = scmp.eq.s32.totalorder %s30, 1
    %p449 = por %p447, %p448
    %p450 = scmp.ne.s32.totalorder %s439, %s440
    %p451 = scmp.eq.s32.totalorder %s30, 0
    %p452 = por %p450, %p451
    %p453 = scmp.ne.s32.totalorder %s439, %s440
    %p454 = scmp.eq.s32.totalorder %s31, 1
    %p455 = por %p453, %p454
    %p457 = scmp.ne.s32.totalorder %s440, %s456
    %p458 = scmp.eq.s32.totalorder %s31, 0
    %p459 = por %p457, %p458
    %s460 = ssub.s32 %s25, %s32
    %p461 = scmp.eq.s32.totalorder %s460, 0
    %s463 = sadd.s32 %s462, 1
    %s464 = scalar_select %p461, %s462, %s463
    %p467 = pneg %p461
    %p468 = scmp.eq.s32.totalorder %s25, 1
    %p469 = por %p467, %p468
    %p470 = scmp.ne.s32.totalorder %s462, %s465
    %p471 = scmp.eq.s32.totalorder %s25, 0
    %p472 = por %p470, %p471
    %p473 = scmp.ne.s32.totalorder %s462, %s465
    %p474 = scmp.eq.s32.totalorder %s30, 1
    %p475 = por %p473, %p474
    %p476 = scmp.ne.s32.totalorder %s465, %s466
    %p477 = scmp.eq.s32.totalorder %s30, 0
    %p478 = por %p476, %p477
    %p479 = scmp.ne.s32.totalorder %s465, %s466
    %p480 = scmp.eq.s32.totalorder %s31, 1
    %p481 = por %p479, %p480
    %p483 = scmp.ne.s32.totalorder %s466, %s482
    %p484 = scmp.eq.s32.totalorder %s31, 0
    %p485 = por %p483, %p484
    %s486 = ssub.s32 %s25, %s32
    %p487 = scmp.eq.s32.totalorder %s486, 0
    %s489 = sadd.s32 %s488, 1
    %s490 = scalar_select %p487, %s488, %s489
    %p493 = pneg %p487
    %p494 = scmp.eq.s32.totalorder %s25, 1
    %p495 = por %p493, %p494
    %p496 = scmp.ne.s32.totalorder %s488, %s491
    %p497 = scmp.eq.s32.totalorder %s25, 0
    %p498 = por %p496, %p497
    %p499 = scmp.ne.s32.totalorder %s488, %s491
    %p500 = scmp.eq.s32.totalorder %s30, 1
    %p501 = por %p499, %p500
    %p502 = scmp.ne.s32.totalorder %s491, %s492
    %p503 = scmp.eq.s32.totalorder %s30, 0
    %p504 = por %p502, %p503
    %p505 = scmp.ne.s32.totalorder %s491, %s492
    %p506 = scmp.eq.s32.totalorder %s31, 1
    %p507 = por %p505, %p506
    %p509 = scmp.ne.s32.totalorder %s492, %s508
    %p510 = scmp.eq.s32.totalorder %s31, 0
    %p511 = por %p509, %p510
    %s512 = ssub.s32 %s25, %s32
    %p513 = scmp.eq.s32.totalorder %s512, 0
    %s515 = sadd.s32 %s514, 1
    %s516 = scalar_select %p513, %s514, %s515
    %p519 = pneg %p513
    %p520 = scmp.eq.s32.totalorder %s25, 1
    %p521 = por %p519, %p520
    %p522 = scmp.ne.s32.totalorder %s514, %s517
    %p523 = scmp.eq.s32.totalorder %s25, 0
    %p524 = por %p522, %p523
    %p525 = scmp.ne.s32.totalorder %s514, %s517
    %p526 = scmp.eq.s32.totalorder %s30, 1
    %p527 = por %p525, %p526
    %p528 = scmp.ne.s32.totalorder %s517, %s518
    %p529 = scmp.eq.s32.totalorder %s30, 0
    %p530 = por %p528, %p529
    %p531 = scmp.ne.s32.totalorder %s517, %s518
    %p532 = scmp.eq.s32.totalorder %s31, 1
    %p533 = por %p531, %p532
    %p535 = scmp.ne.s32.totalorder %s518, %s534
    %p536 = scmp.eq.s32.totalorder %s31, 0
    %p537 = por %p535, %p536
    %p538 = scmp.le.s32.totalorder 1, %s25
    %p539 = scmp.lt.s32.totalorder %s25, 3
    %p540 = pnand %p538, %p539
    %p541 = pneg %p540
    // Predicated region
    $region9: #{lidar_model_forward.1} parent=5 // pred_check
      _
    $region10: #{lidar_model_forward.1} parent=5 // pred_check_branch
      %543 = sbr.rel (%p540) target = $region12
    $region11: #{lidar_model_forward.1} parent=5 // pred_region
      %s544 = ssub.s32 %s25, 1
      // Predicated region
      $region13: #{lidar_model_forward.1} parent=11 // pred_check
        %p545 = pneg %p72
      $region14: #{lidar_model_forward.1} parent=11 // pred_check_branch
        %547 = sbr.rel (%p545) target = $region16
      $region15: #{lidar_model_forward.1} parent=11 // pred_region
        _
      $region16: #{lidar_model_forward.1} parent=11 // pred_fallthru
        _
      // Predicated region
      $region17: #{lidar_model_forward.1} parent=11 // pred_check
        %p548 = pneg %p93
      $region18: #{lidar_model_forward.1} parent=11 // pred_check_branch
        %550 = sbr.rel (%p548) target = $region20
      $region19: #{lidar_model_forward.1} parent=11 // pred_region
        _
      $region20: #{lidar_model_forward.1} parent=11 // pred_fallthru
        _
      // Predicated region
      $region21: #{lidar_model_forward.1} parent=11 // pred_check
        %p551 = pneg %p114
      $region22: #{lidar_model_forward.1} parent=11 // pred_check_branch
        %553 = sbr.rel (%p551) target = $region24
      $region23: #{lidar_model_forward.1} parent=11 // pred_region
        _
      $region24: #{lidar_model_forward.1} parent=11 // pred_fallthru
        _
    $region12: #{lidar_model_forward.1} parent=5 // pred_fallthru
      _
    %p554 = scmp.lt.s32.totalorder %s25, 2
    // Predicated region
    $region25: #{lidar_model_forward.1} parent=5 // pred_check
      %p555 = pneg %p554
    $region26: #{lidar_model_forward.1} parent=5 // pred_check_branch
      %557 = sbr.rel (%p555) target = $region28
    $region27: #{lidar_model_forward.1} parent=5 // pred_region
      // Predicated region
      $region29: #{lidar_model_forward.1} parent=27 // pred_check
        %p558 = pneg %p45
      $region30: #{lidar_model_forward.1} parent=27 // pred_check_branch
        %560 = sbr.rel (%p558) target = $region32
      $region31: #{lidar_model_forward.1} parent=27 // pred_region
        %p561 = scmp.lt.s32.totalorder %s25, 1
        %s562 = scalar_select %p561, %s25, 1
        %s563 = smul.addr %s562, 7
        %s564 = smul.addr %s563, 8
        %s565 = scalar_lea.vmem %s0, %s564
      $region32: #{lidar_model_forward.1} parent=27 // pred_fallthru
        _
      // Predicated region
      $region33: #{lidar_model_forward.1} parent=27 // pred_check
        %p566 = pneg %p134
      $region34: #{lidar_model_forward.1} parent=27 // pred_check_branch
        %568 = sbr.rel (%p566) target = $region36
      $region35: #{lidar_model_forward.1} parent=27 // pred_region
        %p569 = scmp.lt.s32.totalorder %s25, 1
        %s570 = scalar_select %p569, %s25, 1
        %s571 = smul.addr %s570, 2
        %s572 = scalar_lea.vmem %s4, %s571
      $region36: #{lidar_model_forward.1} parent=27 // pred_fallthru
        _
      // Predicated region
      $region37: #{lidar_model_forward.1} parent=27 // pred_check
        %p573 = pneg %p160
      $region38: #{lidar_model_forward.1} parent=27 // pred_check_branch
        %575 = sbr.rel (%p573) target = $region40
      $region39: #{lidar_model_forward.1} parent=27 // pred_region
        %p576 = scmp.lt.s32.totalorder %s25, 1
        %s577 = scalar_select %p576, %s25, 1
        %s578 = scalar_lea.vmem %s5, %s577
      $region40: #{lidar_model_forward.1} parent=27 // pred_fallthru
        _
      // Predicated region
      $region41: #{lidar_model_forward.1} parent=27 // pred_check
        %p579 = pneg %p186
      $region42: #{lidar_model_forward.1} parent=27 // pred_check_branch
        %581 = sbr.rel (%p579) target = $region44
      $region43: #{lidar_model_forward.1} parent=27 // pred_region
        %p582 = scmp.lt.s32.totalorder %s25, 1
        %s583 = scalar_select %p582, %s25, 1
        %s584 = smul.addr %s583, 7
        %s585 = smul.addr %s584, 8
        %s586 = scalar_lea.vmem %s6, %s585
      $region44: #{lidar_model_forward.1} parent=27 // pred_fallthru
        _
      // Predicated region
      $region45: #{lidar_model_forward.1} parent=27 // pred_check
        %p587 = pneg %p212
      $region46: #{lidar_model_forward.1} parent=27 // pred_check_branch
        %589 = sbr.rel (%p587) target = $region48
      $region47: #{lidar_model_forward.1} parent=27 // pred_region
        %p590 = scmp.lt.s32.totalorder %s25, 1
        %s591 = scalar_select %p590, %s25, 1
        %s592 = scalar_lea.vmem %s7, %s591
      $region48: #{lidar_model_forward.1} parent=27 // pred_fallthru
        _
      // Predicated region
      $region49: #{lidar_model_forward.1} parent=27 // pred_check
        %p593 = pneg %p238
      $region50: #{lidar_model_forward.1} parent=27 // pred_check_branch
        %595 = sbr.rel (%p593) target = $region52
      $region51: #{lidar_model_forward.1} parent=27 // pred_region
        %p596 = scmp.lt.s32.totalorder %s25, 1
        %s597 = scalar_select %p596, %s25, 1
        %s598 = smul.addr %s597, 14
        %s599 = smul.addr %s598, 8
        %s600 = scalar_lea.vmem %s8, %s599
      $region52: #{lidar_model_forward.1} parent=27 // pred_fallthru
        _
      // Predicated region
      $region53: #{lidar_model_forward.1} parent=27 // pred_check
        %p601 = pneg %p264
      $region54: #{lidar_model_forward.1} parent=27 // pred_check_branch
        %603 = sbr.rel (%p601) target = $region56
      $region55: #{lidar_model_forward.1} parent=27 // pred_region
        %p604 = scmp.lt.s32.totalorder %s25, 1
        %s605 = scalar_select %p604, %s25, 1
        %s606 = scalar_lea.vmem %s9, %s605
      $region56: #{lidar_model_forward.1} parent=27 // pred_fallthru
        _
      // Predicated region
      $region57: #{lidar_model_forward.1} parent=27 // pred_check
        %p607 = pneg %p290
      $region58: #{lidar_model_forward.1} parent=27 // pred_check_branch
        %609 = sbr.rel (%p607) target = $region60
      $region59: #{lidar_model_forward.1} parent=27 // pred_region
        %p610 = scmp.lt.s32.totalorder %s25, 1
        %s611 = scalar_select %p610, %s25, 1
        %s612 = smul.addr %s611, 14
        %s613 = smul.addr %s612, 8
        %s614 = scalar_lea.vmem %s10, %s613
      $region60: #{lidar_model_forward.1} parent=27 // pred_fallthru
        _
      // Predicated region
      $region61: #{lidar_model_forward.1} parent=27 // pred_check
        %p615 = pneg %p316
      $region62: #{lidar_model_forward.1} parent=27 // pred_check_branch
        %617 = sbr.rel (%p615) target = $region64
      $region63: #{lidar_model_forward.1} parent=27 // pred_region
        %p618 = scmp.lt.s32.totalorder %s25, 1
        %s619 = scalar_select %p618, %s25, 1
        %s620 = scalar_lea.vmem %s11, %s619
      $region64: #{lidar_model_forward.1} parent=27 // pred_fallthru
        _
      // Predicated region
      $region65: #{lidar_model_forward.1} parent=27 // pred_check
        %p621 = pneg %p342
      $region66: #{lidar_model_forward.1} parent=27 // pred_check_branch
        %623 = sbr.rel (%p621) target = $region68
      $region67: #{lidar_model_forward.1} parent=27 // pred_region
        %p624 = scmp.lt.s32.totalorder %s25, 1
        %s625 = scalar_select %p624, %s25, 1
        %s626 = scalar_lea.vmem %s12, %s625
      $region68: #{lidar_model_forward.1} parent=27 // pred_fallthru
        _
      // Predicated region
      $region69: #{lidar_model_forward.1} parent=27 // pred_check
        %p627 = pneg %p368
      $region70: #{lidar_model_forward.1} parent=27 // pred_check_branch
        %629 = sbr.rel (%p627) target = $region72
      $region71: #{lidar_model_forward.1} parent=27 // pred_region
        %p630 = scmp.lt.s32.totalorder %s25, 1
        %s631 = scalar_select %p630, %s25, 1
        %s632 = scalar_lea.vmem %s13, %s631
      $region72: #{lidar_model_forward.1} parent=27 // pred_fallthru
        _
      // Predicated region
      $region73: #{lidar_model_forward.1} parent=27 // pred_check
        %p633 = pneg %p394
      $region74: #{lidar_model_forward.1} parent=27 // pred_check_branch
        %635 = sbr.rel (%p633) target = $region76
      $region75: #{lidar_model_forward.1} parent=27 // pred_region
        %p636 = scmp.lt.s32.totalorder %s25, 1
        %s637 = scalar_select %p636, %s25, 1
        %s638 = smul.addr %s637, 3
        %s639 = smul.addr %s638, 8
        %s640 = scalar_lea.vmem %s14, %s639
      $region76: #{lidar_model_forward.1} parent=27 // pred_fallthru
        _
      // Predicated region
      $region77: #{lidar_model_forward.1} parent=27 // pred_check
        %p641 = pneg %p420
      $region78: #{lidar_model_forward.1} parent=27 // pred_check_branch
        %643 = sbr.rel (%p641) target = $region80
      $region79: #{lidar_model_forward.1} parent=27 // pred_region
        %p644 = scmp.lt.s32.totalorder %s25, 1
        %s645 = scalar_select %p644, %s25, 1
        %s646 = scalar_lea.vmem %s15, %s645
      $region80: #{lidar_model_forward.1} parent=27 // pred_fallthru
        _
      // Predicated region
      $region81: #{lidar_model_forward.1} parent=27 // pred_check
        %p647 = pneg %p446
      $region82: #{lidar_model_forward.1} parent=27 // pred_check_branch
        %649 = sbr.rel (%p647) target = $region84
      $region83: #{lidar_model_forward.1} parent=27 // pred_region
        %p650 = scmp.lt.s32.totalorder %s25, 1
        %s651 = scalar_select %p650, %s25, 1
        %s652 = scalar_lea.vmem %s16, %s651
      $region84: #{lidar_model_forward.1} parent=27 // pred_fallthru
        _
      // Predicated region
      $region85: #{lidar_model_forward.1} parent=27 // pred_check
        %p653 = pneg %p472
      $region86: #{lidar_model_forward.1} parent=27 // pred_check_branch
        %655 = sbr.rel (%p653) target = $region88
      $region87: #{lidar_model_forward.1} parent=27 // pred_region
        %p656 = scmp.lt.s32.totalorder %s25, 1
        %s657 = scalar_select %p656, %s25, 1
        %s658 = scalar_lea.vmem %s17, %s657
      $region88: #{lidar_model_forward.1} parent=27 // pred_fallthru
        _
      // Predicated region
      $region89: #{lidar_model_forward.1} parent=27 // pred_check
        %p659 = pneg %p498
      $region90: #{lidar_model_forward.1} parent=27 // pred_check_branch
        %661 = sbr.rel (%p659) target = $region92
      $region91: #{lidar_model_forward.1} parent=27 // pred_region
        %p662 = scmp.lt.s32.totalorder %s25, 1
        %s663 = scalar_select %p662, %s25, 1
        %s664 = scalar_lea.vmem %s18, %s663
      $region92: #{lidar_model_forward.1} parent=27 // pred_fallthru
        _
    $region28: #{lidar_model_forward.1} parent=5 // pred_fallthru
      _
    %p665 = scmp.le.s32.totalorder 1, %s25
    %p666 = scmp.lt.s32.totalorder %s25, 3
    %p667 = pnand %p665, %p666
    %p668 = pneg %p667
    // Predicated region
    $region93: #{lidar_model_forward.1} parent=5 // pred_check
      _
    $region94: #{lidar_model_forward.1} parent=5 // pred_check_branch
      %670 = sbr.rel (%p667) target = $region96
    $region95: #{lidar_model_forward.1} parent=5 // pred_region
      %s671 = ssub.s32 %s25, 1
      %p672 = scmp.lt.s32.totalorder %s30, 1
      %s673 = scalar_select %p672, %s30, 1
      %s674 = smul.addr %s673, 7
      %s675 = smul.addr %s674, 8
      %s676 = scalar_lea.vmem %s0, %s675
      %p677 = pneg %p51
      %p678 = pneg %p48
      %p679 = pneg %p72
      %p680 = pneg %p69
      %p681 = pneg %p93
      %p682 = pneg %p90
      %p683 = pneg %p114
      %p684 = pneg %p111
      %p685 = scmp.lt.s32.totalorder %s30, 1
      %s686 = scalar_select %p685, %s30, 1
      %s687 = smul.addr %s686, 2
      %s688 = scalar_lea.vmem %s4, %s687
      %p689 = pneg %p140
      %p690 = pneg %p137
      %p691 = scmp.lt.s32.totalorder %s30, 1
      %s692 = scalar_select %p691, %s30, 1
      %s693 = scalar_lea.vmem %s5, %s692
      %p694 = pneg %p166
      %p695 = pneg %p163
      %p696 = scmp.lt.s32.totalorder %s30, 1
      %s697 = scalar_select %p696, %s30, 1
      %s698 = smul.addr %s697, 7
      %s699 = smul.addr %s698, 8
      %s700 = scalar_lea.vmem %s6, %s699
      %p701 = pneg %p192
      %p702 = pneg %p189
      %p703 = scmp.lt.s32.totalorder %s30, 1
      %s704 = scalar_select %p703, %s30, 1
      %s705 = scalar_lea.vmem %s7, %s704
      %p706 = pneg %p218
      %p707 = pneg %p215
      %p708 = scmp.lt.s32.totalorder %s30, 1
      %s709 = scalar_select %p708, %s30, 1
      %s710 = smul.addr %s709, 14
      %s711 = smul.addr %s710, 8
      %s712 = scalar_lea.vmem %s8, %s711
      %p713 = pneg %p244
      %p714 = pneg %p241
      %p715 = scmp.lt.s32.totalorder %s30, 1
      %s716 = scalar_select %p715, %s30, 1
      %s717 = scalar_lea.vmem %s9, %s716
      %p718 = pneg %p270
      %p719 = pneg %p267
      %p720 = scmp.lt.s32.totalorder %s30, 1
      %s721 = scalar_select %p720, %s30, 1
      %s722 = smul.addr %s721, 14
      %s723 = smul.addr %s722, 8
      %s724 = scalar_lea.vmem %s10, %s723
      %p725 = pneg %p296
      %p726 = pneg %p293
      %p727 = scmp.lt.s32.totalorder %s30, 1
      %s728 = scalar_select %p727, %s30, 1
      %s729 = scalar_lea.vmem %s11, %s728
      %p730 = pneg %p322
      %p731 = pneg %p319
      %p732 = scmp.lt.s32.totalorder %s30, 1
      %s733 = scalar_select %p732, %s30, 1
      %s734 = scalar_lea.vmem %s12, %s733
      %p735 = pneg %p348
      %p736 = pneg %p345
      %p737 = scmp.lt.s32.totalorder %s30, 1
      %s738 = scalar_select %p737, %s30, 1
      %s739 = scalar_lea.vmem %s13, %s738
      %p740 = pneg %p374
      %p741 = pneg %p371
      %p742 = scmp.lt.s32.totalorder %s30, 1
      %s743 = scalar_select %p742, %s30, 1
      %s744 = smul.addr %s743, 3
      %s745 = smul.addr %s744, 8
      %s746 = scalar_lea.vmem %s14, %s745
      %p747 = pneg %p400
      %p748 = pneg %p397
      %p749 = scmp.lt.s32.totalorder %s30, 1
      %s750 = scalar_select %p749, %s30, 1
      %s751 = scalar_lea.vmem %s15, %s750
      %p752 = pneg %p426
      %p753 = pneg %p423
      %p754 = scmp.lt.s32.totalorder %s30, 1
      %s755 = scalar_select %p754, %s30, 1
      %s756 = scalar_lea.vmem %s16, %s755
      %p757 = pneg %p452
      %p758 = pneg %p449
      %p759 = scmp.lt.s32.totalorder %s30, 1
      %s760 = scalar_select %p759, %s30, 1
      %s761 = scalar_lea.vmem %s17, %s760
      %p762 = pneg %p478
      %p763 = pneg %p475
      %p764 = scmp.lt.s32.totalorder %s30, 1
      %s765 = scalar_select %p764, %s30, 1
      %s766 = scalar_lea.vmem %s18, %s765
      %p767 = pneg %p504
      %p768 = pneg %p501
      %p769 = pneg %p530
      %p770 = pneg %p527
      %p771 = scmp.lt.s32.totalorder %s30, 1
      %s772 = scalar_select %p771, %s30, 1
      %s773 = smul.addr %s772, 2
      %s774 = scalar_lea.vmem %s19, %s773
      %p775 = scmp.lt.s32.totalorder %s30, 1
      %s776 = scalar_select %p775, %s30, 1
      %s777 = smul.addr %s776, 7
      %s778 = smul.addr %s777, 8
      %s779 = scalar_lea.vmem %s0, %s778
      %p780 = scmp.lt.s32.totalorder %s30, 1
      %s781 = scalar_select %p780, %s30, 1
      %s782 = smul.addr %s781, 2
      %s783 = scalar_lea.vmem %s4, %s782
      %p784 = scmp.lt.s32.totalorder %s30, 1
      %s785 = scalar_select %p784, %s30, 1
      %s786 = scalar_lea.vmem %s5, %s785
      %p787 = scmp.lt.s32.totalorder %s30, 1
      %s788 = scalar_select %p787, %s30, 1
      %s789 = smul.addr %s788, 7
      %s790 = smul.addr %s789, 8
      %s791 = scalar_lea.vmem %s6, %s790
      %p792 = scmp.lt.s32.totalorder %s30, 1
      %s793 = scalar_select %p792, %s30, 1
      %s794 = scalar_lea.vmem %s7, %s793
      %p795 = scmp.lt.s32.totalorder %s30, 1
      %s796 = scalar_select %p795, %s30, 1
      %s797 = smul.addr %s796, 14
      %s798 = smul.addr %s797, 8
      %s799 = scalar_lea.vmem %s8, %s798
      %p800 = scmp.lt.s32.totalorder %s30, 1
      %s801 = scalar_select %p800, %s30, 1
      %s802 = scalar_lea.vmem %s9, %s801
      %p803 = scmp.lt.s32.totalorder %s30, 1
      %s804 = scalar_select %p803, %s30, 1
      %s805 = smul.addr %s804, 14
      %s806 = smul.addr %s805, 8
      %s807 = scalar_lea.vmem %s10, %s806
      %p808 = scmp.lt.s32.totalorder %s30, 1
      %s809 = scalar_select %p808, %s30, 1
      %s810 = scalar_lea.vmem %s11, %s809
      %p811 = scmp.lt.s32.totalorder %s30, 1
      %s812 = scalar_select %p811, %s30, 1
      %s813 = scalar_lea.vmem %s12, %s812
      %p814 = scmp.lt.s32.totalorder %s30, 1
      %s815 = scalar_select %p814, %s30, 1
      %s816 = scalar_lea.vmem %s13, %s815
      %p817 = scmp.lt.s32.totalorder %s30, 1
      %s818 = scalar_select %p817, %s30, 1
      %s819 = smul.addr %s818, 3
      %s820 = smul.addr %s819, 8
      %s821 = scalar_lea.vmem %s14, %s820
      %p822 = scmp.lt.s32.totalorder %s30, 1
      %s823 = scalar_select %p822, %s30, 1
      %s824 = scalar_lea.vmem %s15, %s823
      %p825 = scmp.lt.s32.totalorder %s30, 1
      %s826 = scalar_select %p825, %s30, 1
      %s827 = scalar_lea.vmem %s16, %s826
      %p828 = scmp.lt.s32.totalorder %s30, 1
      %s829 = scalar_select %p828, %s30, 1
      %s830 = scalar_lea.vmem %s17, %s829
      %p831 = scmp.lt.s32.totalorder %s30, 1
      %s832 = scalar_select %p831, %s30, 1
      %s833 = scalar_lea.vmem %s18, %s832
      %p834 = scmp.lt.s32.totalorder %s30, 1
      %s835 = scalar_select %p834, %s30, 1
      %s836 = smul.addr %s835, 2
      %s837 = scalar_lea.vmem %s19, %s836
      %v838 = vld [vmem:[%s779] sm:$0xff]
      %v839 = vld [vmem:[%s779 + $0x8] sm:$0xff]
      %v840 = vld [vmem:[%s779 + $0x10] sm:$0xff]
      %v841 = vld [vmem:[%s779 + $0x18] sm:$0xff]
      %v842 = vld [vmem:[%s779 + $0x20] sm:$0xff]
      %v843 = vld [vmem:[%s779 + $0x28] sm:$0xff]
      %v844 = vld [vmem:[%s779 + $0x30] sm:$0x3]
      %v845 = vld [vmem:[%s783] sm:$0x3]
      %847 = vset.pattern.permute.xlu0 0
      %848 = vperm.xlu0 %847, %v838
      %v849 = vpop.permute.xlu0 %848
      %852 = vset.pattern.permute.xlu0 0
      %853 = vperm.xlu0 %852, %v839
      %v854 = vpop.permute.xlu0 %853
      %857 = vset.pattern.permute.xlu0 0
      %858 = vperm.xlu0 %857, %v840
      %v859 = vpop.permute.xlu0 %858
      %862 = vset.pattern.permute.xlu0 0
      %863 = vperm.xlu0 %862, %v841
      %v864 = vpop.permute.xlu0 %863
      %867 = vset.pattern.permute.xlu0 0
      %868 = vperm.xlu0 %867, %v842
      %v869 = vpop.permute.xlu0 %868
      %872 = vset.pattern.permute.xlu0 0
      %873 = vperm.xlu0 %872, %v843
      %v874 = vpop.permute.xlu0 %873
      %877 = vset.pattern.permute.xlu0 0
      %878 = vperm.xlu0 %877, %v844
      %v879 = vpop.permute.xlu0 %878
      %v881 = vlaneseq
      %v882 = vshrl.u32 %v881, 7
      %v883 = vsub.s32 0, %v882
      %v884 = vrot.slane %v845, %v883
      %v885 = vmul.f32 %v849, %v884
      %v886 = vmul.f32 %v854, %v884
      %v887 = vmul.f32 %v859, %v884
      %v888 = vmul.f32 %v864, %v884
      %v889 = vmul.f32 %v869, %v884
      %v890 = vmul.f32 %v874, %v884
      %v891 = vmul.f32 %v879, %v884
      %892 = vset.pattern.permute.xlu0 1
      %893 = vperm.xlu0 %892, %v838
      %v894 = vpop.permute.xlu0 %893
      %896 = vset.pattern.permute.xlu0 1
      %897 = vperm.xlu0 %896, %v839
      %v898 = vpop.permute.xlu0 %897
      %900 = vset.pattern.permute.xlu0 1
      %901 = vperm.xlu0 %900, %v840
      %v902 = vpop.permute.xlu0 %901
      %904 = vset.pattern.permute.xlu0 1
      %905 = vperm.xlu0 %904, %v841
      %v906 = vpop.permute.xlu0 %905
      %908 = vset.pattern.permute.xlu0 1
      %909 = vperm.xlu0 %908, %v842
      %v910 = vpop.permute.xlu0 %909
      %912 = vset.pattern.permute.xlu0 1
      %913 = vperm.xlu0 %912, %v843
      %v914 = vpop.permute.xlu0 %913
      %916 = vset.pattern.permute.xlu0 1
      %917 = vperm.xlu0 %916, %v844
      %v918 = vpop.permute.xlu0 %917
      %v920 = vlaneseq
      %v921 = vshrl.u32 %v920, 7
      %v922 = vsub.s32 1, %v921
      %v923 = vrot.slane %v845, %v922
      %v924 = vmul.f32 %v894, %v923
      %v925 = vmul.f32 %v898, %v923
      %v926 = vmul.f32 %v902, %v923
      %v927 = vmul.f32 %v906, %v923
      %v928 = vmul.f32 %v910, %v923
      %v929 = vmul.f32 %v914, %v923
      %v930 = vmul.f32 %v918, %v923
      %v931 = vadd.f32 %v885, %v924
      %v932 = vadd.f32 %v886, %v925
      %v933 = vadd.f32 %v887, %v926
      %v934 = vadd.f32 %v888, %v927
      %v935 = vadd.f32 %v889, %v928
      %v936 = vadd.f32 %v890, %v929
      %v937 = vadd.f32 %v891, %v930
      %v938 = vld [vmem:[%s786] sm:$0x1]
      %v940 = vlaneseq
      %v941 = vshrl.u32 %v940, 7
      %v942 = vsub.s32 0, %v941
      %v943 = vrot.slane %v938, %v942
      %v945 = vadd.f32 %v931, %v943
      %v946 = vadd.f32 %v932, %v943
      %v947 = vadd.f32 %v933, %v943
      %v948 = vadd.f32 %v934, %v943
      %v949 = vadd.f32 %v935, %v943
      %v950 = vadd.f32 %v936, %v943
      %v951 = vadd.f32 %v937, %v943
      %v952 = vmax.f32 %v945, 0.0
      %v953 = vmax.f32 %v946, 0.0
      %v954 = vmax.f32 %v947, 0.0
      %v955 = vmax.f32 %v948, 0.0
      %v956 = vmax.f32 %v949, 0.0
      %v957 = vmax.f32 %v950, 0.0
      %v958 = vmax.f32 %v951, 0.0
      %v959 = vand.u32 2147483647, %v945
      %v960 = vand.u32 2147483647, %v946
      %v961 = vand.u32 2147483647, %v947
      %v962 = vand.u32 2147483647, %v948
      %v963 = vand.u32 2147483647, %v949
      %v964 = vand.u32 2147483647, %v950
      %v965 = vand.u32 2147483647, %v951
      %v966 = vsub.f32 0.0, %v959
      %v967 = vsub.f32 0.0, %v960
      %v968 = vsub.f32 0.0, %v961
      %v969 = vsub.f32 0.0, %v962
      %v970 = vsub.f32 0.0, %v963
      %v971 = vsub.f32 0.0, %v964
      %v972 = vsub.f32 0.0, %v965
      %v973 = vmul.f32 %v966, 1.442695
      %v974 = vpow.pop %v973
      %v975 = vmul.f32 %v967, 1.442695
      %v976 = vpow.pop %v975
      %v977 = vmul.f32 %v968, 1.442695
      %v978 = vpow.pop %v977
      %v979 = vmul.f32 %v969, 1.442695
      %v980 = vpow.pop %v979
      %v981 = vmul.f32 %v970, 1.442695
      %v982 = vpow.pop %v981
      %v983 = vmul.f32 %v971, 1.442695
      %v984 = vpow.pop %v983
      %v985 = vmul.f32 %v972, 1.442695
      %v986 = vpow.pop %v985
      %v987 = vadd.f32 %v974, 1.0
      %v988 = vlog2.pop %v987
      %v989 = vmul.f32 %v988, 0.6931472
      %v990 = vmul.f32 -0.5, %v974
      %v991 = vadd.f32 %v990, 1.0
      %v992 = vmul.f32 %v991, %v974
      %v993 = vand.u32 2147483647, %v974
      %vm994 = vcmp.lt.f32.partialorder %v993, 0.0004427343
      %v995 = vsel %vm994, %v992, %v989
      %v996 = vadd.f32 %v976, 1.0
      %v997 = vlog2.pop %v996
      %v998 = vmul.f32 %v997, 0.6931472
      %v999 = vmul.f32 -0.5, %v976
      %v1000 = vadd.f32 %v999, 1.0
      %v1001 = vmul.f32 %v1000, %v976
      %v1002 = vand.u32 2147483647, %v976
      %vm1003 = vcmp.lt.f32.partialorder %v1002, 0.0004427343
      %v1004 = vsel %vm1003, %v1001, %v998
      %v1005 = vadd.f32 %v978, 1.0
      %v1006 = vlog2.pop %v1005
      %v1007 = vmul.f32 %v1006, 0.6931472
      %v1008 = vmul.f32 -0.5, %v978
      %v1009 = vadd.f32 %v1008, 1.0
      %v1010 = vmul.f32 %v1009, %v978
      %v1011 = vand.u32 2147483647, %v978
      %vm1012 = vcmp.lt.f32.partialorder %v1011, 0.0004427343
      %v1013 = vsel %vm1012, %v1010, %v1007
      %v1014 = vadd.f32 %v980, 1.0
      %v1015 = vlog2.pop %v1014
      %v1016 = vmul.f32 %v1015, 0.6931472
      %v1017 = vmul.f32 -0.5, %v980
      %v1018 = vadd.f32 %v1017, 1.0
      %v1019 = vmul.f32 %v1018, %v980
      %v1020 = vand.u32 2147483647, %v980
      %vm1021 = vcmp.lt.f32.partialorder %v1020, 0.0004427343
      %v1022 = vsel %vm1021, %v1019, %v1016
      %v1023 = vadd.f32 %v982, 1.0
      %v1024 = vlog2.pop %v1023
      %v1025 = vmul.f32 %v1024, 0.6931472
      %v1026 = vmul.f32 -0.5, %v982
      %v1027 = vadd.f32 %v1026, 1.0
      %v1028 = vmul.f32 %v1027, %v982
      %v1029 = vand.u32 2147483647, %v982
      %vm1030 = vcmp.lt.f32.partialorder %v1029, 0.0004427343
      %v1031 = vsel %vm1030, %v1028, %v1025
      %v1032 = vadd.f32 %v984, 1.0
      %v1033 = vlog2.pop %v1032
      %v1034 = vmul.f32 %v1033, 0.6931472
      %v1035 = vmul.f32 -0.5, %v984
      %v1036 = vadd.f32 %v1035, 1.0
      %v1037 = vmul.f32 %v1036, %v984
      %v1038 = vand.u32 2147483647, %v984
      %vm1039 = vcmp.lt.f32.partialorder %v1038, 0.0004427343
      %v1040 = vsel %vm1039, %v1037, %v1034
      %v1041 = vadd.f32 %v986, 1.0
      %v1042 = vlog2.pop %v1041
      %v1043 = vmul.f32 %v1042, 0.6931472
      %v1044 = vmul.f32 -0.5, %v986
      %v1045 = vadd.f32 %v1044, 1.0
      %v1046 = vmul.f32 %v1045, %v986
      %v1047 = vand.u32 2147483647, %v986
      %vm1048 = vcmp.lt.f32.partialorder %v1047, 0.0004427343
      %v1049 = vsel %vm1048, %v1046, %v1043
      %v1050 = vadd.f32 %v952, %v995
      %v1051 = vadd.f32 %v953, %v1004
      %v1052 = vadd.f32 %v954, %v1013
      %v1053 = vadd.f32 %v955, %v1022
      %v1054 = vadd.f32 %v956, %v1031
      %v1055 = vadd.f32 %v957, %v1040
      %v1056 = vadd.f32 %v958, %v1049
      %v1057 = vtanh.pop %v1050
      %v1058 = vtanh.pop %v1051
      %v1059 = vtanh.pop %v1052
      %v1060 = vtanh.pop %v1053
      %v1061 = vtanh.pop %v1054
      %v1062 = vtanh.pop %v1055
      %v1063 = vtanh.pop %v1056
      %v1064 = vmul.f32 %v945, %v1057
      %v1065 = vmul.f32 %v946, %v1058
      %v1066 = vmul.f32 %v947, %v1059
      %v1067 = vmul.f32 %v948, %v1060
      %v1068 = vmul.f32 %v949, %v1061
      %v1069 = vmul.f32 %v950, %v1062
      %v1070 = vmul.f32 %v951, %v1063
      %v1071 = vld [vmem:[%s1] sm:$0xff]
      %v1072 = vld [vmem:[%s1 + $0x8] sm:$0xff]
      %v1073 = vld [vmem:[%s1 + $0x10] sm:$0xff]
      %v1074 = vld [vmem:[%s1 + $0x18] sm:$0xff]
      %v1075 = vld [vmem:[%s1 + $0x20] sm:$0xff]
      %v1076 = vld [vmem:[%s1 + $0x28] sm:$0xff]
      %v1077 = vld [vmem:[%s1 + $0x30] sm:$0x3]
      %1085 = vrot.lane.b32.xlu0 %v1064, 122
      %v1086 = vpop.permute.xlu0 %1085
      %1087 = vrot.lane.b32.xlu0 %v1065, 122
      %v1088 = vpop.permute.xlu0 %1087
      %1089 = vrot.lane.b32.xlu0 %v1066, 122
      %v1090 = vpop.permute.xlu0 %1089
      %1091 = vrot.lane.b32.xlu0 %v1067, 122
      %v1092 = vpop.permute.xlu0 %1091
      %1093 = vrot.lane.b32.xlu0 %v1068, 122
      %v1094 = vpop.permute.xlu0 %1093
      %1095 = vrot.lane.b32.xlu0 %v1069, 122
      %v1096 = vpop.permute.xlu0 %1095
      %1097 = vrot.lane.b32.xlu0 %v1070, 122
      %v1098 = vpop.permute.xlu0 %1097
      %vm1105 = vcmask 408576
      %v1107 = vsel %vm1105, %v1071, 0
      %v1110 = vsel %vm1105, %v1072, 0
      %v1113 = vsel %vm1105, %v1073, 0
      %v1116 = vsel %vm1105, %v1074, 0
      %v1119 = vsel %vm1105, %v1075, 0
      %v1122 = vsel %vm1105, %v1076, 0
      %v1125 = vsel %vm1105, %v1077, 0
      %vm1127 = vcmask 1041408
      %v1128 = vsel %vm1127, %v1098, 0
      %1130 = vmatprep.subr.mxu0 0.0
      %1131 = vmatpush1.msra.mxu0 %v1086
      %1132 = vmatprep.subr.mxu0 0.0
      %1133 = vmatpush1.msra.mxu0 %v1088
      %1134 = vmatprep.subr.mxu0 0.0
      %1135 = vmatpush1.msra.mxu0 %v1090
      %1136 = vmatprep.subr.mxu0 0.0
      %1137 = vmatpush1.msra.mxu0 %v1092
      %1138 = vmatprep.subr.mxu0 0.0
      %1139 = vmatpush1.msra.mxu0 %v1094
      %1140 = vmatprep.subr.mxu0 0.0
      %1141 = vmatpush1.msra.mxu0 %v1096
      %1142 = vmatprep.subr.mxu0 0.0
      %1143 = vmatpush1.msra.mxu0 %v1128
      %1144 = vmatprep.subr.mxu0 0.0
      %1145 = vmatpush1.msra.mxu0 0.0
      %1146 = vmatprep.subr.mxu0 0.0
      %1147 = vmatpush1.msra.mxu0 0.0
      %1148 = vmatprep.subr.mxu0 0.0
      %1149 = vmatpush1.msra.mxu0 0.0
      %1150 = vmatprep.subr.mxu0 0.0
      %1151 = vmatpush1.msra.mxu0 0.0
      %1152 = vmatprep.subr.mxu0 0.0
      %1153 = vmatpush1.msra.mxu0 0.0
      %1154 = vmatprep.subr.mxu0 0.0
      %1155 = vmatpush1.msra.mxu0 0.0
      %1156 = vmatprep.subr.mxu0 0.0
      %1157 = vmatpush1.msra.mxu0 0.0
      %1158 = vmatprep.subr.mxu0 0.0
      %1159 = vmatpush1.msra.mxu0 0.0
      %1160 = vmatprep.subr.mxu0 0.0
      %1161 = vmatpush1.msra.mxu0 0.0
      %1162 = vmatprep.subr.mxu0 0.0
      %1163 = vmatpush1.msra.mxu0 0.0
      %1164 = vmatprep.subr.mxu0 0.0
      %1165 = vmatpush1.msra.mxu0 0.0
      %1166 = vmatprep.subr.mxu0 0.0
      %1167 = vmatpush1.msra.mxu0 0.0
      %1168 = vmatprep.subr.mxu0 0.0
      %1169 = vmatpush1.msra.mxu0 0.0
      %1170 = vmatprep.subr.mxu0 0.0
      %1171 = vmatpush1.msra.mxu0 0.0
      %1172 = vmatprep.subr.mxu0 0.0
      %1173 = vmatpush1.msra.mxu0 0.0
      %1174 = vmatprep.subr.mxu0 0.0
      %1175 = vmatpush1.msra.mxu0 0.0
      %1176 = vmatprep.subr.mxu0 0.0
      %1177 = vmatpush1.msra.mxu0 0.0
      %1178 = vmatprep.subr.mxu0 0.0
      %1179 = vmatpush1.msra.mxu0 0.0
      %1180 = vmatprep.subr.mxu0 0.0
      %1181 = vmatpush1.msra.mxu0 0.0
      %1182 = vmatprep.subr.mxu0 0.0
      %1183 = vmatpush1.msra.mxu0 0.0
      %1184 = vmatprep.subr.mxu0 0.0
      %1185 = vmatpush1.msra.mxu0 0.0
      %1186 = vmatprep.subr.mxu0 0.0
      %1187 = vmatpush1.msra.mxu0 0.0
      %1188 = vmatprep.subr.mxu0 0.0
      %1189 = vmatpush1.msra.mxu0 0.0
      %1190 = vmatprep.subr.mxu0 0.0
      %1191 = vmatpush1.msra.mxu0 0.0
      %1192 = vmatprep.subr.mxu0 0.0
      %1193 = vmatpush1.msra.mxu0 0.0
      %1194 = vmatprep.mubr.f32.mxu0 0.0
      %1195 = vmatmul.mubr.f32.gmra.mrb[0].mxu0 %v1107
      %v1196 = vpop.f32.mrb[0].mxu0
      %v1197 = vadd.f32 0.0, %v1196
      %v1198 = vpop.f32.mrb[0].mxu0
      %1199 = vmatprep.mubr.f32.mxu0 0.0
      %1200 = vmatmul.mubr.f32.gmra.mrb[0].mxu0 %v1110
      %v1201 = vpop.f32.mrb[0].mxu0
      %v1202 = vadd.f32 0.0, %v1201
      %v1203 = vpop.f32.mrb[0].mxu0
      %1204 = vmatprep.mubr.f32.mxu0 0.0
      %1205 = vmatmul.mubr.f32.gmra.mrb[0].mxu0 %v1113
      %v1206 = vpop.f32.mrb[0].mxu0
      %v1207 = vadd.f32 0.0, %v1206
      %v1208 = vpop.f32.mrb[0].mxu0
      %1209 = vmatprep.mubr.f32.mxu0 0.0
      %1210 = vmatmul.mubr.f32.gmra.mrb[0].mxu0 %v1116
      %v1211 = vpop.f32.mrb[0].mxu0
      %v1212 = vadd.f32 0.0, %v1211
      %v1213 = vpop.f32.mrb[0].mxu0
      %1214 = vmatprep.mubr.f32.mxu0 0.0
      %1215 = vmatmul.mubr.f32.gmra.mrb[0].mxu0 %v1119
      %v1216 = vpop.f32.mrb[0].mxu0
      %v1217 = vadd.f32 0.0, %v1216
      %v1218 = vpop.f32.mrb[0].mxu0
      %1219 = vmatprep.mubr.f32.mxu0 0.0
      %1220 = vmatmul.mubr.f32.gmra.mrb[0].mxu0 %v1122
      %v1221 = vpop.f32.mrb[0].mxu0
      %v1222 = vadd.f32 0.0, %v1221
      %v1223 = vpop.f32.mrb[0].mxu0
      %1224 = vmatprep.mubr.f32.mxu0 0.0
      %1225 = vmatmul.mubr.f32.gmra.mrb[0].mxu0 %v1125
      %v1226 = vpop.f32.mrb[0].mxu0
      %v1227 = vadd.f32 0.0, %v1226
      %v1228 = vpop.f32.mrb[0].mxu0
      %1229 = vdwg.mxu0
      %s1230 = scalar_lea.vmem %s1, 56
      %v1231 = vld [vmem:[%s1230] sm:$0xff]
      %v1232 = vld [vmem:[%s1230 + $0x8] sm:$0xff]
      %v1233 = vld [vmem:[%s1230 + $0x10] sm:$0xff]
      %v1234 = vld [vmem:[%s1230 + $0x18] sm:$0xff]
      %v1235 = vld [vmem:[%s1230 + $0x20] sm:$0xff]
      %v1236 = vld [vmem:[%s1230 + $0x28] sm:$0xff]
      %v1237 = vld [vmem:[%s1230 + $0x30] sm:$0x3]
      %v1239 = vsel %vm1105, %v1231, 0
      %v1242 = vsel %vm1105, %v1232, 0
      %v1245 = vsel %vm1105, %v1233, 0
      %v1248 = vsel %vm1105, %v1234, 0
      %v1251 = vsel %vm1105, %v1235, 0
      %v1254 = vsel %vm1105, %v1236, 0
      %v1257 = vsel %vm1105, %v1237, 0
      %1259 = vmatprep.subr.mxu0 0.0
      %1260 = vmatpush1.msra.mxu0 %v1086
      %1261 = vmatprep.subr.mxu0 0.0
      %1262 = vmatpush1.msra.mxu0 %v1088
      %1263 = vmatprep.subr.mxu0 0.0
      %1264 = vmatpush1.msra.mxu0 %v1090
      %1265 = vmatprep.subr.mxu0 0.0
      %1266 = vmatpush1.msra.mxu0 %v1092
      %1267 = vmatprep.subr.mxu0 0.0
      %1268 = vmatpush1.msra.mxu0 %v1094
      %1269 = vmatprep.subr.mxu0 0.0
      %1270 = vmatpush1.msra.mxu0 %v1096
      %1271 = vmatprep.subr.mxu0 0.0
      %1272 = vmatpush1.msra.mxu0 %v1128
      %1273 = vmatprep.subr.mxu0 0.0
      %1274 = vmatpush1.msra.mxu0 0.0
      %1275 = vmatprep.subr.mxu0 0.0
      %1276 = vmatpush1.msra.mxu0 0.0
      %1277 = vmatprep.subr.mxu0 0.0
      %1278 = vmatpush1.msra.mxu0 0.0
      %1279 = vmatprep.subr.mxu0 0.0
      %1280 = vmatpush1.msra.mxu0 0.0
      %1281 = vmatprep.subr.mxu0 0.0
      %1282 = vmatpush1.msra.mxu0 0.0
      %1283 = vmatprep.subr.mxu0 0.0
      %1284 = vmatpush1.msra.mxu0 0.0
      %1285 = vmatprep.subr.mxu0 0.0
      %1286 = vmatpush1.msra.mxu0 0.0
      %1287 = vmatprep.subr.mxu0 0.0
      %1288 = vmatpush1.msra.mxu0 0.0
      %1289 = vmatprep.subr.mxu0 0.0
      %1290 = vmatpush1.msra.mxu0 0.0
      %1291 = vmatprep.subr.mxu0 0.0
      %1292 = vmatpush1.msra.mxu0 0.0
      %1293 = vmatprep.subr.mxu0 0.0
      %1294 = vmatpush1.msra.mxu0 0.0
      %1295 = vmatprep.subr.mxu0 0.0
      %1296 = vmatpush1.msra.mxu0 0.0
      %1297 = vmatprep.subr.mxu0 0.0
      %1298 = vmatpush1.msra.mxu0 0.0
      %1299 = vmatprep.subr.mxu0 0.0
      %1300 = vmatpush1.msra.mxu0 0.0
      %1301 = vmatprep.subr.mxu0 0.0
      %1302 = vmatpush1.msra.mxu0 0.0
      %1303 = vmatprep.subr.mxu0 0.0
      %1304 = vmatpush1.msra.mxu0 0.0
      %1305 = vmatprep.subr.mxu0 0.0
      %1306 = vmatpush1.msra.mxu0 0.0
      %1307 = vmatprep.subr.mxu0 0.0
      %1308 = vmatpush1.msra.mxu0 0.0
      %1309 = vmatprep.subr.mxu0 0.0
      %1310 = vmatpush1.msra.mxu0 0.0
      %1311 = vmatprep.subr.mxu0 0.0
      %1312 = vmatpush1.msra.mxu0 0.0
      %1313 = vmatprep.subr.mxu0 0.0
      %1314 = vmatpush1.msra.mxu0 0.0
      %1315 = vmatprep.subr.mxu0 0.0
      %1316 = vmatpush1.msra.mxu0 0.0
      %1317 = vmatprep.subr.mxu0 0.0
      %1318 = vmatpush1.msra.mxu0 0.0
      %1319 = vmatprep.subr.mxu0 0.0
      %1320 = vmatpush1.msra.mxu0 0.0
      %1321 = vmatprep.subr.mxu0 0.0
      %1322 = vmatpush1.msra.mxu0 0.0
      %1323 = vmatprep.mubr.f32.mxu0 0.0
      %1324 = vmatmul.mubr.f32.gmra.mrb[0].mxu0 %v1239
      %v1325 = vpop.f32.mrb[0].mxu0
      %v1326 = vadd.f32 0.0, %v1325
      %v1327 = vpop.f32.mrb[0].mxu0
      %1328 = vmatprep.mubr.f32.mxu0 0.0
      %1329 = vmatmul.mubr.f32.gmra.mrb[0].mxu0 %v1242
      %v1330 = vpop.f32.mrb[0].mxu0
      %v1331 = vadd.f32 0.0, %v1330
      %v1332 = vpop.f32.mrb[0].mxu0
      %1333 = vmatprep.mubr.f32.mxu0 0.0
      %1334 = vmatmul.mubr.f32.gmra.mrb[0].mxu0 %v1245
      %v1335 = vpop.f32.mrb[0].mxu0
      %v1336 = vadd.f32 0.0, %v1335
      %v1337 = vpop.f32.mrb[0].mxu0
      %1338 = vmatprep.mubr.f32.mxu0 0.0
      %1339 = vmatmul.mubr.f32.gmra.mrb[0].mxu0 %v1248
      %v1340 = vpop.f32.mrb[0].mxu0
      %v1341 = vadd.f32 0.0, %v1340
      %v1342 = vpop.f32.mrb[0].mxu0
      %1343 = vmatprep.mubr.f32.mxu0 0.0
      %1344 = vmatmul.mubr.f32.gmra.mrb[0].mxu0 %v1251
      %v1345 = vpop.f32.mrb[0].mxu0
      %v1346 = vadd.f32 0.0, %v1345
      %v1347 = vpop.f32.mrb[0].mxu0
      %1348 = vmatprep.mubr.f32.mxu0 0.0
      %1349 = vmatmul.mubr.f32.gmra.mrb[0].mxu0 %v1254
      %v1350 = vpop.f32.mrb[0].mxu0
      %v1351 = vadd.f32 0.0, %v1350
      %v1352 = vpop.f32.mrb[0].mxu0
      %1353 = vmatprep.mubr.f32.mxu0 0.0
      %1354 = vmatmul.mubr.f32.gmra.mrb[0].mxu0 %v1257
      %v1355 = vpop.f32.mrb[0].mxu0
      %v1356 = vadd.f32 0.0, %v1355
      %v1357 = vpop.f32.mrb[0].mxu0
      %1358 = vdwg.mxu0
      %s1359 = scalar_lea.vmem %s1, 112
      %v1360 = vld [vmem:[%s1359] sm:$0xff]
      %v1361 = vld [vmem:[%s1359 + $0x8] sm:$0xff]
      %v1362 = vld [vmem:[%s1359 + $0x10] sm:$0xff]
      %v1363 = vld [vmem:[%s1359 + $0x18] sm:$0xff]
      %v1364 = vld [vmem:[%s1359 + $0x20] sm:$0xff]
      %v1365 = vld [vmem:[%s1359 + $0x28] sm:$0xff]
      %v1366 = vld [vmem:[%s1359 + $0x30] sm:$0x3]
      %v1368 = vsel %vm1105, %v1360, 0
      %v1371 = vsel %vm1105, %v1361, 0
      %v1374 = vsel %vm1105, %v1362, 0
      %v1377 = vsel %vm1105, %v1363, 0
      %v1380 = vsel %vm1105, %v1364, 0
      %v1383 = vsel %vm1105, %v1365, 0
      %v1386 = vsel %vm1105, %v1366, 0
      %1388 = vmatprep.subr.mxu0 0.0
      %1389 = vmatpush1.msra.mxu0 %v1086
      %1390 = vmatprep.subr.mxu0 0.0
      %1391 = vmatpush1.msra.mxu0 %v1088
      %1392 = vmatprep.subr.mxu0 0.0
      %1393 = vmatpush1.msra.mxu0 %v1090
      %1394 = vmatprep.subr.mxu0 0.0
      %1395 = vmatpush1.msra.mxu0 %v1092
      %1396 = vmatprep.subr.mxu0 0.0
      %1397 = vmatpush1.msra.mxu0 %v1094
      %1398 = vmatprep.subr.mxu0 0.0
      %1399 = vmatpush1.msra.mxu0 %v1096
      %1400 = vmatprep.subr.mxu0 0.0
      %1401 = vmatpush1.msra.mxu0 %v1128
      %1402 = vmatprep.subr.mxu0 0.0
      %1403 = vmatpush1.msra.mxu0 0.0
      %1404 = vmatprep.subr.mxu0 0.0
      %1405 = vmatpush1.msra.mxu0 0.0
      %1406 = vmatprep.subr.mxu0 0.0
      %1407 = vmatpush1.msra.mxu0 0.0
      %1408 = vmatprep.subr.mxu0 0.0
      %1409 = vmatpush1.msra.mxu0 0.0
      %1410 = vmatprep.subr.mxu0 0.0
      %1411 = vmatpush1.msra.mxu0 0.0
      %1412 = vmatprep.subr.mxu0 0.0
      %1413 = vmatpush1.msra.mxu0 0.0
      %1414 = vmatprep.subr.mxu0 0.0
      %1415 = vmatpush1.msra.mxu0 0.0
      %1416 = vmatprep.subr.mxu0 0.0
      %1417 = vmatpush1.msra.mxu0 0.0
      %1418 = vmatprep.subr.mxu0 0.0
      %1419 = vmatpush1.msra.mxu0 0.0
      %1420 = vmatprep.subr.mxu0 0.0
      %1421 = vmatpush1.msra.mxu0 0.0
      %1422 = vmatprep.subr.mxu0 0.0
      %1423 = vmatpush1.msra.mxu0 0.0
      %1424 = vmatprep.subr.mxu0 0.0
      %1425 = vmatpush1.msra.mxu0 0.0
      %1426 = vmatprep.subr.mxu0 0.0
      %1427 = vmatpush1.msra.mxu0 0.0
      %1428 = vmatprep.subr.mxu0 0.0
      %1429 = vmatpush1.msra.mxu0 0.0
      %1430 = vmatprep.subr.mxu0 0.0
      %1431 = vmatpush1.msra.mxu0 0.0
      %1432 = vmatprep.subr.mxu0 0.0
      %1433 = vmatpush1.msra.mxu0 0.0
      %1434 = vmatprep.subr.mxu0 0.0
      %1435 = vmatpush1.msra.mxu0 0.0
      %1436 = vmatprep.subr.mxu0 0.0
      %1437 = vmatpush1.msra.mxu0 0.0
      %1438 = vmatprep.subr.mxu0 0.0
      %1439 = vmatpush1.msra.mxu0 0.0
      %1440 = vmatprep.subr.mxu0 0.0
      %1441 = vmatpush1.msra.mxu0 0.0
      %1442 = vmatprep.subr.mxu0 0.0
      %1443 = vmatpush1.msra.mxu0 0.0
      %1444 = vmatprep.subr.mxu0 0.0
      %1445 = vmatpush1.msra.mxu0 0.0
      %1446 = vmatprep.subr.mxu0 0.0
      %1447 = vmatpush1.msra.mxu0 0.0
      %1448 = vmatprep.subr.mxu0 0.0
      %1449 = vmatpush1.msra.mxu0 0.0
      %1450 = vmatprep.subr.mxu0 0.0
      %1451 = vmatpush1.msra.mxu0 0.0
      %1452 = vmatprep.mubr.f32.mxu0 0.0
      %1453 = vmatmul.mubr.f32.gmra.mrb[0].mxu0 %v1368
      %v1454 = vpop.f32.mrb[0].mxu0
      %v1455 = vadd.f32 0.0, %v1454
      %v1456 = vpop.f32.mrb[0].mxu0
      %1457 = vmatprep.mubr.f32.mxu0 0.0
      %1458 = vmatmul.mubr.f32.gmra.mrb[0].mxu0 %v1371
      %v1459 = vpop.f32.mrb[0].mxu0
      %v1460 = vadd.f32 0.0, %v1459
      %v1461 = vpop.f32.mrb[0].mxu0
      %1462 = vmatprep.mubr.f32.mxu0 0.0
      %1463 = vmatmul.mubr.f32.gmra.mrb[0].mxu0 %v1374
      %v1464 = vpop.f32.mrb[0].mxu0
      %v1465 = vadd.f32 0.0, %v1464
      %v1466 = vpop.f32.mrb[0].mxu0
      %1467 = vmatprep.mubr.f32.mxu0 0.0
      %1468 = vmatmul.mubr.f32.gmra.mrb[0].mxu0 %v1377
      %v1469 = vpop.f32.mrb[0].mxu0
      %v1470 = vadd.f32 0.0, %v1469
      %v1471 = vpop.f32.mrb[0].mxu0
      %1472 = vmatprep.mubr.f32.mxu0 0.0
      %1473 = vmatmul.mubr.f32.gmra.mrb[0].mxu0 %v1380
      %v1474 = vpop.f32.mrb[0].mxu0
      %v1475 = vadd.f32 0.0, %v1474
      %v1476 = vpop.f32.mrb[0].mxu0
      %1477 = vmatprep.mubr.f32.mxu0 0.0
      %1478 = vmatmul.mubr.f32.gmra.mrb[0].mxu0 %v1383
      %v1479 = vpop.f32.mrb[0].mxu0
      %v1480 = vadd.f32 0.0, %v1479
      %v1481 = vpop.f32.mrb[0].mxu0
      %1482 = vmatprep.mubr.f32.mxu0 0.0
      %1483 = vmatmul.mubr.f32.gmra.mrb[0].mxu0 %v1386
      %v1484 = vpop.f32.mrb[0].mxu0
      %v1485 = vadd.f32 0.0, %v1484
      %v1486 = vpop.f32.mrb[0].mxu0
      %1487 = vdwg.mxu0
      %s1488 = scalar_lea.vmem %s1, 168
      %v1489 = vld [vmem:[%s1488] sm:$0xff]
      %v1490 = vld [vmem:[%s1488 + $0x8] sm:$0xff]
      %v1491 = vld [vmem:[%s1488 + $0x10] sm:$0xff]
      %v1492 = vld [vmem:[%s1488 + $0x18] sm:$0xff]
      %v1493 = vld [vmem:[%s1488 + $0x20] sm:$0xff]
      %v1494 = vld [vmem:[%s1488 + $0x28] sm:$0xff]
      %v1495 = vld [vmem:[%s1488 + $0x30] sm:$0x3]
      %v1497 = vsel %vm1105, %v1489, 0
      %v1500 = vsel %vm1105, %v1490, 0
      %v1503 = vsel %vm1105, %v1491, 0
      %v1506 = vsel %vm1105, %v1492, 0
      %v1509 = vsel %vm1105, %v1493, 0
      %v1512 = vsel %vm1105, %v1494, 0
      %v1515 = vsel %vm1105, %v1495, 0
      %1517 = vmatprep.subr.mxu0 0.0
      %1518 = vmatpush1.msra.mxu0 %v1086
      %1519 = vmatprep.subr.mxu0 0.0
      %1520 = vmatpush1.msra.mxu0 %v1088
      %1521 = vmatprep.subr.mxu0 0.0
      %1522 = vmatpush1.msra.mxu0 %v1090
      %1523 = vmatprep.subr.mxu0 0.0
      %1524 = vmatpush1.msra.mxu0 %v1092
      %1525 = vmatprep.subr.mxu0 0.0
      %1526 = vmatpush1.msra.mxu0 %v1094
      %1527 = vmatprep.subr.mxu0 0.0
      %1528 = vmatpush1.msra.mxu0 %v1096
      %1529 = vmatprep.subr.mxu0 0.0
      %1530 = vmatpush1.msra.mxu0 %v1128
      %1531 = vmatprep.subr.mxu0 0.0
      %1532 = vmatpush1.msra.mxu0 0.0
      %1533 = vmatprep.subr.mxu0 0.0
      %1534 = vmatpush1.msra.mxu0 0.0
      %1535 = vmatprep.subr.mxu0 0.0
      %1536 = vmatpush1.msra.mxu0 0.0
      %1537 = vmatprep.subr.mxu0 0.0
      %1538 = vmatpush1.msra.mxu0 0.0
      %1539 = vmatprep.subr.mxu0 0.0
      %1540 = vmatpush1.msra.mxu0 0.0
      %1541 = vmatprep.subr.mxu0 0.0
      %1542 = vmatpush1.msra.mxu0 0.0
      %1543 = vmatprep.subr.mxu0 0.0
      %1544 = vmatpush1.msra.mxu0 0.0
      %1545 = vmatprep.subr.mxu0 0.0
      %1546 = vmatpush1.msra.mxu0 0.0
      %1547 = vmatprep.subr.mxu0 0.0
      %1548 = vmatpush1.msra.mxu0 0.0
      %1549 = vmatprep.subr.mxu0 0.0
      %1550 = vmatpush1.msra.mxu0 0.0
      %1551 = vmatprep.subr.mxu0 0.0
      %1552 = vmatpush1.msra.mxu0 0.0
      %1553 = vmatprep.subr.mxu0 0.0
      %1554 = vmatpush1.msra.mxu0 0.0
      %1555 = vmatprep.subr.mxu0 0.0
      %1556 = vmatpush1.msra.mxu0 0.0
      %1557 = vmatprep.subr.mxu0 0.0
      %1558 = vmatpush1.msra.mxu0 0.0
      %1559 = vmatprep.subr.mxu0 0.0
      %1560 = vmatpush1.msra.mxu0 0.0
      %1561 = vmatprep.subr.mxu0 0.0
      %1562 = vmatpush1.msra.mxu0 0.0
      %1563 = vmatprep.subr.mxu0 0.0
      %1564 = vmatpush1.msra.mxu0 0.0
      %1565 = vmatprep.subr.mxu0 0.0
      %1566 = vmatpush1.msra.mxu0 0.0
      %1567 = vmatprep.subr.mxu0 0.0
      %1568 = vmatpush1.msra.mxu0 0.0
      %1569 = vmatprep.subr.mxu0 0.0
      %1570 = vmatpush1.msra.mxu0 0.0
      %1571 = vmatprep.subr.mxu0 0.0
      %1572 = vmatpush1.msra.mxu0 0.0
      %1573 = vmatprep.subr.mxu0 0.0
      %1574 = vmatpush1.msra.mxu0 0.0
      %1575 = vmatprep.subr.mxu0 0.0
      %1576 = vmatpush1.msra.mxu0 0.0
      %1577 = vmatprep.subr.mxu0 0.0
      %1578 = vmatpush1.msra.mxu0 0.0
      %1579 = vmatprep.subr.mxu0 0.0
      %1580 = vmatpush1.msra.mxu0 0.0
      %1581 = vmatprep.mubr.f32.mxu0 0.0
      %1582 = vmatmul.mubr.f32.gmra.mrb[0].mxu0 %v1497
      %v1583 = vpop.f32.mrb[0].mxu0
      %v1584 = vadd.f32 0.0, %v1583
      %v1585 = vpop.f32.mrb[0].mxu0
      %1586 = vmatprep.mubr.f32.mxu0 0.0
      %1587 = vmatmul.mubr.f32.gmra.mrb[0].mxu0 %v1500
      %v1588 = vpop.f32.mrb[0].mxu0
      %v1589 = vadd.f32 0.0, %v1588
      %v1590 = vpop.f32.mrb[0].mxu0
      %1591 = vmatprep.mubr.f32.mxu0 0.0
      %1592 = vmatmul.mubr.f32.gmra.mrb[0].mxu0 %v1503
      %v1593 = vpop.f32.mrb[0].mxu0
      %v1594 = vadd.f32 0.0, %v1593
      %v1595 = vpop.f32.mrb[0].mxu0
      %1596 = vmatprep.mubr.f32.mxu0 0.0
      %1597 = vmatmul.mubr.f32.gmra.mrb[0].mxu0 %v1506
      %v1598 = vpop.f32.mrb[0].mxu0
      %v1599 = vadd.f32 0.0, %v1598
      %v1600 = vpop.f32.mrb[0].mxu0
      %1601 = vmatprep.mubr.f32.mxu0 0.0
      %1602 = vmatmul.mubr.f32.gmra.mrb[0].mxu0 %v1509
      %v1603 = vpop.f32.mrb[0].mxu0
      %v1604 = vadd.f32 0.0, %v1603
      %v1605 = vpop.f32.mrb[0].mxu0
      %1606 = vmatprep.mubr.f32.mxu0 0.0
      %1607 = vmatmul.mubr.f32.gmra.mrb[0].mxu0 %v1512
      %v1608 = vpop.f32.mrb[0].mxu0
      %v1609 = vadd.f32 0.0, %v1608
      %v1610 = vpop.f32.mrb[0].mxu0
      %1611 = vmatprep.mubr.f32.mxu0 0.0
      %1612 = vmatmul.mubr.f32.gmra.mrb[0].mxu0 %v1515
      %v1613 = vpop.f32.mrb[0].mxu0
      %v1614 = vadd.f32 0.0, %v1613
      %v1615 = vpop.f32.mrb[0].mxu0
      %1616 = vdwg.mxu0
      %s1617 = scalar_lea.vmem %s1, 224
      %v1618 = vld [vmem:[%s1617] sm:$0xff]
      %v1619 = vld [vmem:[%s1617 + $0x8] sm:$0xff]
      %v1620 = vld [vmem:[%s1617 + $0x10] sm:$0xff]
      %v1621 = vld [vmem:[%s1617 + $0x18] sm:$0xff]
      %v1622 = vld [vmem:[%s1617 + $0x20] sm:$0xff]
      %v1623 = vld [vmem:[%s1617 + $0x28] sm:$0xff]
      %v1624 = vld [vmem:[%s1617 + $0x30] sm:$0x3]
      %v1626 = vsel %vm1105, %v1618, 0
      %v1629 = vsel %vm1105, %v1619, 0
      %v1632 = vsel %vm1105, %v1620, 0
      %v1635 = vsel %vm1105, %v1621, 0
      %v1638 = vsel %vm1105, %v1622, 0
      %v1641 = vsel %vm1105, %v1623, 0
      %v1644 = vsel %vm1105, %v1624, 0
      %1646 = vmatprep.subr.mxu0 0.0
      %1647 = vmatpush1.msra.mxu0 %v1086
      %1648 = vmatprep.subr.mxu0 0.0
      %1649 = vmatpush1.msra.mxu0 %v1088
      %1650 = vmatprep.subr.mxu0 0.0
      %1651 = vmatpush1.msra.mxu0 %v1090
      %1652 = vmatprep.subr.mxu0 0.0
      %1653 = vmatpush1.msra.mxu0 %v1092
      %1654 = vmatprep.subr.mxu0 0.0
      %1655 = vmatpush1.msra.mxu0 %v1094
      %1656 = vmatprep.subr.mxu0 0.0
      %1657 = vmatpush1.msra.mxu0 %v1096
      %1658 = vmatprep.subr.mxu0 0.0
      %1659 = vmatpush1.msra.mxu0 %v1128
      %1660 = vmatprep.subr.mxu0 0.0
      %1661 = vmatpush1.msra.mxu0 0.0
      %1662 = vmatprep.subr.mxu0 0.0
      %1663 = vmatpush1.msra.mxu0 0.0
      %1664 = vmatprep.subr.mxu0 0.0
      %1665 = vmatpush1.msra.mxu0 0.0
      %1666 = vmatprep.subr.mxu0 0.0
      %1667 = vmatpush1.msra.mxu0 0.0
      %1668 = vmatprep.subr.mxu0 0.0
      %1669 = vmatpush1.msra.mxu0 0.0
      %1670 = vmatprep.subr.mxu0 0.0
      %1671 = vmatpush1.msra.mxu0 0.0
      %1672 = vmatprep.subr.mxu0 0.0
      %1673 = vmatpush1.msra.mxu0 0.0
      %1674 = vmatprep.subr.mxu0 0.0
      %1675 = vmatpush1.msra.mxu0 0.0
      %1676 = vmatprep.subr.mxu0 0.0
      %1677 = vmatpush1.msra.mxu0 0.0
      %1678 = vmatprep.subr.mxu0 0.0
      %1679 = vmatpush1.msra.mxu0 0.0
      %1680 = vmatprep.subr.mxu0 0.0
      %1681 = vmatpush1.msra.mxu0 0.0
      %1682 = vmatprep.subr.mxu0 0.0
      %1683 = vmatpush1.msra.mxu0 0.0
      %1684 = vmatprep.subr.mxu0 0.0
      %1685 = vmatpush1.msra.mxu0 0.0
      %1686 = vmatprep.subr.mxu0 0.0
      %1687 = vmatpush1.msra.mxu0 0.0
      %1688 = vmatprep.subr.mxu0 0.0
      %1689 = vmatpush1.msra.mxu0 0.0
      %1690 = vmatprep.subr.mxu0 0.0
      %1691 = vmatpush1.msra.mxu0 0.0
      %1692 = vmatprep.subr.mxu0 0.0
      %1693 = vmatpush1.msra.mxu0 0.0
      %1694 = vmatprep.subr.mxu0 0.0
      %1695 = vmatpush1.msra.mxu0 0.0
      %1696 = vmatprep.subr.mxu0 0.0
      %1697 = vmatpush1.msra.mxu0 0.0
      %1698 = vmatprep.subr.mxu0 0.0
      %1699 = vmatpush1.msra.mxu0 0.0
      %1700 = vmatprep.subr.mxu0 0.0
      %1701 = vmatpush1.msra.mxu0 0.0
      %1702 = vmatprep.subr.mxu0 0.0
      %1703 = vmatpush1.msra.mxu0 0.0
      %1704 = vmatprep.subr.mxu0 0.0
      %1705 = vmatpush1.msra.mxu0 0.0
      %1706 = vmatprep.subr.mxu0 0.0
      %1707 = vmatpush1.msra.mxu0 0.0
      %1708 = vmatprep.subr.mxu0 0.0
      %1709 = vmatpush1.msra.mxu0 0.0
      %1710 = vmatprep.mubr.f32.mxu0 0.0
      %1711 = vmatmul.mubr.f32.gmra.mrb[0].mxu0 %v1626
      %v1712 = vpop.f32.mrb[0].mxu0
      %v1713 = vadd.f32 0.0, %v1712
      %v1714 = vpop.f32.mrb[0].mxu0
      %1715 = vmatprep.mubr.f32.mxu0 0.0
      %1716 = vmatmul.mubr.f32.gmra.mrb[0].mxu0 %v1629
      %v1717 = vpop.f32.mrb[0].mxu0
      %v1718 = vadd.f32 0.0, %v1717
      %v1719 = vpop.f32.mrb[0].mxu0
      %1720 = vmatprep.mubr.f32.mxu0 0.0
      %1721 = vmatmul.mubr.f32.gmra.mrb[0].mxu0 %v1632
      %v1722 = vpop.f32.mrb[0].mxu0
      %v1723 = vadd.f32 0.0, %v1722
      %v1724 = vpop.f32.mrb[0].mxu0
      %1725 = vmatprep.mubr.f32.mxu0 0.0
      %1726 = vmatmul.mubr.f32.gmra.mrb[0].mxu0 %v1635
      %v1727 = vpop.f32.mrb[0].mxu0
      %v1728 = vadd.f32 0.0, %v1727
      %v1729 = vpop.f32.mrb[0].mxu0
      %1730 = vmatprep.mubr.f32.mxu0 0.0
      %1731 = vmatmul.mubr.f32.gmra.mrb[0].mxu0 %v1638
      %v1732 = vpop.f32.mrb[0].mxu0
      %v1733 = vadd.f32 0.0, %v1732
      %v1734 = vpop.f32.mrb[0].mxu0
      %1735 = vmatprep.mubr.f32.mxu0 0.0
      %1736 = vmatmul.mubr.f32.gmra.mrb[0].mxu0 %v1641
      %v1737 = vpop.f32.mrb[0].mxu0
      %v1738 = vadd.f32 0.0, %v1737
      %v1739 = vpop.f32.mrb[0].mxu0
      %1740 = vmatprep.mubr.f32.mxu0 0.0
      %1741 = vmatmul.mubr.f32.gmra.mrb[0].mxu0 %v1644
      %v1742 = vpop.f32.mrb[0].mxu0
      %v1743 = vadd.f32 0.0, %v1742
      %v1744 = vpop.f32.mrb[0].mxu0
      %1745 = vdwg.mxu0
      %s1746 = scalar_lea.vmem %s1, 280
      %v1747 = vld [vmem:[%s1746] sm:$0xff]
      %v1748 = vld [vmem:[%s1746 + $0x8] sm:$0xff]
      %v1749 = vld [vmem:[%s1746 + $0x10] sm:$0xff]
      %v1750 = vld [vmem:[%s1746 + $0x18] sm:$0xff]
      %v1751 = vld [vmem:[%s1746 + $0x20] sm:$0xff]
      %v1752 = vld [vmem:[%s1746 + $0x28] sm:$0xff]
      %v1753 = vld [vmem:[%s1746 + $0x30] sm:$0x3]
      %v1755 = vsel %vm1105, %v1747, 0
      %v1758 = vsel %vm1105, %v1748, 0
      %v1761 = vsel %vm1105, %v1749, 0
      %v1764 = vsel %vm1105, %v1750, 0
      %v1767 = vsel %vm1105, %v1751, 0
      %v1770 = vsel %vm1105, %v1752, 0
      %v1773 = vsel %vm1105, %v1753, 0
      %1775 = vmatprep.subr.mxu0 0.0
      %1776 = vmatpush1.msra.mxu0 %v1086
      %1777 = vmatprep.subr.mxu0 0.0
      %1778 = vmatpush1.msra.mxu0 %v1088
      %1779 = vmatprep.subr.mxu0 0.0
      %1780 = vmatpush1.msra.mxu0 %v1090
      %1781 = vmatprep.subr.mxu0 0.0
      %1782 = vmatpush1.msra.mxu0 %v1092
      %1783 = vmatprep.subr.mxu0 0.0
      %1784 = vmatpush1.msra.mxu0 %v1094
      %1785 = vmatprep.subr.mxu0 0.0
      %1786 = vmatpush1.msra.mxu0 %v1096
      %1787 = vmatprep.subr.mxu0 0.0
      %1788 = vmatpush1.msra.mxu0 %v1128
      %1789 = vmatprep.subr.mxu0 0.0
      %1790 = vmatpush1.msra.mxu0 0.0
      %1791 = vmatprep.subr.mxu0 0.0
      %1792 = vmatpush1.msra.mxu0 0.0
      %1793 = vmatprep.subr.mxu0 0.0
      %1794 = vmatpush1.msra.mxu0 0.0
      %1795 = vmatprep.subr.mxu0 0.0
      %1796 = vmatpush1.msra.mxu0 0.0
      %1797 = vmatprep.subr.mxu0 0.0
      %1798 = vmatpush1.msra.mxu0 0.0
      %1799 = vmatprep.subr.mxu0 0.0
      %1800 = vmatpush1.msra.mxu0 0.0
      %1801 = vmatprep.subr.mxu0 0.0
      %1802 = vmatpush1.msra.mxu0 0.0
      %1803 = vmatprep.subr.mxu0 0.0
      %1804 = vmatpush1.msra.mxu0 0.0
      %1805 = vmatprep.subr.mxu0 0.0
      %1806 = vmatpush1.msra.mxu0 0.0
      %1807 = vmatprep.subr.mxu0 0.0
      %1808 = vmatpush1.msra.mxu0 0.0
      %1809 = vmatprep.subr.mxu0 0.0
      %1810 = vmatpush1.msra.mxu0 0.0
      %1811 = vmatprep.subr.mxu0 0.0
      %1812 = vmatpush1.msra.mxu0 0.0
      %1813 = vmatprep.subr.mxu0 0.0
      %1814 = vmatpush1.msra.mxu0 0.0
      %1815 = vmatprep.subr.mxu0 0.0
      %1816 = vmatpush1.msra.mxu0 0.0
      %1817 = vmatprep.subr.mxu0 0.0
      %1818 = vmatpush1.msra.mxu0 0.0
      %1819 = vmatprep.subr.mxu0 0.0
      %1820 = vmatpush1.msra.mxu0 0.0
      %1821 = vmatprep.subr.mxu0 0.0
      %1822 = vmatpush1.msra.mxu0 0.0
      %1823 = vmatprep.subr.mxu0 0.0
      %1824 = vmatpush1.msra.mxu0 0.0
      %1825 = vmatprep.subr.mxu0 0.0
      %1826 = vmatpush1.msra.mxu0 0.0
      %1827 = vmatprep.subr.mxu0 0.0
      %1828 = vmatpush1.msra.mxu0 0.0
      %1829 = vmatprep.subr.mxu0 0.0
      %1830 = vmatpush1.msra.mxu0 0.0
      %1831 = vmatprep.subr.mxu0 0.0
      %1832 = vmatpush1.msra.mxu0 0.0
      %1833 = vmatprep.subr.mxu0 0.0
      %1834 = vmatpush1.msra.mxu0 0.0
      %1835 = vmatprep.subr.mxu0 0.0
      %1836 = vmatpush1.msra.mxu0 0.0
      %1837 = vmatprep.subr.mxu0 0.0
      %1838 = vmatpush1.msra.mxu0 0.0
      %1839 = vmatprep.mubr.f32.mxu0 0.0
      %1840 = vmatmul.mubr.f32.gmra.mrb[0].mxu0 %v1755
      %v1841 = vpop.f32.mrb[0].mxu0
      %v1842 = vadd.f32 0.0, %v1841
      %v1843 = vpop.f32.mrb[0].mxu0
      %1844 = vmatprep.mubr.f32.mxu0 0.0
      %1845 = vmatmul.mubr.f32.gmra.mrb[0].mxu0 %v1758
      %v1846 = vpop.f32.mrb[0].mxu0
      %v1847 = vadd.f32 0.0, %v1846
      %v1848 = vpop.f32.mrb[0].mxu0
      %1849 = vmatprep.mubr.f32.mxu0 0.0
      %1850 = vmatmul.mubr.f32.gmra.mrb[0].mxu0 %v1761
      %v1851 = vpop.f32.mrb[0].mxu0
      %v1852 = vadd.f32 0.0, %v1851
      %v1853 = vpop.f32.mrb[0].mxu0
      %1854 = vmatprep.mubr.f32.mxu0 0.0
      %1855 = vmatmul.mubr.f32.gmra.mrb[0].mxu0 %v1764
      %v1856 = vpop.f32.mrb[0].mxu0
      %v1857 = vadd.f32 0.0, %v1856
      %v1858 = vpop.f32.mrb[0].mxu0
      %1859 = vmatprep.mubr.f32.mxu0 0.0
      %1860 = vmatmul.mubr.f32.gmra.mrb[0].mxu0 %v1767
      %v1861 = vpop.f32.mrb[0].mxu0
      %v1862 = vadd.f32 0.0, %v1861
      %v1863 = vpop.f32.mrb[0].mxu0
      %1864 = vmatprep.mubr.f32.mxu0 0.0
      %1865 = vmatmul.mubr.f32.gmra.mrb[0].mxu0 %v1770
      %v1866 = vpop.f32.mrb[0].mxu0
      %v1867 = vadd.f32 0.0, %v1866
      %v1868 = vpop.f32.mrb[0].mxu0
      %1869 = vmatprep.mubr.f32.mxu0 0.0
      %1870 = vmatmul.mubr.f32.gmra.mrb[0].mxu0 %v1773
      %v1871 = vpop.f32.mrb[0].mxu0
      %v1872 = vadd.f32 0.0, %v1871
      %v1873 = vpop.f32.mrb[0].mxu0
      %1874 = vdwg.mxu0
      %s1875 = scalar_lea.vmem %s1, 336
      %v1876 = vld [vmem:[%s1875] sm:$0xff]
      %v1877 = vld [vmem:[%s1875 + $0x8] sm:$0xff]
      %v1878 = vld [vmem:[%s1875 + $0x10] sm:$0xff]
      %v1879 = vld [vmem:[%s1875 + $0x18] sm:$0xff]
      %v1880 = vld [vmem:[%s1875 + $0x20] sm:$0xff]
      %v1881 = vld [vmem:[%s1875 + $0x28] sm:$0xff]
      %v1882 = vld [vmem:[%s1875 + $0x30] sm:$0x3]
      %v1884 = vsel %vm1105, %v1876, 0
      %v1887 = vsel %vm1105, %v1877, 0
      %v1890 = vsel %vm1105, %v1878, 0
      %v1893 = vsel %vm1105, %v1879, 0
      %v1896 = vsel %vm1105, %v1880, 0
      %v1899 = vsel %vm1105, %v1881, 0
      %v1902 = vsel %vm1105, %v1882, 0
      %1904 = vmatprep.subr.mxu0 0.0
      %1905 = vmatpush1.msra.mxu0 %v1086
      %1906 = vmatprep.subr.mxu0 0.0
      %1907 = vmatpush1.msra.mxu0 %v1088
      %1908 = vmatprep.subr.mxu0 0.0
      %1909 = vmatpush1.msra.mxu0 %v1090
      %1910 = vmatprep.subr.mxu0 0.0
      %1911 = vmatpush1.msra.mxu0 %v1092
      %1912 = vmatprep.subr.mxu0 0.0
      %1913 = vmatpush1.msra.mxu0 %v1094
      %1914 = vmatprep.subr.mxu0 0.0
      %1915 = vmatpush1.msra.mxu0 %v1096
      %1916 = vmatprep.subr.mxu0 0.0
      %1917 = vmatpush1.msra.mxu0 %v1128
      %1918 = vmatprep.subr.mxu0 0.0
      %1919 = vmatpush1.msra.mxu0 0.0
      %1920 = vmatprep.subr.mxu0 0.0
      %1921 = vmatpush1.msra.mxu0 0.0
      %1922 = vmatprep.subr.mxu0 0.0
      %1923 = vmatpush1.msra.mxu0 0.0
      %1924 = vmatprep.subr.mxu0 0.0
      %1925 = vmatpush1.msra.mxu0 0.0
      %1926 = vmatprep.subr.mxu0 0.0
      %1927 = vmatpush1.msra.mxu0 0.0
      %1928 = vmatprep.subr.mxu0 0.0
      %1929 = vmatpush1.msra.mxu0 0.0
      %1930 = vmatprep.subr.mxu0 0.0
      %1931 = vmatpush1.msra.mxu0 0.0
      %1932 = vmatprep.subr.mxu0 0.0
      %1933 = vmatpush1.msra.mxu0 0.0
      %1934 = vmatprep.subr.mxu0 0.0
      %1935 = vmatpush1.msra.mxu0 0.0
      %1936 = vmatprep.subr.mxu0 0.0
      %1937 = vmatpush1.msra.mxu0 0.0
      %1938 = vmatprep.subr.mxu0 0.0
      %1939 = vmatpush1.msra.mxu0 0.0
      %1940 = vmatprep.subr.mxu0 0.0
      %1941 = vmatpush1.msra.mxu0 0.0
      %1942 = vmatprep.subr.mxu0 0.0
      %1943 = vmatpush1.msra.mxu0 0.0
      %1944 = vmatprep.subr.mxu0 0.0
      %1945 = vmatpush1.msra.mxu0 0.0
      %1946 = vmatprep.subr.mxu0 0.0
      %1947 = vmatpush1.msra.mxu0 0.0
      %1948 = vmatprep.subr.mxu0 0.0
      %1949 = vmatpush1.msra.mxu0 0.0
      %1950 = vmatprep.subr.mxu0 0.0
      %1951 = vmatpush1.msra.mxu0 0.0
      %1952 = vmatprep.subr.mxu0 0.0
      %1953 = vmatpush1.msra.mxu0 0.0
      %1954 = vmatprep.subr.mxu0 0.0
      %1955 = vmatpush1.msra.mxu0 0.0
      %1956 = vmatprep.subr.mxu0 0.0
      %1957 = vmatpush1.msra.mxu0 0.0
      %1958 = vmatprep.subr.mxu0 0.0
      %1959 = vmatpush1.msra.mxu0 0.0
      %1960 = vmatprep.subr.mxu0 0.0
      %1961 = vmatpush1.msra.mxu0 0.0
      %1962 = vmatprep.subr.mxu0 0.0
      %1963 = vmatpush1.msra.mxu0 0.0
      %1964 = vmatprep.subr.mxu0 0.0
      %1965 = vmatpush1.msra.mxu0 0.0
      %1966 = vmatprep.subr.mxu0 0.0
      %1967 = vmatpush1.msra.mxu0 0.0
      %1968 = vmatprep.mubr.f32.mxu0 0.0
      %1969 = vmatmul.mubr.f32.gmra.mrb[0].mxu0 %v1884
      %v1970 = vpop.f32.mrb[0].mxu0
      %v1971 = vadd.f32 0.0, %v1970
      %v1972 = vpop.f32.mrb[0].mxu0
      %1973 = vmatprep.mubr.f32.mxu0 0.0
      %1974 = vmatmul.mubr.f32.gmra.mrb[0].mxu0 %v1887
      %v1975 = vpop.f32.mrb[0].mxu0
      %v1976 = vadd.f32 0.0, %v1975
      %v1977 = vpop.f32.mrb[0].mxu0
      %1978 = vmatprep.mubr.f32.mxu0 0.0
      %1979 = vmatmul.mubr.f32.gmra.mrb[0].mxu0 %v1890
      %v1980 = vpop.f32.mrb[0].mxu0
      %v1981 = vadd.f32 0.0, %v1980
      %v1982 = vpop.f32.mrb[0].mxu0
      %1983 = vmatprep.mubr.f32.mxu0 0.0
      %1984 = vmatmul.mubr.f32.gmra.mrb[0].mxu0 %v1893
      %v1985 = vpop.f32.mrb[0].mxu0
      %v1986 = vadd.f32 0.0, %v1985
      %v1987 = vpop.f32.mrb[0].mxu0
      %1988 = vmatprep.mubr.f32.mxu0 0.0
      %1989 = vmatmul.mubr.f32.gmra.mrb[0].mxu0 %v1896
      %v1990 = vpop.f32.mrb[0].mxu0
      %v1991 = vadd.f32 0.0, %v1990
      %v1992 = vpop.f32.mrb[0].mxu0
      %1993 = vmatprep.mubr.f32.mxu0 0.0
      %1994 = vmatmul.mubr.f32.gmra.mrb[0].mxu0 %v1899
      %v1995 = vpop.f32.mrb[0].mxu0
      %v1996 = vadd.f32 0.0, %v1995
      %v1997 = vpop.f32.mrb[0].mxu0
      %1998 = vmatprep.mubr.f32.mxu0 0.0
      %1999 = vmatmul.mubr.f32.gmra.mrb[0].mxu0 %v1902
      %v2000 = vpop.f32.mrb[0].mxu0
      %v2001 = vadd.f32 0.0, %v2000
      %v2002 = vpop.f32.mrb[0].mxu0
      %2003 = vdwg.mxu0
      %s2004 = scalar_lea.vmem %s1, 392
      %v2005 = vld [vmem:[%s2004] sm:$0xff]
      %v2006 = vld [vmem:[%s2004 + $0x8] sm:$0xff]
      %v2007 = vld [vmem:[%s2004 + $0x10] sm:$0xff]
      %v2008 = vld [vmem:[%s2004 + $0x18] sm:$0xff]
      %v2009 = vld [vmem:[%s2004 + $0x20] sm:$0xff]
      %v2010 = vld [vmem:[%s2004 + $0x28] sm:$0xff]
      %v2011 = vld [vmem:[%s2004 + $0x30] sm:$0x3]
      %v2013 = vsel %vm1105, %v2005, 0
      %v2016 = vsel %vm1105, %v2006, 0
      %v2019 = vsel %vm1105, %v2007, 0
      %v2022 = vsel %vm1105, %v2008, 0
      %v2025 = vsel %vm1105, %v2009, 0
      %v2028 = vsel %vm1105, %v2010, 0
      %v2031 = vsel %vm1105, %v2011, 0
      %2033 = vmatprep.subr.mxu0 0.0
      %2034 = vmatpush1.msra.mxu0 %v1086
      %2035 = vmatprep.subr.mxu0 0.0
      %2036 = vmatpush1.msra.mxu0 %v1088
      %2037 = vmatprep.subr.mxu0 0.0
      %2038 = vmatpush1.msra.mxu0 %v1090
      %2039 = vmatprep.subr.mxu0 0.0
      %2040 = vmatpush1.msra.mxu0 %v1092
      %2041 = vmatprep.subr.mxu0 0.0
      %2042 = vmatpush1.msra.mxu0 %v1094
      %2043 = vmatprep.subr.mxu0 0.0
      %2044 = vmatpush1.msra.mxu0 %v1096
      %2045 = vmatprep.subr.mxu0 0.0
      %2046 = vmatpush1.msra.mxu0 %v1128
      %2047 = vmatprep.subr.mxu0 0.0
      %2048 = vmatpush1.msra.mxu0 0.0
      %2049 = vmatprep.subr.mxu0 0.0
      %2050 = vmatpush1.msra.mxu0 0.0
      %2051 = vmatprep.subr.mxu0 0.0
      %2052 = vmatpush1.msra.mxu0 0.0
      %2053 = vmatprep.subr.mxu0 0.0
      %2054 = vmatpush1.msra.mxu0 0.0
      %2055 = vmatprep.subr.mxu0 0.0
      %2056 = vmatpush1.msra.mxu0 0.0
      %2057 = vmatprep.subr.mxu0 0.0
      %2058 = vmatpush1.msra.mxu0 0.0
      %2059 = vmatprep.subr.mxu0 0.0
      %2060 = vmatpush1.msra.mxu0 0.0
      %2061 = vmatprep.subr.mxu0 0.0
      %2062 = vmatpush1.msra.mxu0 0.0
      %2063 = vmatprep.subr.mxu0 0.0
      %2064 = vmatpush1.msra.mxu0 0.0
      %2065 = vmatprep.subr.mxu0 0.0
      %2066 = vmatpush1.msra.mxu0 0.0
      %2067 = vmatprep.subr.mxu0 0.0
      %2068 = vmatpush1.msra.mxu0 0.0
      %2069 = vmatprep.subr.mxu0 0.0
      %2070 = vmatpush1.msra.mxu0 0.0
      %2071 = vmatprep.subr.mxu0 0.0
      %2072 = vmatpush1.msra.mxu0 0.0
      %2073 = vmatprep.subr.mxu0 0.0
      %2074 = vmatpush1.msra.mxu0 0.0
      %2075 = vmatprep.subr.mxu0 0.0
      %2076 = vmatpush1.msra.mxu0 0.0
      %2077 = vmatprep.subr.mxu0 0.0
      %2078 = vmatpush1.msra.mxu0 0.0
      %2079 = vmatprep.subr.mxu0 0.0
      %2080 = vmatpush1.msra.mxu0 0.0
      %2081 = vmatprep.subr.mxu0 0.0
      %2082 = vmatpush1.msra.mxu0 0.0
      %2083 = vmatprep.subr.mxu0 0.0
      %2084 = vmatpush1.msra.mxu0 0.0
      %2085 = vmatprep.subr.mxu0 0.0
      %2086 = vmatpush1.msra.mxu0 0.0
      %2087 = vmatprep.subr.mxu0 0.0
      %2088 = vmatpush1.msra.mxu0 0.0
      %2089 = vmatprep.subr.mxu0 0.0
      %2090 = vmatpush1.msra.mxu0 0.0
      %2091 = vmatprep.subr.mxu0 0.0
      %2092 = vmatpush1.msra.mxu0 0.0
      %2093 = vmatprep.subr.mxu0 0.0
      %2094 = vmatpush1.msra.mxu0 0.0
      %2095 = vmatprep.subr.mxu0 0.0
      %2096 = vmatpush1.msra.mxu0 0.0
      %2097 = vmatprep.mubr.f32.mxu0 0.0
      %2098 = vmatmul.mubr.f32.gmra.mrb[0].mxu0 %v2013
      %v2099 = vpop.f32.mrb[0].mxu0
      %v2100 = vadd.f32 0.0, %v2099
      %v2101 = vpop.f32.mrb[0].mxu0
      %2102 = vmatprep.mubr.f32.mxu0 0.0
      %2103 = vmatmul.mubr.f32.gmra.mrb[0].mxu0 %v2016
      %v2104 = vpop.f32.mrb[0].mxu0
      %v2105 = vadd.f32 0.0, %v2104
      %v2106 = vpop.f32.mrb[0].mxu0
      %2107 = vmatprep.mubr.f32.mxu0 0.0
      %2108 = vmatmul.mubr.f32.gmra.mrb[0].mxu0 %v2019
      %v2109 = vpop.f32.mrb[0].mxu0
      %v2110 = vadd.f32 0.0, %v2109
      %v2111 = vpop.f32.mrb[0].mxu0
      %2112 = vmatprep.mubr.f32.mxu0 0.0
      %2113 = vmatmul.mubr.f32.gmra.mrb[0].mxu0 %v2022
      %v2114 = vpop.f32.mrb[0].mxu0
      %v2115 = vadd.f32 0.0, %v2114
      %v2116 = vpop.f32.mrb[0].mxu0
      %2117 = vmatprep.mubr.f32.mxu0 0.0
      %2118 = vmatmul.mubr.f32.gmra.mrb[0].mxu0 %v2025
      %v2119 = vpop.f32.mrb[0].mxu0
      %v2120 = vadd.f32 0.0, %v2119
      %v2121 = vpop.f32.mrb[0].mxu0
      %2122 = vmatprep.mubr.f32.mxu0 0.0
      %2123 = vmatmul.mubr.f32.gmra.mrb[0].mxu0 %v2028
      %v2124 = vpop.f32.mrb[0].mxu0
      %v2125 = vadd.f32 0.0, %v2124
      %v2126 = vpop.f32.mrb[0].mxu0
      %2127 = vmatprep.mubr.f32.mxu0 0.0
      %2128 = vmatmul.mubr.f32.gmra.mrb[0].mxu0 %v2031
      %v2129 = vpop.f32.mrb[0].mxu0
      %v2130 = vadd.f32 0.0, %v2129
      %v2131 = vpop.f32.mrb[0].mxu0
      %2132 = vdwg.mxu0
      %s2133 = scalar_lea.vmem %s1, 448
      %v2134 = vld [vmem:[%s2133] sm:$0xff]
      %v2135 = vld [vmem:[%s2133 + $0x8] sm:$0xff]
      %v2136 = vld [vmem:[%s2133 + $0x10] sm:$0xff]
      %v2137 = vld [vmem:[%s2133 + $0x18] sm:$0xff]
      %v2138 = vld [vmem:[%s2133 + $0x20] sm:$0xff]
      %v2139 = vld [vmem:[%s2133 + $0x28] sm:$0xff]
      %v2140 = vld [vmem:[%s2133 + $0x30] sm:$0x3]
      %v2142 = vsel %vm1105, %v2134, 0
      %v2145 = vsel %vm1105, %v2135, 0
      %v2148 = vsel %vm1105, %v2136, 0
      %v2151 = vsel %vm1105, %v2137, 0
      %v2154 = vsel %vm1105, %v2138, 0
      %v2157 = vsel %vm1105, %v2139, 0
      %v2160 = vsel %vm1105, %v2140, 0
      %2162 = vmatprep.subr.mxu0 0.0
      %2163 = vmatpush1.msra.mxu0 %v1086
      %2164 = vmatprep.subr.mxu0 0.0
      %2165 = vmatpush1.msra.mxu0 %v1088
      %2166 = vmatprep.subr.mxu0 0.0
      %2167 = vmatpush1.msra.mxu0 %v1090
      %2168 = vmatprep.subr.mxu0 0.0
      %2169 = vmatpush1.msra.mxu0 %v1092
      %2170 = vmatprep.subr.mxu0 0.0
      %2171 = vmatpush1.msra.mxu0 %v1094
      %2172 = vmatprep.subr.mxu0 0.0
      %2173 = vmatpush1.msra.mxu0 %v1096
      %2174 = vmatprep.subr.mxu0 0.0
      %2175 = vmatpush1.msra.mxu0 %v1128
      %2176 = vmatprep.subr.mxu0 0.0
      %2177 = vmatpush1.msra.mxu0 0.0
      %2178 = vmatprep.subr.mxu0 0.0
      %2179 = vmatpush1.msra.mxu0 0.0
      %2180 = vmatprep.subr.mxu0 0.0
      %2181 = vmatpush1.msra.mxu0 0.0
      %2182 = vmatprep.subr.mxu0 0.0
      %2183 = vmatpush1.msra.mxu0 0.0
      %2184 = vmatprep.subr.mxu0 0.0
      %2185 = vmatpush1.msra.mxu0 0.0
      %2186 = vmatprep.subr.mxu0 0.0
      %2187 = vmatpush1.msra.mxu0 0.0
      %2188 = vmatprep.subr.mxu0 0.0
      %2189 = vmatpush1.msra.mxu0 0.0
      %2190 = vmatprep.subr.mxu0 0.0
      %2191 = vmatpush1.msra.mxu0 0.0
      %2192 = vmatprep.subr.mxu0 0.0
      %2193 = vmatpush1.msra.mxu0 0.0
      %2194 = vmatprep.subr.mxu0 0.0
      %2195 = vmatpush1.msra.mxu0 0.0
      %2196 = vmatprep.subr.mxu0 0.0
      %2197 = vmatpush1.msra.mxu0 0.0
      %2198 = vmatprep.subr.mxu0 0.0
      %2199 = vmatpush1.msra.mxu0 0.0
      %2200 = vmatprep.subr.mxu0 0.0
      %2201 = vmatpush1.msra.mxu0 0.0
      %2202 = vmatprep.subr.mxu0 0.0
      %2203 = vmatpush1.msra.mxu0 0.0
      %2204 = vmatprep.subr.mxu0 0.0
      %2205 = vmatpush1.msra.mxu0 0.0
      %2206 = vmatprep.subr.mxu0 0.0
      %2207 = vmatpush1.msra.mxu0 0.0
      %2208 = vmatprep.subr.mxu0 0.0
      %2209 = vmatpush1.msra.mxu0 0.0
      %2210 = vmatprep.subr.mxu0 0.0
      %2211 = vmatpush1.msra.mxu0 0.0
      %2212 = vmatprep.subr.mxu0 0.0
      %2213 = vmatpush1.msra.mxu0 0.0
      %2214 = vmatprep.subr.mxu0 0.0
      %2215 = vmatpush1.msra.mxu0 0.0
      %2216 = vmatprep.subr.mxu0 0.0
      %2217 = vmatpush1.msra.mxu0 0.0
      %2218 = vmatprep.subr.mxu0 0.0
      %2219 = vmatpush1.msra.mxu0 0.0
      %2220 = vmatprep.subr.mxu0 0.0
      %2221 = vmatpush1.msra.mxu0 0.0
      %2222 = vmatprep.subr.mxu0 0.0
      %2223 = vmatpush1.msra.mxu0 0.0
      %2224 = vmatprep.subr.mxu0 0.0
      %2225 = vmatpush1.msra.mxu0 0.0
      %2226 = vmatprep.mubr.f32.mxu0 0.0
      %2227 = vmatmul.mubr.f32.gmra.mrb[0].mxu0 %v2142
      %v2228 = vpop.f32.mrb[0].mxu0
      %v2229 = vadd.f32 0.0, %v2228
      %v2230 = vpop.f32.mrb[0].mxu0
      %2231 = vmatprep.mubr.f32.mxu0 0.0
      %2232 = vmatmul.mubr.f32.gmra.mrb[0].mxu0 %v2145
      %v2233 = vpop.f32.mrb[0].mxu0
      %v2234 = vadd.f32 0.0, %v2233
      %v2235 = vpop.f32.mrb[0].mxu0
      %2236 = vmatprep.mubr.f32.mxu0 0.0
      %2237 = vmatmul.mubr.f32.gmra.mrb[0].mxu0 %v2148
      %v2238 = vpop.f32.mrb[0].mxu0
      %v2239 = vadd.f32 0.0, %v2238
      %v2240 = vpop.f32.mrb[0].mxu0
      %2241 = vmatprep.mubr.f32.mxu0 0.0
      %2242 = vmatmul.mubr.f32.gmra.mrb[0].mxu0 %v2151
      %v2243 = vpop.f32.mrb[0].mxu0
      %v2244 = vadd.f32 0.0, %v2243
      %v2245 = vpop.f32.mrb[0].mxu0
      %2246 = vmatprep.mubr.f32.mxu0 0.0
      %2247 = vmatmul.mubr.f32.gmra.mrb[0].mxu0 %v2154
      %v2248 = vpop.f32.mrb[0].mxu0
      %v2249 = vadd.f32 0.0, %v2248
      %v2250 = vpop.f32.mrb[0].mxu0
      %2251 = vmatprep.mubr.f32.mxu0 0.0
      %2252 = vmatmul.mubr.f32.gmra.mrb[0].mxu0 %v2157
      %v2253 = vpop.f32.mrb[0].mxu0
      %v2254 = vadd.f32 0.0, %v2253
      %v2255 = vpop.f32.mrb[0].mxu0
      %2256 = vmatprep.mubr.f32.mxu0 0.0
      %2257 = vmatmul.mubr.f32.gmra.mrb[0].mxu0 %v2160
      %v2258 = vpop.f32.mrb[0].mxu0
      %v2259 = vadd.f32 0.0, %v2258
      %v2260 = vpop.f32.mrb[0].mxu0
      %2261 = vdwg.mxu0
      %2269 = vrot.lane.b32.xlu0 %v1326, 6
      %v2270 = vpop.permute.xlu0 %2269
      %2271 = vrot.lane.b32.xlu0 %v1331, 6
      %v2272 = vpop.permute.xlu0 %2271
      %2273 = vrot.lane.b32.xlu0 %v1336, 6
      %v2274 = vpop.permute.xlu0 %2273
      %2275 = vrot.lane.b32.xlu0 %v1341, 6
      %v2276 = vpop.permute.xlu0 %2275
      %2277 = vrot.lane.b32.xlu0 %v1346, 6
      %v2278 = vpop.permute.xlu0 %2277
      %2279 = vrot.lane.b32.xlu0 %v1351, 6
      %v2280 = vpop.permute.xlu0 %2279
      %2281 = vrot.lane.b32.xlu0 %v1356, 6
      %v2282 = vpop.permute.xlu0 %2281
      %2297 = vrot.lane.b32.xlu0 %v1455, 12
      %v2298 = vpop.permute.xlu0 %2297
      %2299 = vrot.lane.b32.xlu0 %v1460, 12
      %v2300 = vpop.permute.xlu0 %2299
      %2301 = vrot.lane.b32.xlu0 %v1465, 12
      %v2302 = vpop.permute.xlu0 %2301
      %2303 = vrot.lane.b32.xlu0 %v1470, 12
      %v2304 = vpop.permute.xlu0 %2303
      %2305 = vrot.lane.b32.xlu0 %v1475, 12
      %v2306 = vpop.permute.xlu0 %2305
      %2307 = vrot.lane.b32.xlu0 %v1480, 12
      %v2308 = vpop.permute.xlu0 %2307
      %2309 = vrot.lane.b32.xlu0 %v1485, 12
      %v2310 = vpop.permute.xlu0 %2309
      %2325 = vrot.lane.b32.xlu0 %v1584, 18
      %v2326 = vpop.permute.xlu0 %2325
      %2327 = vrot.lane.b32.xlu0 %v1589, 18
      %v2328 = vpop.permute.xlu0 %2327
      %2329 = vrot.lane.b32.xlu0 %v1594, 18
      %v2330 = vpop.permute.xlu0 %2329
      %2331 = vrot.lane.b32.xlu0 %v1599, 18
      %v2332 = vpop.permute.xlu0 %2331
      %2333 = vrot.lane.b32.xlu0 %v1604, 18
      %v2334 = vpop.permute.xlu0 %2333
      %2335 = vrot.lane.b32.xlu0 %v1609, 18
      %v2336 = vpop.permute.xlu0 %2335
      %2337 = vrot.lane.b32.xlu0 %v1614, 18
      %v2338 = vpop.permute.xlu0 %2337
      %2353 = vrot.lane.b32.xlu0 %v1713, 24
      %v2354 = vpop.permute.xlu0 %2353
      %2355 = vrot.lane.b32.xlu0 %v1718, 24
      %v2356 = vpop.permute.xlu0 %2355
      %2357 = vrot.lane.b32.xlu0 %v1723, 24
      %v2358 = vpop.permute.xlu0 %2357
      %2359 = vrot.lane.b32.xlu0 %v1728, 24
      %v2360 = vpop.permute.xlu0 %2359
      %2361 = vrot.lane.b32.xlu0 %v1733, 24
      %v2362 = vpop.permute.xlu0 %2361
      %2363 = vrot.lane.b32.xlu0 %v1738, 24
      %v2364 = vpop.permute.xlu0 %2363
      %2365 = vrot.lane.b32.xlu0 %v1743, 24
      %v2366 = vpop.permute.xlu0 %2365
      %2381 = vrot.lane.b32.xlu0 %v1842, 30
      %v2382 = vpop.permute.xlu0 %2381
      %2383 = vrot.lane.b32.xlu0 %v1847, 30
      %v2384 = vpop.permute.xlu0 %2383
      %2385 = vrot.lane.b32.xlu0 %v1852, 30
      %v2386 = vpop.permute.xlu0 %2385
      %2387 = vrot.lane.b32.xlu0 %v1857, 30
      %v2388 = vpop.permute.xlu0 %2387
      %2389 = vrot.lane.b32.xlu0 %v1862, 30
      %v2390 = vpop.permute.xlu0 %2389
      %2391 = vrot.lane.b32.xlu0 %v1867, 30
      %v2392 = vpop.permute.xlu0 %2391
      %2393 = vrot.lane.b32.xlu0 %v1872, 30
      %v2394 = vpop.permute.xlu0 %2393
      %2409 = vrot.lane.b32.xlu0 %v1971, 36
      %v2410 = vpop.permute.xlu0 %2409
      %2411 = vrot.lane.b32.xlu0 %v1976, 36
      %v2412 = vpop.permute.xlu0 %2411
      %2413 = vrot.lane.b32.xlu0 %v1981, 36
      %v2414 = vpop.permute.xlu0 %2413
      %2415 = vrot.lane.b32.xlu0 %v1986, 36
      %v2416 = vpop.permute.xlu0 %2415
      %2417 = vrot.lane.b32.xlu0 %v1991, 36
      %v2418 = vpop.permute.xlu0 %2417
      %2419 = vrot.lane.b32.xlu0 %v1996, 36
      %v2420 = vpop.permute.xlu0 %2419
      %2421 = vrot.lane.b32.xlu0 %v2001, 36
      %v2422 = vpop.permute.xlu0 %2421
      %2437 = vrot.lane.b32.xlu0 %v2100, 42
      %v2438 = vpop.permute.xlu0 %2437
      %2439 = vrot.lane.b32.xlu0 %v2105, 42
      %v2440 = vpop.permute.xlu0 %2439
      %2441 = vrot.lane.b32.xlu0 %v2110, 42
      %v2442 = vpop.permute.xlu0 %2441
      %2443 = vrot.lane.b32.xlu0 %v2115, 42
      %v2444 = vpop.permute.xlu0 %2443
      %2445 = vrot.lane.b32.xlu0 %v2120, 42
      %v2446 = vpop.permute.xlu0 %2445
      %2447 = vrot.lane.b32.xlu0 %v2125, 42
      %v2448 = vpop.permute.xlu0 %2447
      %2449 = vrot.lane.b32.xlu0 %v2130, 42
      %v2450 = vpop.permute.xlu0 %2449
      %2465 = vrot.lane.b32.xlu0 %v2229, 48
      %v2466 = vpop.permute.xlu0 %2465
      %2467 = vrot.lane.b32.xlu0 %v2234, 48
      %v2468 = vpop.permute.xlu0 %2467
      %2469 = vrot.lane.b32.xlu0 %v2239, 48
      %v2470 = vpop.permute.xlu0 %2469
      %2471 = vrot.lane.b32.xlu0 %v2244, 48
      %v2472 = vpop.permute.xlu0 %2471
      %2473 = vrot.lane.b32.xlu0 %v2249, 48
      %v2474 = vpop.permute.xlu0 %2473
      %2475 = vrot.lane.b32.xlu0 %v2254, 48
      %v2476 = vpop.permute.xlu0 %2475
      %2477 = vrot.lane.b32.xlu0 %v2259, 48
      %v2478 = vpop.permute.xlu0 %2477
      %vm2486 = vcmask 48128
      %v2487 = vsel %vm2486, %v1197, %v2270
      %v2488 = vsel %vm2486, %v1202, %v2272
      %v2489 = vsel %vm2486, %v1207, %v2274
      %v2490 = vsel %vm2486, %v1212, %v2276
      %v2491 = vsel %vm2486, %v1217, %v2278
      %v2492 = vsel %vm2486, %v1222, %v2280
      %v2493 = vsel %vm2486, %v1227, %v2282
      %vm2494 = vcmask 97280
      %v2495 = vsel %vm2494, %v2487, %v2298
      %v2496 = vsel %vm2494, %v2488, %v2300
      %v2497 = vsel %vm2494, %v2489, %v2302
      %v2498 = vsel %vm2494, %v2490, %v2304
      %v2499 = vsel %vm2494, %v2491, %v2306
      %v2500 = vsel %vm2494, %v2492, %v2308
      %v2501 = vsel %vm2494, %v2493, %v2310
      %vm2502 = vcmask 146432
      %v2503 = vsel %vm2502, %v2495, %v2326
      %v2504 = vsel %vm2502, %v2496, %v2328
      %v2505 = vsel %vm2502, %v2497, %v2330
      %v2506 = vsel %vm2502, %v2498, %v2332
      %v2507 = vsel %vm2502, %v2499, %v2334
      %v2508 = vsel %vm2502, %v2500, %v2336
      %v2509 = vsel %vm2502, %v2501, %v2338
      %vm2510 = vcmask 195584
      %v2511 = vsel %vm2510, %v2503, %v2354
      %v2512 = vsel %vm2510, %v2504, %v2356
      %v2513 = vsel %vm2510, %v2505, %v2358
      %v2514 = vsel %vm2510, %v2506, %v2360
      %v2515 = vsel %vm2510, %v2507, %v2362
      %v2516 = vsel %vm2510, %v2508, %v2364
      %v2517 = vsel %vm2510, %v2509, %v2366
      %vm2518 = vcmask 244736
      %v2519 = vsel %vm2518, %v2511, %v2382
      %v2520 = vsel %vm2518, %v2512, %v2384
      %v2521 = vsel %vm2518, %v2513, %v2386
      %v2522 = vsel %vm2518, %v2514, %v2388
      %v2523 = vsel %vm2518, %v2515, %v2390
      %v2524 = vsel %vm2518, %v2516, %v2392
      %v2525 = vsel %vm2518, %v2517, %v2394
      %vm2526 = vcmask 293888
      %v2527 = vsel %vm2526, %v2519, %v2410
      %v2528 = vsel %vm2526, %v2520, %v2412
      %v2529 = vsel %vm2526, %v2521, %v2414
      %v2530 = vsel %vm2526, %v2522, %v2416
      %v2531 = vsel %vm2526, %v2523, %v2418
      %v2532 = vsel %vm2526, %v2524, %v2420
      %v2533 = vsel %vm2526, %v2525, %v2422
      %vm2534 = vcmask 343040
      %v2535 = vsel %vm2534, %v2527, %v2438
      %v2536 = vsel %vm2534, %v2528, %v2440
      %v2537 = vsel %vm2534, %v2529, %v2442
      %v2538 = vsel %vm2534, %v2530, %v2444
      %v2539 = vsel %vm2534, %v2531, %v2446
      %v2540 = vsel %vm2534, %v2532, %v2448
      %v2541 = vsel %vm2534, %v2533, %v2450
      %vm2542 = vcmask 392192
      %v2543 = vsel %vm2542, %v2535, %v2466
      %v2544 = vsel %vm2542, %v2536, %v2468
      %v2545 = vsel %vm2542, %v2537, %v2470
      %v2546 = vsel %vm2542, %v2538, %v2472
      %v2547 = vsel %vm2542, %v2539, %v2474
      %v2548 = vsel %vm2542, %v2540, %v2476
      %v2549 = vsel %vm2542, %v2541, %v2478
      %v2550 = vld [vmem:[%s791] sm:$0xff]
      %v2551 = vld [vmem:[%s791 + $0x8] sm:$0xff]
      %v2552 = vld [vmem:[%s791 + $0x10] sm:$0xff]
      %v2553 = vld [vmem:[%s791 + $0x18] sm:$0xff]
      %v2554 = vld [vmem:[%s791 + $0x20] sm:$0xff]
      %v2555 = vld [vmem:[%s791 + $0x28] sm:$0xff]
      %v2556 = vld [vmem:[%s791 + $0x30] sm:$0x3f]
      %v2557 = vld [vmem:[%s794] sm:$0x1]
      %v2559 = vlaneseq
      %v2560 = vshrl.u32 %v2559, 7
      %v2561 = vsub.s32 0, %v2560
      %v2562 = vrot.slane %v2557, %v2561
      %vm2564 = vcmask 441344
      %v2566 = vsel %vm2564, %v2543, 0
      %v2569 = vsel %vm2564, %v2544, 0
      %v2572 = vsel %vm2564, %v2545, 0
      %v2575 = vsel %vm2564, %v2546, 0
      %v2578 = vsel %vm2564, %v2547, 0
      %v2581 = vsel %vm2564, %v2548, 0
      %v2584 = vsel %vm2564, %v2549, 0
      %vm2586 = vcmask 1045504
      %v2588 = vsel %vm2586, %v2556, 0
      %2590 = vmatprep.subr.mxu0 0.0
      %2591 = vmatpush1.msra.mxu0 %v2550
      %2592 = vmatprep.subr.mxu0 0.0
      %2593 = vmatpush1.msra.mxu0 %v2551
      %2594 = vmatprep.subr.mxu0 0.0
      %2595 = vmatpush1.msra.mxu0 %v2552
      %2596 = vmatprep.subr.mxu0 0.0
      %2597 = vmatpush1.msra.mxu0 %v2553
      %2598 = vmatprep.subr.mxu0 0.0
      %2599 = vmatpush1.msra.mxu0 %v2554
      %2600 = vmatprep.subr.mxu0 0.0
      %2601 = vmatpush1.msra.mxu0 %v2555
      %2602 = vmatprep.subr.mxu0 0.0
      %2603 = vmatpush1.msra.mxu0 %v2588
      %2604 = vmatprep.subr.mxu0 0.0
      %2605 = vmatpush1.msra.mxu0 0.0
      %2606 = vmatprep.subr.mxu0 0.0
      %2607 = vmatpush1.msra.mxu0 0.0
      %2608 = vmatprep.subr.mxu0 0.0
      %2609 = vmatpush1.msra.mxu0 0.0
      %2610 = vmatprep.subr.mxu0 0.0
      %2611 = vmatpush1.msra.mxu0 0.0
      %2612 = vmatprep.subr.mxu0 0.0
      %2613 = vmatpush1.msra.mxu0 0.0
      %2614 = vmatprep.subr.mxu0 0.0
      %2615 = vmatpush1.msra.mxu0 0.0
      %2616 = vmatprep.subr.mxu0 0.0
      %2617 = vmatpush1.msra.mxu0 0.0
      %2618 = vmatprep.subr.mxu0 0.0
      %2619 = vmatpush1.msra.mxu0 0.0
      %2620 = vmatprep.subr.mxu0 0.0
      %2621 = vmatpush1.msra.mxu0 0.0
      %2622 = vmatprep.subr.mxu0 0.0
      %2623 = vmatpush1.msra.mxu0 0.0
      %2624 = vmatprep.subr.mxu0 0.0
      %2625 = vmatpush1.msra.mxu0 0.0
      %2626 = vmatprep.subr.mxu0 0.0
      %2627 = vmatpush1.msra.mxu0 0.0
      %2628 = vmatprep.subr.mxu0 0.0
      %2629 = vmatpush1.msra.mxu0 0.0
      %2630 = vmatprep.subr.mxu0 0.0
      %2631 = vmatpush1.msra.mxu0 0.0
      %2632 = vmatprep.subr.mxu0 0.0
      %2633 = vmatpush1.msra.mxu0 0.0
      %2634 = vmatprep.subr.mxu0 0.0
      %2635 = vmatpush1.msra.mxu0 0.0
      %2636 = vmatprep.subr.mxu0 0.0
      %2637 = vmatpush1.msra.mxu0 0.0
      %2638 = vmatprep.subr.mxu0 0.0
      %2639 = vmatpush1.msra.mxu0 0.0
      %2640 = vmatprep.subr.mxu0 0.0
      %2641 = vmatpush1.msra.mxu0 0.0
      %2642 = vmatprep.subr.mxu0 0.0
      %2643 = vmatpush1.msra.mxu0 0.0
      %2644 = vmatprep.subr.mxu0 0.0
      %2645 = vmatpush1.msra.mxu0 0.0
      %2646 = vmatprep.subr.mxu0 0.0
      %2647 = vmatpush1.msra.mxu0 0.0
      %2648 = vmatprep.subr.mxu0 0.0
      %2649 = vmatpush1.msra.mxu0 0.0
      %2650 = vmatprep.subr.mxu0 0.0
      %2651 = vmatpush1.msra.mxu0 0.0
      %2652 = vmatprep.subr.mxu0 0.0
      %2653 = vmatpush1.msra.mxu0 0.0
      %2654 = vmatprep.mubr.f32.mxu0 0.0
      %2655 = vmatmul.mubr.f32.gmra.mrb[0].mxu0 %v2566
      %v2656 = vpop.f32.mrb[0].mxu0
      %v2657 = vadd.f32 %v2562, %v2656
      %v2658 = vpop.f32.mrb[0].mxu0
      %2659 = vmatprep.mubr.f32.mxu0 0.0
      %2660 = vmatmul.mubr.f32.gmra.mrb[0].mxu0 %v2569
      %v2661 = vpop.f32.mrb[0].mxu0
      %v2662 = vadd.f32 %v2562, %v2661
      %v2663 = vpop.f32.mrb[0].mxu0
      %2664 = vmatprep.mubr.f32.mxu0 0.0
      %2665 = vmatmul.mubr.f32.gmra.mrb[0].mxu0 %v2572
      %v2666 = vpop.f32.mrb[0].mxu0
      %v2667 = vadd.f32 %v2562, %v2666
      %v2668 = vpop.f32.mrb[0].mxu0
      %2669 = vmatprep.mubr.f32.mxu0 0.0
      %2670 = vmatmul.mubr.f32.gmra.mrb[0].mxu0 %v2575
      %v2671 = vpop.f32.mrb[0].mxu0
      %v2672 = vadd.f32 %v2562, %v2671
      %v2673 = vpop.f32.mrb[0].mxu0
      %2674 = vmatprep.mubr.f32.mxu0 0.0
      %2675 = vmatmul.mubr.f32.gmra.mrb[0].mxu0 %v2578
      %v2676 = vpop.f32.mrb[0].mxu0
      %v2677 = vadd.f32 %v2562, %v2676
      %v2678 = vpop.f32.mrb[0].mxu0
      %2679 = vmatprep.mubr.f32.mxu0 0.0
      %2680 = vmatmul.mubr.f32.gmra.mrb[0].mxu0 %v2581
      %v2681 = vpop.f32.mrb[0].mxu0
      %v2682 = vadd.f32 %v2562, %v2681
      %v2683 = vpop.f32.mrb[0].mxu0
      %2684 = vmatprep.mubr.f32.mxu0 0.0
      %2685 = vmatmul.mubr.f32.gmra.mrb[0].mxu0 %v2584
      %v2686 = vpop.f32.mrb[0].mxu0
      %v2687 = vadd.f32 %v2562, %v2686
      %v2688 = vpop.f32.mrb[0].mxu0
      %2689 = vdwg.mxu0
      %v2690 = vmax.f32 %v2657, 0.0
      %v2691 = vmax.f32 %v2662, 0.0
      %v2692 = vmax.f32 %v2667, 0.0
      %v2693 = vmax.f32 %v2672, 0.0
      %v2694 = vmax.f32 %v2677, 0.0
      %v2695 = vmax.f32 %v2682, 0.0
      %v2696 = vmax.f32 %v2687, 0.0
      %v2697 = vand.u32 2147483647, %v2657
      %v2698 = vand.u32 2147483647, %v2662
      %v2699 = vand.u32 2147483647, %v2667
      %v2700 = vand.u32 2147483647, %v2672
      %v2701 = vand.u32 2147483647, %v2677
      %v2702 = vand.u32 2147483647, %v2682
      %v2703 = vand.u32 2147483647, %v2687
      %v2704 = vsub.f32 0.0, %v2697
      %v2705 = vsub.f32 0.0, %v2698
      %v2706 = vsub.f32 0.0, %v2699
      %v2707 = vsub.f32 0.0, %v2700
      %v2708 = vsub.f32 0.0, %v2701
      %v2709 = vsub.f32 0.0, %v2702
      %v2710 = vsub.f32 0.0, %v2703
      %v2711 = vmul.f32 %v2704, 1.442695
      %v2712 = vpow.pop %v2711
      %v2713 = vmul.f32 %v2705, 1.442695
      %v2714 = vpow.pop %v2713
      %v2715 = vmul.f32 %v2706, 1.442695
      %v2716 = vpow.pop %v2715
      %v2717 = vmul.f32 %v2707, 1.442695
      %v2718 = vpow.pop %v2717
      %v2719 = vmul.f32 %v2708, 1.442695
      %v2720 = vpow.pop %v2719
      %v2721 = vmul.f32 %v2709, 1.442695
      %v2722 = vpow.pop %v2721
      %v2723 = vmul.f32 %v2710, 1.442695
      %v2724 = vpow.pop %v2723
      %v2725 = vadd.f32 %v2712, 1.0
      %v2726 = vlog2.pop %v2725
      %v2727 = vmul.f32 %v2726, 0.6931472
      %v2728 = vmul.f32 -0.5, %v2712
      %v2729 = vadd.f32 %v2728, 1.0
      %v2730 = vmul.f32 %v2729, %v2712
      %v2731 = vand.u32 2147483647, %v2712
      %vm2732 = vcmp.lt.f32.partialorder %v2731, 0.0004427343
      %v2733 = vsel %vm2732, %v2730, %v2727
      %v2734 = vadd.f32 %v2714, 1.0
      %v2735 = vlog2.pop %v2734
      %v2736 = vmul.f32 %v2735, 0.6931472
      %v2737 = vmul.f32 -0.5, %v2714
      %v2738 = vadd.f32 %v2737, 1.0
      %v2739 = vmul.f32 %v2738, %v2714
      %v2740 = vand.u32 2147483647, %v2714
      %vm2741 = vcmp.lt.f32.partialorder %v2740, 0.0004427343
      %v2742 = vsel %vm2741, %v2739, %v2736
      %v2743 = vadd.f32 %v2716, 1.0
      %v2744 = vlog2.pop %v2743
      %v2745 = vmul.f32 %v2744, 0.6931472
      %v2746 = vmul.f32 -0.5, %v2716
      %v2747 = vadd.f32 %v2746, 1.0
      %v2748 = vmul.f32 %v2747, %v2716
      %v2749 = vand.u32 2147483647, %v2716
      %vm2750 = vcmp.lt.f32.partialorder %v2749, 0.0004427343
      %v2751 = vsel %vm2750, %v2748, %v2745
      %v2752 = vadd.f32 %v2718, 1.0
      %v2753 = vlog2.pop %v2752
      %v2754 = vmul.f32 %v2753, 0.6931472
      %v2755 = vmul.f32 -0.5, %v2718
      %v2756 = vadd.f32 %v2755, 1.0
      %v2757 = vmul.f32 %v2756, %v2718
      %v2758 = vand.u32 2147483647, %v2718
      %vm2759 = vcmp.lt.f32.partialorder %v2758, 0.0004427343
      %v2760 = vsel %vm2759, %v2757, %v2754
      %v2761 = vadd.f32 %v2720, 1.0
      %v2762 = vlog2.pop %v2761
      %v2763 = vmul.f32 %v2762, 0.6931472
      %v2764 = vmul.f32 -0.5, %v2720
      %v2765 = vadd.f32 %v2764, 1.0
      %v2766 = vmul.f32 %v2765, %v2720
      %v2767 = vand.u32 2147483647, %v2720
      %vm2768 = vcmp.lt.f32.partialorder %v2767, 0.0004427343
      %v2769 = vsel %vm2768, %v2766, %v2763
      %v2770 = vadd.f32 %v2722, 1.0
      %v2771 = vlog2.pop %v2770
      %v2772 = vmul.f32 %v2771, 0.6931472
      %v2773 = vmul.f32 -0.5, %v2722
      %v2774 = vadd.f32 %v2773, 1.0
      %v2775 = vmul.f32 %v2774, %v2722
      %v2776 = vand.u32 2147483647, %v2722
      %vm2777 = vcmp.lt.f32.partialorder %v2776, 0.0004427343
      %v2778 = vsel %vm2777, %v2775, %v2772
      %v2779 = vadd.f32 %v2724, 1.0
      %v2780 = vlog2.pop %v2779
      %v2781 = vmul.f32 %v2780, 0.6931472
      %v2782 = vmul.f32 -0.5, %v2724
      %v2783 = vadd.f32 %v2782, 1.0
      %v2784 = vmul.f32 %v2783, %v2724
      %v2785 = vand.u32 2147483647, %v2724
      %vm2786 = vcmp.lt.f32.partialorder %v2785, 0.0004427343
      %v2787 = vsel %vm2786, %v2784, %v2781
      %v2788 = vadd.f32 %v2690, %v2733
      %v2789 = vadd.f32 %v2691, %v2742
      %v2790 = vadd.f32 %v2692, %v2751
      %v2791 = vadd.f32 %v2693, %v2760
      %v2792 = vadd.f32 %v2694, %v2769
      %v2793 = vadd.f32 %v2695, %v2778
      %v2794 = vadd.f32 %v2696, %v2787
      %v2795 = vtanh.pop %v2788
      %v2796 = vtanh.pop %v2789
      %v2797 = vtanh.pop %v2790
      %v2798 = vtanh.pop %v2791
      %v2799 = vtanh.pop %v2792
      %v2800 = vtanh.pop %v2793
      %v2801 = vtanh.pop %v2794
      %v2802 = vmul.f32 %v2657, %v2795
      %v2803 = vmul.f32 %v2662, %v2796
      %v2804 = vmul.f32 %v2667, %v2797
      %v2805 = vmul.f32 %v2672, %v2798
      %v2806 = vmul.f32 %v2677, %v2799
      %v2807 = vmul.f32 %v2682, %v2800
      %v2808 = vmul.f32 %v2687, %v2801
      %v2810 = vsel %vm2486, %v2802, %v1086
      %v2811 = vsel %vm2486, %v2803, %v1088
      %v2812 = vsel %vm2486, %v2804, %v1090
      %v2813 = vsel %vm2486, %v2805, %v1092
      %v2814 = vsel %vm2486, %v2806, %v1094
      %v2815 = vsel %vm2486, %v2807, %v1096
      %v2816 = vsel %vm2486, %v2808, %v1098
      %v2818 = vsel %vm1127, %v2816, 0
      %2820 = vmatprep.subr.mxu0 0.0
      %2821 = vmatpush1.msra.mxu0 %v2810
      %2822 = vmatprep.subr.mxu0 0.0
      %2823 = vmatpush1.msra.mxu0 %v2811
      %2824 = vmatprep.subr.mxu0 0.0
      %2825 = vmatpush1.msra.mxu0 %v2812
      %2826 = vmatprep.subr.mxu0 0.0
      %2827 = vmatpush1.msra.mxu0 %v2813
      %2828 = vmatprep.subr.mxu0 0.0
      %2829 = vmatpush1.msra.mxu0 %v2814
      %2830 = vmatprep.subr.mxu0 0.0
      %2831 = vmatpush1.msra.mxu0 %v2815
      %2832 = vmatprep.subr.mxu0 0.0
      %2833 = vmatpush1.msra.mxu0 %v2818
      %2834 = vmatprep.subr.mxu0 0.0
      %2835 = vmatpush1.msra.mxu0 0.0
      %2836 = vmatprep.subr.mxu0 0.0
      %2837 = vmatpush1.msra.mxu0 0.0
      %2838 = vmatprep.subr.mxu0 0.0
      %2839 = vmatpush1.msra.mxu0 0.0
      %2840 = vmatprep.subr.mxu0 0.0
      %2841 = vmatpush1.msra.mxu0 0.0
      %2842 = vmatprep.subr.mxu0 0.0
      %2843 = vmatpush1.msra.mxu0 0.0
      %2844 = vmatprep.subr.mxu0 0.0
      %2845 = vmatpush1.msra.mxu0 0.0
      %2846 = vmatprep.subr.mxu0 0.0
      %2847 = vmatpush1.msra.mxu0 0.0
      %2848 = vmatprep.subr.mxu0 0.0
      %2849 = vmatpush1.msra.mxu0 0.0
      %2850 = vmatprep.subr.mxu0 0.0
      %2851 = vmatpush1.msra.mxu0 0.0
      %2852 = vmatprep.subr.mxu0 0.0
      %2853 = vmatpush1.msra.mxu0 0.0
      %2854 = vmatprep.subr.mxu0 0.0
      %2855 = vmatpush1.msra.mxu0 0.0
      %2856 = vmatprep.subr.mxu0 0.0
      %2857 = vmatpush1.msra.mxu0 0.0
      %2858 = vmatprep.subr.mxu0 0.0
      %2859 = vmatpush1.msra.mxu0 0.0
      %2860 = vmatprep.subr.mxu0 0.0
      %2861 = vmatpush1.msra.mxu0 0.0
      %2862 = vmatprep.subr.mxu0 0.0
      %2863 = vmatpush1.msra.mxu0 0.0
      %2864 = vmatprep.subr.mxu0 0.0
      %2865 = vmatpush1.msra.mxu0 0.0
      %2866 = vmatprep.subr.mxu0 0.0
      %2867 = vmatpush1.msra.mxu0 0.0
      %2868 = vmatprep.subr.mxu0 0.0
      %2869 = vmatpush1.msra.mxu0 0.0
      %2870 = vmatprep.subr.mxu0 0.0
      %2871 = vmatpush1.msra.mxu0 0.0
      %2872 = vmatprep.subr.mxu0 0.0
      %2873 = vmatpush1.msra.mxu0 0.0
      %2874 = vmatprep.subr.mxu0 0.0
      %2875 = vmatpush1.msra.mxu0 0.0
      %2876 = vmatprep.subr.mxu0 0.0
      %2877 = vmatpush1.msra.mxu0 0.0
      %2878 = vmatprep.subr.mxu0 0.0
      %2879 = vmatpush1.msra.mxu0 0.0
      %2880 = vmatprep.subr.mxu0 0.0
      %2881 = vmatpush1.msra.mxu0 0.0
      %2882 = vmatprep.subr.mxu0 0.0
      %2883 = vmatpush1.msra.mxu0 0.0
      %2884 = vmatprep.mubr.f32.mxu0 0.0
      %2885 = vmatmul.mubr.f32.gmra.mrb[0].mxu0 %v1107
      %v2886 = vpop.f32.mrb[0].mxu0
      %v2887 = vadd.f32 0.0, %v2886
      %v2888 = vpop.f32.mrb[0].mxu0
      %2889 = vmatprep.mubr.f32.mxu0 0.0
      %2890 = vmatmul.mubr.f32.gmra.mrb[0].mxu0 %v1110
      %v2891 = vpop.f32.mrb[0].mxu0
      %v2892 = vadd.f32 0.0, %v2891
      %v2893 = vpop.f32.mrb[0].mxu0
      %2894 = vmatprep.mubr.f32.mxu0 0.0
      %2895 = vmatmul.mubr.f32.gmra.mrb[0].mxu0 %v1113
      %v2896 = vpop.f32.mrb[0].mxu0
      %v2897 = vadd.f32 0.0, %v2896
      %v2898 = vpop.f32.mrb[0].mxu0
      %2899 = vmatprep.mubr.f32.mxu0 0.0
      %2900 = vmatmul.mubr.f32.gmra.mrb[0].mxu0 %v1116
      %v2901 = vpop.f32.mrb[0].mxu0
      %v2902 = vadd.f32 0.0, %v2901
      %v2903 = vpop.f32.mrb[0].mxu0
      %2904 = vmatprep.mubr.f32.mxu0 0.0
      %2905 = vmatmul.mubr.f32.gmra.mrb[0].mxu0 %v1119
      %v2906 = vpop.f32.mrb[0].mxu0
      %v2907 = vadd.f32 0.0, %v2906
      %v2908 = vpop.f32.mrb[0].mxu0
      %2909 = vmatprep.mubr.f32.mxu0 0.0
      %2910 = vmatmul.mubr.f32.gmra.mrb[0].mxu0 %v1122
      %v2911 = vpop.f32.mrb[0].mxu0
      %v2912 = vadd.f32 0.0, %v2911
      %v2913 = vpop.f32.mrb[0].mxu0
      %2914 = vmatprep.mubr.f32.mxu0 0.0
      %2915 = vmatmul.mubr.f32.gmra.mrb[0].mxu0 %v1125
      %v2916 = vpop.f32.mrb[0].mxu0
      %v2917 = vadd.f32 0.0, %v2916
      %v2918 = vpop.f32.mrb[0].mxu0
      %2919 = vdwg.mxu0
      %2920 = vmatprep.subr.mxu0 0.0
      %2921 = vmatpush1.msra.mxu0 %v2810
      %2922 = vmatprep.subr.mxu0 0.0
      %2923 = vmatpush1.msra.mxu0 %v2811
      %2924 = vmatprep.subr.mxu0 0.0
      %2925 = vmatpush1.msra.mxu0 %v2812
      %2926 = vmatprep.subr.mxu0 0.0
      %2927 = vmatpush1.msra.mxu0 %v2813
      %2928 = vmatprep.subr.mxu0 0.0
      %2929 = vmatpush1.msra.mxu0 %v2814
      %2930 = vmatprep.subr.mxu0 0.0
      %2931 = vmatpush1.msra.mxu0 %v2815
      %2932 = vmatprep.subr.mxu0 0.0
      %2933 = vmatpush1.msra.mxu0 %v2818
      %2934 = vmatprep.subr.mxu0 0.0
      %2935 = vmatpush1.msra.mxu0 0.0
      %2936 = vmatprep.subr.mxu0 0.0
      %2937 = vmatpush1.msra.mxu0 0.0
      %2938 = vmatprep.subr.mxu0 0.0
      %2939 = vmatpush1.msra.mxu0 0.0
      %2940 = vmatprep.subr.mxu0 0.0
      %2941 = vmatpush1.msra.mxu0 0.0
      %2942 = vmatprep.subr.mxu0 0.0
      %2943 = vmatpush1.msra.mxu0 0.0
      %2944 = vmatprep.subr.mxu0 0.0
      %2945 = vmatpush1.msra.mxu0 0.0
      %2946 = vmatprep.subr.mxu0 0.0
      %2947 = vmatpush1.msra.mxu0 0.0
      %2948 = vmatprep.subr.mxu0 0.0
      %2949 = vmatpush1.msra.mxu0 0.0
      %2950 = vmatprep.subr.mxu0 0.0
      %2951 = vmatpush1.msra.mxu0 0.0
      %2952 = vmatprep.subr.mxu0 0.0
      %2953 = vmatpush1.msra.mxu0 0.0
      %2954 = vmatprep.subr.mxu0 0.0
      %2955 = vmatpush1.msra.mxu0 0.0
      %2956 = vmatprep.subr.mxu0 0.0
      %2957 = vmatpush1.msra.mxu0 0.0
      %2958 = vmatprep.subr.mxu0 0.0
      %2959 = vmatpush1.msra.mxu0 0.0
      %2960 = vmatprep.subr.mxu0 0.0
      %2961 = vmatpush1.msra.mxu0 0.0
      %2962 = vmatprep.subr.mxu0 0.0
      %2963 = vmatpush1.msra.mxu0 0.0
      %2964 = vmatprep.subr.mxu0 0.0
      %2965 = vmatpush1.msra.mxu0 0.0
      %2966 = vmatprep.subr.mxu0 0.0
      %2967 = vmatpush1.msra.mxu0 0.0
      %2968 = vmatprep.subr.mxu0 0.0
      %2969 = vmatpush1.msra.mxu0 0.0
      %2970 = vmatprep.subr.mxu0 0.0
      %2971 = vmatpush1.msra.mxu0 0.0
      %2972 = vmatprep.subr.mxu0 0.0
      %2973 = vmatpush1.msra.mxu0 0.0
      %2974 = vmatprep.subr.mxu0 0.0
      %2975 = vmatpush1.msra.mxu0 0.0
      %2976 = vmatprep.subr.mxu0 0.0
      %2977 = vmatpush1.msra.mxu0 0.0
      %2978 = vmatprep.subr.mxu0 0.0
      %2979 = vmatpush1.msra.mxu0 0.0
      %2980 = vmatprep.subr.mxu0 0.0
      %2981 = vmatpush1.msra.mxu0 0.0
      %2982 = vmatprep.subr.mxu0 0.0
      %2983 = vmatpush1.msra.mxu0 0.0
      %2984 = vmatprep.mubr.f32.mxu0 0.0
      %2985 = vmatmul.mubr.f32.gmra.mrb[0].mxu0 %v1239
      %v2986 = vpop.f32.mrb[0].mxu0
      %v2987 = vadd.f32 0.0, %v2986
      %v2988 = vpop.f32.mrb[0].mxu0
      %2989 = vmatprep.mubr.f32.mxu0 0.0
      %2990 = vmatmul.mubr.f32.gmra.mrb[0].mxu0 %v1242
      %v2991 = vpop.f32.mrb[0].mxu0
      %v2992 = vadd.f32 0.0, %v2991
      %v2993 = vpop.f32.mrb[0].mxu0
      %2994 = vmatprep.mubr.f32.mxu0 0.0
      %2995 = vmatmul.mubr.f32.gmra.mrb[0].mxu0 %v1245
      %v2996 = vpop.f32.mrb[0].mxu0
      %v2997 = vadd.f32 0.0, %v2996
      %v2998 = vpop.f32.mrb[0].mxu0
      %2999 = vmatprep.mubr.f32.mxu0 0.0
      %3000 = vmatmul.mubr.f32.gmra.mrb[0].mxu0 %v1248
      %v3001 = vpop.f32.mrb[0].mxu0
      %v3002 = vadd.f32 0.0, %v3001
      %v3003 = vpop.f32.mrb[0].mxu0
      %3004 = vmatprep.mubr.f32.mxu0 0.0
      %3005 = vmatmul.mubr.f32.gmra.mrb[0].mxu0 %v1251
      %v3006 = vpop.f32.mrb[0].mxu0
      %v3007 = vadd.f32 0.0, %v3006
      %v3008 = vpop.f32.mrb[0].mxu0
      %3009 = vmatprep.mubr.f32.mxu0 0.0
      %3010 = vmatmul.mubr.f32.gmra.mrb[0].mxu0 %v1254
      %v3011 = vpop.f32.mrb[0].mxu0
      %v3012 = vadd.f32 0.0, %v3011
      %v3013 = vpop.f32.mrb[0].mxu0
      %3014 = vmatprep.mubr.f32.mxu0 0.0
      %3015 = vmatmul.mubr.f32.gmra.mrb[0].mxu0 %v1257
      %v3016 = vpop.f32.mrb[0].mxu0
      %v3017 = vadd.f32 0.0, %v3016
      %v3018 = vpop.f32.mrb[0].mxu0
      %3019 = vdwg.mxu0
      %3020 = vmatprep.subr.mxu0 0.0
      %3021 = vmatpush1.msra.mxu0 %v2810
      %3022 = vmatprep.subr.mxu0 0.0
      %3023 = vmatpush1.msra.mxu0 %v2811
      %3024 = vmatprep.subr.mxu0 0.0
      %3025 = vmatpush1.msra.mxu0 %v2812
      %3026 = vmatprep.subr.mxu0 0.0
      %3027 = vmatpush1.msra.mxu0 %v2813
      %3028 = vmatprep.subr.mxu0 0.0
      %3029 = vmatpush1.msra.mxu0 %v2814
      %3030 = vmatprep.subr.mxu0 0.0
      %3031 = vmatpush1.msra.mxu0 %v2815
      %3032 = vmatprep.subr.mxu0 0.0
      %3033 = vmatpush1.msra.mxu0 %v2818
      %3034 = vmatprep.subr.mxu0 0.0
      %3035 = vmatpush1.msra.mxu0 0.0
      %3036 = vmatprep.subr.mxu0 0.0
      %3037 = vmatpush1.msra.mxu0 0.0
      %3038 = vmatprep.subr.mxu0 0.0
      %3039 = vmatpush1.msra.mxu0 0.0
      %3040 = vmatprep.subr.mxu0 0.0
      %3041 = vmatpush1.msra.mxu0 0.0
      %3042 = vmatprep.subr.mxu0 0.0
      %3043 = vmatpush1.msra.mxu0 0.0
      %3044 = vmatprep.subr.mxu0 0.0
      %3045 = vmatpush1.msra.mxu0 0.0
      %3046 = vmatprep.subr.mxu0 0.0
      %3047 = vmatpush1.msra.mxu0 0.0
      %3048 = vmatprep.subr.mxu0 0.0
      %3049 = vmatpush1.msra.mxu0 0.0
      %3050 = vmatprep.subr.mxu0 0.0
      %3051 = vmatpush1.msra.mxu0 0.0
      %3052 = vmatprep.subr.mxu0 0.0
      %3053 = vmatpush1.msra.mxu0 0.0
      %3054 = vmatprep.subr.mxu0 0.0
      %3055 = vmatpush1.msra.mxu0 0.0
      %3056 = vmatprep.subr.mxu0 0.0
      %3057 = vmatpush1.msra.mxu0 0.0
      %3058 = vmatprep.subr.mxu0 0.0
      %3059 = vmatpush1.msra.mxu0 0.0
      %3060 = vmatprep.subr.mxu0 0.0
      %3061 = vmatpush1.msra.mxu0 0.0
      %3062 = vmatprep.subr.mxu0 0.0
      %3063 = vmatpush1.msra.mxu0 0.0
      %3064 = vmatprep.subr.mxu0 0.0
      %3065 = vmatpush1.msra.mxu0 0.0
      %3066 = vmatprep.subr.mxu0 0.0
      %3067 = vmatpush1.msra.mxu0 0.0
      %3068 = vmatprep.subr.mxu0 0.0
      %3069 = vmatpush1.msra.mxu0 0.0
      %3070 = vmatprep.subr.mxu0 0.0
      %3071 = vmatpush1.msra.mxu0 0.0
      %3072 = vmatprep.subr.mxu0 0.0
      %3073 = vmatpush1.msra.mxu0 0.0
      %3074 = vmatprep.subr.mxu0 0.0
      %3075 = vmatpush1.msra.mxu0 0.0
      %3076 = vmatprep.subr.mxu0 0.0
      %3077 = vmatpush1.msra.mxu0 0.0
      %3078 = vmatprep.subr.mxu0 0.0
      %3079 = vmatpush1.msra.mxu0 0.0
      %3080 = vmatprep.subr.mxu0 0.0
      %3081 = vmatpush1.msra.mxu0 0.0
      %3082 = vmatprep.subr.mxu0 0.0
      %3083 = vmatpush1.msra.mxu0 0.0
      %3084 = vmatprep.mubr.f32.mxu0 0.0
      %3085 = vmatmul.mubr.f32.gmra.mrb[0].mxu0 %v1368
      %v3086 = vpop.f32.mrb[0].mxu0
      %v3087 = vadd.f32 0.0, %v3086
      %v3088 = vpop.f32.mrb[0].mxu0
      %3089 = vmatprep.mubr.f32.mxu0 0.0
      %3090 = vmatmul.mubr.f32.gmra.mrb[0].mxu0 %v1371
      %v3091 = vpop.f32.mrb[0].mxu0
      %v3092 = vadd.f32 0.0, %v3091
      %v3093 = vpop.f32.mrb[0].mxu0
      %3094 = vmatprep.mubr.f32.mxu0 0.0
      %3095 = vmatmul.mubr.f32.gmra.mrb[0].mxu0 %v1374
      %v3096 = vpop.f32.mrb[0].mxu0
      %v3097 = vadd.f32 0.0, %v3096
      %v3098 = vpop.f32.mrb[0].mxu0
      %3099 = vmatprep.mubr.f32.mxu0 0.0
      %3100 = vmatmul.mubr.f32.gmra.mrb[0].mxu0 %v1377
      %v3101 = vpop.f32.mrb[0].mxu0
      %v3102 = vadd.f32 0.0, %v3101
      %v3103 = vpop.f32.mrb[0].mxu0
      %3104 = vmatprep.mubr.f32.mxu0 0.0
      %3105 = vmatmul.mubr.f32.gmra.mrb[0].mxu0 %v1380
      %v3106 = vpop.f32.mrb[0].mxu0
      %v3107 = vadd.f32 0.0, %v3106
      %v3108 = vpop.f32.mrb[0].mxu0
      %3109 = vmatprep.mubr.f32.mxu0 0.0
      %3110 = vmatmul.mubr.f32.gmra.mrb[0].mxu0 %v1383
      %v3111 = vpop.f32.mrb[0].mxu0
      %v3112 = vadd.f32 0.0, %v3111
      %v3113 = vpop.f32.mrb[0].mxu0
      %3114 = vmatprep.mubr.f32.mxu0 0.0
      %3115 = vmatmul.mubr.f32.gmra.mrb[0].mxu0 %v1386
      %v3116 = vpop.f32.mrb[0].mxu0
      %v3117 = vadd.f32 0.0, %v3116
      %v3118 = vpop.f32.mrb[0].mxu0
      %3119 = vdwg.mxu0
      %3120 = vmatprep.subr.mxu0 0.0
      %3121 = vmatpush1.msra.mxu0 %v2810
      %3122 = vmatprep.subr.mxu0 0.0
      %3123 = vmatpush1.msra.mxu0 %v2811
      %3124 = vmatprep.subr.mxu0 0.0
      %3125 = vmatpush1.msra.mxu0 %v2812
      %3126 = vmatprep.subr.mxu0 0.0
      %3127 = vmatpush1.msra.mxu0 %v2813
      %3128 = vmatprep.subr.mxu0 0.0
      %3129 = vmatpush1.msra.mxu0 %v2814
      %3130 = vmatprep.subr.mxu0 0.0
      %3131 = vmatpush1.msra.mxu0 %v2815
      %3132 = vmatprep.subr.mxu0 0.0
      %3133 = vmatpush1.msra.mxu0 %v2818
      %3134 = vmatprep.subr.mxu0 0.0
      %3135 = vmatpush1.msra.mxu0 0.0
      %3136 = vmatprep.subr.mxu0 0.0
      %3137 = vmatpush1.msra.mxu0 0.0
      %3138 = vmatprep.subr.mxu0 0.0
      %3139 = vmatpush1.msra.mxu0 0.0
      %3140 = vmatprep.subr.mxu0 0.0
      %3141 = vmatpush1.msra.mxu0 0.0
      %3142 = vmatprep.subr.mxu0 0.0
      %3143 = vmatpush1.msra.mxu0 0.0
      %3144 = vmatprep.subr.mxu0 0.0
      %3145 = vmatpush1.msra.mxu0 0.0
      %3146 = vmatprep.subr.mxu0 0.0
      %3147 = vmatpush1.msra.mxu0 0.0
      %3148 = vmatprep.subr.mxu0 0.0
      %3149 = vmatpush1.msra.mxu0 0.0
      %3150 = vmatprep.subr.mxu0 0.0
      %3151 = vmatpush1.msra.mxu0 0.0
      %3152 = vmatprep.subr.mxu0 0.0
      %3153 = vmatpush1.msra.mxu0 0.0
      %3154 = vmatprep.subr.mxu0 0.0
      %3155 = vmatpush1.msra.mxu0 0.0
      %3156 = vmatprep.subr.mxu0 0.0
      %3157 = vmatpush1.msra.mxu0 0.0
      %3158 = vmatprep.subr.mxu0 0.0
      %3159 = vmatpush1.msra.mxu0 0.0
      %3160 = vmatprep.subr.mxu0 0.0
      %3161 = vmatpush1.msra.mxu0 0.0
      %3162 = vmatprep.subr.mxu0 0.0
      %3163 = vmatpush1.msra.mxu0 0.0
      %3164 = vmatprep.subr.mxu0 0.0
      %3165 = vmatpush1.msra.mxu0 0.0
      %3166 = vmatprep.subr.mxu0 0.0
      %3167 = vmatpush1.msra.mxu0 0.0
      %3168 = vmatprep.subr.mxu0 0.0
      %3169 = vmatpush1.msra.mxu0 0.0
      %3170 = vmatprep.subr.mxu0 0.0
      %3171 = vmatpush1.msra.mxu0 0.0
      %3172 = vmatprep.subr.mxu0 0.0
      %3173 = vmatpush1.msra.mxu0 0.0
      %3174 = vmatprep.subr.mxu0 0.0
      %3175 = vmatpush1.msra.mxu0 0.0
      %3176 = vmatprep.subr.mxu0 0.0
      %3177 = vmatpush1.msra.mxu0 0.0
      %3178 = vmatprep.subr.mxu0 0.0
      %3179 = vmatpush1.msra.mxu0 0.0
      %3180 = vmatprep.subr.mxu0 0.0
      %3181 = vmatpush1.msra.mxu0 0.0
      %3182 = vmatprep.subr.mxu0 0.0
      %3183 = vmatpush1.msra.mxu0 0.0
      %3184 = vmatprep.mubr.f32.mxu0 0.0
      %3185 = vmatmul.mubr.f32.gmra.mrb[0].mxu0 %v1497
      %v3186 = vpop.f32.mrb[0].mxu0
      %v3187 = vadd.f32 0.0, %v3186
      %v3188 = vpop.f32.mrb[0].mxu0
      %3189 = vmatprep.mubr.f32.mxu0 0.0
      %3190 = vmatmul.mubr.f32.gmra.mrb[0].mxu0 %v1500
      %v3191 = vpop.f32.mrb[0].mxu0
      %v3192 = vadd.f32 0.0, %v3191
      %v3193 = vpop.f32.mrb[0].mxu0
      %3194 = vmatprep.mubr.f32.mxu0 0.0
      %3195 = vmatmul.mubr.f32.gmra.mrb[0].mxu0 %v1503
      %v3196 = vpop.f32.mrb[0].mxu0
      %v3197 = vadd.f32 0.0, %v3196
      %v3198 = vpop.f32.mrb[0].mxu0
      %3199 = vmatprep.mubr.f32.mxu0 0.0
      %3200 = vmatmul.mubr.f32.gmra.mrb[0].mxu0 %v1506
      %v3201 = vpop.f32.mrb[0].mxu0
      %v3202 = vadd.f32 0.0, %v3201
      %v3203 = vpop.f32.mrb[0].mxu0
      %3204 = vmatprep.mubr.f32.mxu0 0.0
      %3205 = vmatmul.mubr.f32.gmra.mrb[0].mxu0 %v1509
      %v3206 = vpop.f32.mrb[0].mxu0
      %v3207 = vadd.f32 0.0, %v3206
      %v3208 = vpop.f32.mrb[0].mxu0
      %3209 = vmatprep.mubr.f32.mxu0 0.0
      %3210 = vmatmul.mubr.f32.gmra.mrb[0].mxu0 %v1512
      %v3211 = vpop.f32.mrb[0].mxu0
      %v3212 = vadd.f32 0.0, %v3211
      %v3213 = vpop.f32.mrb[0].mxu0
      %3214 = vmatprep.mubr.f32.mxu0 0.0
      %3215 = vmatmul.mubr.f32.gmra.mrb[0].mxu0 %v1515
      %v3216 = vpop.f32.mrb[0].mxu0
      %v3217 = vadd.f32 0.0, %v3216
      %v3218 = vpop.f32.mrb[0].mxu0
      %3219 = vdwg.mxu0
      %3220 = vmatprep.subr.mxu0 0.0
      %3221 = vmatpush1.msra.mxu0 %v2810
      %3222 = vmatprep.subr.mxu0 0.0
      %3223 = vmatpush1.msra.mxu0 %v2811
      %3224 = vmatprep.subr.mxu0 0.0
      %3225 = vmatpush1.msra.mxu0 %v2812
      %3226 = vmatprep.subr.mxu0 0.0
      %3227 = vmatpush1.msra.mxu0 %v2813
      %3228 = vmatprep.subr.mxu0 0.0
      %3229 = vmatpush1.msra.mxu0 %v2814
      %3230 = vmatprep.subr.mxu0 0.0
      %3231 = vmatpush1.msra.mxu0 %v2815
      %3232 = vmatprep.subr.mxu0 0.0
      %3233 = vmatpush1.msra.mxu0 %v2818
      %3234 = vmatprep.subr.mxu0 0.0
      %3235 = vmatpush1.msra.mxu0 0.0
      %3236 = vmatprep.subr.mxu0 0.0
      %3237 = vmatpush1.msra.mxu0 0.0
      %3238 = vmatprep.subr.mxu0 0.0
      %3239 = vmatpush1.msra.mxu0 0.0
      %3240 = vmatprep.subr.mxu0 0.0
      %3241 = vmatpush1.msra.mxu0 0.0
      %3242 = vmatprep.subr.mxu0 0.0
      %3243 = vmatpush1.msra.mxu0 0.0
      %3244 = vmatprep.subr.mxu0 0.0
      %3245 = vmatpush1.msra.mxu0 0.0
      %3246 = vmatprep.subr.mxu0 0.0
      %3247 = vmatpush1.msra.mxu0 0.0
      %3248 = vmatprep.subr.mxu0 0.0
      %3249 = vmatpush1.msra.mxu0 0.0
      %3250 = vmatprep.subr.mxu0 0.0
      %3251 = vmatpush1.msra.mxu0 0.0
      %3252 = vmatprep.subr.mxu0 0.0
      %3253 = vmatpush1.msra.mxu0 0.0
      %3254 = vmatprep.subr.mxu0 0.0
      %3255 = vmatpush1.msra.mxu0 0.0
      %3256 = vmatprep.subr.mxu0 0.0
      %3257 = vmatpush1.msra.mxu0 0.0
      %3258 = vmatprep.subr.mxu0 0.0
      %3259 = vmatpush1.msra.mxu0 0.0
      %3260 = vmatprep.subr.mxu0 0.0
      %3261 = vmatpush1.msra.mxu0 0.0
      %3262 = vmatprep.subr.mxu0 0.0
      %3263 = vmatpush1.msra.mxu0 0.0
      %3264 = vmatprep.subr.mxu0 0.0
      %3265 = vmatpush1.msra.mxu0 0.0
      %3266 = vmatprep.subr.mxu0 0.0
      %3267 = vmatpush1.msra.mxu0 0.0
      %3268 = vmatprep.subr.mxu0 0.0
      %3269 = vmatpush1.msra.mxu0 0.0
      %3270 = vmatprep.subr.mxu0 0.0
      %3271 = vmatpush1.msra.mxu0 0.0
      %3272 = vmatprep.subr.mxu0 0.0
      %3273 = vmatpush1.msra.mxu0 0.0
      %3274 = vmatprep.subr.mxu0 0.0
      %3275 = vmatpush1.msra.mxu0 0.0
      %3276 = vmatprep.subr.mxu0 0.0
      %3277 = vmatpush1.msra.mxu0 0.0
      %3278 = vmatprep.subr.mxu0 0.0
      %3279 = vmatpush1.msra.mxu0 0.0
      %3280 = vmatprep.subr.mxu0 0.0
      %3281 = vmatpush1.msra.mxu0 0.0
      %3282 = vmatprep.subr.mxu0 0.0
      %3283 = vmatpush1.msra.mxu0 0.0
      %3284 = vmatprep.mubr.f32.mxu0 0.0
      %3285 = vmatmul.mubr.f32.gmra.mrb[0].mxu0 %v1626
      %v3286 = vpop.f32.mrb[0].mxu0
      %v3287 = vadd.f32 0.0, %v3286
      %v3288 = vpop.f32.mrb[0].mxu0
      %3289 = vmatprep.mubr.f32.mxu0 0.0
      %3290 = vmatmul.mubr.f32.gmra.mrb[0].mxu0 %v1629
      %v3291 = vpop.f32.mrb[0].mxu0
      %v3292 = vadd.f32 0.0, %v3291
      %v3293 = vpop.f32.mrb[0].mxu0
      %3294 = vmatprep.mubr.f32.mxu0 0.0
      %3295 = vmatmul.mubr.f32.gmra.mrb[0].mxu0 %v1632
      %v3296 = vpop.f32.mrb[0].mxu0
      %v3297 = vadd.f32 0.0, %v3296
      %v3298 = vpop.f32.mrb[0].mxu0
      %3299 = vmatprep.mubr.f32.mxu0 0.0
      %3300 = vmatmul.mubr.f32.gmra.mrb[0].mxu0 %v1635
      %v3301 = vpop.f32.mrb[0].mxu0
      %v3302 = vadd.f32 0.0, %v3301
      %v3303 = vpop.f32.mrb[0].mxu0
      %3304 = vmatprep.mubr.f32.mxu0 0.0
      %3305 = vmatmul.mubr.f32.gmra.mrb[0].mxu0 %v1638
      %v3306 = vpop.f32.mrb[0].mxu0
      %v3307 = vadd.f32 0.0, %v3306
      %v3308 = vpop.f32.mrb[0].mxu0
      %3309 = vmatprep.mubr.f32.mxu0 0.0
      %3310 = vmatmul.mubr.f32.gmra.mrb[0].mxu0 %v1641
      %v3311 = vpop.f32.mrb[0].mxu0
      %v3312 = vadd.f32 0.0, %v3311
      %v3313 = vpop.f32.mrb[0].mxu0
      %3314 = vmatprep.mubr.f32.mxu0 0.0
      %3315 = vmatmul.mubr.f32.gmra.mrb[0].mxu0 %v1644
      %v3316 = vpop.f32.mrb[0].mxu0
      %v3317 = vadd.f32 0.0, %v3316
      %v3318 = vpop.f32.mrb[0].mxu0
      %3319 = vdwg.mxu0
      %3320 = vmatprep.subr.mxu0 0.0
      %3321 = vmatpush1.msra.mxu0 %v2810
      %3322 = vmatprep.subr.mxu0 0.0
      %3323 = vmatpush1.msra.mxu0 %v2811
      %3324 = vmatprep.subr.mxu0 0.0
      %3325 = vmatpush1.msra.mxu0 %v2812
      %3326 = vmatprep.subr.mxu0 0.0
      %3327 = vmatpush1.msra.mxu0 %v2813
      %3328 = vmatprep.subr.mxu0 0.0
      %3329 = vmatpush1.msra.mxu0 %v2814
      %3330 = vmatprep.subr.mxu0 0.0
      %3331 = vmatpush1.msra.mxu0 %v2815
      %3332 = vmatprep.subr.mxu0 0.0
      %3333 = vmatpush1.msra.mxu0 %v2818
      %3334 = vmatprep.subr.mxu0 0.0
      %3335 = vmatpush1.msra.mxu0 0.0
      %3336 = vmatprep.subr.mxu0 0.0
      %3337 = vmatpush1.msra.mxu0 0.0
      %3338 = vmatprep.subr.mxu0 0.0
      %3339 = vmatpush1.msra.mxu0 0.0
      %3340 = vmatprep.subr.mxu0 0.0
      %3341 = vmatpush1.msra.mxu0 0.0
      %3342 = vmatprep.subr.mxu0 0.0
      %3343 = vmatpush1.msra.mxu0 0.0
      %3344 = vmatprep.subr.mxu0 0.0
      %3345 = vmatpush1.msra.mxu0 0.0
      %3346 = vmatprep.subr.mxu0 0.0
      %3347 = vmatpush1.msra.mxu0 0.0
      %3348 = vmatprep.subr.mxu0 0.0
      %3349 = vmatpush1.msra.mxu0 0.0
      %3350 = vmatprep.subr.mxu0 0.0
      %3351 = vmatpush1.msra.mxu0 0.0
      %3352 = vmatprep.subr.mxu0 0.0
      %3353 = vmatpush1.msra.mxu0 0.0
      %3354 = vmatprep.subr.mxu0 0.0
      %3355 = vmatpush1.msra.mxu0 0.0
      %3356 = vmatprep.subr.mxu0 0.0
      %3357 = vmatpush1.msra.mxu0 0.0
      %3358 = vmatprep.subr.mxu0 0.0
      %3359 = vmatpush1.msra.mxu0 0.0
      %3360 = vmatprep.subr.mxu0 0.0
      %3361 = vmatpush1.msra.mxu0 0.0
      %3362 = vmatprep.subr.mxu0 0.0
      %3363 = vmatpush1.msra.mxu0 0.0
      %3364 = vmatprep.subr.mxu0 0.0
      %3365 = vmatpush1.msra.mxu0 0.0
      %3366 = vmatprep.subr.mxu0 0.0
      %3367 = vmatpush1.msra.mxu0 0.0
      %3368 = vmatprep.subr.mxu0 0.0
      %3369 = vmatpush1.msra.mxu0 0.0
      %3370 = vmatprep.subr.mxu0 0.0
      %3371 = vmatpush1.msra.mxu0 0.0
      %3372 = vmatprep.subr.mxu0 0.0
      %3373 = vmatpush1.msra.mxu0 0.0
      %3374 = vmatprep.subr.mxu0 0.0
      %3375 = vmatpush1.msra.mxu0 0.0
      %3376 = vmatprep.subr.mxu0 0.0
      %3377 = vmatpush1.msra.mxu0 0.0
      %3378 = vmatprep.subr.mxu0 0.0
      %3379 = vmatpush1.msra.mxu0 0.0
      %3380 = vmatprep.subr.mxu0 0.0
      %3381 = vmatpush1.msra.mxu0 0.0
      %3382 = vmatprep.subr.mxu0 0.0
      %3383 = vmatpush1.msra.mxu0 0.0
      %3384 = vmatprep.mubr.f32.mxu0 0.0
      %3385 = vmatmul.mubr.f32.gmra.mrb[0].mxu0 %v1755
      %v3386 = vpop.f32.mrb[0].mxu0
      %v3387 = vadd.f32 0.0, %v3386
      %v3388 = vpop.f32.mrb[0].mxu0
      %3389 = vmatprep.mubr.f32.mxu0 0.0
      %3390 = vmatmul.mubr.f32.gmra.mrb[0].mxu0 %v1758
      %v3391 = vpop.f32.mrb[0].mxu0
      %v3392 = vadd.f32 0.0, %v3391
      %v3393 = vpop.f32.mrb[0].mxu0
      %3394 = vmatprep.mubr.f32.mxu0 0.0
      %3395 = vmatmul.mubr.f32.gmra.mrb[0].mxu0 %v1761
      %v3396 = vpop.f32.mrb[0].mxu0
      %v3397 = vadd.f32 0.0, %v3396
      %v3398 = vpop.f32.mrb[0].mxu0
      %3399 = vmatprep.mubr.f32.mxu0 0.0
      %3400 = vmatmul.mubr.f32.gmra.mrb[0].mxu0 %v1764
      %v3401 = vpop.f32.mrb[0].mxu0
      %v3402 = vadd.f32 0.0, %v3401
      %v3403 = vpop.f32.mrb[0].mxu0
      %3404 = vmatprep.mubr.f32.mxu0 0.0
      %3405 = vmatmul.mubr.f32.gmra.mrb[0].mxu0 %v1767
      %v3406 = vpop.f32.mrb[0].mxu0
      %v3407 = vadd.f32 0.0, %v3406
      %v3408 = vpop.f32.mrb[0].mxu0
      %3409 = vmatprep.mubr.f32.mxu0 0.0
      %3410 = vmatmul.mubr.f32.gmra.mrb[0].mxu0 %v1770
      %v3411 = vpop.f32.mrb[0].mxu0
      %v3412 = vadd.f32 0.0, %v3411
      %v3413 = vpop.f32.mrb[0].mxu0
      %3414 = vmatprep.mubr.f32.mxu0 0.0
      %3415 = vmatmul.mubr.f32.gmra.mrb[0].mxu0 %v1773
      %v3416 = vpop.f32.mrb[0].mxu0
      %v3417 = vadd.f32 0.0, %v3416
      %v3418 = vpop.f32.mrb[0].mxu0
      %3419 = vdwg.mxu0
      %3420 = vmatprep.subr.mxu0 0.0
      %3421 = vmatpush1.msra.mxu0 %v2810
      %3422 = vmatprep.subr.mxu0 0.0
      %3423 = vmatpush1.msra.mxu0 %v2811
      %3424 = vmatprep.subr.mxu0 0.0
      %3425 = vmatpush1.msra.mxu0 %v2812
      %3426 = vmatprep.subr.mxu0 0.0
      %3427 = vmatpush1.msra.mxu0 %v2813
      %3428 = vmatprep.subr.mxu0 0.0
      %3429 = vmatpush1.msra.mxu0 %v2814
      %3430 = vmatprep.subr.mxu0 0.0
      %3431 = vmatpush1.msra.mxu0 %v2815
      %3432 = vmatprep.subr.mxu0 0.0
      %3433 = vmatpush1.msra.mxu0 %v2818
      %3434 = vmatprep.subr.mxu0 0.0
      %3435 = vmatpush1.msra.mxu0 0.0
      %3436 = vmatprep.subr.mxu0 0.0
      %3437 = vmatpush1.msra.mxu0 0.0
      %3438 = vmatprep.subr.mxu0 0.0
      %3439 = vmatpush1.msra.mxu0 0.0
      %3440 = vmatprep.subr.mxu0 0.0
      %3441 = vmatpush1.msra.mxu0 0.0
      %3442 = vmatprep.subr.mxu0 0.0
      %3443 = vmatpush1.msra.mxu0 0.0
      %3444 = vmatprep.subr.mxu0 0.0
      %3445 = vmatpush1.msra.mxu0 0.0
      %3446 = vmatprep.subr.mxu0 0.0
      %3447 = vmatpush1.msra.mxu0 0.0
      %3448 = vmatprep.subr.mxu0 0.0
      %3449 = vmatpush1.msra.mxu0 0.0
      %3450 = vmatprep.subr.mxu0 0.0
      %3451 = vmatpush1.msra.mxu0 0.0
      %3452 = vmatprep.subr.mxu0 0.0
      %3453 = vmatpush1.msra.mxu0 0.0
      %3454 = vmatprep.subr.mxu0 0.0
      %3455 = vmatpush1.msra.mxu0 0.0
      %3456 = vmatprep.subr.mxu0 0.0
      %3457 = vmatpush1.msra.mxu0 0.0
      %3458 = vmatprep.subr.mxu0 0.0
      %3459 = vmatpush1.msra.mxu0 0.0
      %3460 = vmatprep.subr.mxu0 0.0
      %3461 = vmatpush1.msra.mxu0 0.0
      %3462 = vmatprep.subr.mxu0 0.0
      %3463 = vmatpush1.msra.mxu0 0.0
      %3464 = vmatprep.subr.mxu0 0.0
      %3465 = vmatpush1.msra.mxu0 0.0
      %3466 = vmatprep.subr.mxu0 0.0
      %3467 = vmatpush1.msra.mxu0 0.0
      %3468 = vmatprep.subr.mxu0 0.0
      %3469 = vmatpush1.msra.mxu0 0.0
      %3470 = vmatprep.subr.mxu0 0.0
      %3471 = vmatpush1.msra.mxu0 0.0
      %3472 = vmatprep.subr.mxu0 0.0
      %3473 = vmatpush1.msra.mxu0 0.0
      %3474 = vmatprep.subr.mxu0 0.0
      %3475 = vmatpush1.msra.mxu0 0.0
      %3476 = vmatprep.subr.mxu0 0.0
      %3477 = vmatpush1.msra.mxu0 0.0
      %3478 = vmatprep.subr.mxu0 0.0
      %3479 = vmatpush1.msra.mxu0 0.0
      %3480 = vmatprep.subr.mxu0 0.0
      %3481 = vmatpush1.msra.mxu0 0.0
      %3482 = vmatprep.subr.mxu0 0.0
      %3483 = vmatpush1.msra.mxu0 0.0
      %3484 = vmatprep.mubr.f32.mxu0 0.0
      %3485 = vmatmul.mubr.f32.gmra.mrb[0].mxu0 %v1884
      %v3486 = vpop.f32.mrb[0].mxu0
      %v3487 = vadd.f32 0.0, %v3486
      %v3488 = vpop.f32.mrb[0].mxu0
      %3489 = vmatprep.mubr.f32.mxu0 0.0
      %3490 = vmatmul.mubr.f32.gmra.mrb[0].mxu0 %v1887
      %v3491 = vpop.f32.mrb[0].mxu0
      %v3492 = vadd.f32 0.0, %v3491
      %v3493 = vpop.f32.mrb[0].mxu0
      %3494 = vmatprep.mubr.f32.mxu0 0.0
      %3495 = vmatmul.mubr.f32.gmra.mrb[0].mxu0 %v1890
      %v3496 = vpop.f32.mrb[0].mxu0
      %v3497 = vadd.f32 0.0, %v3496
      %v3498 = vpop.f32.mrb[0].mxu0
      %3499 = vmatprep.mubr.f32.mxu0 0.0
      %3500 = vmatmul.mubr.f32.gmra.mrb[0].mxu0 %v1893
      %v3501 = vpop.f32.mrb[0].mxu0
      %v3502 = vadd.f32 0.0, %v3501
      %v3503 = vpop.f32.mrb[0].mxu0
      %3504 = vmatprep.mubr.f32.mxu0 0.0
      %3505 = vmatmul.mubr.f32.gmra.mrb[0].mxu0 %v1896
      %v3506 = vpop.f32.mrb[0].mxu0
      %v3507 = vadd.f32 0.0, %v3506
      %v3508 = vpop.f32.mrb[0].mxu0
      %3509 = vmatprep.mubr.f32.mxu0 0.0
      %3510 = vmatmul.mubr.f32.gmra.mrb[0].mxu0 %v1899
      %v3511 = vpop.f32.mrb[0].mxu0
      %v3512 = vadd.f32 0.0, %v3511
      %v3513 = vpop.f32.mrb[0].mxu0
      %3514 = vmatprep.mubr.f32.mxu0 0.0
      %3515 = vmatmul.mubr.f32.gmra.mrb[0].mxu0 %v1902
      %v3516 = vpop.f32.mrb[0].mxu0
      %v3517 = vadd.f32 0.0, %v3516
      %v3518 = vpop.f32.mrb[0].mxu0
      %3519 = vdwg.mxu0
      %3520 = vmatprep.subr.mxu0 0.0
      %3521 = vmatpush1.msra.mxu0 %v2810
      %3522 = vmatprep.subr.mxu0 0.0
      %3523 = vmatpush1.msra.mxu0 %v2811
      %3524 = vmatprep.subr.mxu0 0.0
      %3525 = vmatpush1.msra.mxu0 %v2812
      %3526 = vmatprep.subr.mxu0 0.0
      %3527 = vmatpush1.msra.mxu0 %v2813
      %3528 = vmatprep.subr.mxu0 0.0
      %3529 = vmatpush1.msra.mxu0 %v2814
      %3530 = vmatprep.subr.mxu0 0.0
      %3531 = vmatpush1.msra.mxu0 %v2815
      %3532 = vmatprep.subr.mxu0 0.0
      %3533 = vmatpush1.msra.mxu0 %v2818
      %3534 = vmatprep.subr.mxu0 0.0
      %3535 = vmatpush1.msra.mxu0 0.0
      %3536 = vmatprep.subr.mxu0 0.0
      %3537 = vmatpush1.msra.mxu0 0.0
      %3538 = vmatprep.subr.mxu0 0.0
      %3539 = vmatpush1.msra.mxu0 0.0
      %3540 = vmatprep.subr.mxu0 0.0
      %3541 = vmatpush1.msra.mxu0 0.0
      %3542 = vmatprep.subr.mxu0 0.0
      %3543 = vmatpush1.msra.mxu0 0.0
      %3544 = vmatprep.subr.mxu0 0.0
      %3545 = vmatpush1.msra.mxu0 0.0
      %3546 = vmatprep.subr.mxu0 0.0
      %3547 = vmatpush1.msra.mxu0 0.0
      %3548 = vmatprep.subr.mxu0 0.0
      %3549 = vmatpush1.msra.mxu0 0.0
      %3550 = vmatprep.subr.mxu0 0.0
      %3551 = vmatpush1.msra.mxu0 0.0
      %3552 = vmatprep.subr.mxu0 0.0
      %3553 = vmatpush1.msra.mxu0 0.0
      %3554 = vmatprep.subr.mxu0 0.0
      %3555 = vmatpush1.msra.mxu0 0.0
      %3556 = vmatprep.subr.mxu0 0.0
      %3557 = vmatpush1.msra.mxu0 0.0
      %3558 = vmatprep.subr.mxu0 0.0
      %3559 = vmatpush1.msra.mxu0 0.0
      %3560 = vmatprep.subr.mxu0 0.0
      %3561 = vmatpush1.msra.mxu0 0.0
      %3562 = vmatprep.subr.mxu0 0.0
      %3563 = vmatpush1.msra.mxu0 0.0
      %3564 = vmatprep.subr.mxu0 0.0
      %3565 = vmatpush1.msra.mxu0 0.0
      %3566 = vmatprep.subr.mxu0 0.0
      %3567 = vmatpush1.msra.mxu0 0.0
      %3568 = vmatprep.subr.mxu0 0.0
      %3569 = vmatpush1.msra.mxu0 0.0
      %3570 = vmatprep.subr.mxu0 0.0
      %3571 = vmatpush1.msra.mxu0 0.0
      %3572 = vmatprep.subr.mxu0 0.0
      %3573 = vmatpush1.msra.mxu0 0.0
      %3574 = vmatprep.subr.mxu0 0.0
      %3575 = vmatpush1.msra.mxu0 0.0
      %3576 = vmatprep.subr.mxu0 0.0
      %3577 = vmatpush1.msra.mxu0 0.0
      %3578 = vmatprep.subr.mxu0 0.0
      %3579 = vmatpush1.msra.mxu0 0.0
      %3580 = vmatprep.subr.mxu0 0.0
      %3581 = vmatpush1.msra.mxu0 0.0
      %3582 = vmatprep.subr.mxu0 0.0
      %3583 = vmatpush1.msra.mxu0 0.0
      %3584 = vmatprep.mubr.f32.mxu0 0.0
      %3585 = vmatmul.mubr.f32.gmra.mrb[0].mxu0 %v2013
      %v3586 = vpop.f32.mrb[0].mxu0
      %v3587 = vadd.f32 0.0, %v3586
      %v3588 = vpop.f32.mrb[0].mxu0
      %3589 = vmatprep.mubr.f32.mxu0 0.0
      %3590 = vmatmul.mubr.f32.gmra.mrb[0].mxu0 %v2016
      %v3591 = vpop.f32.mrb[0].mxu0
      %v3592 = vadd.f32 0.0, %v3591
      %v3593 = vpop.f32.mrb[0].mxu0
      %3594 = vmatprep.mubr.f32.mxu0 0.0
      %3595 = vmatmul.mubr.f32.gmra.mrb[0].mxu0 %v2019
      %v3596 = vpop.f32.mrb[0].mxu0
      %v3597 = vadd.f32 0.0, %v3596
      %v3598 = vpop.f32.mrb[0].mxu0
      %3599 = vmatprep.mubr.f32.mxu0 0.0
      %3600 = vmatmul.mubr.f32.gmra.mrb[0].mxu0 %v2022
      %v3601 = vpop.f32.mrb[0].mxu0
      %v3602 = vadd.f32 0.0, %v3601
      %v3603 = vpop.f32.mrb[0].mxu0
      %3604 = vmatprep.mubr.f32.mxu0 0.0
      %3605 = vmatmul.mubr.f32.gmra.mrb[0].mxu0 %v2025
      %v3606 = vpop.f32.mrb[0].mxu0
      %v3607 = vadd.f32 0.0, %v3606
      %v3608 = vpop.f32.mrb[0].mxu0
      %3609 = vmatprep.mubr.f32.mxu0 0.0
      %3610 = vmatmul.mubr.f32.gmra.mrb[0].mxu0 %v2028
      %v3611 = vpop.f32.mrb[0].mxu0
      %v3612 = vadd.f32 0.0, %v3611
      %v3613 = vpop.f32.mrb[0].mxu0
      %3614 = vmatprep.mubr.f32.mxu0 0.0
      %3615 = vmatmul.mubr.f32.gmra.mrb[0].mxu0 %v2031
      %v3616 = vpop.f32.mrb[0].mxu0
      %v3617 = vadd.f32 0.0, %v3616
      %v3618 = vpop.f32.mrb[0].mxu0
      %3619 = vdwg.mxu0
      %3620 = vmatprep.subr.mxu0 0.0
      %3621 = vmatpush1.msra.mxu0 %v2810
      %3622 = vmatprep.subr.mxu0 0.0
      %3623 = vmatpush1.msra.mxu0 %v2811
      %3624 = vmatprep.subr.mxu0 0.0
      %3625 = vmatpush1.msra.mxu0 %v2812
      %3626 = vmatprep.subr.mxu0 0.0
      %3627 = vmatpush1.msra.mxu0 %v2813
      %3628 = vmatprep.subr.mxu0 0.0
      %3629 = vmatpush1.msra.mxu0 %v2814
      %3630 = vmatprep.subr.mxu0 0.0
      %3631 = vmatpush1.msra.mxu0 %v2815
      %3632 = vmatprep.subr.mxu0 0.0
      %3633 = vmatpush1.msra.mxu0 %v2818
      %3634 = vmatprep.subr.mxu0 0.0
      %3635 = vmatpush1.msra.mxu0 0.0
      %3636 = vmatprep.subr.mxu0 0.0
      %3637 = vmatpush1.msra.mxu0 0.0
      %3638 = vmatprep.subr.mxu0 0.0
      %3639 = vmatpush1.msra.mxu0 0.0
      %3640 = vmatprep.subr.mxu0 0.0
      %3641 = vmatpush1.msra.mxu0 0.0
      %3642 = vmatprep.subr.mxu0 0.0
      %3643 = vmatpush1.msra.mxu0 0.0
      %3644 = vmatprep.subr.mxu0 0.0
      %3645 = vmatpush1.msra.mxu0 0.0
      %3646 = vmatprep.subr.mxu0 0.0
      %3647 = vmatpush1.msra.mxu0 0.0
      %3648 = vmatprep.subr.mxu0 0.0
      %3649 = vmatpush1.msra.mxu0 0.0
      %3650 = vmatprep.subr.mxu0 0.0
      %3651 = vmatpush1.msra.mxu0 0.0
      %3652 = vmatprep.subr.mxu0 0.0
      %3653 = vmatpush1.msra.mxu0 0.0
      %3654 = vmatprep.subr.mxu0 0.0
      %3655 = vmatpush1.msra.mxu0 0.0
      %3656 = vmatprep.subr.mxu0 0.0
      %3657 = vmatpush1.msra.mxu0 0.0
      %3658 = vmatprep.subr.mxu0 0.0
      %3659 = vmatpush1.msra.mxu0 0.0
      %3660 = vmatprep.subr.mxu0 0.0
      %3661 = vmatpush1.msra.mxu0 0.0
      %3662 = vmatprep.subr.mxu0 0.0
      %3663 = vmatpush1.msra.mxu0 0.0
      %3664 = vmatprep.subr.mxu0 0.0
      %3665 = vmatpush1.msra.mxu0 0.0
      %3666 = vmatprep.subr.mxu0 0.0
      %3667 = vmatpush1.msra.mxu0 0.0
      %3668 = vmatprep.subr.mxu0 0.0
      %3669 = vmatpush1.msra.mxu0 0.0
      %3670 = vmatprep.subr.mxu0 0.0
      %3671 = vmatpush1.msra.mxu0 0.0
      %3672 = vmatprep.subr.mxu0 0.0
      %3673 = vmatpush1.msra.mxu0 0.0
      %3674 = vmatprep.subr.mxu0 0.0
      %3675 = vmatpush1.msra.mxu0 0.0
      %3676 = vmatprep.subr.mxu0 0.0
      %3677 = vmatpush1.msra.mxu0 0.0
      %3678 = vmatprep.subr.mxu0 0.0
      %3679 = vmatpush1.msra.mxu0 0.0
      %3680 = vmatprep.subr.mxu0 0.0
      %3681 = vmatpush1.msra.mxu0 0.0
      %3682 = vmatprep.subr.mxu0 0.0
      %3683 = vmatpush1.msra.mxu0 0.0
      %3684 = vmatprep.mubr.f32.mxu0 0.0
      %3685 = vmatmul.mubr.f32.gmra.mrb[0].mxu0 %v2142
      %v3686 = vpop.f32.mrb[0].mxu0
      %v3687 = vadd.f32 0.0, %v3686
      %v3688 = vpop.f32.mrb[0].mxu0
      %3689 = vmatprep.mubr.f32.mxu0 0.0
      %3690 = vmatmul.mubr.f32.gmra.mrb[0].mxu0 %v2145
      %v3691 = vpop.f32.mrb[0].mxu0
      %v3692 = vadd.f32 0.0, %v3691
      %v3693 = vpop.f32.mrb[0].mxu0
      %3694 = vmatprep.mubr.f32.mxu0 0.0
      %3695 = vmatmul.mubr.f32.gmra.mrb[0].mxu0 %v2148
      %v3696 = vpop.f32.mrb[0].mxu0
      %v3697 = vadd.f32 0.0, %v3696
      %v3698 = vpop.f32.mrb[0].mxu0
      %3699 = vmatprep.mubr.f32.mxu0 0.0
      %3700 = vmatmul.mubr.f32.gmra.mrb[0].mxu0 %v2151
      %v3701 = vpop.f32.mrb[0].mxu0
      %v3702 = vadd.f32 0.0, %v3701
      %v3703 = vpop.f32.mrb[0].mxu0
      %3704 = vmatprep.mubr.f32.mxu0 0.0
      %3705 = vmatmul.mubr.f32.gmra.mrb[0].mxu0 %v2154
      %v3706 = vpop.f32.mrb[0].mxu0
      %v3707 = vadd.f32 0.0, %v3706
      %v3708 = vpop.f32.mrb[0].mxu0
      %3709 = vmatprep.mubr.f32.mxu0 0.0
      %3710 = vmatmul.mubr.f32.gmra.mrb[0].mxu0 %v2157
      %v3711 = vpop.f32.mrb[0].mxu0
      %v3712 = vadd.f32 0.0, %v3711
      %v3713 = vpop.f32.mrb[0].mxu0
      %3714 = vmatprep.mubr.f32.mxu0 0.0
      %3715 = vmatmul.mubr.f32.gmra.mrb[0].mxu0 %v2160
      %v3716 = vpop.f32.mrb[0].mxu0
      %v3717 = vadd.f32 0.0, %v3716
      %v3718 = vpop.f32.mrb[0].mxu0
      %3719 = vdwg.mxu0
      %3727 = vrot.lane.b32.xlu0 %v2987, 12
      %v3728 = vpop.permute.xlu0 %3727
      %3729 = vrot.lane.b32.xlu0 %v2992, 12
      %v3730 = vpop.permute.xlu0 %3729
      %3731 = vrot.lane.b32.xlu0 %v2997, 12
      %v3732 = vpop.permute.xlu0 %3731
      %3733 = vrot.lane.b32.xlu0 %v3002, 12
      %v3734 = vpop.permute.xlu0 %3733
      %3735 = vrot.lane.b32.xlu0 %v3007, 12
      %v3736 = vpop.permute.xlu0 %3735
      %3737 = vrot.lane.b32.xlu0 %v3012, 12
      %v3738 = vpop.permute.xlu0 %3737
      %3739 = vrot.lane.b32.xlu0 %v3017, 12
      %v3740 = vpop.permute.xlu0 %3739
      %3755 = vrot.lane.b32.xlu0 %v3087, 24
      %v3756 = vpop.permute.xlu0 %3755
      %3757 = vrot.lane.b32.xlu0 %v3092, 24
      %v3758 = vpop.permute.xlu0 %3757
      %3759 = vrot.lane.b32.xlu0 %v3097, 24
      %v3760 = vpop.permute.xlu0 %3759
      %3761 = vrot.lane.b32.xlu0 %v3102, 24
      %v3762 = vpop.permute.xlu0 %3761
      %3763 = vrot.lane.b32.xlu0 %v3107, 24
      %v3764 = vpop.permute.xlu0 %3763
      %3765 = vrot.lane.b32.xlu0 %v3112, 24
      %v3766 = vpop.permute.xlu0 %3765
      %3767 = vrot.lane.b32.xlu0 %v3117, 24
      %v3768 = vpop.permute.xlu0 %3767
      %3783 = vrot.lane.b32.xlu0 %v3187, 36
      %v3784 = vpop.permute.xlu0 %3783
      %3785 = vrot.lane.b32.xlu0 %v3192, 36
      %v3786 = vpop.permute.xlu0 %3785
      %3787 = vrot.lane.b32.xlu0 %v3197, 36
      %v3788 = vpop.permute.xlu0 %3787
      %3789 = vrot.lane.b32.xlu0 %v3202, 36
      %v3790 = vpop.permute.xlu0 %3789
      %3791 = vrot.lane.b32.xlu0 %v3207, 36
      %v3792 = vpop.permute.xlu0 %3791
      %3793 = vrot.lane.b32.xlu0 %v3212, 36
      %v3794 = vpop.permute.xlu0 %3793
      %3795 = vrot.lane.b32.xlu0 %v3217, 36
      %v3796 = vpop.permute.xlu0 %3795
      %3811 = vrot.lane.b32.xlu0 %v3287, 48
      %v3812 = vpop.permute.xlu0 %3811
      %3813 = vrot.lane.b32.xlu0 %v3292, 48
      %v3814 = vpop.permute.xlu0 %3813
      %3815 = vrot.lane.b32.xlu0 %v3297, 48
      %v3816 = vpop.permute.xlu0 %3815
      %3817 = vrot.lane.b32.xlu0 %v3302, 48
      %v3818 = vpop.permute.xlu0 %3817
      %3819 = vrot.lane.b32.xlu0 %v3307, 48
      %v3820 = vpop.permute.xlu0 %3819
      %3821 = vrot.lane.b32.xlu0 %v3312, 48
      %v3822 = vpop.permute.xlu0 %3821
      %3823 = vrot.lane.b32.xlu0 %v3317, 48
      %v3824 = vpop.permute.xlu0 %3823
      %3839 = vrot.lane.b32.xlu0 %v3387, 60
      %v3840 = vpop.permute.xlu0 %3839
      %3841 = vrot.lane.b32.xlu0 %v3392, 60
      %v3842 = vpop.permute.xlu0 %3841
      %3843 = vrot.lane.b32.xlu0 %v3397, 60
      %v3844 = vpop.permute.xlu0 %3843
      %3845 = vrot.lane.b32.xlu0 %v3402, 60
      %v3846 = vpop.permute.xlu0 %3845
      %3847 = vrot.lane.b32.xlu0 %v3407, 60
      %v3848 = vpop.permute.xlu0 %3847
      %3849 = vrot.lane.b32.xlu0 %v3412, 60
      %v3850 = vpop.permute.xlu0 %3849
      %3851 = vrot.lane.b32.xlu0 %v3417, 60
      %v3852 = vpop.permute.xlu0 %3851
      %3867 = vrot.lane.b32.xlu0 %v3487, 72
      %v3868 = vpop.permute.xlu0 %3867
      %3869 = vrot.lane.b32.xlu0 %v3492, 72
      %v3870 = vpop.permute.xlu0 %3869
      %3871 = vrot.lane.b32.xlu0 %v3497, 72
      %v3872 = vpop.permute.xlu0 %3871
      %3873 = vrot.lane.b32.xlu0 %v3502, 72
      %v3874 = vpop.permute.xlu0 %3873
      %3875 = vrot.lane.b32.xlu0 %v3507, 72
      %v3876 = vpop.permute.xlu0 %3875
      %3877 = vrot.lane.b32.xlu0 %v3512, 72
      %v3878 = vpop.permute.xlu0 %3877
      %3879 = vrot.lane.b32.xlu0 %v3517, 72
      %v3880 = vpop.permute.xlu0 %3879
      %3895 = vrot.lane.b32.xlu0 %v3587, 84
      %v3896 = vpop.permute.xlu0 %3895
      %3897 = vrot.lane.b32.xlu0 %v3592, 84
      %v3898 = vpop.permute.xlu0 %3897
      %3899 = vrot.lane.b32.xlu0 %v3597, 84
      %v3900 = vpop.permute.xlu0 %3899
      %3901 = vrot.lane.b32.xlu0 %v3602, 84
      %v3902 = vpop.permute.xlu0 %3901
      %3903 = vrot.lane.b32.xlu0 %v3607, 84
      %v3904 = vpop.permute.xlu0 %3903
      %3905 = vrot.lane.b32.xlu0 %v3612, 84
      %v3906 = vpop.permute.xlu0 %3905
      %3907 = vrot.lane.b32.xlu0 %v3617, 84
      %v3908 = vpop.permute.xlu0 %3907
      %3923 = vrot.lane.b32.xlu0 %v3687, 96
      %v3924 = vpop.permute.xlu0 %3923
      %3925 = vrot.lane.b32.xlu0 %v3692, 96
      %v3926 = vpop.permute.xlu0 %3925
      %3927 = vrot.lane.b32.xlu0 %v3697, 96
      %v3928 = vpop.permute.xlu0 %3927
      %3929 = vrot.lane.b32.xlu0 %v3702, 96
      %v3930 = vpop.permute.xlu0 %3929
      %3931 = vrot.lane.b32.xlu0 %v3707, 96
      %v3932 = vpop.permute.xlu0 %3931
      %3933 = vrot.lane.b32.xlu0 %v3712, 96
      %v3934 = vpop.permute.xlu0 %3933
      %3935 = vrot.lane.b32.xlu0 %v3717, 96
      %v3936 = vpop.permute.xlu0 %3935
      %v3944 = vsel %vm2494, %v2887, %v3728
      %v3945 = vsel %vm2494, %v2892, %v3730
      %v3946 = vsel %vm2494, %v2897, %v3732
      %v3947 = vsel %vm2494, %v2902, %v3734
      %v3948 = vsel %vm2494, %v2907, %v3736
      %v3949 = vsel %vm2494, %v2912, %v3738
      %v3950 = vsel %vm2494, %v2917, %v3740
      %v3951 = vsel %vm2510, %v3944, %v3756
      %v3952 = vsel %vm2510, %v3945, %v3758
      %v3953 = vsel %vm2510, %v3946, %v3760
      %v3954 = vsel %vm2510, %v3947, %v3762
      %v3955 = vsel %vm2510, %v3948, %v3764
      %v3956 = vsel %vm2510, %v3949, %v3766
      %v3957 = vsel %vm2510, %v3950, %v3768
      %v3958 = vsel %vm2526, %v3951, %v3784
      %v3959 = vsel %vm2526, %v3952, %v3786
      %v3960 = vsel %vm2526, %v3953, %v3788
      %v3961 = vsel %vm2526, %v3954, %v3790
      %v3962 = vsel %vm2526, %v3955, %v3792
      %v3963 = vsel %vm2526, %v3956, %v3794
      %v3964 = vsel %vm2526, %v3957, %v3796
      %v3965 = vsel %vm2542, %v3958, %v3812
      %v3966 = vsel %vm2542, %v3959, %v3814
      %v3967 = vsel %vm2542, %v3960, %v3816
      %v3968 = vsel %vm2542, %v3961, %v3818
      %v3969 = vsel %vm2542, %v3962, %v3820
      %v3970 = vsel %vm2542, %v3963, %v3822
      %v3971 = vsel %vm2542, %v3964, %v3824
      %vm3972 = vcmask 490496
      %v3973 = vsel %vm3972, %v3965, %v3840
      %v3974 = vsel %vm3972, %v3966, %v3842
      %v3975 = vsel %vm3972, %v3967, %v3844
      %v3976 = vsel %vm3972, %v3968, %v3846
      %v3977 = vsel %vm3972, %v3969, %v3848
      %v3978 = vsel %vm3972, %v3970, %v3850
      %v3979 = vsel %vm3972, %v3971, %v3852
      %vm3980 = vcmask 588800
      %v3981 = vsel %vm3980, %v3973, %v3868
      %v3982 = vsel %vm3980, %v3974, %v3870
      %v3983 = vsel %vm3980, %v3975, %v3872
      %v3984 = vsel %vm3980, %v3976, %v3874
      %v3985 = vsel %vm3980, %v3977, %v3876
      %v3986 = vsel %vm3980, %v3978, %v3878
      %v3987 = vsel %vm3980, %v3979, %v3880
      %vm3988 = vcmask 687104
      %v3989 = vsel %vm3988, %v3981, %v3896
      %v3990 = vsel %vm3988, %v3982, %v3898
      %v3991 = vsel %vm3988, %v3983, %v3900
      %v3992 = vsel %vm3988, %v3984, %v3902
      %v3993 = vsel %vm3988, %v3985, %v3904
      %v3994 = vsel %vm3988, %v3986, %v3906
      %v3995 = vsel %vm3988, %v3987, %v3908
      %vm3996 = vcmask 785408
      %v3997 = vsel %vm3996, %v3989, %v3924
      %v3998 = vsel %vm3996, %v3990, %v3926
      %v3999 = vsel %vm3996, %v3991, %v3928
      %v4000 = vsel %vm3996, %v3992, %v3930
      %v4001 = vsel %vm3996, %v3993, %v3932
      %v4002 = vsel %vm3996, %v3994, %v3934
      %v4003 = vsel %vm3996, %v3995, %v3936
      %v4004 = vld [vmem:[%s799] sm:$0xff]
      %v4005 = vld [vmem:[%s799 + $0x8] sm:$0xff]
      %v4006 = vld [vmem:[%s799 + $0x10] sm:$0xff]
      %v4007 = vld [vmem:[%s799 + $0x18] sm:$0xff]
      %v4008 = vld [vmem:[%s799 + $0x20] sm:$0xff]
      %v4009 = vld [vmem:[%s799 + $0x28] sm:$0xff]
      %v4010 = vld [vmem:[%s799 + $0x30] sm:$0xff]
      %v4011 = vld [vmem:[%s799 + $0x38] sm:$0xff]
      %v4012 = vld [vmem:[%s799 + $0x40] sm:$0xff]
      %v4013 = vld [vmem:[%s799 + $0x48] sm:$0xff]
      %v4014 = vld [vmem:[%s799 + $0x50] sm:$0xff]
      %v4015 = vld [vmem:[%s799 + $0x58] sm:$0xff]
      %v4016 = vld [vmem:[%s799 + $0x60] sm:$0xff]
      %v4017 = vld [vmem:[%s799 + $0x68] sm:$0xf]
      %v4018 = vld [vmem:[%s802] sm:$0x1]
      %v4020 = vlaneseq
      %v4021 = vshrl.u32 %v4020, 7
      %v4022 = vsub.s32 0, %v4021
      %v4023 = vrot.slane %v4018, %v4022
      %vm4025 = vcmask 883712
      %v4027 = vsel %vm4025, %v3997, 0
      %v4030 = vsel %vm4025, %v3998, 0
      %v4033 = vsel %vm4025, %v3999, 0
      %v4036 = vsel %vm4025, %v4000, 0
      %v4039 = vsel %vm4025, %v4001, 0
      %v4042 = vsel %vm4025, %v4002, 0
      %v4045 = vsel %vm4025, %v4003, 0
      %vm4047 = vcmask 1043456
      %v4049 = vsel %vm4047, %v4017, 0
      %4051 = vmatprep.subr.mxu0 0.0
      %4052 = vmatpush1.msra.mxu0 %v4004
      %4053 = vmatprep.subr.mxu0 0.0
      %4054 = vmatpush1.msra.mxu0 %v4005
      %4055 = vmatprep.subr.mxu0 0.0
      %4056 = vmatpush1.msra.mxu0 %v4006
      %4057 = vmatprep.subr.mxu0 0.0
      %4058 = vmatpush1.msra.mxu0 %v4007
      %4059 = vmatprep.subr.mxu0 0.0
      %4060 = vmatpush1.msra.mxu0 %v4008
      %4061 = vmatprep.subr.mxu0 0.0
      %4062 = vmatpush1.msra.mxu0 %v4009
      %4063 = vmatprep.subr.mxu0 0.0
      %4064 = vmatpush1.msra.mxu0 %v4010
      %4065 = vmatprep.subr.mxu0 0.0
      %4066 = vmatpush1.msra.mxu0 %v4011
      %4067 = vmatprep.subr.mxu0 0.0
      %4068 = vmatpush1.msra.mxu0 %v4012
      %4069 = vmatprep.subr.mxu0 0.0
      %4070 = vmatpush1.msra.mxu0 %v4013
      %4071 = vmatprep.subr.mxu0 0.0
      %4072 = vmatpush1.msra.mxu0 %v4014
      %4073 = vmatprep.subr.mxu0 0.0
      %4074 = vmatpush1.msra.mxu0 %v4015
      %4075 = vmatprep.subr.mxu0 0.0
      %4076 = vmatpush1.msra.mxu0 %v4016
      %4077 = vmatprep.subr.mxu0 0.0
      %4078 = vmatpush1.msra.mxu0 %v4049
      %4079 = vmatprep.subr.mxu0 0.0
      %4080 = vmatpush1.msra.mxu0 0.0
      %4081 = vmatprep.subr.mxu0 0.0
      %4082 = vmatpush1.msra.mxu0 0.0
      %4083 = vmatprep.subr.mxu0 0.0
      %4084 = vmatpush1.msra.mxu0 0.0
      %4085 = vmatprep.subr.mxu0 0.0
      %4086 = vmatpush1.msra.mxu0 0.0
      %4087 = vmatprep.subr.mxu0 0.0
      %4088 = vmatpush1.msra.mxu0 0.0
      %4089 = vmatprep.subr.mxu0 0.0
      %4090 = vmatpush1.msra.mxu0 0.0
      %4091 = vmatprep.subr.mxu0 0.0
      %4092 = vmatpush1.msra.mxu0 0.0
      %4093 = vmatprep.subr.mxu0 0.0
      %4094 = vmatpush1.msra.mxu0 0.0
      %4095 = vmatprep.subr.mxu0 0.0
      %4096 = vmatpush1.msra.mxu0 0.0
      %4097 = vmatprep.subr.mxu0 0.0
      %4098 = vmatpush1.msra.mxu0 0.0
      %4099 = vmatprep.subr.mxu0 0.0
      %4100 = vmatpush1.msra.mxu0 0.0
      %4101 = vmatprep.subr.mxu0 0.0
      %4102 = vmatpush1.msra.mxu0 0.0
      %4103 = vmatprep.subr.mxu0 0.0
      %4104 = vmatpush1.msra.mxu0 0.0
      %4105 = vmatprep.subr.mxu0 0.0
      %4106 = vmatpush1.msra.mxu0 0.0
      %4107 = vmatprep.subr.mxu0 0.0
      %4108 = vmatpush1.msra.mxu0 0.0
      %4109 = vmatprep.subr.mxu0 0.0
      %4110 = vmatpush1.msra.mxu0 0.0
      %4111 = vmatprep.subr.mxu0 0.0
      %4112 = vmatpush1.msra.mxu0 0.0
      %4113 = vmatprep.subr.mxu0 0.0
      %4114 = vmatpush1.msra.mxu0 0.0
      %4115 = vmatprep.mubr.f32.mxu0 0.0
      %4116 = vmatmul.mubr.f32.gmra.mrb[0].mxu0 %v4027
      %v4117 = vpop.f32.mrb[0].mxu0
      %v4118 = vadd.f32 %v4023, %v4117
      %v4119 = vpop.f32.mrb[0].mxu0
      %4120 = vmatprep.mubr.f32.mxu0 0.0
      %4121 = vmatmul.mubr.f32.gmra.mrb[0].mxu0 %v4030
      %v4122 = vpop.f32.mrb[0].mxu0
      %v4123 = vadd.f32 %v4023, %v4122
      %v4124 = vpop.f32.mrb[0].mxu0
      %4125 = vmatprep.mubr.f32.mxu0 0.0
      %4126 = vmatmul.mubr.f32.gmra.mrb[0].mxu0 %v4033
      %v4127 = vpop.f32.mrb[0].mxu0
      %v4128 = vadd.f32 %v4023, %v4127
      %v4129 = vpop.f32.mrb[0].mxu0
      %4130 = vmatprep.mubr.f32.mxu0 0.0
      %4131 = vmatmul.mubr.f32.gmra.mrb[0].mxu0 %v4036
      %v4132 = vpop.f32.mrb[0].mxu0
      %v4133 = vadd.f32 %v4023, %v4132
      %v4134 = vpop.f32.mrb[0].mxu0
      %4135 = vmatprep.mubr.f32.mxu0 0.0
      %4136 = vmatmul.mubr.f32.gmra.mrb[0].mxu0 %v4039
      %v4137 = vpop.f32.mrb[0].mxu0
      %v4138 = vadd.f32 %v4023, %v4137
      %v4139 = vpop.f32.mrb[0].mxu0
      %4140 = vmatprep.mubr.f32.mxu0 0.0
      %4141 = vmatmul.mubr.f32.gmra.mrb[0].mxu0 %v4042
      %v4142 = vpop.f32.mrb[0].mxu0
      %v4143 = vadd.f32 %v4023, %v4142
      %v4144 = vpop.f32.mrb[0].mxu0
      %4145 = vmatprep.mubr.f32.mxu0 0.0
      %4146 = vmatmul.mubr.f32.gmra.mrb[0].mxu0 %v4045
      %v4147 = vpop.f32.mrb[0].mxu0
      %v4148 = vadd.f32 %v4023, %v4147
      %v4149 = vpop.f32.mrb[0].mxu0
      %4150 = vdwg.mxu0
      %v4151 = vmax.f32 %v4118, 0.0
      %v4152 = vmax.f32 %v4123, 0.0
      %v4153 = vmax.f32 %v4128, 0.0
      %v4154 = vmax.f32 %v4133, 0.0
      %v4155 = vmax.f32 %v4138, 0.0
      %v4156 = vmax.f32 %v4143, 0.0
      %v4157 = vmax.f32 %v4148, 0.0
      %v4158 = vand.u32 2147483647, %v4118
      %v4159 = vand.u32 2147483647, %v4123
      %v4160 = vand.u32 2147483647, %v4128
      %v4161 = vand.u32 2147483647, %v4133
      %v4162 = vand.u32 2147483647, %v4138
      %v4163 = vand.u32 2147483647, %v4143
      %v4164 = vand.u32 2147483647, %v4148
      %v4165 = vsub.f32 0.0, %v4158
      %v4166 = vsub.f32 0.0, %v4159
      %v4167 = vsub.f32 0.0, %v4160
      %v4168 = vsub.f32 0.0, %v4161
      %v4169 = vsub.f32 0.0, %v4162
      %v4170 = vsub.f32 0.0, %v4163
      %v4171 = vsub.f32 0.0, %v4164
      %v4172 = vmul.f32 %v4165, 1.442695
      %v4173 = vpow.pop %v4172
      %v4174 = vmul.f32 %v4166, 1.442695
      %v4175 = vpow.pop %v4174
      %v4176 = vmul.f32 %v4167, 1.442695
      %v4177 = vpow.pop %v4176
      %v4178 = vmul.f32 %v4168, 1.442695
      %v4179 = vpow.pop %v4178
      %v4180 = vmul.f32 %v4169, 1.442695
      %v4181 = vpow.pop %v4180
      %v4182 = vmul.f32 %v4170, 1.442695
      %v4183 = vpow.pop %v4182
      %v4184 = vmul.f32 %v4171, 1.442695
      %v4185 = vpow.pop %v4184
      %v4186 = vadd.f32 %v4173, 1.0
      %v4187 = vlog2.pop %v4186
      %v4188 = vmul.f32 %v4187, 0.6931472
      %v4189 = vmul.f32 -0.5, %v4173
      %v4190 = vadd.f32 %v4189, 1.0
      %v4191 = vmul.f32 %v4190, %v4173
      %v4192 = vand.u32 2147483647, %v4173
      %vm4193 = vcmp.lt.f32.partialorder %v4192, 0.0004427343
      %v4194 = vsel %vm4193, %v4191, %v4188
      %v4195 = vadd.f32 %v4175, 1.0
      %v4196 = vlog2.pop %v4195
      %v4197 = vmul.f32 %v4196, 0.6931472
      %v4198 = vmul.f32 -0.5, %v4175
      %v4199 = vadd.f32 %v4198, 1.0
      %v4200 = vmul.f32 %v4199, %v4175
      %v4201 = vand.u32 2147483647, %v4175
      %vm4202 = vcmp.lt.f32.partialorder %v4201, 0.0004427343
      %v4203 = vsel %vm4202, %v4200, %v4197
      %v4204 = vadd.f32 %v4177, 1.0
      %v4205 = vlog2.pop %v4204
      %v4206 = vmul.f32 %v4205, 0.6931472
      %v4207 = vmul.f32 -0.5, %v4177
      %v4208 = vadd.f32 %v4207, 1.0
      %v4209 = vmul.f32 %v4208, %v4177
      %v4210 = vand.u32 2147483647, %v4177
      %vm4211 = vcmp.lt.f32.partialorder %v4210, 0.0004427343
      %v4212 = vsel %vm4211, %v4209, %v4206
      %v4213 = vadd.f32 %v4179, 1.0
      %v4214 = vlog2.pop %v4213
      %v4215 = vmul.f32 %v4214, 0.6931472
      %v4216 = vmul.f32 -0.5, %v4179
      %v4217 = vadd.f32 %v4216, 1.0
      %v4218 = vmul.f32 %v4217, %v4179
      %v4219 = vand.u32 2147483647, %v4179
      %vm4220 = vcmp.lt.f32.partialorder %v4219, 0.0004427343
      %v4221 = vsel %vm4220, %v4218, %v4215
      %v4222 = vadd.f32 %v4181, 1.0
      %v4223 = vlog2.pop %v4222
      %v4224 = vmul.f32 %v4223, 0.6931472
      %v4225 = vmul.f32 -0.5, %v4181
      %v4226 = vadd.f32 %v4225, 1.0
      %v4227 = vmul.f32 %v4226, %v4181
      %v4228 = vand.u32 2147483647, %v4181
      %vm4229 = vcmp.lt.f32.partialorder %v4228, 0.0004427343
      %v4230 = vsel %vm4229, %v4227, %v4224
      %v4231 = vadd.f32 %v4183, 1.0
      %v4232 = vlog2.pop %v4231
      %v4233 = vmul.f32 %v4232, 0.6931472
      %v4234 = vmul.f32 -0.5, %v4183
      %v4235 = vadd.f32 %v4234, 1.0
      %v4236 = vmul.f32 %v4235, %v4183
      %v4237 = vand.u32 2147483647, %v4183
      %vm4238 = vcmp.lt.f32.partialorder %v4237, 0.0004427343
      %v4239 = vsel %vm4238, %v4236, %v4233
      %v4240 = vadd.f32 %v4185, 1.0
      %v4241 = vlog2.pop %v4240
      %v4242 = vmul.f32 %v4241, 0.6931472
      %v4243 = vmul.f32 -0.5, %v4185
      %v4244 = vadd.f32 %v4243, 1.0
      %v4245 = vmul.f32 %v4244, %v4185
      %v4246 = vand.u32 2147483647, %v4185
      %vm4247 = vcmp.lt.f32.partialorder %v4246, 0.0004427343
      %v4248 = vsel %vm4247, %v4245, %v4242
      %v4249 = vadd.f32 %v4151, %v4194
      %v4250 = vadd.f32 %v4152, %v4203
      %v4251 = vadd.f32 %v4153, %v4212
      %v4252 = vadd.f32 %v4154, %v4221
      %v4253 = vadd.f32 %v4155, %v4230
      %v4254 = vadd.f32 %v4156, %v4239
      %v4255 = vadd.f32 %v4157, %v4248
      %v4256 = vtanh.pop %v4249
      %v4257 = vtanh.pop %v4250
      %v4258 = vtanh.pop %v4251
      %v4259 = vtanh.pop %v4252
      %v4260 = vtanh.pop %v4253
      %v4261 = vtanh.pop %v4254
      %v4262 = vtanh.pop %v4255
      %v4263 = vmul.f32 %v4118, %v4256
      %v4264 = vmul.f32 %v4123, %v4257
      %v4265 = vmul.f32 %v4128, %v4258
      %v4266 = vmul.f32 %v4133, %v4259
      %v4267 = vmul.f32 %v4138, %v4260
      %v4268 = vmul.f32 %v4143, %v4261
      %v4269 = vmul.f32 %v4148, %v4262
      %4270 = vrot.lane.b32.xlu0 %v1064, 116
      %v4271 = vpop.permute.xlu0 %4270
      %4272 = vrot.lane.b32.xlu0 %v1065, 116
      %v4273 = vpop.permute.xlu0 %4272
      %4274 = vrot.lane.b32.xlu0 %v1066, 116
      %v4275 = vpop.permute.xlu0 %4274
      %4276 = vrot.lane.b32.xlu0 %v1067, 116
      %v4277 = vpop.permute.xlu0 %4276
      %4278 = vrot.lane.b32.xlu0 %v1068, 116
      %v4279 = vpop.permute.xlu0 %4278
      %4280 = vrot.lane.b32.xlu0 %v1069, 116
      %v4281 = vpop.permute.xlu0 %4280
      %4282 = vrot.lane.b32.xlu0 %v1070, 116
      %v4283 = vpop.permute.xlu0 %4282
      %v4291 = vsel %vm2486, %v4263, %v4271
      %v4292 = vsel %vm2486, %v4264, %v4273
      %v4293 = vsel %vm2486, %v4265, %v4275
      %v4294 = vsel %vm2486, %v4266, %v4277
      %v4295 = vsel %vm2486, %v4267, %v4279
      %v4296 = vsel %vm2486, %v4268, %v4281
      %v4297 = vsel %vm2486, %v4269, %v4283
      %v4299 = vsel %vm1127, %v4297, 0
      %4301 = vmatprep.subr.mxu0 0.0
      %4302 = vmatpush1.msra.mxu0 %v4291
      %4303 = vmatprep.subr.mxu0 0.0
      %4304 = vmatpush1.msra.mxu0 %v4292
      %4305 = vmatprep.subr.mxu0 0.0
      %4306 = vmatpush1.msra.mxu0 %v4293
      %4307 = vmatprep.subr.mxu0 0.0
      %4308 = vmatpush1.msra.mxu0 %v4294
      %4309 = vmatprep.subr.mxu0 0.0
      %4310 = vmatpush1.msra.mxu0 %v4295
      %4311 = vmatprep.subr.mxu0 0.0
      %4312 = vmatpush1.msra.mxu0 %v4296
      %4313 = vmatprep.subr.mxu0 0.0
      %4314 = vmatpush1.msra.mxu0 %v4299
      %4315 = vmatprep.subr.mxu0 0.0
      %4316 = vmatpush1.msra.mxu0 0.0
      %4317 = vmatprep.subr.mxu0 0.0
      %4318 = vmatpush1.msra.mxu0 0.0
      %4319 = vmatprep.subr.mxu0 0.0
      %4320 = vmatpush1.msra.mxu0 0.0
      %4321 = vmatprep.subr.mxu0 0.0
      %4322 = vmatpush1.msra.mxu0 0.0
      %4323 = vmatprep.subr.mxu0 0.0
      %4324 = vmatpush1.msra.mxu0 0.0
      %4325 = vmatprep.subr.mxu0 0.0
      %4326 = vmatpush1.msra.mxu0 0.0
      %4327 = vmatprep.subr.mxu0 0.0
      %4328 = vmatpush1.msra.mxu0 0.0
      %4329 = vmatprep.subr.mxu0 0.0
      %4330 = vmatpush1.msra.mxu0 0.0
      %4331 = vmatprep.subr.mxu0 0.0
      %4332 = vmatpush1.msra.mxu0 0.0
      %4333 = vmatprep.subr.mxu0 0.0
      %4334 = vmatpush1.msra.mxu0 0.0
      %4335 = vmatprep.subr.mxu0 0.0
      %4336 = vmatpush1.msra.mxu0 0.0
      %4337 = vmatprep.subr.mxu0 0.0
      %4338 = vmatpush1.msra.mxu0 0.0
      %4339 = vmatprep.subr.mxu0 0.0
      %4340 = vmatpush1.msra.mxu0 0.0
      %4341 = vmatprep.subr.mxu0 0.0
      %4342 = vmatpush1.msra.mxu0 0.0
      %4343 = vmatprep.subr.mxu0 0.0
      %4344 = vmatpush1.msra.mxu0 0.0
      %4345 = vmatprep.subr.mxu0 0.0
      %4346 = vmatpush1.msra.mxu0 0.0
      %4347 = vmatprep.subr.mxu0 0.0
      %4348 = vmatpush1.msra.mxu0 0.0
      %4349 = vmatprep.subr.mxu0 0.0
      %4350 = vmatpush1.msra.mxu0 0.0
      %4351 = vmatprep.subr.mxu0 0.0
      %4352 = vmatpush1.msra.mxu0 0.0
      %4353 = vmatprep.subr.mxu0 0.0
      %4354 = vmatpush1.msra.mxu0 0.0
      %4355 = vmatprep.subr.mxu0 0.0
      %4356 = vmatpush1.msra.mxu0 0.0
      %4357 = vmatprep.subr.mxu0 0.0
      %4358 = vmatpush1.msra.mxu0 0.0
      %4359 = vmatprep.subr.mxu0 0.0
      %4360 = vmatpush1.msra.mxu0 0.0
      %4361 = vmatprep.subr.mxu0 0.0
      %4362 = vmatpush1.msra.mxu0 0.0
      %4363 = vmatprep.subr.mxu0 0.0
      %4364 = vmatpush1.msra.mxu0 0.0
      %4365 = vmatprep.mubr.f32.mxu0 0.0
      %4366 = vmatmul.mubr.f32.gmra.mrb[0].mxu0 %v1107
      %v4367 = vpop.f32.mrb[0].mxu0
      %v4368 = vadd.f32 0.0, %v4367
      %v4369 = vpop.f32.mrb[0].mxu0
      %4370 = vmatprep.mubr.f32.mxu0 0.0
      %4371 = vmatmul.mubr.f32.gmra.mrb[0].mxu0 %v1110
      %v4372 = vpop.f32.mrb[0].mxu0
      %v4373 = vadd.f32 0.0, %v4372
      %v4374 = vpop.f32.mrb[0].mxu0
      %4375 = vmatprep.mubr.f32.mxu0 0.0
      %4376 = vmatmul.mubr.f32.gmra.mrb[0].mxu0 %v1113
      %v4377 = vpop.f32.mrb[0].mxu0
      %v4378 = vadd.f32 0.0, %v4377
      %v4379 = vpop.f32.mrb[0].mxu0
      %4380 = vmatprep.mubr.f32.mxu0 0.0
      %4381 = vmatmul.mubr.f32.gmra.mrb[0].mxu0 %v1116
      %v4382 = vpop.f32.mrb[0].mxu0
      %v4383 = vadd.f32 0.0, %v4382
      %v4384 = vpop.f32.mrb[0].mxu0
      %4385 = vmatprep.mubr.f32.mxu0 0.0
      %4386 = vmatmul.mubr.f32.gmra.mrb[0].mxu0 %v1119
      %v4387 = vpop.f32.mrb[0].mxu0
      %v4388 = vadd.f32 0.0, %v4387
      %v4389 = vpop.f32.mrb[0].mxu0
      %4390 = vmatprep.mubr.f32.mxu0 0.0
      %4391 = vmatmul.mubr.f32.gmra.mrb[0].mxu0 %v1122
      %v4392 = vpop.f32.mrb[0].mxu0
      %v4393 = vadd.f32 0.0, %v4392
      %v4394 = vpop.f32.mrb[0].mxu0
      %4395 = vmatprep.mubr.f32.mxu0 0.0
      %4396 = vmatmul.mubr.f32.gmra.mrb[0].mxu0 %v1125
      %v4397 = vpop.f32.mrb[0].mxu0
      %v4398 = vadd.f32 0.0, %v4397
      %v4399 = vpop.f32.mrb[0].mxu0
      %4400 = vdwg.mxu0
      %4401 = vmatprep.subr.mxu0 0.0
      %4402 = vmatpush1.msra.mxu0 %v4291
      %4403 = vmatprep.subr.mxu0 0.0
      %4404 = vmatpush1.msra.mxu0 %v4292
      %4405 = vmatprep.subr.mxu0 0.0
      %4406 = vmatpush1.msra.mxu0 %v4293
      %4407 = vmatprep.subr.mxu0 0.0
      %4408 = vmatpush1.msra.mxu0 %v4294
      %4409 = vmatprep.subr.mxu0 0.0
      %4410 = vmatpush1.msra.mxu0 %v4295
      %4411 = vmatprep.subr.mxu0 0.0
      %4412 = vmatpush1.msra.mxu0 %v4296
      %4413 = vmatprep.subr.mxu0 0.0
      %4414 = vmatpush1.msra.mxu0 %v4299
      %4415 = vmatprep.subr.mxu0 0.0
      %4416 = vmatpush1.msra.mxu0 0.0
      %4417 = vmatprep.subr.mxu0 0.0
      %4418 = vmatpush1.msra.mxu0 0.0
      %4419 = vmatprep.subr.mxu0 0.0
      %4420 = vmatpush1.msra.mxu0 0.0
      %4421 = vmatprep.subr.mxu0 0.0
      %4422 = vmatpush1.msra.mxu0 0.0
      %4423 = vmatprep.subr.mxu0 0.0
      %4424 = vmatpush1.msra.mxu0 0.0
      %4425 = vmatprep.subr.mxu0 0.0
      %4426 = vmatpush1.msra.mxu0 0.0
      %4427 = vmatprep.subr.mxu0 0.0
      %4428 = vmatpush1.msra.mxu0 0.0
      %4429 = vmatprep.subr.mxu0 0.0
      %4430 = vmatpush1.msra.mxu0 0.0
      %4431 = vmatprep.subr.mxu0 0.0
      %4432 = vmatpush1.msra.mxu0 0.0
      %4433 = vmatprep.subr.mxu0 0.0
      %4434 = vmatpush1.msra.mxu0 0.0
      %4435 = vmatprep.subr.mxu0 0.0
      %4436 = vmatpush1.msra.mxu0 0.0
      %4437 = vmatprep.subr.mxu0 0.0
      %4438 = vmatpush1.msra.mxu0 0.0
      %4439 = vmatprep.subr.mxu0 0.0
      %4440 = vmatpush1.msra.mxu0 0.0
      %4441 = vmatprep.subr.mxu0 0.0
      %4442 = vmatpush1.msra.mxu0 0.0
      %4443 = vmatprep.subr.mxu0 0.0
      %4444 = vmatpush1.msra.mxu0 0.0
      %4445 = vmatprep.subr.mxu0 0.0
      %4446 = vmatpush1.msra.mxu0 0.0
      %4447 = vmatprep.subr.mxu0 0.0
      %4448 = vmatpush1.msra.mxu0 0.0
      %4449 = vmatprep.subr.mxu0 0.0
      %4450 = vmatpush1.msra.mxu0 0.0
      %4451 = vmatprep.subr.mxu0 0.0
      %4452 = vmatpush1.msra.mxu0 0.0
      %4453 = vmatprep.subr.mxu0 0.0
      %4454 = vmatpush1.msra.mxu0 0.0
      %4455 = vmatprep.subr.mxu0 0.0
      %4456 = vmatpush1.msra.mxu0 0.0
      %4457 = vmatprep.subr.mxu0 0.0
      %4458 = vmatpush1.msra.mxu0 0.0
      %4459 = vmatprep.subr.mxu0 0.0
      %4460 = vmatpush1.msra.mxu0 0.0
      %4461 = vmatprep.subr.mxu0 0.0
      %4462 = vmatpush1.msra.mxu0 0.0
      %4463 = vmatprep.subr.mxu0 0.0
      %4464 = vmatpush1.msra.mxu0 0.0
      %4465 = vmatprep.mubr.f32.mxu0 0.0
      %4466 = vmatmul.mubr.f32.gmra.mrb[0].mxu0 %v1239
      %v4467 = vpop.f32.mrb[0].mxu0
      %v4468 = vadd.f32 0.0, %v4467
      %v4469 = vpop.f32.mrb[0].mxu0
      %4470 = vmatprep.mubr.f32.mxu0 0.0
      %4471 = vmatmul.mubr.f32.gmra.mrb[0].mxu0 %v1242
      %v4472 = vpop.f32.mrb[0].mxu0
      %v4473 = vadd.f32 0.0, %v4472
      %v4474 = vpop.f32.mrb[0].mxu0
      %4475 = vmatprep.mubr.f32.mxu0 0.0
      %4476 = vmatmul.mubr.f32.gmra.mrb[0].mxu0 %v1245
      %v4477 = vpop.f32.mrb[0].mxu0
      %v4478 = vadd.f32 0.0, %v4477
      %v4479 = vpop.f32.mrb[0].mxu0
      %4480 = vmatprep.mubr.f32.mxu0 0.0
      %4481 = vmatmul.mubr.f32.gmra.mrb[0].mxu0 %v1248
      %v4482 = vpop.f32.mrb[0].mxu0
      %v4483 = vadd.f32 0.0, %v4482
      %v4484 = vpop.f32.mrb[0].mxu0
      %4485 = vmatprep.mubr.f32.mxu0 0.0
      %4486 = vmatmul.mubr.f32.gmra.mrb[0].mxu0 %v1251
      %v4487 = vpop.f32.mrb[0].mxu0
      %v4488 = vadd.f32 0.0, %v4487
      %v4489 = vpop.f32.mrb[0].mxu0
      %4490 = vmatprep.mubr.f32.mxu0 0.0
      %4491 = vmatmul.mubr.f32.gmra.mrb[0].mxu0 %v1254
      %v4492 = vpop.f32.mrb[0].mxu0
      %v4493 = vadd.f32 0.0, %v4492
      %v4494 = vpop.f32.mrb[0].mxu0
      %4495 = vmatprep.mubr.f32.mxu0 0.0
      %4496 = vmatmul.mubr.f32.gmra.mrb[0].mxu0 %v1257
      %v4497 = vpop.f32.mrb[0].mxu0
      %v4498 = vadd.f32 0.0, %v4497
      %v4499 = vpop.f32.mrb[0].mxu0
      %4500 = vdwg.mxu0
      %4501 = vmatprep.subr.mxu0 0.0
      %4502 = vmatpush1.msra.mxu0 %v4291
      %4503 = vmatprep.subr.mxu0 0.0
      %4504 = vmatpush1.msra.mxu0 %v4292
      %4505 = vmatprep.subr.mxu0 0.0
      %4506 = vmatpush1.msra.mxu0 %v4293
      %4507 = vmatprep.subr.mxu0 0.0
      %4508 = vmatpush1.msra.mxu0 %v4294
      %4509 = vmatprep.subr.mxu0 0.0
      %4510 = vmatpush1.msra.mxu0 %v4295
      %4511 = vmatprep.subr.mxu0 0.0
      %4512 = vmatpush1.msra.mxu0 %v4296
      %4513 = vmatprep.subr.mxu0 0.0
      %4514 = vmatpush1.msra.mxu0 %v4299
      %4515 = vmatprep.subr.mxu0 0.0
      %4516 = vmatpush1.msra.mxu0 0.0
      %4517 = vmatprep.subr.mxu0 0.0
      %4518 = vmatpush1.msra.mxu0 0.0
      %4519 = vmatprep.subr.mxu0 0.0
      %4520 = vmatpush1.msra.mxu0 0.0
      %4521 = vmatprep.subr.mxu0 0.0
      %4522 = vmatpush1.msra.mxu0 0.0
      %4523 = vmatprep.subr.mxu0 0.0
      %4524 = vmatpush1.msra.mxu0 0.0
      %4525 = vmatprep.subr.mxu0 0.0
      %4526 = vmatpush1.msra.mxu0 0.0
      %4527 = vmatprep.subr.mxu0 0.0
      %4528 = vmatpush1.msra.mxu0 0.0
      %4529 = vmatprep.subr.mxu0 0.0
      %4530 = vmatpush1.msra.mxu0 0.0
      %4531 = vmatprep.subr.mxu0 0.0
      %4532 = vmatpush1.msra.mxu0 0.0
      %4533 = vmatprep.subr.mxu0 0.0
      %4534 = vmatpush1.msra.mxu0 0.0
      %4535 = vmatprep.subr.mxu0 0.0
      %4536 = vmatpush1.msra.mxu0 0.0
      %4537 = vmatprep.subr.mxu0 0.0
      %4538 = vmatpush1.msra.mxu0 0.0
      %4539 = vmatprep.subr.mxu0 0.0
      %4540 = vmatpush1.msra.mxu0 0.0
      %4541 = vmatprep.subr.mxu0 0.0
      %4542 = vmatpush1.msra.mxu0 0.0
      %4543 = vmatprep.subr.mxu0 0.0
      %4544 = vmatpush1.msra.mxu0 0.0
      %4545 = vmatprep.subr.mxu0 0.0
      %4546 = vmatpush1.msra.mxu0 0.0
      %4547 = vmatprep.subr.mxu0 0.0
      %4548 = vmatpush1.msra.mxu0 0.0
      %4549 = vmatprep.subr.mxu0 0.0
      %4550 = vmatpush1.msra.mxu0 0.0
      %4551 = vmatprep.subr.mxu0 0.0
      %4552 = vmatpush1.msra.mxu0 0.0
      %4553 = vmatprep.subr.mxu0 0.0
      %4554 = vmatpush1.msra.mxu0 0.0
      %4555 = vmatprep.subr.mxu0 0.0
      %4556 = vmatpush1.msra.mxu0 0.0
      %4557 = vmatprep.subr.mxu0 0.0
      %4558 = vmatpush1.msra.mxu0 0.0
      %4559 = vmatprep.subr.mxu0 0.0
      %4560 = vmatpush1.msra.mxu0 0.0
      %4561 = vmatprep.subr.mxu0 0.0
      %4562 = vmatpush1.msra.mxu0 0.0
      %4563 = vmatprep.subr.mxu0 0.0
      %4564 = vmatpush1.msra.mxu0 0.0
      %4565 = vmatprep.mubr.f32.mxu0 0.0
      %4566 = vmatmul.mubr.f32.gmra.mrb[0].mxu0 %v1368
      %v4567 = vpop.f32.mrb[0].mxu0
      %v4568 = vadd.f32 0.0, %v4567
      %v4569 = vpop.f32.mrb[0].mxu0
      %4570 = vmatprep.mubr.f32.mxu0 0.0
      %4571 = vmatmul.mubr.f32.gmra.mrb[0].mxu0 %v1371
      %v4572 = vpop.f32.mrb[0].mxu0
      %v4573 = vadd.f32 0.0, %v4572
      %v4574 = vpop.f32.mrb[0].mxu0
      %4575 = vmatprep.mubr.f32.mxu0 0.0
      %4576 = vmatmul.mubr.f32.gmra.mrb[0].mxu0 %v1374
      %v4577 = vpop.f32.mrb[0].mxu0
      %v4578 = vadd.f32 0.0, %v4577
      %v4579 = vpop.f32.mrb[0].mxu0
      %4580 = vmatprep.mubr.f32.mxu0 0.0
      %4581 = vmatmul.mubr.f32.gmra.mrb[0].mxu0 %v1377
      %v4582 = vpop.f32.mrb[0].mxu0
      %v4583 = vadd.f32 0.0, %v4582
      %v4584 = vpop.f32.mrb[0].mxu0
      %4585 = vmatprep.mubr.f32.mxu0 0.0
      %4586 = vmatmul.mubr.f32.gmra.mrb[0].mxu0 %v1380
      %v4587 = vpop.f32.mrb[0].mxu0
      %v4588 = vadd.f32 0.0, %v4587
      %v4589 = vpop.f32.mrb[0].mxu0
      %4590 = vmatprep.mubr.f32.mxu0 0.0
      %4591 = vmatmul.mubr.f32.gmra.mrb[0].mxu0 %v1383
      %v4592 = vpop.f32.mrb[0].mxu0
      %v4593 = vadd.f32 0.0, %v4592
      %v4594 = vpop.f32.mrb[0].mxu0
      %4595 = vmatprep.mubr.f32.mxu0 0.0
      %4596 = vmatmul.mubr.f32.gmra.mrb[0].mxu0 %v1386
      %v4597 = vpop.f32.mrb[0].mxu0
      %v4598 = vadd.f32 0.0, %v4597
      %v4599 = vpop.f32.mrb[0].mxu0
      %4600 = vdwg.mxu0
      %4601 = vmatprep.subr.mxu0 0.0
      %4602 = vmatpush1.msra.mxu0 %v4291
      %4603 = vmatprep.subr.mxu0 0.0
      %4604 = vmatpush1.msra.mxu0 %v4292
      %4605 = vmatprep.subr.mxu0 0.0
      %4606 = vmatpush1.msra.mxu0 %v4293
      %4607 = vmatprep.subr.mxu0 0.0
      %4608 = vmatpush1.msra.mxu0 %v4294
      %4609 = vmatprep.subr.mxu0 0.0
      %4610 = vmatpush1.msra.mxu0 %v4295
      %4611 = vmatprep.subr.mxu0 0.0
      %4612 = vmatpush1.msra.mxu0 %v4296
      %4613 = vmatprep.subr.mxu0 0.0
      %4614 = vmatpush1.msra.mxu0 %v4299
      %4615 = vmatprep.subr.mxu0 0.0
      %4616 = vmatpush1.msra.mxu0 0.0
      %4617 = vmatprep.subr.mxu0 0.0
      %4618 = vmatpush1.msra.mxu0 0.0
      %4619 = vmatprep.subr.mxu0 0.0
      %4620 = vmatpush1.msra.mxu0 0.0
      %4621 = vmatprep.subr.mxu0 0.0
      %4622 = vmatpush1.msra.mxu0 0.0
      %4623 = vmatprep.subr.mxu0 0.0
      %4624 = vmatpush1.msra.mxu0 0.0
      %4625 = vmatprep.subr.mxu0 0.0
      %4626 = vmatpush1.msra.mxu0 0.0
      %4627 = vmatprep.subr.mxu0 0.0
      %4628 = vmatpush1.msra.mxu0 0.0
      %4629 = vmatprep.subr.mxu0 0.0
      %4630 = vmatpush1.msra.mxu0 0.0
      %4631 = vmatprep.subr.mxu0 0.0
      %4632 = vmatpush1.msra.mxu0 0.0
      %4633 = vmatprep.subr.mxu0 0.0
      %4634 = vmatpush1.msra.mxu0 0.0
      %4635 = vmatprep.subr.mxu0 0.0
      %4636 = vmatpush1.msra.mxu0 0.0
      %4637 = vmatprep.subr.mxu0 0.0
      %4638 = vmatpush1.msra.mxu0 0.0
      %4639 = vmatprep.subr.mxu0 0.0
      %4640 = vmatpush1.msra.mxu0 0.0
      %4641 = vmatprep.subr.mxu0 0.0
      %4642 = vmatpush1.msra.mxu0 0.0
      %4643 = vmatprep.subr.mxu0 0.0
      %4644 = vmatpush1.msra.mxu0 0.0
      %4645 = vmatprep.subr.mxu0 0.0
      %4646 = vmatpush1.msra.mxu0 0.0
      %4647 = vmatprep.subr.mxu0 0.0
      %4648 = vmatpush1.msra.mxu0 0.0
      %4649 = vmatprep.subr.mxu0 0.0
      %4650 = vmatpush1.msra.mxu0 0.0
      %4651 = vmatprep.subr.mxu0 0.0
      %4652 = vmatpush1.msra.mxu0 0.0
      %4653 = vmatprep.subr.mxu0 0.0
      %4654 = vmatpush1.msra.mxu0 0.0
      %4655 = vmatprep.subr.mxu0 0.0
      %4656 = vmatpush1.msra.mxu0 0.0
      %4657 = vmatprep.subr.mxu0 0.0
      %4658 = vmatpush1.msra.mxu0 0.0
      %4659 = vmatprep.subr.mxu0 0.0
      %4660 = vmatpush1.msra.mxu0 0.0
      %4661 = vmatprep.subr.mxu0 0.0
      %4662 = vmatpush1.msra.mxu0 0.0
      %4663 = vmatprep.subr.mxu0 0.0
      %4664 = vmatpush1.msra.mxu0 0.0
      %4665 = vmatprep.mubr.f32.mxu0 0.0
      %4666 = vmatmul.mubr.f32.gmra.mrb[0].mxu0 %v1497
      %v4667 = vpop.f32.mrb[0].mxu0
      %v4668 = vadd.f32 0.0, %v4667
      %v4669 = vpop.f32.mrb[0].mxu0
      %4670 = vmatprep.mubr.f32.mxu0 0.0
      %4671 = vmatmul.mubr.f32.gmra.mrb[0].mxu0 %v1500
      %v4672 = vpop.f32.mrb[0].mxu0
      %v4673 = vadd.f32 0.0, %v4672
      %v4674 = vpop.f32.mrb[0].mxu0
      %4675 = vmatprep.mubr.f32.mxu0 0.0
      %4676 = vmatmul.mubr.f32.gmra.mrb[0].mxu0 %v1503
      %v4677 = vpop.f32.mrb[0].mxu0
      %v4678 = vadd.f32 0.0, %v4677
      %v4679 = vpop.f32.mrb[0].mxu0
      %4680 = vmatprep.mubr.f32.mxu0 0.0
      %4681 = vmatmul.mubr.f32.gmra.mrb[0].mxu0 %v1506
      %v4682 = vpop.f32.mrb[0].mxu0
      %v4683 = vadd.f32 0.0, %v4682
      %v4684 = vpop.f32.mrb[0].mxu0
      %4685 = vmatprep.mubr.f32.mxu0 0.0
      %4686 = vmatmul.mubr.f32.gmra.mrb[0].mxu0 %v1509
      %v4687 = vpop.f32.mrb[0].mxu0
      %v4688 = vadd.f32 0.0, %v4687
      %v4689 = vpop.f32.mrb[0].mxu0
      %4690 = vmatprep.mubr.f32.mxu0 0.0
      %4691 = vmatmul.mubr.f32.gmra.mrb[0].mxu0 %v1512
      %v4692 = vpop.f32.mrb[0].mxu0
      %v4693 = vadd.f32 0.0, %v4692
      %v4694 = vpop.f32.mrb[0].mxu0
      %4695 = vmatprep.mubr.f32.mxu0 0.0
      %4696 = vmatmul.mubr.f32.gmra.mrb[0].mxu0 %v1515
      %v4697 = vpop.f32.mrb[0].mxu0
      %v4698 = vadd.f32 0.0, %v4697
      %v4699 = vpop.f32.mrb[0].mxu0
      %4700 = vdwg.mxu0
      %4701 = vmatprep.subr.mxu0 0.0
      %4702 = vmatpush1.msra.mxu0 %v4291
      %4703 = vmatprep.subr.mxu0 0.0
      %4704 = vmatpush1.msra.mxu0 %v4292
      %4705 = vmatprep.subr.mxu0 0.0
      %4706 = vmatpush1.msra.mxu0 %v4293
      %4707 = vmatprep.subr.mxu0 0.0
      %4708 = vmatpush1.msra.mxu0 %v4294
      %4709 = vmatprep.subr.mxu0 0.0
      %4710 = vmatpush1.msra.mxu0 %v4295
      %4711 = vmatprep.subr.mxu0 0.0
      %4712 = vmatpush1.msra.mxu0 %v4296
      %4713 = vmatprep.subr.mxu0 0.0
      %4714 = vmatpush1.msra.mxu0 %v4299
      %4715 = vmatprep.subr.mxu0 0.0
      %4716 = vmatpush1.msra.mxu0 0.0
      %4717 = vmatprep.subr.mxu0 0.0
      %4718 = vmatpush1.msra.mxu0 0.0
      %4719 = vmatprep.subr.mxu0 0.0
      %4720 = vmatpush1.msra.mxu0 0.0
      %4721 = vmatprep.subr.mxu0 0.0
      %4722 = vmatpush1.msra.mxu0 0.0
      %4723 = vmatprep.subr.mxu0 0.0
      %4724 = vmatpush1.msra.mxu0 0.0
      %4725 = vmatprep.subr.mxu0 0.0
      %4726 = vmatpush1.msra.mxu0 0.0
      %4727 = vmatprep.subr.mxu0 0.0
      %4728 = vmatpush1.msra.mxu0 0.0
      %4729 = vmatprep.subr.mxu0 0.0
      %4730 = vmatpush1.msra.mxu0 0.0
      %4731 = vmatprep.subr.mxu0 0.0
      %4732 = vmatpush1.msra.mxu0 0.0
      %4733 = vmatprep.subr.mxu0 0.0
      %4734 = vmatpush1.msra.mxu0 0.0
      %4735 = vmatprep.subr.mxu0 0.0
      %4736 = vmatpush1.msra.mxu0 0.0
      %4737 = vmatprep.subr.mxu0 0.0
      %4738 = vmatpush1.msra.mxu0 0.0
      %4739 = vmatprep.subr.mxu0 0.0
      %4740 = vmatpush1.msra.mxu0 0.0
      %4741 = vmatprep.subr.mxu0 0.0
      %4742 = vmatpush1.msra.mxu0 0.0
      %4743 = vmatprep.subr.mxu0 0.0
      %4744 = vmatpush1.msra.mxu0 0.0
      %4745 = vmatprep.subr.mxu0 0.0
      %4746 = vmatpush1.msra.mxu0 0.0
      %4747 = vmatprep.subr.mxu0 0.0
      %4748 = vmatpush1.msra.mxu0 0.0
      %4749 = vmatprep.subr.mxu0 0.0
      %4750 = vmatpush1.msra.mxu0 0.0
      %4751 = vmatprep.subr.mxu0 0.0
      %4752 = vmatpush1.msra.mxu0 0.0
      %4753 = vmatprep.subr.mxu0 0.0
      %4754 = vmatpush1.msra.mxu0 0.0
      %4755 = vmatprep.subr.mxu0 0.0
      %4756 = vmatpush1.msra.mxu0 0.0
      %4757 = vmatprep.subr.mxu0 0.0
      %4758 = vmatpush1.msra.mxu0 0.0
      %4759 = vmatprep.subr.mxu0 0.0
      %4760 = vmatpush1.msra.mxu0 0.0
      %4761 = vmatprep.subr.mxu0 0.0
      %4762 = vmatpush1.msra.mxu0 0.0
      %4763 = vmatprep.subr.mxu0 0.0
      %4764 = vmatpush1.msra.mxu0 0.0
      %4765 = vmatprep.mubr.f32.mxu0 0.0
      %4766 = vmatmul.mubr.f32.gmra.mrb[0].mxu0 %v1626
      %v4767 = vpop.f32.mrb[0].mxu0
      %v4768 = vadd.f32 0.0, %v4767
      %v4769 = vpop.f32.mrb[0].mxu0
      %4770 = vmatprep.mubr.f32.mxu0 0.0
      %4771 = vmatmul.mubr.f32.gmra.mrb[0].mxu0 %v1629
      %v4772 = vpop.f32.mrb[0].mxu0
      %v4773 = vadd.f32 0.0, %v4772
      %v4774 = vpop.f32.mrb[0].mxu0
      %4775 = vmatprep.mubr.f32.mxu0 0.0
      %4776 = vmatmul.mubr.f32.gmra.mrb[0].mxu0 %v1632
      %v4777 = vpop.f32.mrb[0].mxu0
      %v4778 = vadd.f32 0.0, %v4777
      %v4779 = vpop.f32.mrb[0].mxu0
      %4780 = vmatprep.mubr.f32.mxu0 0.0
      %4781 = vmatmul.mubr.f32.gmra.mrb[0].mxu0 %v1635
      %v4782 = vpop.f32.mrb[0].mxu0
      %v4783 = vadd.f32 0.0, %v4782
      %v4784 = vpop.f32.mrb[0].mxu0
      %4785 = vmatprep.mubr.f32.mxu0 0.0
      %4786 = vmatmul.mubr.f32.gmra.mrb[0].mxu0 %v1638
      %v4787 = vpop.f32.mrb[0].mxu0
      %v4788 = vadd.f32 0.0, %v4787
      %v4789 = vpop.f32.mrb[0].mxu0
      %4790 = vmatprep.mubr.f32.mxu0 0.0
      %4791 = vmatmul.mubr.f32.gmra.mrb[0].mxu0 %v1641
      %v4792 = vpop.f32.mrb[0].mxu0
      %v4793 = vadd.f32 0.0, %v4792
      %v4794 = vpop.f32.mrb[0].mxu0
      %4795 = vmatprep.mubr.f32.mxu0 0.0
      %4796 = vmatmul.mubr.f32.gmra.mrb[0].mxu0 %v1644
      %v4797 = vpop.f32.mrb[0].mxu0
      %v4798 = vadd.f32 0.0, %v4797
      %v4799 = vpop.f32.mrb[0].mxu0
      %4800 = vdwg.mxu0
      %4801 = vmatprep.subr.mxu0 0.0
      %4802 = vmatpush1.msra.mxu0 %v4291
      %4803 = vmatprep.subr.mxu0 0.0
      %4804 = vmatpush1.msra.mxu0 %v4292
      %4805 = vmatprep.subr.mxu0 0.0
      %4806 = vmatpush1.msra.mxu0 %v4293
      %4807 = vmatprep.subr.mxu0 0.0
      %4808 = vmatpush1.msra.mxu0 %v4294
      %4809 = vmatprep.subr.mxu0 0.0
      %4810 = vmatpush1.msra.mxu0 %v4295
      %4811 = vmatprep.subr.mxu0 0.0
      %4812 = vmatpush1.msra.mxu0 %v4296
      %4813 = vmatprep.subr.mxu0 0.0
      %4814 = vmatpush1.msra.mxu0 %v4299
      %4815 = vmatprep.subr.mxu0 0.0
      %4816 = vmatpush1.msra.mxu0 0.0
      %4817 = vmatprep.subr.mxu0 0.0
      %4818 = vmatpush1.msra.mxu0 0.0
      %4819 = vmatprep.subr.mxu0 0.0
      %4820 = vmatpush1.msra.mxu0 0.0
      %4821 = vmatprep.subr.mxu0 0.0
      %4822 = vmatpush1.msra.mxu0 0.0
      %4823 = vmatprep.subr.mxu0 0.0
      %4824 = vmatpush1.msra.mxu0 0.0
      %4825 = vmatprep.subr.mxu0 0.0
      %4826 = vmatpush1.msra.mxu0 0.0
      %4827 = vmatprep.subr.mxu0 0.0
      %4828 = vmatpush1.msra.mxu0 0.0
      %4829 = vmatprep.subr.mxu0 0.0
      %4830 = vmatpush1.msra.mxu0 0.0
      %4831 = vmatprep.subr.mxu0 0.0
      %4832 = vmatpush1.msra.mxu0 0.0
      %4833 = vmatprep.subr.mxu0 0.0
      %4834 = vmatpush1.msra.mxu0 0.0
      %4835 = vmatprep.subr.mxu0 0.0
      %4836 = vmatpush1.msra.mxu0 0.0
      %4837 = vmatprep.subr.mxu0 0.0
      %4838 = vmatpush1.msra.mxu0 0.0
      %4839 = vmatprep.subr.mxu0 0.0
      %4840 = vmatpush1.msra.mxu0 0.0
      %4841 = vmatprep.subr.mxu0 0.0
      %4842 = vmatpush1.msra.mxu0 0.0
      %4843 = vmatprep.subr.mxu0 0.0
      %4844 = vmatpush1.msra.mxu0 0.0
      %4845 = vmatprep.subr.mxu0 0.0
      %4846 = vmatpush1.msra.mxu0 0.0
      %4847 = vmatprep.subr.mxu0 0.0
      %4848 = vmatpush1.msra.mxu0 0.0
      %4849 = vmatprep.subr.mxu0 0.0
      %4850 = vmatpush1.msra.mxu0 0.0
      %4851 = vmatprep.subr.mxu0 0.0
      %4852 = vmatpush1.msra.mxu0 0.0
      %4853 = vmatprep.subr.mxu0 0.0
      %4854 = vmatpush1.msra.mxu0 0.0
      %4855 = vmatprep.subr.mxu0 0.0
      %4856 = vmatpush1.msra.mxu0 0.0
      %4857 = vmatprep.subr.mxu0 0.0
      %4858 = vmatpush1.msra.mxu0 0.0
      %4859 = vmatprep.subr.mxu0 0.0
      %4860 = vmatpush1.msra.mxu0 0.0
      %4861 = vmatprep.subr.mxu0 0.0
      %4862 = vmatpush1.msra.mxu0 0.0
      %4863 = vmatprep.subr.mxu0 0.0
      %4864 = vmatpush1.msra.mxu0 0.0
      %4865 = vmatprep.mubr.f32.mxu0 0.0
      %4866 = vmatmul.mubr.f32.gmra.mrb[0].mxu0 %v1755
      %v4867 = vpop.f32.mrb[0].mxu0
      %v4868 = vadd.f32 0.0, %v4867
      %v4869 = vpop.f32.mrb[0].mxu0
      %4870 = vmatprep.mubr.f32.mxu0 0.0
      %4871 = vmatmul.mubr.f32.gmra.mrb[0].mxu0 %v1758
      %v4872 = vpop.f32.mrb[0].mxu0
      %v4873 = vadd.f32 0.0, %v4872
      %v4874 = vpop.f32.mrb[0].mxu0
      %4875 = vmatprep.mubr.f32.mxu0 0.0
      %4876 = vmatmul.mubr.f32.gmra.mrb[0].mxu0 %v1761
      %v4877 = vpop.f32.mrb[0].mxu0
      %v4878 = vadd.f32 0.0, %v4877
      %v4879 = vpop.f32.mrb[0].mxu0
      %4880 = vmatprep.mubr.f32.mxu0 0.0
      %4881 = vmatmul.mubr.f32.gmra.mrb[0].mxu0 %v1764
      %v4882 = vpop.f32.mrb[0].mxu0
      %v4883 = vadd.f32 0.0, %v4882
      %v4884 = vpop.f32.mrb[0].mxu0
      %4885 = vmatprep.mubr.f32.mxu0 0.0
      %4886 = vmatmul.mubr.f32.gmra.mrb[0].mxu0 %v1767
      %v4887 = vpop.f32.mrb[0].mxu0
      %v4888 = vadd.f32 0.0, %v4887
      %v4889 = vpop.f32.mrb[0].mxu0
      %4890 = vmatprep.mubr.f32.mxu0 0.0
      %4891 = vmatmul.mubr.f32.gmra.mrb[0].mxu0 %v1770
      %v4892 = vpop.f32.mrb[0].mxu0
      %v4893 = vadd.f32 0.0, %v4892
      %v4894 = vpop.f32.mrb[0].mxu0
      %4895 = vmatprep.mubr.f32.mxu0 0.0
      %4896 = vmatmul.mubr.f32.gmra.mrb[0].mxu0 %v1773
      %v4897 = vpop.f32.mrb[0].mxu0
      %v4898 = vadd.f32 0.0, %v4897
      %v4899 = vpop.f32.mrb[0].mxu0
      %4900 = vdwg.mxu0
      %4901 = vmatprep.subr.mxu0 0.0
      %4902 = vmatpush1.msra.mxu0 %v4291
      %4903 = vmatprep.subr.mxu0 0.0
      %4904 = vmatpush1.msra.mxu0 %v4292
      %4905 = vmatprep.subr.mxu0 0.0
      %4906 = vmatpush1.msra.mxu0 %v4293
      %4907 = vmatprep.subr.mxu0 0.0
      %4908 = vmatpush1.msra.mxu0 %v4294
      %4909 = vmatprep.subr.mxu0 0.0
      %4910 = vmatpush1.msra.mxu0 %v4295
      %4911 = vmatprep.subr.mxu0 0.0
      %4912 = vmatpush1.msra.mxu0 %v4296
      %4913 = vmatprep.subr.mxu0 0.0
      %4914 = vmatpush1.msra.mxu0 %v4299
      %4915 = vmatprep.subr.mxu0 0.0
      %4916 = vmatpush1.msra.mxu0 0.0
      %4917 = vmatprep.subr.mxu0 0.0
      %4918 = vmatpush1.msra.mxu0 0.0
      %4919 = vmatprep.subr.mxu0 0.0
      %4920 = vmatpush1.msra.mxu0 0.0
      %4921 = vmatprep.subr.mxu0 0.0
      %4922 = vmatpush1.msra.mxu0 0.0
      %4923 = vmatprep.subr.mxu0 0.0
      %4924 = vmatpush1.msra.mxu0 0.0
      %4925 = vmatprep.subr.mxu0 0.0
      %4926 = vmatpush1.msra.mxu0 0.0
      %4927 = vmatprep.subr.mxu0 0.0
      %4928 = vmatpush1.msra.mxu0 0.0
      %4929 = vmatprep.subr.mxu0 0.0
      %4930 = vmatpush1.msra.mxu0 0.0
      %4931 = vmatprep.subr.mxu0 0.0
      %4932 = vmatpush1.msra.mxu0 0.0
      %4933 = vmatprep.subr.mxu0 0.0
      %4934 = vmatpush1.msra.mxu0 0.0
      %4935 = vmatprep.subr.mxu0 0.0
      %4936 = vmatpush1.msra.mxu0 0.0
      %4937 = vmatprep.subr.mxu0 0.0
      %4938 = vmatpush1.msra.mxu0 0.0
      %4939 = vmatprep.subr.mxu0 0.0
      %4940 = vmatpush1.msra.mxu0 0.0
      %4941 = vmatprep.subr.mxu0 0.0
      %4942 = vmatpush1.msra.mxu0 0.0
      %4943 = vmatprep.subr.mxu0 0.0
      %4944 = vmatpush1.msra.mxu0 0.0
      %4945 = vmatprep.subr.mxu0 0.0
      %4946 = vmatpush1.msra.mxu0 0.0
      %4947 = vmatprep.subr.mxu0 0.0
      %4948 = vmatpush1.msra.mxu0 0.0
      %4949 = vmatprep.subr.mxu0 0.0
      %4950 = vmatpush1.msra.mxu0 0.0
      %4951 = vmatprep.subr.mxu0 0.0
      %4952 = vmatpush1.msra.mxu0 0.0
      %4953 = vmatprep.subr.mxu0 0.0
      %4954 = vmatpush1.msra.mxu0 0.0
      %4955 = vmatprep.subr.mxu0 0.0
      %4956 = vmatpush1.msra.mxu0 0.0
      %4957 = vmatprep.subr.mxu0 0.0
      %4958 = vmatpush1.msra.mxu0 0.0
      %4959 = vmatprep.subr.mxu0 0.0
      %4960 = vmatpush1.msra.mxu0 0.0
      %4961 = vmatprep.subr.mxu0 0.0
      %4962 = vmatpush1.msra.mxu0 0.0
      %4963 = vmatprep.subr.mxu0 0.0
      %4964 = vmatpush1.msra.mxu0 0.0
      %4965 = vmatprep.mubr.f32.mxu0 0.0
      %4966 = vmatmul.mubr.f32.gmra.mrb[0].mxu0 %v1884
      %v4967 = vpop.f32.mrb[0].mxu0
      %v4968 = vadd.f32 0.0, %v4967
      %v4969 = vpop.f32.mrb[0].mxu0
      %4970 = vmatprep.mubr.f32.mxu0 0.0
      %4971 = vmatmul.mubr.f32.gmra.mrb[0].mxu0 %v1887
      %v4972 = vpop.f32.mrb[0].mxu0
      %v4973 = vadd.f32 0.0, %v4972
      %v4974 = vpop.f32.mrb[0].mxu0
      %4975 = vmatprep.mubr.f32.mxu0 0.0
      %4976 = vmatmul.mubr.f32.gmra.mrb[0].mxu0 %v1890
      %v4977 = vpop.f32.mrb[0].mxu0
      %v4978 = vadd.f32 0.0, %v4977
      %v4979 = vpop.f32.mrb[0].mxu0
      %4980 = vmatprep.mubr.f32.mxu0 0.0
      %4981 = vmatmul.mubr.f32.gmra.mrb[0].mxu0 %v1893
      %v4982 = vpop.f32.mrb[0].mxu0
      %v4983 = vadd.f32 0.0, %v4982
      %v4984 = vpop.f32.mrb[0].mxu0
      %4985 = vmatprep.mubr.f32.mxu0 0.0
      %4986 = vmatmul.mubr.f32.gmra.mrb[0].mxu0 %v1896
      %v4987 = vpop.f32.mrb[0].mxu0
      %v4988 = vadd.f32 0.0, %v4987
      %v4989 = vpop.f32.mrb[0].mxu0
      %4990 = vmatprep.mubr.f32.mxu0 0.0
      %4991 = vmatmul.mubr.f32.gmra.mrb[0].mxu0 %v1899
      %v4992 = vpop.f32.mrb[0].mxu0
      %v4993 = vadd.f32 0.0, %v4992
      %v4994 = vpop.f32.mrb[0].mxu0
      %4995 = vmatprep.mubr.f32.mxu0 0.0
      %4996 = vmatmul.mubr.f32.gmra.mrb[0].mxu0 %v1902
      %v4997 = vpop.f32.mrb[0].mxu0
      %v4998 = vadd.f32 0.0, %v4997
      %v4999 = vpop.f32.mrb[0].mxu0
      %5000 = vdwg.mxu0
      %5001 = vmatprep.subr.mxu0 0.0
      %5002 = vmatpush1.msra.mxu0 %v4291
      %5003 = vmatprep.subr.mxu0 0.0
      %5004 = vmatpush1.msra.mxu0 %v4292
      %5005 = vmatprep.subr.mxu0 0.0
      %5006 = vmatpush1.msra.mxu0 %v4293
      %5007 = vmatprep.subr.mxu0 0.0
      %5008 = vmatpush1.msra.mxu0 %v4294
      %5009 = vmatprep.subr.mxu0 0.0
      %5010 = vmatpush1.msra.mxu0 %v4295
      %5011 = vmatprep.subr.mxu0 0.0
      %5012 = vmatpush1.msra.mxu0 %v4296
      %5013 = vmatprep.subr.mxu0 0.0
      %5014 = vmatpush1.msra.mxu0 %v4299
      %5015 = vmatprep.subr.mxu0 0.0
      %5016 = vmatpush1.msra.mxu0 0.0
      %5017 = vmatprep.subr.mxu0 0.0
      %5018 = vmatpush1.msra.mxu0 0.0
      %5019 = vmatprep.subr.mxu0 0.0
      %5020 = vmatpush1.msra.mxu0 0.0
      %5021 = vmatprep.subr.mxu0 0.0
      %5022 = vmatpush1.msra.mxu0 0.0
      %5023 = vmatprep.subr.mxu0 0.0
      %5024 = vmatpush1.msra.mxu0 0.0
      %5025 = vmatprep.subr.mxu0 0.0
      %5026 = vmatpush1.msra.mxu0 0.0
      %5027 = vmatprep.subr.mxu0 0.0
      %5028 = vmatpush1.msra.mxu0 0.0
      %5029 = vmatprep.subr.mxu0 0.0
      %5030 = vmatpush1.msra.mxu0 0.0
      %5031 = vmatprep.subr.mxu0 0.0
      %5032 = vmatpush1.msra.mxu0 0.0
      %5033 = vmatprep.subr.mxu0 0.0
      %5034 = vmatpush1.msra.mxu0 0.0
      %5035 = vmatprep.subr.mxu0 0.0
      %5036 = vmatpush1.msra.mxu0 0.0
      %5037 = vmatprep.subr.mxu0 0.0
      %5038 = vmatpush1.msra.mxu0 0.0
      %5039 = vmatprep.subr.mxu0 0.0
      %5040 = vmatpush1.msra.mxu0 0.0
      %5041 = vmatprep.subr.mxu0 0.0
      %5042 = vmatpush1.msra.mxu0 0.0
      %5043 = vmatprep.subr.mxu0 0.0
      %5044 = vmatpush1.msra.mxu0 0.0
      %5045 = vmatprep.subr.mxu0 0.0
      %5046 = vmatpush1.msra.mxu0 0.0
      %5047 = vmatprep.subr.mxu0 0.0
      %5048 = vmatpush1.msra.mxu0 0.0
      %5049 = vmatprep.subr.mxu0 0.0
      %5050 = vmatpush1.msra.mxu0 0.0
      %5051 = vmatprep.subr.mxu0 0.0
      %5052 = vmatpush1.msra.mxu0 0.0
      %5053 = vmatprep.subr.mxu0 0.0
      %5054 = vmatpush1.msra.mxu0 0.0
      %5055 = vmatprep.subr.mxu0 0.0
      %5056 = vmatpush1.msra.mxu0 0.0
      %5057 = vmatprep.subr.mxu0 0.0
      %5058 = vmatpush1.msra.mxu0 0.0
      %5059 = vmatprep.subr.mxu0 0.0
      %5060 = vmatpush1.msra.mxu0 0.0
      %5061 = vmatprep.subr.mxu0 0.0
      %5062 = vmatpush1.msra.mxu0 0.0
      %5063 = vmatprep.subr.mxu0 0.0
      %5064 = vmatpush1.msra.mxu0 0.0
      %5065 = vmatprep.mubr.f32.mxu0 0.0
      %5066 = vmatmul.mubr.f32.gmra.mrb[0].mxu0 %v2013
      %v5067 = vpop.f32.mrb[0].mxu0
      %v5068 = vadd.f32 0.0, %v5067
      %v5069 = vpop.f32.mrb[0].mxu0
      %5070 = vmatprep.mubr.f32.mxu0 0.0
      %5071 = vmatmul.mubr.f32.gmra.mrb[0].mxu0 %v2016
      %v5072 = vpop.f32.mrb[0].mxu0
      %v5073 = vadd.f32 0.0, %v5072
      %v5074 = vpop.f32.mrb[0].mxu0
      %5075 = vmatprep.mubr.f32.mxu0 0.0
      %5076 = vmatmul.mubr.f32.gmra.mrb[0].mxu0 %v2019
      %v5077 = vpop.f32.mrb[0].mxu0
      %v5078 = vadd.f32 0.0, %v5077
      %v5079 = vpop.f32.mrb[0].mxu0
      %5080 = vmatprep.mubr.f32.mxu0 0.0
      %5081 = vmatmul.mubr.f32.gmra.mrb[0].mxu0 %v2022
      %v5082 = vpop.f32.mrb[0].mxu0
      %v5083 = vadd.f32 0.0, %v5082
      %v5084 = vpop.f32.mrb[0].mxu0
      %5085 = vmatprep.mubr.f32.mxu0 0.0
      %5086 = vmatmul.mubr.f32.gmra.mrb[0].mxu0 %v2025
      %v5087 = vpop.f32.mrb[0].mxu0
      %v5088 = vadd.f32 0.0, %v5087
      %v5089 = vpop.f32.mrb[0].mxu0
      %5090 = vmatprep.mubr.f32.mxu0 0.0
      %5091 = vmatmul.mubr.f32.gmra.mrb[0].mxu0 %v2028
      %v5092 = vpop.f32.mrb[0].mxu0
      %v5093 = vadd.f32 0.0, %v5092
      %v5094 = vpop.f32.mrb[0].mxu0
      %5095 = vmatprep.mubr.f32.mxu0 0.0
      %5096 = vmatmul.mubr.f32.gmra.mrb[0].mxu0 %v2031
      %v5097 = vpop.f32.mrb[0].mxu0
      %v5098 = vadd.f32 0.0, %v5097
      %v5099 = vpop.f32.mrb[0].mxu0
      %5100 = vdwg.mxu0
      %5101 = vmatprep.subr.mxu0 0.0
      %5102 = vmatpush1.msra.mxu0 %v4291
      %5103 = vmatprep.subr.mxu0 0.0
      %5104 = vmatpush1.msra.mxu0 %v4292
      %5105 = vmatprep.subr.mxu0 0.0
      %5106 = vmatpush1.msra.mxu0 %v4293
      %5107 = vmatprep.subr.mxu0 0.0
      %5108 = vmatpush1.msra.mxu0 %v4294
      %5109 = vmatprep.subr.mxu0 0.0
      %5110 = vmatpush1.msra.mxu0 %v4295
      %5111 = vmatprep.subr.mxu0 0.0
      %5112 = vmatpush1.msra.mxu0 %v4296
      %5113 = vmatprep.subr.mxu0 0.0
      %5114 = vmatpush1.msra.mxu0 %v4299
      %5115 = vmatprep.subr.mxu0 0.0
      %5116 = vmatpush1.msra.mxu0 0.0
      %5117 = vmatprep.subr.mxu0 0.0
      %5118 = vmatpush1.msra.mxu0 0.0
      %5119 = vmatprep.subr.mxu0 0.0
      %5120 = vmatpush1.msra.mxu0 0.0
      %5121 = vmatprep.subr.mxu0 0.0
      %5122 = vmatpush1.msra.mxu0 0.0
      %5123 = vmatprep.subr.mxu0 0.0
      %5124 = vmatpush1.msra.mxu0 0.0
      %5125 = vmatprep.subr.mxu0 0.0
      %5126 = vmatpush1.msra.mxu0 0.0
      %5127 = vmatprep.subr.mxu0 0.0
      %5128 = vmatpush1.msra.mxu0 0.0
      %5129 = vmatprep.subr.mxu0 0.0
      %5130 = vmatpush1.msra.mxu0 0.0
      %5131 = vmatprep.subr.mxu0 0.0
      %5132 = vmatpush1.msra.mxu0 0.0
      %5133 = vmatprep.subr.mxu0 0.0
      %5134 = vmatpush1.msra.mxu0 0.0
      %5135 = vmatprep.subr.mxu0 0.0
      %5136 = vmatpush1.msra.mxu0 0.0
      %5137 = vmatprep.subr.mxu0 0.0
      %5138 = vmatpush1.msra.mxu0 0.0
      %5139 = vmatprep.subr.mxu0 0.0
      %5140 = vmatpush1.msra.mxu0 0.0
      %5141 = vmatprep.subr.mxu0 0.0
      %5142 = vmatpush1.msra.mxu0 0.0
      %5143 = vmatprep.subr.mxu0 0.0
      %5144 = vmatpush1.msra.mxu0 0.0
      %5145 = vmatprep.subr.mxu0 0.0
      %5146 = vmatpush1.msra.mxu0 0.0
      %5147 = vmatprep.subr.mxu0 0.0
      %5148 = vmatpush1.msra.mxu0 0.0
      %5149 = vmatprep.subr.mxu0 0.0
      %5150 = vmatpush1.msra.mxu0 0.0
      %5151 = vmatprep.subr.mxu0 0.0
      %5152 = vmatpush1.msra.mxu0 0.0
      %5153 = vmatprep.subr.mxu0 0.0
      %5154 = vmatpush1.msra.mxu0 0.0
      %5155 = vmatprep.subr.mxu0 0.0
      %5156 = vmatpush1.msra.mxu0 0.0
      %5157 = vmatprep.subr.mxu0 0.0
      %5158 = vmatpush1.msra.mxu0 0.0
      %5159 = vmatprep.subr.mxu0 0.0
      %5160 = vmatpush1.msra.mxu0 0.0
      %5161 = vmatprep.subr.mxu0 0.0
      %5162 = vmatpush1.msra.mxu0 0.0
      %5163 = vmatprep.subr.mxu0 0.0
      %5164 = vmatpush1.msra.mxu0 0.0
      %5165 = vmatprep.mubr.f32.mxu0 0.0
      %5166 = vmatmul.mubr.f32.gmra.mrb[0].mxu0 %v2142
      %v5167 = vpop.f32.mrb[0].mxu0
      %v5168 = vadd.f32 0.0, %v5167
      %v5169 = vpop.f32.mrb[0].mxu0
      %5170 = vmatprep.mubr.f32.mxu0 0.0
      %5171 = vmatmul.mubr.f32.gmra.mrb[0].mxu0 %v2145
      %v5172 = vpop.f32.mrb[0].mxu0
      %v5173 = vadd.f32 0.0, %v5172
      %v5174 = vpop.f32.mrb[0].mxu0
      %5175 = vmatprep.mubr.f32.mxu0 0.0
      %5176 = vmatmul.mubr.f32.gmra.mrb[0].mxu0 %v2148
      %v5177 = vpop.f32.mrb[0].mxu0
      %v5178 = vadd.f32 0.0, %v5177
      %v5179 = vpop.f32.mrb[0].mxu0
      %5180 = vmatprep.mubr.f32.mxu0 0.0
      %5181 = vmatmul.mubr.f32.gmra.mrb[0].mxu0 %v2151
      %v5182 = vpop.f32.mrb[0].mxu0
      %v5183 = vadd.f32 0.0, %v5182
      %v5184 = vpop.f32.mrb[0].mxu0
      %5185 = vmatprep.mubr.f32.mxu0 0.0
      %5186 = vmatmul.mubr.f32.gmra.mrb[0].mxu0 %v2154
      %v5187 = vpop.f32.mrb[0].mxu0
      %v5188 = vadd.f32 0.0, %v5187
      %v5189 = vpop.f32.mrb[0].mxu0
      %5190 = vmatprep.mubr.f32.mxu0 0.0
      %5191 = vmatmul.mubr.f32.gmra.mrb[0].mxu0 %v2157
      %v5192 = vpop.f32.mrb[0].mxu0
      %v5193 = vadd.f32 0.0, %v5192
      %v5194 = vpop.f32.mrb[0].mxu0
      %5195 = vmatprep.mubr.f32.mxu0 0.0
      %5196 = vmatmul.mubr.f32.gmra.mrb[0].mxu0 %v2160
      %v5197 = vpop.f32.mrb[0].mxu0
      %v5198 = vadd.f32 0.0, %v5197
      %v5199 = vpop.f32.mrb[0].mxu0
      %5200 = vdwg.mxu0
      %5208 = vrot.lane.b32.xlu0 %v4468, 12
      %v5209 = vpop.permute.xlu0 %5208
      %5210 = vrot.lane.b32.xlu0 %v4473, 12
      %v5211 = vpop.permute.xlu0 %5210
      %5212 = vrot.lane.b32.xlu0 %v4478, 12
      %v5213 = vpop.permute.xlu0 %5212
      %5214 = vrot.lane.b32.xlu0 %v4483, 12
      %v5215 = vpop.permute.xlu0 %5214
      %5216 = vrot.lane.b32.xlu0 %v4488, 12
      %v5217 = vpop.permute.xlu0 %5216
      %5218 = vrot.lane.b32.xlu0 %v4493, 12
      %v5219 = vpop.permute.xlu0 %5218
      %5220 = vrot.lane.b32.xlu0 %v4498, 12
      %v5221 = vpop.permute.xlu0 %5220
      %5236 = vrot.lane.b32.xlu0 %v4568, 24
      %v5237 = vpop.permute.xlu0 %5236
      %5238 = vrot.lane.b32.xlu0 %v4573, 24
      %v5239 = vpop.permute.xlu0 %5238
      %5240 = vrot.lane.b32.xlu0 %v4578, 24
      %v5241 = vpop.permute.xlu0 %5240
      %5242 = vrot.lane.b32.xlu0 %v4583, 24
      %v5243 = vpop.permute.xlu0 %5242
      %5244 = vrot.lane.b32.xlu0 %v4588, 24
      %v5245 = vpop.permute.xlu0 %5244
      %5246 = vrot.lane.b32.xlu0 %v4593, 24
      %v5247 = vpop.permute.xlu0 %5246
      %5248 = vrot.lane.b32.xlu0 %v4598, 24
      %v5249 = vpop.permute.xlu0 %5248
      %5264 = vrot.lane.b32.xlu0 %v4668, 36
      %v5265 = vpop.permute.xlu0 %5264
      %5266 = vrot.lane.b32.xlu0 %v4673, 36
      %v5267 = vpop.permute.xlu0 %5266
      %5268 = vrot.lane.b32.xlu0 %v4678, 36
      %v5269 = vpop.permute.xlu0 %5268
      %5270 = vrot.lane.b32.xlu0 %v4683, 36
      %v5271 = vpop.permute.xlu0 %5270
      %5272 = vrot.lane.b32.xlu0 %v4688, 36
      %v5273 = vpop.permute.xlu0 %5272
      %5274 = vrot.lane.b32.xlu0 %v4693, 36
      %v5275 = vpop.permute.xlu0 %5274
      %5276 = vrot.lane.b32.xlu0 %v4698, 36
      %v5277 = vpop.permute.xlu0 %5276
      %5292 = vrot.lane.b32.xlu0 %v4768, 48
      %v5293 = vpop.permute.xlu0 %5292
      %5294 = vrot.lane.b32.xlu0 %v4773, 48
      %v5295 = vpop.permute.xlu0 %5294
      %5296 = vrot.lane.b32.xlu0 %v4778, 48
      %v5297 = vpop.permute.xlu0 %5296
      %5298 = vrot.lane.b32.xlu0 %v4783, 48
      %v5299 = vpop.permute.xlu0 %5298
      %5300 = vrot.lane.b32.xlu0 %v4788, 48
      %v5301 = vpop.permute.xlu0 %5300
      %5302 = vrot.lane.b32.xlu0 %v4793, 48
      %v5303 = vpop.permute.xlu0 %5302
      %5304 = vrot.lane.b32.xlu0 %v4798, 48
      %v5305 = vpop.permute.xlu0 %5304
      %5320 = vrot.lane.b32.xlu0 %v4868, 60
      %v5321 = vpop.permute.xlu0 %5320
      %5322 = vrot.lane.b32.xlu0 %v4873, 60
      %v5323 = vpop.permute.xlu0 %5322
      %5324 = vrot.lane.b32.xlu0 %v4878, 60
      %v5325 = vpop.permute.xlu0 %5324
      %5326 = vrot.lane.b32.xlu0 %v4883, 60
      %v5327 = vpop.permute.xlu0 %5326
      %5328 = vrot.lane.b32.xlu0 %v4888, 60
      %v5329 = vpop.permute.xlu0 %5328
      %5330 = vrot.lane.b32.xlu0 %v4893, 60
      %v5331 = vpop.permute.xlu0 %5330
      %5332 = vrot.lane.b32.xlu0 %v4898, 60
      %v5333 = vpop.permute.xlu0 %5332
      %5348 = vrot.lane.b32.xlu0 %v4968, 72
      %v5349 = vpop.permute.xlu0 %5348
      %5350 = vrot.lane.b32.xlu0 %v4973, 72
      %v5351 = vpop.permute.xlu0 %5350
      %5352 = vrot.lane.b32.xlu0 %v4978, 72
      %v5353 = vpop.permute.xlu0 %5352
      %5354 = vrot.lane.b32.xlu0 %v4983, 72
      %v5355 = vpop.permute.xlu0 %5354
      %5356 = vrot.lane.b32.xlu0 %v4988, 72
      %v5357 = vpop.permute.xlu0 %5356
      %5358 = vrot.lane.b32.xlu0 %v4993, 72
      %v5359 = vpop.permute.xlu0 %5358
      %5360 = vrot.lane.b32.xlu0 %v4998, 72
      %v5361 = vpop.permute.xlu0 %5360
      %5376 = vrot.lane.b32.xlu0 %v5068, 84
      %v5377 = vpop.permute.xlu0 %5376
      %5378 = vrot.lane.b32.xlu0 %v5073, 84
      %v5379 = vpop.permute.xlu0 %5378
      %5380 = vrot.lane.b32.xlu0 %v5078, 84
      %v5381 = vpop.permute.xlu0 %5380
      %5382 = vrot.lane.b32.xlu0 %v5083, 84
      %v5383 = vpop.permute.xlu0 %5382
      %5384 = vrot.lane.b32.xlu0 %v5088, 84
      %v5385 = vpop.permute.xlu0 %5384
      %5386 = vrot.lane.b32.xlu0 %v5093, 84
      %v5387 = vpop.permute.xlu0 %5386
      %5388 = vrot.lane.b32.xlu0 %v5098, 84
      %v5389 = vpop.permute.xlu0 %5388
      %5404 = vrot.lane.b32.xlu0 %v5168, 96
      %v5405 = vpop.permute.xlu0 %5404
      %5406 = vrot.lane.b32.xlu0 %v5173, 96
      %v5407 = vpop.permute.xlu0 %5406
      %5408 = vrot.lane.b32.xlu0 %v5178, 96
      %v5409 = vpop.permute.xlu0 %5408
      %5410 = vrot.lane.b32.xlu0 %v5183, 96
      %v5411 = vpop.permute.xlu0 %5410
      %5412 = vrot.lane.b32.xlu0 %v5188, 96
      %v5413 = vpop.permute.xlu0 %5412
      %5414 = vrot.lane.b32.xlu0 %v5193, 96
      %v5415 = vpop.permute.xlu0 %5414
      %5416 = vrot.lane.b32.xlu0 %v5198, 96
      %v5417 = vpop.permute.xlu0 %5416
      %v5425 = vsel %vm2494, %v4368, %v5209
      %v5426 = vsel %vm2494, %v4373, %v5211
      %v5427 = vsel %vm2494, %v4378, %v5213
      %v5428 = vsel %vm2494, %v4383, %v5215
      %v5429 = vsel %vm2494, %v4388, %v5217
      %v5430 = vsel %vm2494, %v4393, %v5219
      %v5431 = vsel %vm2494, %v4398, %v5221
      %v5432 = vsel %vm2510, %v5425, %v5237
      %v5433 = vsel %vm2510, %v5426, %v5239
      %v5434 = vsel %vm2510, %v5427, %v5241
      %v5435 = vsel %vm2510, %v5428, %v5243
      %v5436 = vsel %vm2510, %v5429, %v5245
      %v5437 = vsel %vm2510, %v5430, %v5247
      %v5438 = vsel %vm2510, %v5431, %v5249
      %v5439 = vsel %vm2526, %v5432, %v5265
      %v5440 = vsel %vm2526, %v5433, %v5267
      %v5441 = vsel %vm2526, %v5434, %v5269
      %v5442 = vsel %vm2526, %v5435, %v5271
      %v5443 = vsel %vm2526, %v5436, %v5273
      %v5444 = vsel %vm2526, %v5437, %v5275
      %v5445 = vsel %vm2526, %v5438, %v5277
      %v5446 = vsel %vm2542, %v5439, %v5293
      %v5447 = vsel %vm2542, %v5440, %v5295
      %v5448 = vsel %vm2542, %v5441, %v5297
      %v5449 = vsel %vm2542, %v5442, %v5299
      %v5450 = vsel %vm2542, %v5443, %v5301
      %v5451 = vsel %vm2542, %v5444, %v5303
      %v5452 = vsel %vm2542, %v5445, %v5305
      %v5453 = vsel %vm3972, %v5446, %v5321
      %v5454 = vsel %vm3972, %v5447, %v5323
      %v5455 = vsel %vm3972, %v5448, %v5325
      %v5456 = vsel %vm3972, %v5449, %v5327
      %v5457 = vsel %vm3972, %v5450, %v5329
      %v5458 = vsel %vm3972, %v5451, %v5331
      %v5459 = vsel %vm3972, %v5452, %v5333
      %v5460 = vsel %vm3980, %v5453, %v5349
      %v5461 = vsel %vm3980, %v5454, %v5351
      %v5462 = vsel %vm3980, %v5455, %v5353
      %v5463 = vsel %vm3980, %v5456, %v5355
      %v5464 = vsel %vm3980, %v5457, %v5357
      %v5465 = vsel %vm3980, %v5458, %v5359
      %v5466 = vsel %vm3980, %v5459, %v5361
      %v5467 = vsel %vm3988, %v5460, %v5377
      %v5468 = vsel %vm3988, %v5461, %v5379
      %v5469 = vsel %vm3988, %v5462, %v5381
      %v5470 = vsel %vm3988, %v5463, %v5383
      %v5471 = vsel %vm3988, %v5464, %v5385
      %v5472 = vsel %vm3988, %v5465, %v5387
      %v5473 = vsel %vm3988, %v5466, %v5389
      %v5474 = vsel %vm3996, %v5467, %v5405
      %v5475 = vsel %vm3996, %v5468, %v5407
      %v5476 = vsel %vm3996, %v5469, %v5409
      %v5477 = vsel %vm3996, %v5470, %v5411
      %v5478 = vsel %vm3996, %v5471, %v5413
      %v5479 = vsel %vm3996, %v5472, %v5415
      %v5480 = vsel %vm3996, %v5473, %v5417
      %v5481 = vld [vmem:[%s807] sm:$0xff]
      %v5482 = vld [vmem:[%s807 + $0x8] sm:$0xff]
      %v5483 = vld [vmem:[%s807 + $0x10] sm:$0xff]
      %v5484 = vld [vmem:[%s807 + $0x18] sm:$0xff]
      %v5485 = vld [vmem:[%s807 + $0x20] sm:$0xff]
      %v5486 = vld [vmem:[%s807 + $0x28] sm:$0xff]
      %v5487 = vld [vmem:[%s807 + $0x30] sm:$0xff]
      %v5488 = vld [vmem:[%s807 + $0x38] sm:$0xff]
      %v5489 = vld [vmem:[%s807 + $0x40] sm:$0xff]
      %v5490 = vld [vmem:[%s807 + $0x48] sm:$0xff]
      %v5491 = vld [vmem:[%s807 + $0x50] sm:$0xff]
      %v5492 = vld [vmem:[%s807 + $0x58] sm:$0xff]
      %v5493 = vld [vmem:[%s807 + $0x60] sm:$0xff]
      %v5494 = vld [vmem:[%s807 + $0x68] sm:$0xf]
      %v5495 = vld [vmem:[%s810] sm:$0x1]
      %v5497 = vlaneseq
      %v5498 = vshrl.u32 %v5497, 7
      %v5499 = vsub.s32 0, %v5498
      %v5500 = vrot.slane %v5495, %v5499
      %v5503 = vsel %vm4025, %v5474, 0
      %v5506 = vsel %vm4025, %v5475, 0
      %v5509 = vsel %vm4025, %v5476, 0
      %v5512 = vsel %vm4025, %v5477, 0
      %v5515 = vsel %vm4025, %v5478, 0
      %v5518 = vsel %vm4025, %v5479, 0
      %v5521 = vsel %vm4025, %v5480, 0
      %v5524 = vsel %vm4047, %v5494, 0
      %5526 = vmatprep.subr.mxu0 0.0
      %5527 = vmatpush1.msra.mxu0 %v5481
      %5528 = vmatprep.subr.mxu0 0.0
      %5529 = vmatpush1.msra.mxu0 %v5482
      %5530 = vmatprep.subr.mxu0 0.0
      %5531 = vmatpush1.msra.mxu0 %v5483
      %5532 = vmatprep.subr.mxu0 0.0
      %5533 = vmatpush1.msra.mxu0 %v5484
      %5534 = vmatprep.subr.mxu0 0.0
      %5535 = vmatpush1.msra.mxu0 %v5485
      %5536 = vmatprep.subr.mxu0 0.0
      %5537 = vmatpush1.msra.mxu0 %v5486
      %5538 = vmatprep.subr.mxu0 0.0
      %5539 = vmatpush1.msra.mxu0 %v5487
      %5540 = vmatprep.subr.mxu0 0.0
      %5541 = vmatpush1.msra.mxu0 %v5488
      %5542 = vmatprep.subr.mxu0 0.0
      %5543 = vmatpush1.msra.mxu0 %v5489
      %5544 = vmatprep.subr.mxu0 0.0
      %5545 = vmatpush1.msra.mxu0 %v5490
      %5546 = vmatprep.subr.mxu0 0.0
      %5547 = vmatpush1.msra.mxu0 %v5491
      %5548 = vmatprep.subr.mxu0 0.0
      %5549 = vmatpush1.msra.mxu0 %v5492
      %5550 = vmatprep.subr.mxu0 0.0
      %5551 = vmatpush1.msra.mxu0 %v5493
      %5552 = vmatprep.subr.mxu0 0.0
      %5553 = vmatpush1.msra.mxu0 %v5524
      %5554 = vmatprep.subr.mxu0 0.0
      %5555 = vmatpush1.msra.mxu0 0.0
      %5556 = vmatprep.subr.mxu0 0.0
      %5557 = vmatpush1.msra.mxu0 0.0
      %5558 = vmatprep.subr.mxu0 0.0
      %5559 = vmatpush1.msra.mxu0 0.0
      %5560 = vmatprep.subr.mxu0 0.0
      %5561 = vmatpush1.msra.mxu0 0.0
      %5562 = vmatprep.subr.mxu0 0.0
      %5563 = vmatpush1.msra.mxu0 0.0
      %5564 = vmatprep.subr.mxu0 0.0
      %5565 = vmatpush1.msra.mxu0 0.0
      %5566 = vmatprep.subr.mxu0 0.0
      %5567 = vmatpush1.msra.mxu0 0.0
      %5568 = vmatprep.subr.mxu0 0.0
      %5569 = vmatpush1.msra.mxu0 0.0
      %5570 = vmatprep.subr.mxu0 0.0
      %5571 = vmatpush1.msra.mxu0 0.0
      %5572 = vmatprep.subr.mxu0 0.0
      %5573 = vmatpush1.msra.mxu0 0.0
      %5574 = vmatprep.subr.mxu0 0.0
      %5575 = vmatpush1.msra.mxu0 0.0
      %5576 = vmatprep.subr.mxu0 0.0
      %5577 = vmatpush1.msra.mxu0 0.0
      %5578 = vmatprep.subr.mxu0 0.0
      %5579 = vmatpush1.msra.mxu0 0.0
      %5580 = vmatprep.subr.mxu0 0.0
      %5581 = vmatpush1.msra.mxu0 0.0
      %5582 = vmatprep.subr.mxu0 0.0
      %5583 = vmatpush1.msra.mxu0 0.0
      %5584 = vmatprep.subr.mxu0 0.0
      %5585 = vmatpush1.msra.mxu0 0.0
      %5586 = vmatprep.subr.mxu0 0.0
      %5587 = vmatpush1.msra.mxu0 0.0
      %5588 = vmatprep.subr.mxu0 0.0
      %5589 = vmatpush1.msra.mxu0 0.0
      %5590 = vmatprep.mubr.f32.mxu0 0.0
      %5591 = vmatmul.mubr.f32.gmra.mrb[0].mxu0 %v5503
      %v5592 = vpop.f32.mrb[0].mxu0
      %v5593 = vadd.f32 %v5500, %v5592
      %v5594 = vpop.f32.mrb[0].mxu0
      %5595 = vmatprep.mubr.f32.mxu0 0.0
      %5596 = vmatmul.mubr.f32.gmra.mrb[0].mxu0 %v5506
      %v5597 = vpop.f32.mrb[0].mxu0
      %v5598 = vadd.f32 %v5500, %v5597
      %v5599 = vpop.f32.mrb[0].mxu0
      %5600 = vmatprep.mubr.f32.mxu0 0.0
      %5601 = vmatmul.mubr.f32.gmra.mrb[0].mxu0 %v5509
      %v5602 = vpop.f32.mrb[0].mxu0
      %v5603 = vadd.f32 %v5500, %v5602
      %v5604 = vpop.f32.mrb[0].mxu0
      %5605 = vmatprep.mubr.f32.mxu0 0.0
      %5606 = vmatmul.mubr.f32.gmra.mrb[0].mxu0 %v5512
      %v5607 = vpop.f32.mrb[0].mxu0
      %v5608 = vadd.f32 %v5500, %v5607
      %v5609 = vpop.f32.mrb[0].mxu0
      %5610 = vmatprep.mubr.f32.mxu0 0.0
      %5611 = vmatmul.mubr.f32.gmra.mrb[0].mxu0 %v5515
      %v5612 = vpop.f32.mrb[0].mxu0
      %v5613 = vadd.f32 %v5500, %v5612
      %v5614 = vpop.f32.mrb[0].mxu0
      %5615 = vmatprep.mubr.f32.mxu0 0.0
      %5616 = vmatmul.mubr.f32.gmra.mrb[0].mxu0 %v5518
      %v5617 = vpop.f32.mrb[0].mxu0
      %v5618 = vadd.f32 %v5500, %v5617
      %v5619 = vpop.f32.mrb[0].mxu0
      %5620 = vmatprep.mubr.f32.mxu0 0.0
      %5621 = vmatmul.mubr.f32.gmra.mrb[0].mxu0 %v5521
      %v5622 = vpop.f32.mrb[0].mxu0
      %v5623 = vadd.f32 %v5500, %v5622
      %v5624 = vpop.f32.mrb[0].mxu0
      %5625 = vdwg.mxu0
      %5633 = vrot.lane.b32.xlu0 %v2802, 6
      %v5634 = vpop.permute.xlu0 %5633
      %5635 = vrot.lane.b32.xlu0 %v2803, 6
      %v5636 = vpop.permute.xlu0 %5635
      %5637 = vrot.lane.b32.xlu0 %v2804, 6
      %v5638 = vpop.permute.xlu0 %5637
      %5639 = vrot.lane.b32.xlu0 %v2805, 6
      %v5640 = vpop.permute.xlu0 %5639
      %5641 = vrot.lane.b32.xlu0 %v2806, 6
      %v5642 = vpop.permute.xlu0 %5641
      %5643 = vrot.lane.b32.xlu0 %v2807, 6
      %v5644 = vpop.permute.xlu0 %5643
      %5645 = vrot.lane.b32.xlu0 %v2808, 6
      %v5646 = vpop.permute.xlu0 %5645
      %5661 = vrot.lane.b32.xlu0 %v4263, 12
      %v5662 = vpop.permute.xlu0 %5661
      %5663 = vrot.lane.b32.xlu0 %v4264, 12
      %v5664 = vpop.permute.xlu0 %5663
      %5665 = vrot.lane.b32.xlu0 %v4265, 12
      %v5666 = vpop.permute.xlu0 %5665
      %5667 = vrot.lane.b32.xlu0 %v4266, 12
      %v5668 = vpop.permute.xlu0 %5667
      %5669 = vrot.lane.b32.xlu0 %v4267, 12
      %v5670 = vpop.permute.xlu0 %5669
      %5671 = vrot.lane.b32.xlu0 %v4268, 12
      %v5672 = vpop.permute.xlu0 %5671
      %5673 = vrot.lane.b32.xlu0 %v4269, 12
      %v5674 = vpop.permute.xlu0 %5673
      %5689 = vrot.lane.b32.xlu0 %v5593, 18
      %v5690 = vpop.permute.xlu0 %5689
      %5691 = vrot.lane.b32.xlu0 %v5598, 18
      %v5692 = vpop.permute.xlu0 %5691
      %5693 = vrot.lane.b32.xlu0 %v5603, 18
      %v5694 = vpop.permute.xlu0 %5693
      %5695 = vrot.lane.b32.xlu0 %v5608, 18
      %v5696 = vpop.permute.xlu0 %5695
      %5697 = vrot.lane.b32.xlu0 %v5613, 18
      %v5698 = vpop.permute.xlu0 %5697
      %5699 = vrot.lane.b32.xlu0 %v5618, 18
      %v5700 = vpop.permute.xlu0 %5699
      %5701 = vrot.lane.b32.xlu0 %v5623, 18
      %v5702 = vpop.permute.xlu0 %5701
      %v5710 = vsel %vm2486, %v1064, %v5634
      %v5711 = vsel %vm2486, %v1065, %v5636
      %v5712 = vsel %vm2486, %v1066, %v5638
      %v5713 = vsel %vm2486, %v1067, %v5640
      %v5714 = vsel %vm2486, %v1068, %v5642
      %v5715 = vsel %vm2486, %v1069, %v5644
      %v5716 = vsel %vm2486, %v1070, %v5646
      %v5717 = vsel %vm2494, %v5710, %v5662
      %v5718 = vsel %vm2494, %v5711, %v5664
      %v5719 = vsel %vm2494, %v5712, %v5666
      %v5720 = vsel %vm2494, %v5713, %v5668
      %v5721 = vsel %vm2494, %v5714, %v5670
      %v5722 = vsel %vm2494, %v5715, %v5672
      %v5723 = vsel %vm2494, %v5716, %v5674
      %v5724 = vsel %vm2502, %v5717, %v5690
      %v5725 = vsel %vm2502, %v5718, %v5692
      %v5726 = vsel %vm2502, %v5719, %v5694
      %v5727 = vsel %vm2502, %v5720, %v5696
      %v5728 = vsel %vm2502, %v5721, %v5698
      %v5729 = vsel %vm2502, %v5722, %v5700
      %v5730 = vsel %vm2502, %v5723, %v5702
      %v5731 = vld [vmem:[%s813] sm:$0x1]
      %v5733 = vlaneseq
      %v5734 = vshrl.u32 %v5733, 7
      %v5735 = vsub.s32 0, %v5734
      %v5736 = vrot.slane %v5731, %v5735
      %v5738 = vmul.f32 %v5724, %v5736
      %v5739 = vmul.f32 %v5725, %v5736
      %v5740 = vmul.f32 %v5726, %v5736
      %v5741 = vmul.f32 %v5727, %v5736
      %v5742 = vmul.f32 %v5728, %v5736
      %v5743 = vmul.f32 %v5729, %v5736
      %v5744 = vmul.f32 %v5730, %v5736
      %v5745 = vld [vmem:[%s816] sm:$0x1]
      %v5747 = vlaneseq
      %v5748 = vshrl.u32 %v5747, 7
      %v5749 = vsub.s32 0, %v5748
      %v5750 = vrot.slane %v5745, %v5749
      %v5752 = vadd.f32 %v5738, %v5750
      %v5753 = vadd.f32 %v5739, %v5750
      %v5754 = vadd.f32 %v5740, %v5750
      %v5755 = vadd.f32 %v5741, %v5750
      %v5756 = vadd.f32 %v5742, %v5750
      %v5757 = vadd.f32 %v5743, %v5750
      %v5758 = vadd.f32 %v5744, %v5750
      %v5759 = vmax.f32 %v5752, 0.0
      %v5760 = vmax.f32 %v5753, 0.0
      %v5761 = vmax.f32 %v5754, 0.0
      %v5762 = vmax.f32 %v5755, 0.0
      %v5763 = vmax.f32 %v5756, 0.0
      %v5764 = vmax.f32 %v5757, 0.0
      %v5765 = vmax.f32 %v5758, 0.0
      %v5766 = vand.u32 2147483647, %v5752
      %v5767 = vand.u32 2147483647, %v5753
      %v5768 = vand.u32 2147483647, %v5754
      %v5769 = vand.u32 2147483647, %v5755
      %v5770 = vand.u32 2147483647, %v5756
      %v5771 = vand.u32 2147483647, %v5757
      %v5772 = vand.u32 2147483647, %v5758
      %v5773 = vsub.f32 0.0, %v5766
      %v5774 = vsub.f32 0.0, %v5767
      %v5775 = vsub.f32 0.0, %v5768
      %v5776 = vsub.f32 0.0, %v5769
      %v5777 = vsub.f32 0.0, %v5770
      %v5778 = vsub.f32 0.0, %v5771
      %v5779 = vsub.f32 0.0, %v5772
      %v5780 = vmul.f32 %v5773, 1.442695
      %v5781 = vpow.pop %v5780
      %v5782 = vmul.f32 %v5774, 1.442695
      %v5783 = vpow.pop %v5782
      %v5784 = vmul.f32 %v5775, 1.442695
      %v5785 = vpow.pop %v5784
      %v5786 = vmul.f32 %v5776, 1.442695
      %v5787 = vpow.pop %v5786
      %v5788 = vmul.f32 %v5777, 1.442695
      %v5789 = vpow.pop %v5788
      %v5790 = vmul.f32 %v5778, 1.442695
      %v5791 = vpow.pop %v5790
      %v5792 = vmul.f32 %v5779, 1.442695
      %v5793 = vpow.pop %v5792
      %v5794 = vadd.f32 %v5781, 1.0
      %v5795 = vlog2.pop %v5794
      %v5796 = vmul.f32 %v5795, 0.6931472
      %v5797 = vmul.f32 -0.5, %v5781
      %v5798 = vadd.f32 %v5797, 1.0
      %v5799 = vmul.f32 %v5798, %v5781
      %v5800 = vand.u32 2147483647, %v5781
      %vm5801 = vcmp.lt.f32.partialorder %v5800, 0.0004427343
      %v5802 = vsel %vm5801, %v5799, %v5796
      %v5803 = vadd.f32 %v5783, 1.0
      %v5804 = vlog2.pop %v5803
      %v5805 = vmul.f32 %v5804, 0.6931472
      %v5806 = vmul.f32 -0.5, %v5783
      %v5807 = vadd.f32 %v5806, 1.0
      %v5808 = vmul.f32 %v5807, %v5783
      %v5809 = vand.u32 2147483647, %v5783
      %vm5810 = vcmp.lt.f32.partialorder %v5809, 0.0004427343
      %v5811 = vsel %vm5810, %v5808, %v5805
      %v5812 = vadd.f32 %v5785, 1.0
      %v5813 = vlog2.pop %v5812
      %v5814 = vmul.f32 %v5813, 0.6931472
      %v5815 = vmul.f32 -0.5, %v5785
      %v5816 = vadd.f32 %v5815, 1.0
      %v5817 = vmul.f32 %v5816, %v5785
      %v5818 = vand.u32 2147483647, %v5785
      %vm5819 = vcmp.lt.f32.partialorder %v5818, 0.0004427343
      %v5820 = vsel %vm5819, %v5817, %v5814
      %v5821 = vadd.f32 %v5787, 1.0
      %v5822 = vlog2.pop %v5821
      %v5823 = vmul.f32 %v5822, 0.6931472
      %v5824 = vmul.f32 -0.5, %v5787
      %v5825 = vadd.f32 %v5824, 1.0
      %v5826 = vmul.f32 %v5825, %v5787
      %v5827 = vand.u32 2147483647, %v5787
      %vm5828 = vcmp.lt.f32.partialorder %v5827, 0.0004427343
      %v5829 = vsel %vm5828, %v5826, %v5823
      %v5830 = vadd.f32 %v5789, 1.0
      %v5831 = vlog2.pop %v5830
      %v5832 = vmul.f32 %v5831, 0.6931472
      %v5833 = vmul.f32 -0.5, %v5789
      %v5834 = vadd.f32 %v5833, 1.0
      %v5835 = vmul.f32 %v5834, %v5789
      %v5836 = vand.u32 2147483647, %v5789
      %vm5837 = vcmp.lt.f32.partialorder %v5836, 0.0004427343
      %v5838 = vsel %vm5837, %v5835, %v5832
      %v5839 = vadd.f32 %v5791, 1.0
      %v5840 = vlog2.pop %v5839
      %v5841 = vmul.f32 %v5840, 0.6931472
      %v5842 = vmul.f32 -0.5, %v5791
      %v5843 = vadd.f32 %v5842, 1.0
      %v5844 = vmul.f32 %v5843, %v5791
      %v5845 = vand.u32 2147483647, %v5791
      %vm5846 = vcmp.lt.f32.partialorder %v5845, 0.0004427343
      %v5847 = vsel %vm5846, %v5844, %v5841
      %v5848 = vadd.f32 %v5793, 1.0
      %v5849 = vlog2.pop %v5848
      %v5850 = vmul.f32 %v5849, 0.6931472
      %v5851 = vmul.f32 -0.5, %v5793
      %v5852 = vadd.f32 %v5851, 1.0
      %v5853 = vmul.f32 %v5852, %v5793
      %v5854 = vand.u32 2147483647, %v5793
      %vm5855 = vcmp.lt.f32.partialorder %v5854, 0.0004427343
      %v5856 = vsel %vm5855, %v5853, %v5850
      %v5857 = vadd.f32 %v5759, %v5802
      %v5858 = vadd.f32 %v5760, %v5811
      %v5859 = vadd.f32 %v5761, %v5820
      %v5860 = vadd.f32 %v5762, %v5829
      %v5861 = vadd.f32 %v5763, %v5838
      %v5862 = vadd.f32 %v5764, %v5847
      %v5863 = vadd.f32 %v5765, %v5856
      %v5864 = vtanh.pop %v5857
      %v5865 = vtanh.pop %v5858
      %v5866 = vtanh.pop %v5859
      %v5867 = vtanh.pop %v5860
      %v5868 = vtanh.pop %v5861
      %v5869 = vtanh.pop %v5862
      %v5870 = vtanh.pop %v5863
      %v5871 = vmul.f32 %v5752, %v5864
      %v5872 = vmul.f32 %v5753, %v5865
      %v5873 = vmul.f32 %v5754, %v5866
      %v5874 = vmul.f32 %v5755, %v5867
      %v5875 = vmul.f32 %v5756, %v5868
      %v5876 = vmul.f32 %v5757, %v5869
      %v5877 = vmul.f32 %v5758, %v5870
      %v5878 = vld [vmem:[%s821] sm:$0xff]
      %v5879 = vld [vmem:[%s821 + $0x8] sm:$0xff]
      %v5880 = vld [vmem:[%s821 + $0x10] sm:$0xff]
      %v5881 = vld [vmem:[%s824] sm:$0x1]
      %v5883 = vlaneseq
      %v5884 = vshrl.u32 %v5883, 7
      %v5885 = vsub.s32 0, %v5884
      %v5886 = vrot.slane %v5881, %v5885
      %v5889 = vsel %vm2510, %v5871, 0
      %v5892 = vsel %vm2510, %v5872, 0
      %v5895 = vsel %vm2510, %v5873, 0
      %v5898 = vsel %vm2510, %v5874, 0
      %v5901 = vsel %vm2510, %v5875, 0
      %v5904 = vsel %vm2510, %v5876, 0
      %v5907 = vsel %vm2510, %v5877, 0
      %5909 = vmatprep.subr.mxu0 0.0
      %5910 = vmatpush1.msra.mxu0 %v5878
      %5911 = vmatprep.subr.mxu0 0.0
      %5912 = vmatpush1.msra.mxu0 %v5879
      %5913 = vmatprep.subr.mxu0 0.0
      %5914 = vmatpush1.msra.mxu0 %v5880
      %5915 = vmatprep.subr.mxu0 0.0
      %5916 = vmatpush1.msra.mxu0 0.0
      %5917 = vmatprep.subr.mxu0 0.0
      %5918 = vmatpush1.msra.mxu0 0.0
      %5919 = vmatprep.subr.mxu0 0.0
      %5920 = vmatpush1.msra.mxu0 0.0
      %5921 = vmatprep.subr.mxu0 0.0
      %5922 = vmatpush1.msra.mxu0 0.0
      %5923 = vmatprep.subr.mxu0 0.0
      %5924 = vmatpush1.msra.mxu0 0.0
      %5925 = vmatprep.subr.mxu0 0.0
      %5926 = vmatpush1.msra.mxu0 0.0
      %5927 = vmatprep.subr.mxu0 0.0
      %5928 = vmatpush1.msra.mxu0 0.0
      %5929 = vmatprep.subr.mxu0 0.0
      %5930 = vmatpush1.msra.mxu0 0.0
      %5931 = vmatprep.subr.mxu0 0.0
      %5932 = vmatpush1.msra.mxu0 0.0
      %5933 = vmatprep.subr.mxu0 0.0
      %5934 = vmatpush1.msra.mxu0 0.0
      %5935 = vmatprep.subr.mxu0 0.0
      %5936 = vmatpush1.msra.mxu0 0.0
      %5937 = vmatprep.subr.mxu0 0.0
      %5938 = vmatpush1.msra.mxu0 0.0
      %5939 = vmatprep.subr.mxu0 0.0
      %5940 = vmatpush1.msra.mxu0 0.0
      %5941 = vmatprep.subr.mxu0 0.0
      %5942 = vmatpush1.msra.mxu0 0.0
      %5943 = vmatprep.subr.mxu0 0.0
      %5944 = vmatpush1.msra.mxu0 0.0
      %5945 = vmatprep.subr.mxu0 0.0
      %5946 = vmatpush1.msra.mxu0 0.0
      %5947 = vmatprep.subr.mxu0 0.0
      %5948 = vmatpush1.msra.mxu0 0.0
      %5949 = vmatprep.subr.mxu0 0.0
      %5950 = vmatpush1.msra.mxu0 0.0
      %5951 = vmatprep.subr.mxu0 0.0
      %5952 = vmatpush1.msra.mxu0 0.0
      %5953 = vmatprep.subr.mxu0 0.0
      %5954 = vmatpush1.msra.mxu0 0.0
      %5955 = vmatprep.subr.mxu0 0.0
      %5956 = vmatpush1.msra.mxu0 0.0
      %5957 = vmatprep.subr.mxu0 0.0
      %5958 = vmatpush1.msra.mxu0 0.0
      %5959 = vmatprep.subr.mxu0 0.0
      %5960 = vmatpush1.msra.mxu0 0.0
      %5961 = vmatprep.subr.mxu0 0.0
      %5962 = vmatpush1.msra.mxu0 0.0
      %5963 = vmatprep.subr.mxu0 0.0
      %5964 = vmatpush1.msra.mxu0 0.0
      %5965 = vmatprep.subr.mxu0 0.0
      %5966 = vmatpush1.msra.mxu0 0.0
      %5967 = vmatprep.subr.mxu0 0.0
      %5968 = vmatpush1.msra.mxu0 0.0
      %5969 = vmatprep.subr.mxu0 0.0
      %5970 = vmatpush1.msra.mxu0 0.0
      %5971 = vmatprep.subr.mxu0 0.0
      %5972 = vmatpush1.msra.mxu0 0.0
      %5973 = vmatprep.mubr.f32.mxu0 0.0
      %5974 = vmatmul.mubr.f32.gmra.mrb[0].mxu0 %v5889
      %v5975 = vpop.f32.mrb[0].mxu0
      %v5976 = vadd.f32 %v5886, %v5975
      %v5977 = vpop.f32.mrb[0].mxu0
      %5978 = vmatprep.mubr.f32.mxu0 0.0
      %5979 = vmatmul.mubr.f32.gmra.mrb[0].mxu0 %v5892
      %v5980 = vpop.f32.mrb[0].mxu0
      %v5981 = vadd.f32 %v5886, %v5980
      %v5982 = vpop.f32.mrb[0].mxu0
      %5983 = vmatprep.mubr.f32.mxu0 0.0
      %5984 = vmatmul.mubr.f32.gmra.mrb[0].mxu0 %v5895
      %v5985 = vpop.f32.mrb[0].mxu0
      %v5986 = vadd.f32 %v5886, %v5985
      %v5987 = vpop.f32.mrb[0].mxu0
      %5988 = vmatprep.mubr.f32.mxu0 0.0
      %5989 = vmatmul.mubr.f32.gmra.mrb[0].mxu0 %v5898
      %v5990 = vpop.f32.mrb[0].mxu0
      %v5991 = vadd.f32 %v5886, %v5990
      %v5992 = vpop.f32.mrb[0].mxu0
      %5993 = vmatprep.mubr.f32.mxu0 0.0
      %5994 = vmatmul.mubr.f32.gmra.mrb[0].mxu0 %v5901
      %v5995 = vpop.f32.mrb[0].mxu0
      %v5996 = vadd.f32 %v5886, %v5995
      %v5997 = vpop.f32.mrb[0].mxu0
      %5998 = vmatprep.mubr.f32.mxu0 0.0
      %5999 = vmatmul.mubr.f32.gmra.mrb[0].mxu0 %v5904
      %v6000 = vpop.f32.mrb[0].mxu0
      %v6001 = vadd.f32 %v5886, %v6000
      %v6002 = vpop.f32.mrb[0].mxu0
      %6003 = vmatprep.mubr.f32.mxu0 0.0
      %6004 = vmatmul.mubr.f32.gmra.mrb[0].mxu0 %v5907
      %v6005 = vpop.f32.mrb[0].mxu0
      %v6006 = vadd.f32 %v5886, %v6005
      %v6007 = vpop.f32.mrb[0].mxu0
      %6008 = vdwg.mxu0
      %v6009 = vld [vmem:[%s2] sm:$0xff]
      %v6010 = vld [vmem:[%s2 + $0x8] sm:$0xff]
      %v6011 = vld [vmem:[%s2 + $0x10] sm:$0xff]
      %v6012 = vld [vmem:[%s2 + $0x18] sm:$0xff]
      %v6013 = vld [vmem:[%s2 + $0x20] sm:$0xff]
      %v6014 = vld [vmem:[%s2 + $0x28] sm:$0xff]
      %v6015 = vld [vmem:[%s2 + $0x30] sm:$0x3]
      %6023 = vrot.lane.b32.xlu0 %v5976, 125
      %v6024 = vpop.permute.xlu0 %6023
      %6025 = vrot.lane.b32.xlu0 %v5981, 125
      %v6026 = vpop.permute.xlu0 %6025
      %6027 = vrot.lane.b32.xlu0 %v5986, 125
      %v6028 = vpop.permute.xlu0 %6027
      %6029 = vrot.lane.b32.xlu0 %v5991, 125
      %v6030 = vpop.permute.xlu0 %6029
      %6031 = vrot.lane.b32.xlu0 %v5996, 125
      %v6032 = vpop.permute.xlu0 %6031
      %6033 = vrot.lane.b32.xlu0 %v6001, 125
      %v6034 = vpop.permute.xlu0 %6033
      %6035 = vrot.lane.b32.xlu0 %v6006, 125
      %v6036 = vpop.permute.xlu0 %6035
      %vm6037 = vcmask 23552
      %v6038 = vsel %vm6037, %v5976, 0
      %v6040 = vsel %vm6037, %v5981, 0
      %v6042 = vsel %vm6037, %v5986, 0
      %v6044 = vsel %vm6037, %v5991, 0
      %v6046 = vsel %vm6037, %v5996, 0
      %v6048 = vsel %vm6037, %v6001, 0
      %v6050 = vsel %vm6037, %v6006, 0
      %v6052 = vsel %vm6037, %v6024, 0
      %v6054 = vsel %vm6037, %v6026, 0
      %v6056 = vsel %vm6037, %v6028, 0
      %v6058 = vsel %vm6037, %v6030, 0
      %v6060 = vsel %vm6037, %v6032, 0
      %v6062 = vsel %vm6037, %v6034, 0
      %v6064 = vsel %vm6037, %v6036, 0
      %6066 = vmatprep.subr.mxu0 0.0
      %6067 = vmatpush1.xpose.msra.mxu0 %v6052
      %6068 = vmatprep.subr.mxu0 0.0
      %6069 = vmatpush1.xpose.msra.mxu0 %v6054
      %6070 = vmatprep.subr.mxu0 0.0
      %6071 = vmatpush1.xpose.msra.mxu0 %v6056
      %6072 = vmatprep.subr.mxu0 0.0
      %6073 = vmatpush1.xpose.msra.mxu0 %v6058
      %6074 = vmatprep.subr.mxu0 0.0
      %6075 = vmatpush1.xpose.msra.mxu0 %v6060
      %6076 = vmatprep.subr.mxu0 0.0
      %6077 = vmatpush1.xpose.msra.mxu0 %v6062
      %6078 = vmatprep.subr.mxu0 0.0
      %6079 = vmatpush1.xpose.msra.mxu0 %v6064
      %6080 = vmatprep.subr.mxu0 0.0
      %6081 = vmatpush1.xpose.msra.mxu0 0.0
      %6082 = vmatprep.subr.mxu0 0.0
      %6083 = vmatpush1.xpose.msra.mxu0 0.0
      %6084 = vmatprep.subr.mxu0 0.0
      %6085 = vmatpush1.xpose.msra.mxu0 0.0
      %6086 = vmatprep.subr.mxu0 0.0
      %6087 = vmatpush1.xpose.msra.mxu0 0.0
      %6088 = vmatprep.subr.mxu0 0.0
      %6089 = vmatpush1.xpose.msra.mxu0 0.0
      %6090 = vmatprep.subr.mxu0 0.0
      %6091 = vmatpush1.xpose.msra.mxu0 0.0
      %6092 = vmatprep.subr.mxu0 0.0
      %6093 = vmatpush1.xpose.msra.mxu0 0.0
      %6094 = vmatprep.subr.mxu0 0.0
      %6095 = vmatpush1.xpose.msra.mxu0 0.0
      %6096 = vmatprep.subr.mxu0 0.0
      %6097 = vmatpush1.xpose.msra.mxu0 0.0
      %6098 = vmatprep.subr.mxu0 0.0
      %6099 = vmatpush1.xpose.msra.mxu0 0.0
      %6100 = vmatprep.subr.mxu0 0.0
      %6101 = vmatpush1.xpose.msra.mxu0 0.0
      %6102 = vmatprep.subr.mxu0 0.0
      %6103 = vmatpush1.xpose.msra.mxu0 0.0
      %6104 = vmatprep.subr.mxu0 0.0
      %6105 = vmatpush1.xpose.msra.mxu0 0.0
      %6106 = vmatprep.subr.mxu0 0.0
      %6107 = vmatpush1.xpose.msra.mxu0 0.0
      %6108 = vmatprep.subr.mxu0 0.0
      %6109 = vmatpush1.xpose.msra.mxu0 0.0
      %6110 = vmatprep.subr.mxu0 0.0
      %6111 = vmatpush1.xpose.msra.mxu0 0.0
      %6112 = vmatprep.subr.mxu0 0.0
      %6113 = vmatpush1.xpose.msra.mxu0 0.0
      %6114 = vmatprep.subr.mxu0 0.0
      %6115 = vmatpush1.xpose.msra.mxu0 0.0
      %6116 = vmatprep.subr.mxu0 0.0
      %6117 = vmatpush1.xpose.msra.mxu0 0.0
      %6118 = vmatprep.subr.mxu0 0.0
      %6119 = vmatpush1.xpose.msra.mxu0 0.0
      %6120 = vmatprep.subr.mxu0 0.0
      %6121 = vmatpush1.xpose.msra.mxu0 0.0
      %6122 = vmatprep.subr.mxu0 0.0
      %6123 = vmatpush1.xpose.msra.mxu0 0.0
      %6124 = vmatprep.subr.mxu0 0.0
      %6125 = vmatpush1.xpose.msra.mxu0 0.0
      %6126 = vmatprep.subr.mxu0 0.0
      %6127 = vmatpush1.xpose.msra.mxu0 0.0
      %6128 = vmatprep.subr.mxu0 0.0
      %6129 = vmatpush1.xpose.msra.mxu0 0.0
      %6130 = vmatprep.mubr.f32.mxu0 0.0
      %6131 = vmatmul.mubr.f32.gmra.mrb[0].mxu0 %v6038
      %v6132 = vpop.f32.mrb[0].mxu0
      %v6133 = vadd.f32 %v6009, %v6132
      %v6134 = vpop.f32.mrb[0].mxu0
      %6135 = vmatprep.mubr.f32.mxu0 0.0
      %6136 = vmatmul.mubr.f32.gmra.mrb[0].mxu0 %v6040
      %v6137 = vpop.f32.mrb[0].mxu0
      %v6138 = vadd.f32 %v6010, %v6137
      %v6139 = vpop.f32.mrb[0].mxu0
      %6140 = vmatprep.mubr.f32.mxu0 0.0
      %6141 = vmatmul.mubr.f32.gmra.mrb[0].mxu0 %v6042
      %v6142 = vpop.f32.mrb[0].mxu0
      %v6143 = vadd.f32 %v6011, %v6142
      %v6144 = vpop.f32.mrb[0].mxu0
      %6145 = vmatprep.mubr.f32.mxu0 0.0
      %6146 = vmatmul.mubr.f32.gmra.mrb[0].mxu0 %v6044
      %v6147 = vpop.f32.mrb[0].mxu0
      %v6148 = vadd.f32 %v6012, %v6147
      %v6149 = vpop.f32.mrb[0].mxu0
      %6150 = vmatprep.mubr.f32.mxu0 0.0
      %6151 = vmatmul.mubr.f32.gmra.mrb[0].mxu0 %v6046
      %v6152 = vpop.f32.mrb[0].mxu0
      %v6153 = vadd.f32 %v6013, %v6152
      %v6154 = vpop.f32.mrb[0].mxu0
      %6155 = vmatprep.mubr.f32.mxu0 0.0
      %6156 = vmatmul.mubr.f32.gmra.mrb[0].mxu0 %v6048
      %v6157 = vpop.f32.mrb[0].mxu0
      %v6158 = vadd.f32 %v6014, %v6157
      %v6159 = vpop.f32.mrb[0].mxu0
      %6160 = vmatprep.mubr.f32.mxu0 0.0
      %6161 = vmatmul.mubr.f32.gmra.mrb[0].mxu0 %v6050
      %v6162 = vpop.f32.mrb[0].mxu0
      %v6163 = vadd.f32 %v6015, %v6162
      %v6164 = vpop.f32.mrb[0].mxu0
      %6165 = vdwg.mxu0
      %v6166 = vsel %vm1105, %v6133, -inf
      %6167 = vmax.xlane.f32.xlu0 %v6166
      %v6168 = vpop.xlane.xlu0 %6167
      %v6169 = vsel %vm1105, %v6138, -inf
      %6170 = vmax.xlane.f32.xlu0 %v6169
      %v6171 = vpop.xlane.xlu0 %6170
      %v6172 = vsel %vm1105, %v6143, -inf
      %6173 = vmax.xlane.f32.xlu0 %v6172
      %v6174 = vpop.xlane.xlu0 %6173
      %v6175 = vsel %vm1105, %v6148, -inf
      %6176 = vmax.xlane.f32.xlu0 %v6175
      %v6177 = vpop.xlane.xlu0 %6176
      %v6178 = vsel %vm1105, %v6153, -inf
      %6179 = vmax.xlane.f32.xlu0 %v6178
      %v6180 = vpop.xlane.xlu0 %6179
      %v6181 = vsel %vm1105, %v6158, -inf
      %6182 = vmax.xlane.f32.xlu0 %v6181
      %v6183 = vpop.xlane.xlu0 %6182
      %vm6184 = vcmask 402432
      %v6185 = vsel %vm6184, %v6163, -inf
      %6186 = vmax.xlane.f32.xlu0 %v6185
      %v6187 = vpop.xlane.xlu0 %6186
      %v6188 = vsub.f32 %v6133, %v6168
      %v6189 = vsub.f32 %v6138, %v6171
      %v6190 = vsub.f32 %v6143, %v6174
      %v6191 = vsub.f32 %v6148, %v6177
      %v6192 = vsub.f32 %v6153, %v6180
      %v6193 = vsub.f32 %v6158, %v6183
      %v6194 = vsub.f32 %v6163, %v6187
      %v6195 = vmul.f32 %v6188, 1.442695
      %v6196 = vpow.pop %v6195
      %v6197 = vmul.f32 %v6189, 1.442695
      %v6198 = vpow.pop %v6197
      %v6199 = vmul.f32 %v6190, 1.442695
      %v6200 = vpow.pop %v6199
      %v6201 = vmul.f32 %v6191, 1.442695
      %v6202 = vpow.pop %v6201
      %v6203 = vmul.f32 %v6192, 1.442695
      %v6204 = vpow.pop %v6203
      %v6205 = vmul.f32 %v6193, 1.442695
      %v6206 = vpow.pop %v6205
      %v6207 = vmul.f32 %v6194, 1.442695
      %v6208 = vpow.pop %v6207
      %v6209 = vsel %vm1105, %v6196, 0.0
      %6210 = vadd.xlane.f32.xlu0 %v6209
      %v6211 = vpop.xlane.xlu0 %6210
      %v6212 = vsel %vm1105, %v6198, 0.0
      %6213 = vadd.xlane.f32.xlu0 %v6212
      %v6214 = vpop.xlane.xlu0 %6213
      %v6215 = vsel %vm1105, %v6200, 0.0
      %6216 = vadd.xlane.f32.xlu0 %v6215
      %v6217 = vpop.xlane.xlu0 %6216
      %v6218 = vsel %vm1105, %v6202, 0.0
      %6219 = vadd.xlane.f32.xlu0 %v6218
      %v6220 = vpop.xlane.xlu0 %6219
      %v6221 = vsel %vm1105, %v6204, 0.0
      %6222 = vadd.xlane.f32.xlu0 %v6221
      %v6223 = vpop.xlane.xlu0 %6222
      %v6224 = vsel %vm1105, %v6206, 0.0
      %6225 = vadd.xlane.f32.xlu0 %v6224
      %v6226 = vpop.xlane.xlu0 %6225
      %v6227 = vsel %vm6184, %v6208, 0.0
      %6228 = vadd.xlane.f32.xlu0 %v6227
      %v6229 = vpop.xlane.xlu0 %6228
      %v6230 = vrcp.pop %v6211
      %v6231 = vmul.f32 %v6196, %v6230
      %v6232 = vrcp.pop %v6214
      %v6233 = vmul.f32 %v6198, %v6232
      %v6234 = vrcp.pop %v6217
      %v6235 = vmul.f32 %v6200, %v6234
      %v6236 = vrcp.pop %v6220
      %v6237 = vmul.f32 %v6202, %v6236
      %v6238 = vrcp.pop %v6223
      %v6239 = vmul.f32 %v6204, %v6238
      %v6240 = vrcp.pop %v6226
      %v6241 = vmul.f32 %v6206, %v6240
      %v6242 = vrcp.pop %v6229
      %v6243 = vmul.f32 %v6208, %v6242
      %6244 = vrot.lane.b32.xlu0 %v5976, 122
      %v6245 = vpop.permute.xlu0 %6244
      %6246 = vrot.lane.b32.xlu0 %v5981, 122
      %v6247 = vpop.permute.xlu0 %6246
      %6248 = vrot.lane.b32.xlu0 %v5986, 122
      %v6249 = vpop.permute.xlu0 %6248
      %6250 = vrot.lane.b32.xlu0 %v5991, 122
      %v6251 = vpop.permute.xlu0 %6250
      %6252 = vrot.lane.b32.xlu0 %v5996, 122
      %v6253 = vpop.permute.xlu0 %6252
      %6254 = vrot.lane.b32.xlu0 %v6001, 122
      %v6255 = vpop.permute.xlu0 %6254
      %6256 = vrot.lane.b32.xlu0 %v6006, 122
      %v6257 = vpop.permute.xlu0 %6256
      %v6265 = vsel %vm1105, %v6231, 0
      %v6268 = vsel %vm1105, %v6233, 0
      %v6271 = vsel %vm1105, %v6235, 0
      %v6274 = vsel %vm1105, %v6237, 0
      %v6277 = vsel %vm1105, %v6239, 0
      %v6280 = vsel %vm1105, %v6241, 0
      %v6283 = vsel %vm1105, %v6243, 0
      %v6285 = vsel %vm1127, %v6257, 0
      %6287 = vmatprep.subr.mxu0 0.0
      %6288 = vmatpush1.msra.mxu0 %v6245
      %6289 = vmatprep.subr.mxu0 0.0
      %6290 = vmatpush1.msra.mxu0 %v6247
      %6291 = vmatprep.subr.mxu0 0.0
      %6292 = vmatpush1.msra.mxu0 %v6249
      %6293 = vmatprep.subr.mxu0 0.0
      %6294 = vmatpush1.msra.mxu0 %v6251
      %6295 = vmatprep.subr.mxu0 0.0
      %6296 = vmatpush1.msra.mxu0 %v6253
      %6297 = vmatprep.subr.mxu0 0.0
      %6298 = vmatpush1.msra.mxu0 %v6255
      %6299 = vmatprep.subr.mxu0 0.0
      %6300 = vmatpush1.msra.mxu0 %v6285
      %6301 = vmatprep.subr.mxu0 0.0
      %6302 = vmatpush1.msra.mxu0 0.0
      %6303 = vmatprep.subr.mxu0 0.0
      %6304 = vmatpush1.msra.mxu0 0.0
      %6305 = vmatprep.subr.mxu0 0.0
      %6306 = vmatpush1.msra.mxu0 0.0
      %6307 = vmatprep.subr.mxu0 0.0
      %6308 = vmatpush1.msra.mxu0 0.0
      %6309 = vmatprep.subr.mxu0 0.0
      %6310 = vmatpush1.msra.mxu0 0.0
      %6311 = vmatprep.subr.mxu0 0.0
      %6312 = vmatpush1.msra.mxu0 0.0
      %6313 = vmatprep.subr.mxu0 0.0
      %6314 = vmatpush1.msra.mxu0 0.0
      %6315 = vmatprep.subr.mxu0 0.0
      %6316 = vmatpush1.msra.mxu0 0.0
      %6317 = vmatprep.subr.mxu0 0.0
      %6318 = vmatpush1.msra.mxu0 0.0
      %6319 = vmatprep.subr.mxu0 0.0
      %6320 = vmatpush1.msra.mxu0 0.0
      %6321 = vmatprep.subr.mxu0 0.0
      %6322 = vmatpush1.msra.mxu0 0.0
      %6323 = vmatprep.subr.mxu0 0.0
      %6324 = vmatpush1.msra.mxu0 0.0
      %6325 = vmatprep.subr.mxu0 0.0
      %6326 = vmatpush1.msra.mxu0 0.0
      %6327 = vmatprep.subr.mxu0 0.0
      %6328 = vmatpush1.msra.mxu0 0.0
      %6329 = vmatprep.subr.mxu0 0.0
      %6330 = vmatpush1.msra.mxu0 0.0
      %6331 = vmatprep.subr.mxu0 0.0
      %6332 = vmatpush1.msra.mxu0 0.0
      %6333 = vmatprep.subr.mxu0 0.0
      %6334 = vmatpush1.msra.mxu0 0.0
      %6335 = vmatprep.subr.mxu0 0.0
      %6336 = vmatpush1.msra.mxu0 0.0
      %6337 = vmatprep.subr.mxu0 0.0
      %6338 = vmatpush1.msra.mxu0 0.0
      %6339 = vmatprep.subr.mxu0 0.0
      %6340 = vmatpush1.msra.mxu0 0.0
      %6341 = vmatprep.subr.mxu0 0.0
      %6342 = vmatpush1.msra.mxu0 0.0
      %6343 = vmatprep.subr.mxu0 0.0
      %6344 = vmatpush1.msra.mxu0 0.0
      %6345 = vmatprep.subr.mxu0 0.0
      %6346 = vmatpush1.msra.mxu0 0.0
      %6347 = vmatprep.subr.mxu0 0.0
      %6348 = vmatpush1.msra.mxu0 0.0
      %6349 = vmatprep.subr.mxu0 0.0
      %6350 = vmatpush1.msra.mxu0 0.0
      %6351 = vmatprep.mubr.f32.mxu0 0.0
      %6352 = vmatmul.mubr.f32.gmra.mrb[0].mxu0 %v6265
      %v6353 = vpop.f32.mrb[0].mxu0
      %v6354 = vadd.f32 0.0, %v6353
      %v6355 = vpop.f32.mrb[0].mxu0
      %6356 = vmatprep.mubr.f32.mxu0 0.0
      %6357 = vmatmul.mubr.f32.gmra.mrb[0].mxu0 %v6268
      %v6358 = vpop.f32.mrb[0].mxu0
      %v6359 = vadd.f32 0.0, %v6358
      %v6360 = vpop.f32.mrb[0].mxu0
      %6361 = vmatprep.mubr.f32.mxu0 0.0
      %6362 = vmatmul.mubr.f32.gmra.mrb[0].mxu0 %v6271
      %v6363 = vpop.f32.mrb[0].mxu0
      %v6364 = vadd.f32 0.0, %v6363
      %v6365 = vpop.f32.mrb[0].mxu0
      %6366 = vmatprep.mubr.f32.mxu0 0.0
      %6367 = vmatmul.mubr.f32.gmra.mrb[0].mxu0 %v6274
      %v6368 = vpop.f32.mrb[0].mxu0
      %v6369 = vadd.f32 0.0, %v6368
      %v6370 = vpop.f32.mrb[0].mxu0
      %6371 = vmatprep.mubr.f32.mxu0 0.0
      %6372 = vmatmul.mubr.f32.gmra.mrb[0].mxu0 %v6277
      %v6373 = vpop.f32.mrb[0].mxu0
      %v6374 = vadd.f32 0.0, %v6373
      %v6375 = vpop.f32.mrb[0].mxu0
      %6376 = vmatprep.mubr.f32.mxu0 0.0
      %6377 = vmatmul.mubr.f32.gmra.mrb[0].mxu0 %v6280
      %v6378 = vpop.f32.mrb[0].mxu0
      %v6379 = vadd.f32 0.0, %v6378
      %v6380 = vpop.f32.mrb[0].mxu0
      %6381 = vmatprep.mubr.f32.mxu0 0.0
      %6382 = vmatmul.mubr.f32.gmra.mrb[0].mxu0 %v6283
      %v6383 = vpop.f32.mrb[0].mxu0
      %v6384 = vadd.f32 0.0, %v6383
      %v6385 = vpop.f32.mrb[0].mxu0
      %6386 = vdwg.mxu0
      %v6387 = vld [vmem:[%s827] sm:$0x1]
      %v6389 = vlaneseq
      %v6390 = vshrl.u32 %v6389, 7
      %v6391 = vsub.s32 0, %v6390
      %v6392 = vrot.slane %v6387, %v6391
      %6393 = vset.pattern.permute.xlu0 0
      %6394 = vperm.xlu0 %6393, %v6392
      %v6395 = vpop.permute.xlu0 %6394
      %v6397 = vmul.f32 %v6395, %v6354
      %v6398 = vmul.f32 %v6395, %v6359
      %v6399 = vmul.f32 %v6395, %v6364
      %v6400 = vmul.f32 %v6395, %v6369
      %v6401 = vmul.f32 %v6395, %v6374
      %v6402 = vmul.f32 %v6395, %v6379
      %v6403 = vmul.f32 %v6395, %v6384
      %v6404 = vadd.f32 %v6397, %v5871
      %v6405 = vadd.f32 %v6398, %v5872
      %v6406 = vadd.f32 %v6399, %v5873
      %v6407 = vadd.f32 %v6400, %v5874
      %v6408 = vadd.f32 %v6401, %v5875
      %v6409 = vadd.f32 %v6402, %v5876
      %v6410 = vadd.f32 %v6403, %v5877
      %v6411 = vmul.f32 %v6404, %v5871
      %v6412 = vmul.f32 %v6405, %v5872
      %v6413 = vmul.f32 %v6406, %v5873
      %v6414 = vmul.f32 %v6407, %v5874
      %v6415 = vmul.f32 %v6408, %v5875
      %v6416 = vmul.f32 %v6409, %v5876
      %v6417 = vmul.f32 %v6410, %v5877
      %v6418 = vld [vmem:[%s830] sm:$0x1]
      %v6420 = vlaneseq
      %v6421 = vshrl.u32 %v6420, 7
      %v6422 = vsub.s32 0, %v6421
      %v6423 = vrot.slane %v6418, %v6422
      %v6425 = vmul.f32 %v6411, %v6423
      %v6426 = vmul.f32 %v6412, %v6423
      %v6427 = vmul.f32 %v6413, %v6423
      %v6428 = vmul.f32 %v6414, %v6423
      %v6429 = vmul.f32 %v6415, %v6423
      %v6430 = vmul.f32 %v6416, %v6423
      %v6431 = vmul.f32 %v6417, %v6423
      %v6432 = vld [vmem:[%s833] sm:$0x1]
      %v6434 = vlaneseq
      %v6435 = vshrl.u32 %v6434, 7
      %v6436 = vsub.s32 0, %v6435
      %v6437 = vrot.slane %v6432, %v6436
      %v6439 = vadd.f32 %v6425, %v6437
      %v6440 = vadd.f32 %v6426, %v6437
      %v6441 = vadd.f32 %v6427, %v6437
      %v6442 = vadd.f32 %v6428, %v6437
      %v6443 = vadd.f32 %v6429, %v6437
      %v6444 = vadd.f32 %v6430, %v6437
      %v6445 = vadd.f32 %v6431, %v6437
      %v6446 = vmax.f32 %v6439, 0.0
      %v6447 = vmax.f32 %v6440, 0.0
      %v6448 = vmax.f32 %v6441, 0.0
      %v6449 = vmax.f32 %v6442, 0.0
      %v6450 = vmax.f32 %v6443, 0.0
      %v6451 = vmax.f32 %v6444, 0.0
      %v6452 = vmax.f32 %v6445, 0.0
      %v6453 = vand.u32 2147483647, %v6439
      %v6454 = vand.u32 2147483647, %v6440
      %v6455 = vand.u32 2147483647, %v6441
      %v6456 = vand.u32 2147483647, %v6442
      %v6457 = vand.u32 2147483647, %v6443
      %v6458 = vand.u32 2147483647, %v6444
      %v6459 = vand.u32 2147483647, %v6445
      %v6460 = vsub.f32 0.0, %v6453
      %v6461 = vsub.f32 0.0, %v6454
      %v6462 = vsub.f32 0.0, %v6455
      %v6463 = vsub.f32 0.0, %v6456
      %v6464 = vsub.f32 0.0, %v6457
      %v6465 = vsub.f32 0.0, %v6458
      %v6466 = vsub.f32 0.0, %v6459
      %v6467 = vmul.f32 %v6460, 1.442695
      %v6468 = vpow.pop %v6467
      %v6469 = vmul.f32 %v6461, 1.442695
      %v6470 = vpow.pop %v6469
      %v6471 = vmul.f32 %v6462, 1.442695
      %v6472 = vpow.pop %v6471
      %v6473 = vmul.f32 %v6463, 1.442695
      %v6474 = vpow.pop %v6473
      %v6475 = vmul.f32 %v6464, 1.442695
      %v6476 = vpow.pop %v6475
      %v6477 = vmul.f32 %v6465, 1.442695
      %v6478 = vpow.pop %v6477
      %v6479 = vmul.f32 %v6466, 1.442695
      %v6480 = vpow.pop %v6479
      %v6481 = vadd.f32 %v6468, 1.0
      %v6482 = vlog2.pop %v6481
      %v6483 = vmul.f32 %v6482, 0.6931472
      %v6484 = vmul.f32 -0.5, %v6468
      %v6485 = vadd.f32 %v6484, 1.0
      %v6486 = vmul.f32 %v6485, %v6468
      %v6487 = vand.u32 2147483647, %v6468
      %vm6488 = vcmp.lt.f32.partialorder %v6487, 0.0004427343
      %v6489 = vsel %vm6488, %v6486, %v6483
      %v6490 = vadd.f32 %v6470, 1.0
      %v6491 = vlog2.pop %v6490
      %v6492 = vmul.f32 %v6491, 0.6931472
      %v6493 = vmul.f32 -0.5, %v6470
      %v6494 = vadd.f32 %v6493, 1.0
      %v6495 = vmul.f32 %v6494, %v6470
      %v6496 = vand.u32 2147483647, %v6470
      %vm6497 = vcmp.lt.f32.partialorder %v6496, 0.0004427343
      %v6498 = vsel %vm6497, %v6495, %v6492
      %v6499 = vadd.f32 %v6472, 1.0
      %v6500 = vlog2.pop %v6499
      %v6501 = vmul.f32 %v6500, 0.6931472
      %v6502 = vmul.f32 -0.5, %v6472
      %v6503 = vadd.f32 %v6502, 1.0
      %v6504 = vmul.f32 %v6503, %v6472
      %v6505 = vand.u32 2147483647, %v6472
      %vm6506 = vcmp.lt.f32.partialorder %v6505, 0.0004427343
      %v6507 = vsel %vm6506, %v6504, %v6501
      %v6508 = vadd.f32 %v6474, 1.0
      %v6509 = vlog2.pop %v6508
      %v6510 = vmul.f32 %v6509, 0.6931472
      %v6511 = vmul.f32 -0.5, %v6474
      %v6512 = vadd.f32 %v6511, 1.0
      %v6513 = vmul.f32 %v6512, %v6474
      %v6514 = vand.u32 2147483647, %v6474
      %vm6515 = vcmp.lt.f32.partialorder %v6514, 0.0004427343
      %v6516 = vsel %vm6515, %v6513, %v6510
      %v6517 = vadd.f32 %v6476, 1.0
      %v6518 = vlog2.pop %v6517
      %v6519 = vmul.f32 %v6518, 0.6931472
      %v6520 = vmul.f32 -0.5, %v6476
      %v6521 = vadd.f32 %v6520, 1.0
      %v6522 = vmul.f32 %v6521, %v6476
      %v6523 = vand.u32 2147483647, %v6476
      %vm6524 = vcmp.lt.f32.partialorder %v6523, 0.0004427343
      %v6525 = vsel %vm6524, %v6522, %v6519
      %v6526 = vadd.f32 %v6478, 1.0
      %v6527 = vlog2.pop %v6526
      %v6528 = vmul.f32 %v6527, 0.6931472
      %v6529 = vmul.f32 -0.5, %v6478
      %v6530 = vadd.f32 %v6529, 1.0
      %v6531 = vmul.f32 %v6530, %v6478
      %v6532 = vand.u32 2147483647, %v6478
      %vm6533 = vcmp.lt.f32.partialorder %v6532, 0.0004427343
      %v6534 = vsel %vm6533, %v6531, %v6528
      %v6535 = vadd.f32 %v6480, 1.0
      %v6536 = vlog2.pop %v6535
      %v6537 = vmul.f32 %v6536, 0.6931472
      %v6538 = vmul.f32 -0.5, %v6480
      %v6539 = vadd.f32 %v6538, 1.0
      %v6540 = vmul.f32 %v6539, %v6480
      %v6541 = vand.u32 2147483647, %v6480
      %vm6542 = vcmp.lt.f32.partialorder %v6541, 0.0004427343
      %v6543 = vsel %vm6542, %v6540, %v6537
      %v6544 = vadd.f32 %v6446, %v6489
      %v6545 = vadd.f32 %v6447, %v6498
      %v6546 = vadd.f32 %v6448, %v6507
      %v6547 = vadd.f32 %v6449, %v6516
      %v6548 = vadd.f32 %v6450, %v6525
      %v6549 = vadd.f32 %v6451, %v6534
      %v6550 = vadd.f32 %v6452, %v6543
      %v6551 = vtanh.pop %v6544
      %v6552 = vtanh.pop %v6545
      %v6553 = vtanh.pop %v6546
      %v6554 = vtanh.pop %v6547
      %v6555 = vtanh.pop %v6548
      %v6556 = vtanh.pop %v6549
      %v6557 = vtanh.pop %v6550
      %v6558 = vmul.f32 %v6439, %v6551
      %v6559 = vmul.f32 %v6440, %v6552
      %v6560 = vmul.f32 %v6441, %v6553
      %v6561 = vmul.f32 %v6442, %v6554
      %v6562 = vmul.f32 %v6443, %v6555
      %v6563 = vmul.f32 %v6444, %v6556
      %v6564 = vmul.f32 %v6445, %v6557
      %v6565 = vld [vmem:[%s3] sm:$0x3]
      %v6567 = vsel %vm1105, %v6565, 0
      %v6570 = vsel %vm1127, %v6564, 0
      %6572 = vmatprep.subr.mxu0 0.0
      %6573 = vmatpush1.msra.mxu0 %v6558
      %6574 = vmatprep.subr.mxu0 0.0
      %6575 = vmatpush1.msra.mxu0 %v6559
      %6576 = vmatprep.subr.mxu0 0.0
      %6577 = vmatpush1.msra.mxu0 %v6560
      %6578 = vmatprep.subr.mxu0 0.0
      %6579 = vmatpush1.msra.mxu0 %v6561
      %6580 = vmatprep.subr.mxu0 0.0
      %6581 = vmatpush1.msra.mxu0 %v6562
      %6582 = vmatprep.subr.mxu0 0.0
      %6583 = vmatpush1.msra.mxu0 %v6563
      %6584 = vmatprep.subr.mxu0 0.0
      %6585 = vmatpush1.msra.mxu0 %v6570
      %6586 = vmatprep.subr.mxu0 0.0
      %6587 = vmatpush1.msra.mxu0 0.0
      %6588 = vmatprep.subr.mxu0 0.0
      %6589 = vmatpush1.msra.mxu0 0.0
      %6590 = vmatprep.subr.mxu0 0.0
      %6591 = vmatpush1.msra.mxu0 0.0
      %6592 = vmatprep.subr.mxu0 0.0
      %6593 = vmatpush1.msra.mxu0 0.0
      %6594 = vmatprep.subr.mxu0 0.0
      %6595 = vmatpush1.msra.mxu0 0.0
      %6596 = vmatprep.subr.mxu0 0.0
      %6597 = vmatpush1.msra.mxu0 0.0
      %6598 = vmatprep.subr.mxu0 0.0
      %6599 = vmatpush1.msra.mxu0 0.0
      %6600 = vmatprep.subr.mxu0 0.0
      %6601 = vmatpush1.msra.mxu0 0.0
      %6602 = vmatprep.subr.mxu0 0.0
      %6603 = vmatpush1.msra.mxu0 0.0
      %6604 = vmatprep.subr.mxu0 0.0
      %6605 = vmatpush1.msra.mxu0 0.0
      %6606 = vmatprep.subr.mxu0 0.0
      %6607 = vmatpush1.msra.mxu0 0.0
      %6608 = vmatprep.subr.mxu0 0.0
      %6609 = vmatpush1.msra.mxu0 0.0
      %6610 = vmatprep.subr.mxu0 0.0
      %6611 = vmatpush1.msra.mxu0 0.0
      %6612 = vmatprep.subr.mxu0 0.0
      %6613 = vmatpush1.msra.mxu0 0.0
      %6614 = vmatprep.subr.mxu0 0.0
      %6615 = vmatpush1.msra.mxu0 0.0
      %6616 = vmatprep.subr.mxu0 0.0
      %6617 = vmatpush1.msra.mxu0 0.0
      %6618 = vmatprep.subr.mxu0 0.0
      %6619 = vmatpush1.msra.mxu0 0.0
      %6620 = vmatprep.subr.mxu0 0.0
      %6621 = vmatpush1.msra.mxu0 0.0
      %6622 = vmatprep.subr.mxu0 0.0
      %6623 = vmatpush1.msra.mxu0 0.0
      %6624 = vmatprep.subr.mxu0 0.0
      %6625 = vmatpush1.msra.mxu0 0.0
      %6626 = vmatprep.subr.mxu0 0.0
      %6627 = vmatpush1.msra.mxu0 0.0
      %6628 = vmatprep.subr.mxu0 0.0
      %6629 = vmatpush1.msra.mxu0 0.0
      %6630 = vmatprep.subr.mxu0 0.0
      %6631 = vmatpush1.msra.mxu0 0.0
      %6632 = vmatprep.subr.mxu0 0.0
      %6633 = vmatpush1.msra.mxu0 0.0
      %6634 = vmatprep.subr.mxu0 0.0
      %6635 = vmatpush1.msra.mxu0 0.0
      %6636 = vmatprep.mubr.f32.mxu0 0.0
      %6637 = vmatmul.mubr.f32.gmra.mrb[0].mxu0 %v6567
      %v6638 = vpop.f32.mrb[0].mxu0
      %v6639 = vadd.f32 0.0, %v6638
      %v6640 = vpop.f32.mrb[0].mxu0
      %6641 = vdwg.mxu0
      %vm6642 = vcmask 189440
      %6643 = vst.msk [vmem:[%s837] sm:$0x3] %vm6642, %v6639
      %p6644 = scmp.lt.s32.totalorder %s30, 1
      %s6645 = scalar_select %p6644, %s30, 1
      %s6646 = smul.addr %s6645, 2
      %s6647 = scalar_lea.vmem %s19, %s6646
      // Predicated region
      $region97: #{lidar_model_forward.1} parent=95 // pred_check
        %p6648 = pneg %p527
      $region98: #{lidar_model_forward.1} parent=95 // pred_check_branch
        %6650 = sbr.rel (%p6648) target = $region100
      $region99: #{lidar_model_forward.1} parent=95 // pred_region
        _
      $region100: #{lidar_model_forward.1} parent=95 // pred_fallthru
        _
    $region96: #{lidar_model_forward.1} parent=5 // pred_fallthru
      _
    %p6651 = scmp.le.s32.totalorder 2, %s25
    // Predicated region
    $region101: #{lidar_model_forward.1} parent=5 // pred_check
      %p6652 = pneg %p6651
    $region102: #{lidar_model_forward.1} parent=5 // pred_check_branch
      %6654 = sbr.rel (%p6652) target = $region104
    $region103: #{lidar_model_forward.1} parent=5 // pred_region
      %s6655 = ssub.s32 %s25, 2
      // Predicated region
      $region105: #{lidar_model_forward.1} parent=103 // pred_check
        %p6656 = pneg %p533
      $region106: #{lidar_model_forward.1} parent=103 // pred_check_branch
        %6658 = sbr.rel (%p6656) target = $region108
      $region107: #{lidar_model_forward.1} parent=103 // pred_region
        %p6659 = scmp.lt.s32.totalorder %s31, 1
        %s6660 = scalar_select %p6659, %s31, 1
        %s6661 = smul.addr %s6660, 2
        %s6662 = scalar_lea.vmem %s19, %s6661
      $region108: #{lidar_model_forward.1} parent=103 // pred_fallthru
        _
    $region104: #{lidar_model_forward.1} parent=5 // pred_fallthru
      _
  $region6: #{lidar_model_forward.1} parent=0 // loop_footer
    %s29 = sadd.s32 1, %s25
  $region7: #{lidar_model_forward.1} parent=0 // loop_footer_branch
    %24 = sbr.rel target = $region3
  $region8: #{lidar_model_forward.1} parent=0 // loop_exit
    _

</llo_original>
